<compile_context>
chip_gen: v7x
topology: tpu7x:2x2x1
jax: 0.10.0
libtpu: 0.0.40
codegen_flags: <defaults>
</compile_context>

<pallas_src>
import functools
import math

import jax
import jax.numpy as jnp
from jax.experimental import pallas as pl
from jax.experimental.pallas import tpu as pltpu


# ----------------------------------------------------------------------------
# Fused Pallas kernel: all LSTM layers + ReLU + time loop + final Linear.
# ----------------------------------------------------------------------------
def _fused_lstm2_kernel(x_ref, w0_ref, b0_ref, wx_ref, bx_ref, wh_ref,
                        fcw_ref, fcb_ref, out_ref,
                        h_scr, c_scr, xproj_scr, *,
                        hidden_dim, seq_len, relu_flags):
    H = hidden_dim
    T = seq_len
    L = len(relu_flags)
    B = x_ref.shape[1]
    mm_dtype = wh_ref.dtype           # bf16 (perf) or f32 (validation mode)

    # h0 = c0 = 0 (LSTM2.forward always starts from zeros); state is packed
    # lane-dense as (B, L*H).
    h_scr[...] = jnp.zeros_like(h_scr)
    c_scr[...] = jnp.zeros_like(c_scr)

    # ---- Precompute layer-0 input projection for ALL timesteps at once ----
    # (T*B, d_pad) @ (d_pad, 4H): batched M = T*B fills the MXU far better
    # than a per-step M = B matmul and takes it off the recurrence chain.
    d_pad = x_ref.shape[2]
    x_all = x_ref[...].reshape(T * B, d_pad)
    xp = jnp.dot(x_all, w0_ref[...], preferred_element_type=jnp.float32)
    xproj_scr[...] = xp.reshape(T, B, 4 * H) + b0_ref[...]

    # ---- Hoisted loop invariants ----
    # i/f/o columns of W and b were pre-scaled by 0.5 at fuse time, so a
    # SINGLE tanh gives: tanh(z) for the g gate and 0.5*tanh(z/2)+0.5 ==
    # sigmoid(z) for i/f/o (the extra 0.5*y+0.5 is a free VPU op).
    col = jax.lax.broadcasted_iota(jnp.int32, (B, 4 * H), 1)
    g_mask = (col >= 2 * H) & (col < 3 * H)
    # per-layer biases read once (JAX does not CSE these per step)
    b_hoist = [bx_ref[l - 1] for l in range(1, L)]          # each (1, 4H)

    def cell(gates, l):
        y = jnp.tanh(gates)                                 # single EUP pass
        act = jnp.where(g_mask, y, 0.5 * y + 0.5)
        i_g = act[:, 0:H]
        f_g = act[:, H:2 * H]
        g_g = act[:, 2 * H:3 * H]
        o_g = act[:, 3 * H:4 * H]
        c_new = f_g * c_scr[:, l * H:(l + 1) * H] + i_g * g_g
        h_new = o_g * jnp.tanh(c_new)
        c_scr[:, l * H:(l + 1) * H] = c_new
        h_scr[:, l * H:(l + 1) * H] = h_new
        return h_new

    def time_step(t, carry):
        # ----- layer 0: x side precomputed, only the h matmul remains -----
        gates = xproj_scr[t] + jnp.dot(
            h_scr[:, 0:H].astype(mm_dtype), wh_ref[0],
            preferred_element_type=jnp.float32)
        cur = cell(gates, 0)

        # ----- layers 1..L-1 (statically unrolled) -----
        for l in range(1, L):
            if relu_flags[l]:                    # ReLU between LSTM stacks
                cur = jnp.maximum(cur, 0.0)
            # Two accumulating dots instead of concat+dot (no lane concat,
            # true K = H); element-wise math stays f32.
            gates = (jnp.dot(cur.astype(mm_dtype), wx_ref[l - 1],
                             preferred_element_type=jnp.float32)
                     + jnp.dot(h_scr[:, l * H:(l + 1) * H].astype(mm_dtype),
                               wh_ref[l],
                               preferred_element_type=jnp.float32)
                     + b_hoist[l - 1])
            cur = cell(gates, l)
        return carry

    # Full unroll for short sequences (wavefront overlap across steps); cap
    # the unroll factor once T grows to limit code size / vreg pressure.
    unroll = True if T <= 16 else 4
    jax.lax.fori_loop(0, T, time_step, 0, unroll=unroll)

    # ---- Final Linear on the last layer's final hidden state ----
    h_last = h_scr[:, (L - 1) * H:L * H].astype(mm_dtype)
    out_ref[...] = (jnp.dot(h_last, fcw_ref[...],
                            preferred_element_type=jnp.float32)
                    + fcb_ref[...])


# ----------------------------------------------------------------------------
# Parameter init (deterministic, mimics torch nn.LSTM / nn.Linear uniform)
# ----------------------------------------------------------------------------
def init_raw_params(key, input_dim, hidden_dim, num_layers, output_dim,
                    num_lstms):
    k = 1.0 / math.sqrt(hidden_dim)
    layers = []
    for s in range(num_lstms):
        for l in range(num_layers):
            d_in = input_dim if (s == 0 and l == 0) else hidden_dim
            key, k1, k2, k3, k4 = jax.random.split(key, 5)
            layers.append({
                "w_ih": jax.random.uniform(k1, (4 * hidden_dim, d_in),
                                           jnp.float32, -k, k),
                "w_hh": jax.random.uniform(k2, (4 * hidden_dim, hidden_dim),
                                           jnp.float32, -k, k),
                "b_ih": jax.random.uniform(k3, (4 * hidden_dim,),
                                           jnp.float32, -k, k),
                "b_hh": jax.random.uniform(k4, (4 * hidden_dim,),
                                           jnp.float32, -k, k),
            })
    key, k1, k2 = jax.random.split(key, 3)
    fc_w = jax.random.uniform(k1, (output_dim, hidden_dim), jnp.float32, -k, k)
    fc_b = jax.random.uniform(k2, (output_dim,), jnp.float32, -k, k)
    return {"layers": layers, "fc_w": fc_w, "fc_b": fc_b}


def fuse_params(raw, input_dim, hidden_dim, output_dim, num_layers, num_lstms,
                *, mm_dtype=jnp.bfloat16):
    """Pre-stack / pre-transpose / pre-scale everything for the fused kernel."""
    H = hidden_dim
    L = num_layers * num_lstms
    d_pad = ((input_dim + 7) // 8) * 8

    # 0.5 pre-scale on i/f/o gate columns -> single tanh implements sigmoid.
    col = jnp.arange(4 * H)
    gate_scale = jnp.where((col >= 2 * H) & (col < 3 * H), 1.0, 0.5)

    layers = raw["layers"]
    relu_flags = tuple((li % num_layers == 0 and li >= num_layers)
                       for li in range(L))

    # Layer 0: input weight (rows padded to d_pad) + fused, pre-scaled bias.
    w_ih0 = layers[0]["w_ih"].T * gate_scale                  # (d_in, 4H)
    w_ih0 = jnp.pad(w_ih0, ((0, d_pad - input_dim), (0, 0)))  # (d_pad, 4H)
    b0 = ((layers[0]["b_ih"] + layers[0]["b_hh"]) * gate_scale
          ).reshape(1, 4 * H)

    # Recurrent weights for all layers: (L, H, 4H).
    w_h = jnp.stack([layers[l]["w_hh"].T * gate_scale for l in range(L)], 0)

    # Input weights + biases for layers 1..L-1 (K = H, no padding needed).
    if L > 1:
        w_x = jnp.stack([layers[l]["w_ih"].T * gate_scale
                         for l in range(1, L)], 0)            # (L-1, H, 4H)
        b_rest = jnp.stack(
            [((layers[l]["b_ih"] + layers[l]["b_hh"]) * gate_scale
              ).reshape(1, 4 * H) for l in range(1, L)], 0)    # (L-1, 1, 4H)
    else:
        w_x = jnp.zeros((1, H, 4 * H), jnp.float32)           # unused dummy
        b_rest = jnp.zeros((1, 1, 4 * H), jnp.float32)

    o_pad = max(128, ((output_dim + 127) // 128) * 128)        # lane-dense
    fc_w = jnp.zeros((H, o_pad), jnp.float32).at[:, :output_dim].set(
        raw["fc_w"].T)
    fc_b = jnp.zeros((1, o_pad), jnp.float32).at[:, :output_dim].set(
        raw["fc_b"])

    return {
        "w_ih0": w_ih0.astype(mm_dtype),        # (d_pad, 4H)
        "b0": b0.astype(jnp.float32),           # (1, 4H)
        "w_x": w_x.astype(mm_dtype),            # (max(L-1,1), H, 4H)
        "b_rest": b_rest.astype(jnp.float32),   # (max(L-1,1), 1, 4H)
        "w_h": w_h.astype(mm_dtype),            # (L, H, 4H)
        "fc_w": fc_w.astype(mm_dtype),          # (H, o_pad)
        "fc_b": fc_b.astype(jnp.float32),       # (1, o_pad)
        "relu_flags": relu_flags,
        "hidden_dim": H,
        "output_dim": output_dim,
        "d_pad": d_pad,
        "mm_dtype": mm_dtype,
    }


# ----------------------------------------------------------------------------
# LSTM2.forward equivalent (single fused pallas_call)
# ----------------------------------------------------------------------------
def lstm2_forward(params, x):
    """x: (B, T, input_dim) batch_first, like the PyTorch module."""
    B, T, Din = x.shape
    H = params["hidden_dim"]
    d_pad = params["d_pad"]
    o_pad = params["fc_w"].shape[1]
    L = len(params["relu_flags"])
    b_pad = max(8, ((B + 7) // 8) * 8)           # pad batch to 8 sublanes

    x_tm = jnp.transpose(x, (1, 0, 2)).astype(jnp.float32)      # (T, B, Din)
    x_tm = jnp.pad(x_tm, ((0, 0), (0, b_pad - B), (0, d_pad - Din)))
    x_tm = x_tm.astype(params["mm_dtype"])

    kernel = functools.partial(
        _fused_lstm2_kernel,
        hidden_dim=H, seq_len=T, relu_flags=params["relu_flags"])

    out = pl.pallas_call(
        kernel,
        out_shape=jax.ShapeDtypeStruct((b_pad, o_pad), jnp.float32),
        scratch_shapes=[
            pltpu.VMEM((b_pad, L * H), jnp.float32),     # packed h state
            pltpu.VMEM((b_pad, L * H), jnp.float32),     # packed c state
            pltpu.VMEM((T, b_pad, 4 * H), jnp.float32),  # layer-0 x-projection
        ],
        # Explicit VMEM budget; at larger H/T/L stream x over a time grid.
        compiler_params=pltpu.CompilerParams(vmem_limit_bytes=32 * 1024 * 1024),
    )(x_tm, params["w_ih0"], params["b0"], params["w_x"], params["b_rest"],
      params["w_h"], params["fc_w"], params["fc_b"])

    return out[:B, :params["output_dim"]]


# ----------------------------------------------------------------------------
# Pure-JAX reference (mirrors PyTorch LSTM2.forward) for validation
# ----------------------------------------------------------------------------
def lstm2_reference(raw, x, hidden_dim, num_layers, num_lstms):
    H = hidden_dim
    out = jnp.transpose(x, (1, 0, 2)).astype(jnp.float32)        # (T, B, Din)
    li = 0
    for s in range(num_lstms):
        for l in range(num_layers):
            layer = raw["layers"][li]; li += 1
            inp = jnp.maximum(out, 0.0) if (s > 0 and l == 0) else out
            T, B, _ = inp.shape
            h = jnp.zeros((B, H), jnp.float32)
            c = jnp.zeros((B, H), jnp.float32)
            hs = []
            for t in range(T):
                gates = (inp[t] @ layer["w_ih"].T + layer["b_ih"]
                         + h @ layer["w_hh"].T + layer["b_hh"])
                i_g = jax.nn.sigmoid(gates[:, 0:H])
                f_g = jax.nn.sigmoid(gates[:, H:2 * H])
                g_g = jnp.tanh(gates[:, 2 * H:3 * H])
                o_g = jax.nn.sigmoid(gates[:, 3 * H:4 * H])
                c = f_g * c + i_g * g_g
                h = o_g * jnp.tanh(c)
                hs.append(h)
            out = jnp.stack(hs, axis=0)
    return out[-1] @ raw["fc_w"].T + raw["fc_b"]


# ----------------------------------------------------------------------------
if __name__ == "__main__":
    # Small shapes consistent with the module's forward.
    batch, seq = 2, 8
    input_dim, hidden_dim, num_layers, output_dim, num_lstms = 4, 32, 2, 3, 2

    key = jax.random.PRNGKey(0)
    key, pkey, xkey = jax.random.split(key, 3)
    raw = init_raw_params(pkey, input_dim, hidden_dim, num_layers,
                          output_dim, num_lstms)
    x = jax.random.normal(xkey, (batch, seq, input_dim), jnp.float32)

    y_ref = lstm2_reference(raw, x, hidden_dim, num_layers, num_lstms)

    # 1) Tight correctness check with f32 matmul operands.
    params_f32 = fuse_params(raw, input_dim, hidden_dim, output_dim,
                             num_layers, num_lstms, mm_dtype=jnp.float32)
    y_f32 = jax.block_until_ready(lstm2_forward(params_f32, x))
    assert y_f32.shape == (batch, output_dim)
    err_f32 = float(jnp.max(jnp.abs(y_f32 - y_ref)))
    assert err_f32 < 1e-3, f"f32 mismatch vs reference: {err_f32}"

    # 2) Performance configuration: bf16 matmul operands, f32 accumulation
    #    and f32 element-wise cell math (expected ~1e-3-level drift).
    params_bf16 = fuse_params(raw, input_dim, hidden_dim, output_dim,
                              num_layers, num_lstms, mm_dtype=jnp.bfloat16)
    y_bf16 = jax.block_until_ready(lstm2_forward(params_bf16, x))
    assert y_bf16.shape == (batch, output_dim)
    err_bf16 = float(jnp.max(jnp.abs(y_bf16 - y_ref)))
    assert err_bf16 < 5e-2, f"bf16 mismatch vs reference: {err_bf16}"

    # TODO(synk): stateful LSTM2.predict (persistent h/c across calls) is not
    # implemented; only forward() (zero-initialized h/c) is covered.
    print("KERNEL_OK")
</pallas_src>

<mosaic_0001>
module attributes {stable_mosaic.version = 11 : i64} {
  func.func @_fused_lstm2_kernel(%arg0: memref<8x8x8xf32, #tpu.memory_space<vmem>>, %arg1: memref<8x128xf32, #tpu.memory_space<vmem>>, %arg2: memref<1x128xf32, #tpu.memory_space<vmem>>, %arg3: memref<3x32x128xf32, #tpu.memory_space<vmem>>, %arg4: memref<3x1x128xf32, #tpu.memory_space<vmem>>, %arg5: memref<4x32x128xf32, #tpu.memory_space<vmem>>, %arg6: memref<32x128xf32, #tpu.memory_space<vmem>>, %arg7: memref<1x128xf32, #tpu.memory_space<vmem>>, %arg8: memref<8x128xf32, #tpu.memory_space<vmem>>, %arg9: memref<8x128xf32, #tpu.memory_space<vmem>>, %arg10: memref<8x128xf32, #tpu.memory_space<vmem>>, %arg11: memref<8x8x128xf32, #tpu.memory_space<vmem>>) attributes {dimension_semantics = [], scalar_prefetch = 0 : i64, scratch_operands = 3 : i64, tpu.core_type = #tpu.core_type<tc>} {
    %cst = arith.constant 0.000000e+00 : f32
    %0 = vector.broadcast %cst : f32 to vector<8x128xf32>
    %c0 = arith.constant 0 : index
    %c0_0 = arith.constant 0 : index
    %1 = vector.load %arg9[%c0, %c0_0] : memref<8x128xf32, #tpu.memory_space<vmem>>, vector<8x128xf32>
    tpu.vector_store %arg9[%c0, %c0_0], %0 {strides = array<i32>} : memref<8x128xf32, #tpu.memory_space<vmem>>, vector<8x128xf32>,
    %cst_1 = arith.constant 0.000000e+00 : f32
    %2 = vector.broadcast %cst_1 : f32 to vector<8x128xf32>
    %c0_2 = arith.constant 0 : index
    %c0_3 = arith.constant 0 : index
    %3 = vector.load %arg10[%c0_2, %c0_3] : memref<8x128xf32, #tpu.memory_space<vmem>>, vector<8x128xf32>
    tpu.vector_store %arg10[%c0_2, %c0_3], %2 {strides = array<i32>} : memref<8x128xf32, #tpu.memory_space<vmem>>, vector<8x128xf32>,
    %c0_4 = arith.constant 0 : index
    %c0_5 = arith.constant 0 : index
    %c0_6 = arith.constant 0 : index
    %4 = vector.load %arg0[%c0_4, %c0_5, %c0_6] : memref<8x8x8xf32, #tpu.memory_space<vmem>>, vector<8x8x8xf32>
    %5 = vector.shape_cast %4 : vector<8x8x8xf32> to vector<64x8xf32>
    %c0_7 = arith.constant 0 : index
    %c0_8 = arith.constant 0 : index
    %6 = vector.load %arg1[%c0_7, %c0_8] : memref<8x128xf32, #tpu.memory_space<vmem>>, vector<8x128xf32>
    %cst_9 = arith.constant dense<0.000000e+00> : vector<64x128xf32>
    %7 = tpu.matmul %5, %6, %cst_9 {dimension_numbers = #tpu.dot_dimension_numbers<[1], [0], [0], [1], [0, 0, 1, 1], [], []>} : vector<64x8xf32>, vector<8x128xf32>, vector<64x128xf32> -> vector<64x128xf32>
    %8 = vector.shape_cast %7 : vector<64x128xf32> to vector<8x8x128xf32>
    %c0_10 = arith.constant 0 : index
    %c0_11 = arith.constant 0 : index
    %9 = vector.load %arg2[%c0_10, %c0_11] : memref<1x128xf32, #tpu.memory_space<vmem>>, vector<1x128xf32>
    %10 = vector.shape_cast %9 : vector<1x128xf32> to vector<1x1x128xf32>
    %11 = vector.broadcast %10 : vector<1x1x128xf32> to vector<8x8x128xf32>
    %12 = arith.addf %8, %11 : vector<8x8x128xf32>
    %c0_12 = arith.constant 0 : index
    %c0_13 = arith.constant 0 : index
    %c0_14 = arith.constant 0 : index
    %13 = vector.load %arg11[%c0_12, %c0_13, %c0_14] : memref<8x8x128xf32, #tpu.memory_space<vmem>>, vector<8x8x128xf32>
    tpu.vector_store %arg11[%c0_12, %c0_13, %c0_14], %12 {strides = array<i32>} : memref<8x8x128xf32, #tpu.memory_space<vmem>>, vector<8x8x128xf32>,
    %14 = tpu.iota {dimensions = array<i32: 1>} : vector<8x128xi32>
    %c64_i32 = arith.constant 64 : i32
    %15 = vector.broadcast %c64_i32 : i32 to vector<8x128xi32>
    %16 = arith.cmpi sge, %14, %15 : vector<8x128xi32>
    %c96_i32 = arith.constant 96 : i32
    %17 = vector.broadcast %c96_i32 : i32 to vector<8x128xi32>
    %18 = arith.cmpi slt, %14, %17 : vector<8x128xi32>
    %19 = arith.andi %16, %18 : vector<8x128xi1>
    %c0_15 = arith.constant 0 : index
    %c0_16 = arith.constant 0 : index
    %c0_17 = arith.constant 0 : index
    %20 = vector.load %arg4[%c0_15, %c0_16, %c0_17] : memref<3x1x128xf32, #tpu.memory_space<vmem>>, vector<1x1x128xf32>
    %21 = vector.shape_cast %20 : vector<1x1x128xf32> to vector<1x128xf32>
    %c1 = arith.constant 1 : index
    %c0_18 = arith.constant 0 : index
    %c0_19 = arith.constant 0 : index
    %22 = vector.load %arg4[%c1, %c0_18, %c0_19] : memref<3x1x128xf32, #tpu.memory_space<vmem>>, vector<1x1x128xf32>
    %23 = vector.shape_cast %22 : vector<1x1x128xf32> to vector<1x128xf32>
    %c2 = arith.constant 2 : index
    %c0_20 = arith.constant 0 : index
    %c0_21 = arith.constant 0 : index
    %24 = vector.load %arg4[%c2, %c0_20, %c0_21] : memref<3x1x128xf32, #tpu.memory_space<vmem>>, vector<1x1x128xf32>
    %25 = vector.shape_cast %24 : vector<1x1x128xf32> to vector<1x128xf32>
    %c0_i32 = arith.constant 0 : i32
    %26 = arith.index_cast %c0_i32 : i32 to index
    %c0_22 = arith.constant 0 : index
    %c0_23 = arith.constant 0 : index
    %27 = vector.load %arg11[%26, %c0_22, %c0_23] : memref<8x8x128xf32, #tpu.memory_space<vmem>>, vector<1x8x128xf32>
    %28 = vector.shape_cast %27 : vector<1x8x128xf32> to vector<8x128xf32>
    %c0_24 = arith.constant 0 : index
    %c0_25 = arith.constant 0 : index
    %29 = vector.load %arg9[%c0_24, %c0_25] : memref<8x128xf32, #tpu.memory_space<vmem>>, vector<8x32xf32>
    %c0_26 = arith.constant 0 : index
    %c0_27 = arith.constant 0 : index
    %c0_28 = arith.constant 0 : index
    %30 = vector.load %arg5[%c0_26, %c0_27, %c0_28] : memref<4x32x128xf32, #tpu.memory_space<vmem>>, vector<1x32x128xf32>
    %31 = vector.shape_cast %30 : vector<1x32x128xf32> to vector<32x128xf32>
    %cst_29 = arith.constant dense<0.000000e+00> : vector<8x128xf32>
    %32 = tpu.matmul %29, %31, %cst_29 {dimension_numbers = #tpu.dot_dimension_numbers<[1], [0], [0], [1], [0, 0, 1, 1], [], []>} : vector<8x32xf32>, vector<32x128xf32>, vector<8x128xf32> -> vector<8x128xf32>
    %33 = arith.addf %28, %32 : vector<8x128xf32>
    %34 = math.tanh %33 : vector<8x128xf32>
    %cst_30 = arith.constant 5.000000e-01 : f32
    %35 = vector.broadcast %cst_30 : f32 to vector<8x128xf32>
    %36 = arith.mulf %35, %34 : vector<8x128xf32>
    %cst_31 = arith.constant 5.000000e-01 : f32
    %37 = vector.broadcast %cst_31 : f32 to vector<8x128xf32>
    %38 = arith.addf %36, %37 : vector<8x128xf32>
    %39 = arith.select %19, %34, %38 : vector<8x128xi1>, vector<8x128xf32>
    %40 = vector.extract_strided_slice %39 {offsets = [0, 0], sizes = [8, 32], strides = [1, 1]} : vector<8x128xf32> to vector<8x32xf32>
    %41 = vector.extract_strided_slice %39 {offsets = [0, 32], sizes = [8, 32], strides = [1, 1]} : vector<8x128xf32> to vector<8x32xf32>
    %42 = vector.extract_strided_slice %39 {offsets = [0, 64], sizes = [8, 32], strides = [1, 1]} : vector<8x128xf32> to vector<8x32xf32>
    %43 = vector.extract_strided_slice %39 {offsets = [0, 96], sizes = [8, 32], strides = [1, 1]} : vector<8x128xf32> to vector<8x32xf32>
    %c0_32 = arith.constant 0 : index
    %c0_33 = arith.constant 0 : index
    %44 = vector.load %arg10[%c0_32, %c0_33] : memref<8x128xf32, #tpu.memory_space<vmem>>, vector<8x32xf32>
    %45 = arith.mulf %41, %44 : vector<8x32xf32>
    %46 = arith.mulf %40, %42 : vector<8x32xf32>
    %47 = arith.addf %45, %46 : vector<8x32xf32>
    %48 = math.tanh %47 : vector<8x32xf32>
    %49 = arith.mulf %43, %48 : vector<8x32xf32>
    %c0_34 = arith.constant 0 : index
    %c0_35 = arith.constant 0 : index
    %50 = vector.load %arg10[%c0_34, %c0_35] : memref<8x128xf32, #tpu.memory_space<vmem>>, vector<8x32xf32>
    tpu.vector_store %arg10[%c0_34, %c0_35], %47 {strides = array<i32>} : memref<8x128xf32, #tpu.memory_space<vmem>>, vector<8x32xf32>,
    %c0_36 = arith.constant 0 : index
    %c0_37 = arith.constant 0 : index
    %51 = vector.load %arg9[%c0_36, %c0_37] : memref<8x128xf32, #tpu.memory_space<vmem>>, vector<8x32xf32>
    tpu.vector_store %arg9[%c0_36, %c0_37], %49 {strides = array<i32>} : memref<8x128xf32, #tpu.memory_space<vmem>>, vector<8x32xf32>,
    %c0_38 = arith.constant 0 : index
    %c0_39 = arith.constant 0 : index
    %c0_40 = arith.constant 0 : index
    %52 = vector.load %arg3[%c0_38, %c0_39, %c0_40] : memref<3x32x128xf32, #tpu.memory_space<vmem>>, vector<1x32x128xf32>
    %53 = vector.shape_cast %52 : vector<1x32x128xf32> to vector<32x128xf32>
    %cst_41 = arith.constant dense<0.000000e+00> : vector<8x128xf32>
    %54 = tpu.matmul %49, %53, %cst_41 {dimension_numbers = #tpu.dot_dimension_numbers<[1], [0], [0], [1], [0, 0, 1, 1], [], []>} : vector<8x32xf32>, vector<32x128xf32>, vector<8x128xf32> -> vector<8x128xf32>
    %c0_42 = arith.constant 0 : index
    %c32 = arith.constant 32 : index
    %55 = vector.load %arg9[%c0_42, %c32] : memref<8x128xf32, #tpu.memory_space<vmem>>, vector<8x32xf32>
    %c1_43 = arith.constant 1 : index
    %c0_44 = arith.constant 0 : index
    %c0_45 = arith.constant 0 : index
    %56 = vector.load %arg5[%c1_43, %c0_44, %c0_45] : memref<4x32x128xf32, #tpu.memory_space<vmem>>, vector<1x32x128xf32>
    %57 = vector.shape_cast %56 : vector<1x32x128xf32> to vector<32x128xf32>
    %cst_46 = arith.constant dense<0.000000e+00> : vector<8x128xf32>
    %58 = tpu.matmul %55, %57, %cst_46 {dimension_numbers = #tpu.dot_dimension_numbers<[1], [0], [0], [1], [0, 0, 1, 1], [], []>} : vector<8x32xf32>, vector<32x128xf32>, vector<8x128xf32> -> vector<8x128xf32>
    %59 = arith.addf %54, %58 : vector<8x128xf32>
    %60 = vector.broadcast %21 : vector<1x128xf32> to vector<8x128xf32>
    %61 = arith.addf %59, %60 : vector<8x128xf32>
    %62 = math.tanh %61 : vector<8x128xf32>
    %cst_47 = arith.constant 5.000000e-01 : f32
    %63 = vector.broadcast %cst_47 : f32 to vector<8x128xf32>
    %64 = arith.mulf %63, %62 : vector<8x128xf32>
    %cst_48 = arith.constant 5.000000e-01 : f32
    %65 = vector.broadcast %cst_48 : f32 to vector<8x128xf32>
    %66 = arith.addf %64, %65 : vector<8x128xf32>
    %67 = arith.select %19, %62, %66 : vector<8x128xi1>, vector<8x128xf32>
    %68 = vector.extract_strided_slice %67 {offsets = [0, 0], sizes = [8, 32], strides = [1, 1]} : vector<8x128xf32> to vector<8x32xf32>
    %69 = vector.extract_strided_slice %67 {offsets = [0, 32], sizes = [8, 32], strides = [1, 1]} : vector<8x128xf32> to vector<8x32xf32>
    %70 = vector.extract_strided_slice %67 {offsets = [0, 64], sizes = [8, 32], strides = [1, 1]} : vector<8x128xf32> to vector<8x32xf32>
    %71 = vector.extract_strided_slice %67 {offsets = [0, 96], sizes = [8, 32], strides = [1, 1]} : vector<8x128xf32> to vector<8x32xf32>
    %c0_49 = arith.constant 0 : index
    %c32_50 = arith.constant 32 : index
    %72 = vector.load %arg10[%c0_49, %c32_50] : memref<8x128xf32, #tpu.memory_space<vmem>>, vector<8x32xf32>
    %73 = arith.mulf %69, %72 : vector<8x32xf32>
    %74 = arith.mulf %68, %70 : vector<8x32xf32>
    %75 = arith.addf %73, %74 : vector<8x32xf32>
    %76 = math.tanh %75 : vector<8x32xf32>
    %77 = arith.mulf %71, %76 : vector<8x32xf32>
    %c0_51 = arith.constant 0 : index
    %c32_52 = arith.constant 32 : index
    %78 = vector.load %arg10[%c0_51, %c32_52] : memref<8x128xf32, #tpu.memory_space<vmem>>, vector<8x32xf32>
    tpu.vector_store %arg10[%c0_51, %c32_52], %75 {strides = array<i32>} : memref<8x128xf32, #tpu.memory_space<vmem>>, vector<8x32xf32>,
    %c0_53 = arith.constant 0 : index
    %c32_54 = arith.constant 32 : index
    %79 = vector.load %arg9[%c0_53, %c32_54] : memref<8x128xf32, #tpu.memory_space<vmem>>, vector<8x32xf32>
    tpu.vector_store %arg9[%c0_53, %c32_54], %77 {strides = array<i32>} : memref<8x128xf32, #tpu.memory_space<vmem>>, vector<8x32xf32>,
    %cst_55 = arith.constant 0.000000e+00 : f32
    %80 = vector.broadcast %cst_55 : f32 to vector<8x32xf32>
    %81 = arith.maximumf %77, %80 : vector<8x32xf32>
    %c1_56 = arith.constant 1 : index
    %c0_57 = arith.constant 0 : index
    %c0_58 = arith.constant 0 : index
    %82 = vector.load %arg3[%c1_56, %c0_57, %c0_58] : memref<3x32x128xf32, #tpu.memory_space<vmem>>, vector<1x32x128xf32>
    %83 = vector.shape_cast %82 : vector<1x32x128xf32> to vector<32x128xf32>
    %cst_59 = arith.constant dense<0.000000e+00> : vector<8x128xf32>
    %84 = tpu.matmul %81, %83, %cst_59 {dimension_numbers = #tpu.dot_dimension_numbers<[1], [0], [0], [1], [0, 0, 1, 1], [], []>} : vector<8x32xf32>, vector<32x128xf32>, vector<8x128xf32> -> vector<8x128xf32>
    %c0_60 = arith.constant 0 : index
    %c64 = arith.constant 64 : index
    %85 = vector.load %arg9[%c0_60, %c64] : memref<8x128xf32, #tpu.memory_space<vmem>>, vector<8x32xf32>
    %c2_61 = arith.constant 2 : index
    %c0_62 = arith.constant 0 : index
    %c0_63 = arith.constant 0 : index
    %86 = vector.load %arg5[%c2_61, %c0_62, %c0_63] : memref<4x32x128xf32, #tpu.memory_space<vmem>>, vector<1x32x128xf32>
    %87 = vector.shape_cast %86 : vector<1x32x128xf32> to vector<32x128xf32>
    %cst_64 = arith.constant dense<0.000000e+00> : vector<8x128xf32>
    %88 = tpu.matmul %85, %87, %cst_64 {dimension_numbers = #tpu.dot_dimension_numbers<[1], [0], [0], [1], [0, 0, 1, 1], [], []>} : vector<8x32xf32>, vector<32x128xf32>, vector<8x128xf32> -> vector<8x128xf32>
    %89 = arith.addf %84, %88 : vector<8x128xf32>
    %90 = vector.broadcast %23 : vector<1x128xf32> to vector<8x128xf32>
    %91 = arith.addf %89, %90 : vector<8x128xf32>
    %92 = math.tanh %91 : vector<8x128xf32>
    %cst_65 = arith.constant 5.000000e-01 : f32
    %93 = vector.broadcast %cst_65 : f32 to vector<8x128xf32>
    %94 = arith.mulf %93, %92 : vector<8x128xf32>
    %cst_66 = arith.constant 5.000000e-01 : f32
    %95 = vector.broadcast %cst_66 : f32 to vector<8x128xf32>
    %96 = arith.addf %94, %95 : vector<8x128xf32>
    %97 = arith.select %19, %92, %96 : vector<8x128xi1>, vector<8x128xf32>
    %98 = vector.extract_strided_slice %97 {offsets = [0, 0], sizes = [8, 32], strides = [1, 1]} : vector<8x128xf32> to vector<8x32xf32>
    %99 = vector.extract_strided_slice %97 {offsets = [0, 32], sizes = [8, 32], strides = [1, 1]} : vector<8x128xf32> to vector<8x32xf32>
    %100 = vector.extract_strided_slice %97 {offsets = [0, 64], sizes = [8, 32], strides = [1, 1]} : vector<8x128xf32> to vector<8x32xf32>
    %101 = vector.extract_strided_slice %97 {offsets = [0, 96], sizes = [8, 32], strides = [1, 1]} : vector<8x128xf32> to vector<8x32xf32>
    %c0_67 = arith.constant 0 : index
    %c64_68 = arith.constant 64 : index
    %102 = vector.load %arg10[%c0_67, %c64_68] : memref<8x128xf32, #tpu.memory_space<vmem>>, vector<8x32xf32>
    %103 = arith.mulf %99, %102 : vector<8x32xf32>
    %104 = arith.mulf %98, %100 : vector<8x32xf32>
    %105 = arith.addf %103, %104 : vector<8x32xf32>
    %106 = math.tanh %105 : vector<8x32xf32>
    %107 = arith.mulf %101, %106 : vector<8x32xf32>
    %c0_69 = arith.constant 0 : index
    %c64_70 = arith.constant 64 : index
    %108 = vector.load %arg10[%c0_69, %c64_70] : memref<8x128xf32, #tpu.memory_space<vmem>>, vector<8x32xf32>
    tpu.vector_store %arg10[%c0_69, %c64_70], %105 {strides = array<i32>} : memref<8x128xf32, #tpu.memory_space<vmem>>, vector<8x32xf32>,
    %c0_71 = arith.constant 0 : index
    %c64_72 = arith.constant 64 : index
    %109 = vector.load %arg9[%c0_71, %c64_72] : memref<8x128xf32, #tpu.memory_space<vmem>>, vector<8x32xf32>
    tpu.vector_store %arg9[%c0_71, %c64_72], %107 {strides = array<i32>} : memref<8x128xf32, #tpu.memory_space<vmem>>, vector<8x32xf32>,
    %c2_73 = arith.constant 2 : index
    %c0_74 = arith.constant 0 : index
    %c0_75 = arith.constant 0 : index
    %110 = vector.load %arg3[%c2_73, %c0_74, %c0_75] : memref<3x32x128xf32, #tpu.memory_space<vmem>>, vector<1x32x128xf32>
    %111 = vector.shape_cast %110 : vector<1x32x128xf32> to vector<32x128xf32>
    %cst_76 = arith.constant dense<0.000000e+00> : vector<8x128xf32>
    %112 = tpu.matmul %107, %111, %cst_76 {dimension_numbers = #tpu.dot_dimension_numbers<[1], [0], [0], [1], [0, 0, 1, 1], [], []>} : vector<8x32xf32>, vector<32x128xf32>, vector<8x128xf32> -> vector<8x128xf32>
    %c0_77 = arith.constant 0 : index
    %c96 = arith.constant 96 : index
    %113 = vector.load %arg9[%c0_77, %c96] : memref<8x128xf32, #tpu.memory_space<vmem>>, vector<8x32xf32>
    %c3 = arith.constant 3 : index
    %c0_78 = arith.constant 0 : index
    %c0_79 = arith.constant 0 : index
    %114 = vector.load %arg5[%c3, %c0_78, %c0_79] : memref<4x32x128xf32, #tpu.memory_space<vmem>>, vector<1x32x128xf32>
    %115 = vector.shape_cast %114 : vector<1x32x128xf32> to vector<32x128xf32>
    %cst_80 = arith.constant dense<0.000000e+00> : vector<8x128xf32>
    %116 = tpu.matmul %113, %115, %cst_80 {dimension_numbers = #tpu.dot_dimension_numbers<[1], [0], [0], [1], [0, 0, 1, 1], [], []>} : vector<8x32xf32>, vector<32x128xf32>, vector<8x128xf32> -> vector<8x128xf32>
    %117 = arith.addf %112, %116 : vector<8x128xf32>
    %118 = vector.broadcast %25 : vector<1x128xf32> to vector<8x128xf32>
    %119 = arith.addf %117, %118 : vector<8x128xf32>
    %120 = math.tanh %119 : vector<8x128xf32>
    %cst_81 = arith.constant 5.000000e-01 : f32
    %121 = vector.broadcast %cst_81 : f32 to vector<8x128xf32>
    %122 = arith.mulf %121, %120 : vector<8x128xf32>
    %cst_82 = arith.constant 5.000000e-01 : f32
    %123 = vector.broadcast %cst_82 : f32 to vector<8x128xf32>
    %124 = arith.addf %122, %123 : vector<8x128xf32>
    %125 = arith.select %19, %120, %124 : vector<8x128xi1>, vector<8x128xf32>
    %126 = vector.extract_strided_slice %125 {offsets = [0, 0], sizes = [8, 32], strides = [1, 1]} : vector<8x128xf32> to vector<8x32xf32>
    %127 = vector.extract_strided_slice %125 {offsets = [0, 32], sizes = [8, 32], strides = [1, 1]} : vector<8x128xf32> to vector<8x32xf32>
    %128 = vector.extract_strided_slice %125 {offsets = [0, 64], sizes = [8, 32], strides = [1, 1]} : vector<8x128xf32> to vector<8x32xf32>
    %129 = vector.extract_strided_slice %125 {offsets = [0, 96], sizes = [8, 32], strides = [1, 1]} : vector<8x128xf32> to vector<8x32xf32>
    %c0_83 = arith.constant 0 : index
    %c96_84 = arith.constant 96 : index
    %130 = vector.load %arg10[%c0_83, %c96_84] : memref<8x128xf32, #tpu.memory_space<vmem>>, vector<8x32xf32>
    %131 = arith.mulf %127, %130 : vector<8x32xf32>
    %132 = arith.mulf %126, %128 : vector<8x32xf32>
    %133 = arith.addf %131, %132 : vector<8x32xf32>
    %134 = math.tanh %133 : vector<8x32xf32>
    %135 = arith.mulf %129, %134 : vector<8x32xf32>
    %c0_85 = arith.constant 0 : index
    %c96_86 = arith.constant 96 : index
    %136 = vector.load %arg10[%c0_85, %c96_86] : memref<8x128xf32, #tpu.memory_space<vmem>>, vector<8x32xf32>
    tpu.vector_store %arg10[%c0_85, %c96_86], %133 {strides = array<i32>} : memref<8x128xf32, #tpu.memory_space<vmem>>, vector<8x32xf32>,
    %c0_87 = arith.constant 0 : index
    %c96_88 = arith.constant 96 : index
    %137 = vector.load %arg9[%c0_87, %c96_88] : memref<8x128xf32, #tpu.memory_space<vmem>>, vector<8x32xf32>
    tpu.vector_store %arg9[%c0_87, %c96_88], %135 {strides = array<i32>} : memref<8x128xf32, #tpu.memory_space<vmem>>, vector<8x32xf32>,
    %c1_i32 = arith.constant 1 : i32
    %138 = arith.index_cast %c1_i32 : i32 to index
    %c0_89 = arith.constant 0 : index
    %c0_90 = arith.constant 0 : index
    %139 = vector.load %arg11[%138, %c0_89, %c0_90] : memref<8x8x128xf32, #tpu.memory_space<vmem>>, vector<1x8x128xf32>
    %140 = vector.shape_cast %139 : vector<1x8x128xf32> to vector<8x128xf32>
    %c0_91 = arith.constant 0 : index
    %c0_92 = arith.constant 0 : index
    %141 = vector.load %arg9[%c0_91, %c0_92] : memref<8x128xf32, #tpu.memory_space<vmem>>, vector<8x32xf32>
    %c0_93 = arith.constant 0 : index
    %c0_94 = arith.constant 0 : index
    %c0_95 = arith.constant 0 : index
    %142 = vector.load %arg5[%c0_93, %c0_94, %c0_95] : memref<4x32x128xf32, #tpu.memory_space<vmem>>, vector<1x32x128xf32>
    %143 = vector.shape_cast %142 : vector<1x32x128xf32> to vector<32x128xf32>
    %cst_96 = arith.constant dense<0.000000e+00> : vector<8x128xf32>
    %144 = tpu.matmul %141, %143, %cst_96 {dimension_numbers = #tpu.dot_dimension_numbers<[1], [0], [0], [1], [0, 0, 1, 1], [], []>} : vector<8x32xf32>, vector<32x128xf32>, vector<8x128xf32> -> vector<8x128xf32>
    %145 = arith.addf %140, %144 : vector<8x128xf32>
    %146 = math.tanh %145 : vector<8x128xf32>
    %cst_97 = arith.constant 5.000000e-01 : f32
    %147 = vector.broadcast %cst_97 : f32 to vector<8x128xf32>
    %148 = arith.mulf %147, %146 : vector<8x128xf32>
    %cst_98 = arith.constant 5.000000e-01 : f32
    %149 = vector.broadcast %cst_98 : f32 to vector<8x128xf32>
    %150 = arith.addf %148, %149 : vector<8x128xf32>
    %151 = arith.select %19, %146, %150 : vector<8x128xi1>, vector<8x128xf32>
    %152 = vector.extract_strided_slice %151 {offsets = [0, 0], sizes = [8, 32], strides = [1, 1]} : vector<8x128xf32> to vector<8x32xf32>
    %153 = vector.extract_strided_slice %151 {offsets = [0, 32], sizes = [8, 32], strides = [1, 1]} : vector<8x128xf32> to vector<8x32xf32>
    %154 = vector.extract_strided_slice %151 {offsets = [0, 64], sizes = [8, 32], strides = [1, 1]} : vector<8x128xf32> to vector<8x32xf32>
    %155 = vector.extract_strided_slice %151 {offsets = [0, 96], sizes = [8, 32], strides = [1, 1]} : vector<8x128xf32> to vector<8x32xf32>
    %c0_99 = arith.constant 0 : index
    %c0_100 = arith.constant 0 : index
    %156 = vector.load %arg10[%c0_99, %c0_100] : memref<8x128xf32, #tpu.memory_space<vmem>>, vector<8x32xf32>
    %157 = arith.mulf %153, %156 : vector<8x32xf32>
    %158 = arith.mulf %152, %154 : vector<8x32xf32>
    %159 = arith.addf %157, %158 : vector<8x32xf32>
    %160 = math.tanh %159 : vector<8x32xf32>
    %161 = arith.mulf %155, %160 : vector<8x32xf32>
    %c0_101 = arith.constant 0 : index
    %c0_102 = arith.constant 0 : index
    %162 = vector.load %arg10[%c0_101, %c0_102] : memref<8x128xf32, #tpu.memory_space<vmem>>, vector<8x32xf32>
    tpu.vector_store %arg10[%c0_101, %c0_102], %159 {strides = array<i32>} : memref<8x128xf32, #tpu.memory_space<vmem>>, vector<8x32xf32>,
    %c0_103 = arith.constant 0 : index
    %c0_104 = arith.constant 0 : index
    %163 = vector.load %arg9[%c0_103, %c0_104] : memref<8x128xf32, #tpu.memory_space<vmem>>, vector<8x32xf32>
    tpu.vector_store %arg9[%c0_103, %c0_104], %161 {strides = array<i32>} : memref<8x128xf32, #tpu.memory_space<vmem>>, vector<8x32xf32>,
    %c0_105 = arith.constant 0 : index
    %c0_106 = arith.constant 0 : index
    %c0_107 = arith.constant 0 : index
    %164 = vector.load %arg3[%c0_105, %c0_106, %c0_107] : memref<3x32x128xf32, #tpu.memory_space<vmem>>, vector<1x32x128xf32>
    %165 = vector.shape_cast %164 : vector<1x32x128xf32> to vector<32x128xf32>
    %cst_108 = arith.constant dense<0.000000e+00> : vector<8x128xf32>
    %166 = tpu.matmul %161, %165, %cst_108 {dimension_numbers = #tpu.dot_dimension_numbers<[1], [0], [0], [1], [0, 0, 1, 1], [], []>} : vector<8x32xf32>, vector<32x128xf32>, vector<8x128xf32> -> vector<8x128xf32>
    %c0_109 = arith.constant 0 : index
    %c32_110 = arith.constant 32 : index
    %167 = vector.load %arg9[%c0_109, %c32_110] : memref<8x128xf32, #tpu.memory_space<vmem>>, vector<8x32xf32>
    %c1_111 = arith.constant 1 : index
    %c0_112 = arith.constant 0 : index
    %c0_113 = arith.constant 0 : index
    %168 = vector.load %arg5[%c1_111, %c0_112, %c0_113] : memref<4x32x128xf32, #tpu.memory_space<vmem>>, vector<1x32x128xf32>
    %169 = vector.shape_cast %168 : vector<1x32x128xf32> to vector<32x128xf32>
    %cst_114 = arith.constant dense<0.000000e+00> : vector<8x128xf32>
    %170 = tpu.matmul %167, %169, %cst_114 {dimension_numbers = #tpu.dot_dimension_numbers<[1], [0], [0], [1], [0, 0, 1, 1], [], []>} : vector<8x32xf32>, vector<32x128xf32>, vector<8x128xf32> -> vector<8x128xf32>
    %171 = arith.addf %166, %170 : vector<8x128xf32>
    %172 = vector.broadcast %21 : vector<1x128xf32> to vector<8x128xf32>
    %173 = arith.addf %171, %172 : vector<8x128xf32>
    %174 = math.tanh %173 : vector<8x128xf32>
    %cst_115 = arith.constant 5.000000e-01 : f32
    %175 = vector.broadcast %cst_115 : f32 to vector<8x128xf32>
    %176 = arith.mulf %175, %174 : vector<8x128xf32>
    %cst_116 = arith.constant 5.000000e-01 : f32
    %177 = vector.broadcast %cst_116 : f32 to vector<8x128xf32>
    %178 = arith.addf %176, %177 : vector<8x128xf32>
    %179 = arith.select %19, %174, %178 : vector<8x128xi1>, vector<8x128xf32>
    %180 = vector.extract_strided_slice %179 {offsets = [0, 0], sizes = [8, 32], strides = [1, 1]} : vector<8x128xf32> to vector<8x32xf32>
    %181 = vector.extract_strided_slice %179 {offsets = [0, 32], sizes = [8, 32], strides = [1, 1]} : vector<8x128xf32> to vector<8x32xf32>
    %182 = vector.extract_strided_slice %179 {offsets = [0, 64], sizes = [8, 32], strides = [1, 1]} : vector<8x128xf32> to vector<8x32xf32>
    %183 = vector.extract_strided_slice %179 {offsets = [0, 96], sizes = [8, 32], strides = [1, 1]} : vector<8x128xf32> to vector<8x32xf32>
    %c0_117 = arith.constant 0 : index
    %c32_118 = arith.constant 32 : index
    %184 = vector.load %arg10[%c0_117, %c32_118] : memref<8x128xf32, #tpu.memory_space<vmem>>, vector<8x32xf32>
    %185 = arith.mulf %181, %184 : vector<8x32xf32>
    %186 = arith.mulf %180, %182 : vector<8x32xf32>
    %187 = arith.addf %185, %186 : vector<8x32xf32>
    %188 = math.tanh %187 : vector<8x32xf32>
    %189 = arith.mulf %183, %188 : vector<8x32xf32>
    %c0_119 = arith.constant 0 : index
    %c32_120 = arith.constant 32 : index
    %190 = vector.load %arg10[%c0_119, %c32_120] : memref<8x128xf32, #tpu.memory_space<vmem>>, vector<8x32xf32>
    tpu.vector_store %arg10[%c0_119, %c32_120], %187 {strides = array<i32>} : memref<8x128xf32, #tpu.memory_space<vmem>>, vector<8x32xf32>,
    %c0_121 = arith.constant 0 : index
    %c32_122 = arith.constant 32 : index
    %191 = vector.load %arg9[%c0_121, %c32_122] : memref<8x128xf32, #tpu.memory_space<vmem>>, vector<8x32xf32>
    tpu.vector_store %arg9[%c0_121, %c32_122], %189 {strides = array<i32>} : memref<8x128xf32, #tpu.memory_space<vmem>>, vector<8x32xf32>,
    %cst_123 = arith.constant 0.000000e+00 : f32
    %192 = vector.broadcast %cst_123 : f32 to vector<8x32xf32>
    %193 = arith.maximumf %189, %192 : vector<8x32xf32>
    %c1_124 = arith.constant 1 : index
    %c0_125 = arith.constant 0 : index
    %c0_126 = arith.constant 0 : index
    %194 = vector.load %arg3[%c1_124, %c0_125, %c0_126] : memref<3x32x128xf32, #tpu.memory_space<vmem>>, vector<1x32x128xf32>
    %195 = vector.shape_cast %194 : vector<1x32x128xf32> to vector<32x128xf32>
    %cst_127 = arith.constant dense<0.000000e+00> : vector<8x128xf32>
    %196 = tpu.matmul %193, %195, %cst_127 {dimension_numbers = #tpu.dot_dimension_numbers<[1], [0], [0], [1], [0, 0, 1, 1], [], []>} : vector<8x32xf32>, vector<32x128xf32>, vector<8x128xf32> -> vector<8x128xf32>
    %c0_128 = arith.constant 0 : index
    %c64_129 = arith.constant 64 : index
    %197 = vector.load %arg9[%c0_128, %c64_129] : memref<8x128xf32, #tpu.memory_space<vmem>>, vector<8x32xf32>
    %c2_130 = arith.constant 2 : index
    %c0_131 = arith.constant 0 : index
    %c0_132 = arith.constant 0 : index
    %198 = vector.load %arg5[%c2_130, %c0_131, %c0_132] : memref<4x32x128xf32, #tpu.memory_space<vmem>>, vector<1x32x128xf32>
    %199 = vector.shape_cast %198 : vector<1x32x128xf32> to vector<32x128xf32>
    %cst_133 = arith.constant dense<0.000000e+00> : vector<8x128xf32>
    %200 = tpu.matmul %197, %199, %cst_133 {dimension_numbers = #tpu.dot_dimension_numbers<[1], [0], [0], [1], [0, 0, 1, 1], [], []>} : vector<8x32xf32>, vector<32x128xf32>, vector<8x128xf32> -> vector<8x128xf32>
    %201 = arith.addf %196, %200 : vector<8x128xf32>
    %202 = vector.broadcast %23 : vector<1x128xf32> to vector<8x128xf32>
    %203 = arith.addf %201, %202 : vector<8x128xf32>
    %204 = math.tanh %203 : vector<8x128xf32>
    %cst_134 = arith.constant 5.000000e-01 : f32
    %205 = vector.broadcast %cst_134 : f32 to vector<8x128xf32>
    %206 = arith.mulf %205, %204 : vector<8x128xf32>
    %cst_135 = arith.constant 5.000000e-01 : f32
    %207 = vector.broadcast %cst_135 : f32 to vector<8x128xf32>
    %208 = arith.addf %206, %207 : vector<8x128xf32>
    %209 = arith.select %19, %204, %208 : vector<8x128xi1>, vector<8x128xf32>
    %210 = vector.extract_strided_slice %209 {offsets = [0, 0], sizes = [8, 32], strides = [1, 1]} : vector<8x128xf32> to vector<8x32xf32>
    %211 = vector.extract_strided_slice %209 {offsets = [0, 32], sizes = [8, 32], strides = [1, 1]} : vector<8x128xf32> to vector<8x32xf32>
    %212 = vector.extract_strided_slice %209 {offsets = [0, 64], sizes = [8, 32], strides = [1, 1]} : vector<8x128xf32> to vector<8x32xf32>
    %213 = vector.extract_strided_slice %209 {offsets = [0, 96], sizes = [8, 32], strides = [1, 1]} : vector<8x128xf32> to vector<8x32xf32>
    %c0_136 = arith.constant 0 : index
    %c64_137 = arith.constant 64 : index
    %214 = vector.load %arg10[%c0_136, %c64_137] : memref<8x128xf32, #tpu.memory_space<vmem>>, vector<8x32xf32>
    %215 = arith.mulf %211, %214 : vector<8x32xf32>
    %216 = arith.mulf %210, %212 : vector<8x32xf32>
    %217 = arith.addf %215, %216 : vector<8x32xf32>
    %218 = math.tanh %217 : vector<8x32xf32>
    %219 = arith.mulf %213, %218 : vector<8x32xf32>
    %c0_138 = arith.constant 0 : index
    %c64_139 = arith.constant 64 : index
    %220 = vector.load %arg10[%c0_138, %c64_139] : memref<8x128xf32, #tpu.memory_space<vmem>>, vector<8x32xf32>
    tpu.vector_store %arg10[%c0_138, %c64_139], %217 {strides = array<i32>} : memref<8x128xf32, #tpu.memory_space<vmem>>, vector<8x32xf32>,
    %c0_140 = arith.constant 0 : index
    %c64_141 = arith.constant 64 : index
    %221 = vector.load %arg9[%c0_140, %c64_141] : memref<8x128xf32, #tpu.memory_space<vmem>>, vector<8x32xf32>
    tpu.vector_store %arg9[%c0_140, %c64_141], %219 {strides = array<i32>} : memref<8x128xf32, #tpu.memory_space<vmem>>, vector<8x32xf32>,
    %c2_142 = arith.constant 2 : index
    %c0_143 = arith.constant 0 : index
    %c0_144 = arith.constant 0 : index
    %222 = vector.load %arg3[%c2_142, %c0_143, %c0_144] : memref<3x32x128xf32, #tpu.memory_space<vmem>>, vector<1x32x128xf32>
    %223 = vector.shape_cast %222 : vector<1x32x128xf32> to vector<32x128xf32>
    %cst_145 = arith.constant dense<0.000000e+00> : vector<8x128xf32>
    %224 = tpu.matmul %219, %223, %cst_145 {dimension_numbers = #tpu.dot_dimension_numbers<[1], [0], [0], [1], [0, 0, 1, 1], [], []>} : vector<8x32xf32>, vector<32x128xf32>, vector<8x128xf32> -> vector<8x128xf32>
    %c0_146 = arith.constant 0 : index
    %c96_147 = arith.constant 96 : index
    %225 = vector.load %arg9[%c0_146, %c96_147] : memref<8x128xf32, #tpu.memory_space<vmem>>, vector<8x32xf32>
    %c3_148 = arith.constant 3 : index
    %c0_149 = arith.constant 0 : index
    %c0_150 = arith.constant 0 : index
    %226 = vector.load %arg5[%c3_148, %c0_149, %c0_150] : memref<4x32x128xf32, #tpu.memory_space<vmem>>, vector<1x32x128xf32>
    %227 = vector.shape_cast %226 : vector<1x32x128xf32> to vector<32x128xf32>
    %cst_151 = arith.constant dense<0.000000e+00> : vector<8x128xf32>
    %228 = tpu.matmul %225, %227, %cst_151 {dimension_numbers = #tpu.dot_dimension_numbers<[1], [0], [0], [1], [0, 0, 1, 1], [], []>} : vector<8x32xf32>, vector<32x128xf32>, vector<8x128xf32> -> vector<8x128xf32>
    %229 = arith.addf %224, %228 : vector<8x128xf32>
    %230 = vector.broadcast %25 : vector<1x128xf32> to vector<8x128xf32>
    %231 = arith.addf %229, %230 : vector<8x128xf32>
    %232 = math.tanh %231 : vector<8x128xf32>
    %cst_152 = arith.constant 5.000000e-01 : f32
    %233 = vector.broadcast %cst_152 : f32 to vector<8x128xf32>
    %234 = arith.mulf %233, %232 : vector<8x128xf32>
    %cst_153 = arith.constant 5.000000e-01 : f32
    %235 = vector.broadcast %cst_153 : f32 to vector<8x128xf32>
    %236 = arith.addf %234, %235 : vector<8x128xf32>
    %237 = arith.select %19, %232, %236 : vector<8x128xi1>, vector<8x128xf32>
    %238 = vector.extract_strided_slice %237 {offsets = [0, 0], sizes = [8, 32], strides = [1, 1]} : vector<8x128xf32> to vector<8x32xf32>
    %239 = vector.extract_strided_slice %237 {offsets = [0, 32], sizes = [8, 32], strides = [1, 1]} : vector<8x128xf32> to vector<8x32xf32>
    %240 = vector.extract_strided_slice %237 {offsets = [0, 64], sizes = [8, 32], strides = [1, 1]} : vector<8x128xf32> to vector<8x32xf32>
    %241 = vector.extract_strided_slice %237 {offsets = [0, 96], sizes = [8, 32], strides = [1, 1]} : vector<8x128xf32> to vector<8x32xf32>
    %c0_154 = arith.constant 0 : index
    %c96_155 = arith.constant 96 : index
    %242 = vector.load %arg10[%c0_154, %c96_155] : memref<8x128xf32, #tpu.memory_space<vmem>>, vector<8x32xf32>
    %243 = arith.mulf %239, %242 : vector<8x32xf32>
    %244 = arith.mulf %238, %240 : vector<8x32xf32>
    %245 = arith.addf %243, %244 : vector<8x32xf32>
    %246 = math.tanh %245 : vector<8x32xf32>
    %247 = arith.mulf %241, %246 : vector<8x32xf32>
    %c0_156 = arith.constant 0 : index
    %c96_157 = arith.constant 96 : index
    %248 = vector.load %arg10[%c0_156, %c96_157] : memref<8x128xf32, #tpu.memory_space<vmem>>, vector<8x32xf32>
    tpu.vector_store %arg10[%c0_156, %c96_157], %245 {strides = array<i32>} : memref<8x128xf32, #tpu.memory_space<vmem>>, vector<8x32xf32>,
    %c0_158 = arith.constant 0 : index
    %c96_159 = arith.constant 96 : index
    %249 = vector.load %arg9[%c0_158, %c96_159] : memref<8x128xf32, #tpu.memory_space<vmem>>, vector<8x32xf32>
    tpu.vector_store %arg9[%c0_158, %c96_159], %247 {strides = array<i32>} : memref<8x128xf32, #tpu.memory_space<vmem>>, vector<8x32xf32>,
    %c2_i32 = arith.constant 2 : i32
    %250 = arith.index_cast %c2_i32 : i32 to index
    %c0_160 = arith.constant 0 : index
    %c0_161 = arith.constant 0 : index
    %251 = vector.load %arg11[%250, %c0_160, %c0_161] : memref<8x8x128xf32, #tpu.memory_space<vmem>>, vector<1x8x128xf32>
    %252 = vector.shape_cast %251 : vector<1x8x128xf32> to vector<8x128xf32>
    %c0_162 = arith.constant 0 : index
    %c0_163 = arith.constant 0 : index
    %253 = vector.load %arg9[%c0_162, %c0_163] : memref<8x128xf32, #tpu.memory_space<vmem>>, vector<8x32xf32>
    %c0_164 = arith.constant 0 : index
    %c0_165 = arith.constant 0 : index
    %c0_166 = arith.constant 0 : index
    %254 = vector.load %arg5[%c0_164, %c0_165, %c0_166] : memref<4x32x128xf32, #tpu.memory_space<vmem>>, vector<1x32x128xf32>
    %255 = vector.shape_cast %254 : vector<1x32x128xf32> to vector<32x128xf32>
    %cst_167 = arith.constant dense<0.000000e+00> : vector<8x128xf32>
    %256 = tpu.matmul %253, %255, %cst_167 {dimension_numbers = #tpu.dot_dimension_numbers<[1], [0], [0], [1], [0, 0, 1, 1], [], []>} : vector<8x32xf32>, vector<32x128xf32>, vector<8x128xf32> -> vector<8x128xf32>
    %257 = arith.addf %252, %256 : vector<8x128xf32>
    %258 = math.tanh %257 : vector<8x128xf32>
    %cst_168 = arith.constant 5.000000e-01 : f32
    %259 = vector.broadcast %cst_168 : f32 to vector<8x128xf32>
    %260 = arith.mulf %259, %258 : vector<8x128xf32>
    %cst_169 = arith.constant 5.000000e-01 : f32
    %261 = vector.broadcast %cst_169 : f32 to vector<8x128xf32>
    %262 = arith.addf %260, %261 : vector<8x128xf32>
    %263 = arith.select %19, %258, %262 : vector<8x128xi1>, vector<8x128xf32>
    %264 = vector.extract_strided_slice %263 {offsets = [0, 0], sizes = [8, 32], strides = [1, 1]} : vector<8x128xf32> to vector<8x32xf32>
    %265 = vector.extract_strided_slice %263 {offsets = [0, 32], sizes = [8, 32], strides = [1, 1]} : vector<8x128xf32> to vector<8x32xf32>
    %266 = vector.extract_strided_slice %263 {offsets = [0, 64], sizes = [8, 32], strides = [1, 1]} : vector<8x128xf32> to vector<8x32xf32>
    %267 = vector.extract_strided_slice %263 {offsets = [0, 96], sizes = [8, 32], strides = [1, 1]} : vector<8x128xf32> to vector<8x32xf32>
    %c0_170 = arith.constant 0 : index
    %c0_171 = arith.constant 0 : index
    %268 = vector.load %arg10[%c0_170, %c0_171] : memref<8x128xf32, #tpu.memory_space<vmem>>, vector<8x32xf32>
    %269 = arith.mulf %265, %268 : vector<8x32xf32>
    %270 = arith.mulf %264, %266 : vector<8x32xf32>
    %271 = arith.addf %269, %270 : vector<8x32xf32>
    %272 = math.tanh %271 : vector<8x32xf32>
    %273 = arith.mulf %267, %272 : vector<8x32xf32>
    %c0_172 = arith.constant 0 : index
    %c0_173 = arith.constant 0 : index
    %274 = vector.load %arg10[%c0_172, %c0_173] : memref<8x128xf32, #tpu.memory_space<vmem>>, vector<8x32xf32>
    tpu.vector_store %arg10[%c0_172, %c0_173], %271 {strides = array<i32>} : memref<8x128xf32, #tpu.memory_space<vmem>>, vector<8x32xf32>,
    %c0_174 = arith.constant 0 : index
    %c0_175 = arith.constant 0 : index
    %275 = vector.load %arg9[%c0_174, %c0_175] : memref<8x128xf32, #tpu.memory_space<vmem>>, vector<8x32xf32>
    tpu.vector_store %arg9[%c0_174, %c0_175], %273 {strides = array<i32>} : memref<8x128xf32, #tpu.memory_space<vmem>>, vector<8x32xf32>,
    %c0_176 = arith.constant 0 : index
    %c0_177 = arith.constant 0 : index
    %c0_178 = arith.constant 0 : index
    %276 = vector.load %arg3[%c0_176, %c0_177, %c0_178] : memref<3x32x128xf32, #tpu.memory_space<vmem>>, vector<1x32x128xf32>
    %277 = vector.shape_cast %276 : vector<1x32x128xf32> to vector<32x128xf32>
    %cst_179 = arith.constant dense<0.000000e+00> : vector<8x128xf32>
    %278 = tpu.matmul %273, %277, %cst_179 {dimension_numbers = #tpu.dot_dimension_numbers<[1], [0], [0], [1], [0, 0, 1, 1], [], []>} : vector<8x32xf32>, vector<32x128xf32>, vector<8x128xf32> -> vector<8x128xf32>
    %c0_180 = arith.constant 0 : index
    %c32_181 = arith.constant 32 : index
    %279 = vector.load %arg9[%c0_180, %c32_181] : memref<8x128xf32, #tpu.memory_space<vmem>>, vector<8x32xf32>
    %c1_182 = arith.constant 1 : index
    %c0_183 = arith.constant 0 : index
    %c0_184 = arith.constant 0 : index
    %280 = vector.load %arg5[%c1_182, %c0_183, %c0_184] : memref<4x32x128xf32, #tpu.memory_space<vmem>>, vector<1x32x128xf32>
    %281 = vector.shape_cast %280 : vector<1x32x128xf32> to vector<32x128xf32>
    %cst_185 = arith.constant dense<0.000000e+00> : vector<8x128xf32>
    %282 = tpu.matmul %279, %281, %cst_185 {dimension_numbers = #tpu.dot_dimension_numbers<[1], [0], [0], [1], [0, 0, 1, 1], [], []>} : vector<8x32xf32>, vector<32x128xf32>, vector<8x128xf32> -> vector<8x128xf32>
    %283 = arith.addf %278, %282 : vector<8x128xf32>
    %284 = vector.broadcast %21 : vector<1x128xf32> to vector<8x128xf32>
    %285 = arith.addf %283, %284 : vector<8x128xf32>
    %286 = math.tanh %285 : vector<8x128xf32>
    %cst_186 = arith.constant 5.000000e-01 : f32
    %287 = vector.broadcast %cst_186 : f32 to vector<8x128xf32>
    %288 = arith.mulf %287, %286 : vector<8x128xf32>
    %cst_187 = arith.constant 5.000000e-01 : f32
    %289 = vector.broadcast %cst_187 : f32 to vector<8x128xf32>
    %290 = arith.addf %288, %289 : vector<8x128xf32>
    %291 = arith.select %19, %286, %290 : vector<8x128xi1>, vector<8x128xf32>
    %292 = vector.extract_strided_slice %291 {offsets = [0, 0], sizes = [8, 32], strides = [1, 1]} : vector<8x128xf32> to vector<8x32xf32>
    %293 = vector.extract_strided_slice %291 {offsets = [0, 32], sizes = [8, 32], strides = [1, 1]} : vector<8x128xf32> to vector<8x32xf32>
    %294 = vector.extract_strided_slice %291 {offsets = [0, 64], sizes = [8, 32], strides = [1, 1]} : vector<8x128xf32> to vector<8x32xf32>
    %295 = vector.extract_strided_slice %291 {offsets = [0, 96], sizes = [8, 32], strides = [1, 1]} : vector<8x128xf32> to vector<8x32xf32>
    %c0_188 = arith.constant 0 : index
    %c32_189 = arith.constant 32 : index
    %296 = vector.load %arg10[%c0_188, %c32_189] : memref<8x128xf32, #tpu.memory_space<vmem>>, vector<8x32xf32>
    %297 = arith.mulf %293, %296 : vector<8x32xf32>
    %298 = arith.mulf %292, %294 : vector<8x32xf32>
    %299 = arith.addf %297, %298 : vector<8x32xf32>
    %300 = math.tanh %299 : vector<8x32xf32>
    %301 = arith.mulf %295, %300 : vector<8x32xf32>
    %c0_190 = arith.constant 0 : index
    %c32_191 = arith.constant 32 : index
    %302 = vector.load %arg10[%c0_190, %c32_191] : memref<8x128xf32, #tpu.memory_space<vmem>>, vector<8x32xf32>
    tpu.vector_store %arg10[%c0_190, %c32_191], %299 {strides = array<i32>} : memref<8x128xf32, #tpu.memory_space<vmem>>, vector<8x32xf32>,
    %c0_192 = arith.constant 0 : index
    %c32_193 = arith.constant 32 : index
    %303 = vector.load %arg9[%c0_192, %c32_193] : memref<8x128xf32, #tpu.memory_space<vmem>>, vector<8x32xf32>
    tpu.vector_store %arg9[%c0_192, %c32_193], %301 {strides = array<i32>} : memref<8x128xf32, #tpu.memory_space<vmem>>, vector<8x32xf32>,
    %cst_194 = arith.constant 0.000000e+00 : f32
    %304 = vector.broadcast %cst_194 : f32 to vector<8x32xf32>
    %305 = arith.maximumf %301, %304 : vector<8x32xf32>
    %c1_195 = arith.constant 1 : index
    %c0_196 = arith.constant 0 : index
    %c0_197 = arith.constant 0 : index
    %306 = vector.load %arg3[%c1_195, %c0_196, %c0_197] : memref<3x32x128xf32, #tpu.memory_space<vmem>>, vector<1x32x128xf32>
    %307 = vector.shape_cast %306 : vector<1x32x128xf32> to vector<32x128xf32>
    %cst_198 = arith.constant dense<0.000000e+00> : vector<8x128xf32>
    %308 = tpu.matmul %305, %307, %cst_198 {dimension_numbers = #tpu.dot_dimension_numbers<[1], [0], [0], [1], [0, 0, 1, 1], [], []>} : vector<8x32xf32>, vector<32x128xf32>, vector<8x128xf32> -> vector<8x128xf32>
    %c0_199 = arith.constant 0 : index
    %c64_200 = arith.constant 64 : index
    %309 = vector.load %arg9[%c0_199, %c64_200] : memref<8x128xf32, #tpu.memory_space<vmem>>, vector<8x32xf32>
    %c2_201 = arith.constant 2 : index
    %c0_202 = arith.constant 0 : index
    %c0_203 = arith.constant 0 : index
    %310 = vector.load %arg5[%c2_201, %c0_202, %c0_203] : memref<4x32x128xf32, #tpu.memory_space<vmem>>, vector<1x32x128xf32>
    %311 = vector.shape_cast %310 : vector<1x32x128xf32> to vector<32x128xf32>
    %cst_204 = arith.constant dense<0.000000e+00> : vector<8x128xf32>
    %312 = tpu.matmul %309, %311, %cst_204 {dimension_numbers = #tpu.dot_dimension_numbers<[1], [0], [0], [1], [0, 0, 1, 1], [], []>} : vector<8x32xf32>, vector<32x128xf32>, vector<8x128xf32> -> vector<8x128xf32>
    %313 = arith.addf %308, %312 : vector<8x128xf32>
    %314 = vector.broadcast %23 : vector<1x128xf32> to vector<8x128xf32>
    %315 = arith.addf %313, %314 : vector<8x128xf32>
    %316 = math.tanh %315 : vector<8x128xf32>
    %cst_205 = arith.constant 5.000000e-01 : f32
    %317 = vector.broadcast %cst_205 : f32 to vector<8x128xf32>
    %318 = arith.mulf %317, %316 : vector<8x128xf32>
    %cst_206 = arith.constant 5.000000e-01 : f32
    %319 = vector.broadcast %cst_206 : f32 to vector<8x128xf32>
    %320 = arith.addf %318, %319 : vector<8x128xf32>
    %321 = arith.select %19, %316, %320 : vector<8x128xi1>, vector<8x128xf32>
    %322 = vector.extract_strided_slice %321 {offsets = [0, 0], sizes = [8, 32], strides = [1, 1]} : vector<8x128xf32> to vector<8x32xf32>
    %323 = vector.extract_strided_slice %321 {offsets = [0, 32], sizes = [8, 32], strides = [1, 1]} : vector<8x128xf32> to vector<8x32xf32>
    %324 = vector.extract_strided_slice %321 {offsets = [0, 64], sizes = [8, 32], strides = [1, 1]} : vector<8x128xf32> to vector<8x32xf32>
    %325 = vector.extract_strided_slice %321 {offsets = [0, 96], sizes = [8, 32], strides = [1, 1]} : vector<8x128xf32> to vector<8x32xf32>
    %c0_207 = arith.constant 0 : index
    %c64_208 = arith.constant 64 : index
    %326 = vector.load %arg10[%c0_207, %c64_208] : memref<8x128xf32, #tpu.memory_space<vmem>>, vector<8x32xf32>
    %327 = arith.mulf %323, %326 : vector<8x32xf32>
    %328 = arith.mulf %322, %324 : vector<8x32xf32>
    %329 = arith.addf %327, %328 : vector<8x32xf32>
    %330 = math.tanh %329 : vector<8x32xf32>
    %331 = arith.mulf %325, %330 : vector<8x32xf32>
    %c0_209 = arith.constant 0 : index
    %c64_210 = arith.constant 64 : index
    %332 = vector.load %arg10[%c0_209, %c64_210] : memref<8x128xf32, #tpu.memory_space<vmem>>, vector<8x32xf32>
    tpu.vector_store %arg10[%c0_209, %c64_210], %329 {strides = array<i32>} : memref<8x128xf32, #tpu.memory_space<vmem>>, vector<8x32xf32>,
    %c0_211 = arith.constant 0 : index
    %c64_212 = arith.constant 64 : index
    %333 = vector.load %arg9[%c0_211, %c64_212] : memref<8x128xf32, #tpu.memory_space<vmem>>, vector<8x32xf32>
    tpu.vector_store %arg9[%c0_211, %c64_212], %331 {strides = array<i32>} : memref<8x128xf32, #tpu.memory_space<vmem>>, vector<8x32xf32>,
    %c2_213 = arith.constant 2 : index
    %c0_214 = arith.constant 0 : index
    %c0_215 = arith.constant 0 : index
    %334 = vector.load %arg3[%c2_213, %c0_214, %c0_215] : memref<3x32x128xf32, #tpu.memory_space<vmem>>, vector<1x32x128xf32>
    %335 = vector.shape_cast %334 : vector<1x32x128xf32> to vector<32x128xf32>
    %cst_216 = arith.constant dense<0.000000e+00> : vector<8x128xf32>
    %336 = tpu.matmul %331, %335, %cst_216 {dimension_numbers = #tpu.dot_dimension_numbers<[1], [0], [0], [1], [0, 0, 1, 1], [], []>} : vector<8x32xf32>, vector<32x128xf32>, vector<8x128xf32> -> vector<8x128xf32>
    %c0_217 = arith.constant 0 : index
    %c96_218 = arith.constant 96 : index
    %337 = vector.load %arg9[%c0_217, %c96_218] : memref<8x128xf32, #tpu.memory_space<vmem>>, vector<8x32xf32>
    %c3_219 = arith.constant 3 : index
    %c0_220 = arith.constant 0 : index
    %c0_221 = arith.constant 0 : index
    %338 = vector.load %arg5[%c3_219, %c0_220, %c0_221] : memref<4x32x128xf32, #tpu.memory_space<vmem>>, vector<1x32x128xf32>
    %339 = vector.shape_cast %338 : vector<1x32x128xf32> to vector<32x128xf32>
    %cst_222 = arith.constant dense<0.000000e+00> : vector<8x128xf32>
    %340 = tpu.matmul %337, %339, %cst_222 {dimension_numbers = #tpu.dot_dimension_numbers<[1], [0], [0], [1], [0, 0, 1, 1], [], []>} : vector<8x32xf32>, vector<32x128xf32>, vector<8x128xf32> -> vector<8x128xf32>
    %341 = arith.addf %336, %340 : vector<8x128xf32>
    %342 = vector.broadcast %25 : vector<1x128xf32> to vector<8x128xf32>
    %343 = arith.addf %341, %342 : vector<8x128xf32>
    %344 = math.tanh %343 : vector<8x128xf32>
    %cst_223 = arith.constant 5.000000e-01 : f32
    %345 = vector.broadcast %cst_223 : f32 to vector<8x128xf32>
    %346 = arith.mulf %345, %344 : vector<8x128xf32>
    %cst_224 = arith.constant 5.000000e-01 : f32
    %347 = vector.broadcast %cst_224 : f32 to vector<8x128xf32>
    %348 = arith.addf %346, %347 : vector<8x128xf32>
    %349 = arith.select %19, %344, %348 : vector<8x128xi1>, vector<8x128xf32>
    %350 = vector.extract_strided_slice %349 {offsets = [0, 0], sizes = [8, 32], strides = [1, 1]} : vector<8x128xf32> to vector<8x32xf32>
    %351 = vector.extract_strided_slice %349 {offsets = [0, 32], sizes = [8, 32], strides = [1, 1]} : vector<8x128xf32> to vector<8x32xf32>
    %352 = vector.extract_strided_slice %349 {offsets = [0, 64], sizes = [8, 32], strides = [1, 1]} : vector<8x128xf32> to vector<8x32xf32>
    %353 = vector.extract_strided_slice %349 {offsets = [0, 96], sizes = [8, 32], strides = [1, 1]} : vector<8x128xf32> to vector<8x32xf32>
    %c0_225 = arith.constant 0 : index
    %c96_226 = arith.constant 96 : index
    %354 = vector.load %arg10[%c0_225, %c96_226] : memref<8x128xf32, #tpu.memory_space<vmem>>, vector<8x32xf32>
    %355 = arith.mulf %351, %354 : vector<8x32xf32>
    %356 = arith.mulf %350, %352 : vector<8x32xf32>
    %357 = arith.addf %355, %356 : vector<8x32xf32>
    %358 = math.tanh %357 : vector<8x32xf32>
    %359 = arith.mulf %353, %358 : vector<8x32xf32>
    %c0_227 = arith.constant 0 : index
    %c96_228 = arith.constant 96 : index
    %360 = vector.load %arg10[%c0_227, %c96_228] : memref<8x128xf32, #tpu.memory_space<vmem>>, vector<8x32xf32>
    tpu.vector_store %arg10[%c0_227, %c96_228], %357 {strides = array<i32>} : memref<8x128xf32, #tpu.memory_space<vmem>>, vector<8x32xf32>,
    %c0_229 = arith.constant 0 : index
    %c96_230 = arith.constant 96 : index
    %361 = vector.load %arg9[%c0_229, %c96_230] : memref<8x128xf32, #tpu.memory_space<vmem>>, vector<8x32xf32>
    tpu.vector_store %arg9[%c0_229, %c96_230], %359 {strides = array<i32>} : memref<8x128xf32, #tpu.memory_space<vmem>>, vector<8x32xf32>,
    %c3_i32 = arith.constant 3 : i32
    %362 = arith.index_cast %c3_i32 : i32 to index
    %c0_231 = arith.constant 0 : index
    %c0_232 = arith.constant 0 : index
    %363 = vector.load %arg11[%362, %c0_231, %c0_232] : memref<8x8x128xf32, #tpu.memory_space<vmem>>, vector<1x8x128xf32>
    %364 = vector.shape_cast %363 : vector<1x8x128xf32> to vector<8x128xf32>
    %c0_233 = arith.constant 0 : index
    %c0_234 = arith.constant 0 : index
    %365 = vector.load %arg9[%c0_233, %c0_234] : memref<8x128xf32, #tpu.memory_space<vmem>>, vector<8x32xf32>
    %c0_235 = arith.constant 0 : index
    %c0_236 = arith.constant 0 : index
    %c0_237 = arith.constant 0 : index
    %366 = vector.load %arg5[%c0_235, %c0_236, %c0_237] : memref<4x32x128xf32, #tpu.memory_space<vmem>>, vector<1x32x128xf32>
    %367 = vector.shape_cast %366 : vector<1x32x128xf32> to vector<32x128xf32>
    %cst_238 = arith.constant dense<0.000000e+00> : vector<8x128xf32>
    %368 = tpu.matmul %365, %367, %cst_238 {dimension_numbers = #tpu.dot_dimension_numbers<[1], [0], [0], [1], [0, 0, 1, 1], [], []>} : vector<8x32xf32>, vector<32x128xf32>, vector<8x128xf32> -> vector<8x128xf32>
    %369 = arith.addf %364, %368 : vector<8x128xf32>
    %370 = math.tanh %369 : vector<8x128xf32>
    %cst_239 = arith.constant 5.000000e-01 : f32
    %371 = vector.broadcast %cst_239 : f32 to vector<8x128xf32>
    %372 = arith.mulf %371, %370 : vector<8x128xf32>
    %cst_240 = arith.constant 5.000000e-01 : f32
    %373 = vector.broadcast %cst_240 : f32 to vector<8x128xf32>
    %374 = arith.addf %372, %373 : vector<8x128xf32>
    %375 = arith.select %19, %370, %374 : vector<8x128xi1>, vector<8x128xf32>
    %376 = vector.extract_strided_slice %375 {offsets = [0, 0], sizes = [8, 32], strides = [1, 1]} : vector<8x128xf32> to vector<8x32xf32>
    %377 = vector.extract_strided_slice %375 {offsets = [0, 32], sizes = [8, 32], strides = [1, 1]} : vector<8x128xf32> to vector<8x32xf32>
    %378 = vector.extract_strided_slice %375 {offsets = [0, 64], sizes = [8, 32], strides = [1, 1]} : vector<8x128xf32> to vector<8x32xf32>
    %379 = vector.extract_strided_slice %375 {offsets = [0, 96], sizes = [8, 32], strides = [1, 1]} : vector<8x128xf32> to vector<8x32xf32>
    %c0_241 = arith.constant 0 : index
    %c0_242 = arith.constant 0 : index
    %380 = vector.load %arg10[%c0_241, %c0_242] : memref<8x128xf32, #tpu.memory_space<vmem>>, vector<8x32xf32>
    %381 = arith.mulf %377, %380 : vector<8x32xf32>
    %382 = arith.mulf %376, %378 : vector<8x32xf32>
    %383 = arith.addf %381, %382 : vector<8x32xf32>
    %384 = math.tanh %383 : vector<8x32xf32>
    %385 = arith.mulf %379, %384 : vector<8x32xf32>
    %c0_243 = arith.constant 0 : index
    %c0_244 = arith.constant 0 : index
    %386 = vector.load %arg10[%c0_243, %c0_244] : memref<8x128xf32, #tpu.memory_space<vmem>>, vector<8x32xf32>
    tpu.vector_store %arg10[%c0_243, %c0_244], %383 {strides = array<i32>} : memref<8x128xf32, #tpu.memory_space<vmem>>, vector<8x32xf32>,
    %c0_245 = arith.constant 0 : index
    %c0_246 = arith.constant 0 : index
    %387 = vector.load %arg9[%c0_245, %c0_246] : memref<8x128xf32, #tpu.memory_space<vmem>>, vector<8x32xf32>
    tpu.vector_store %arg9[%c0_245, %c0_246], %385 {strides = array<i32>} : memref<8x128xf32, #tpu.memory_space<vmem>>, vector<8x32xf32>,
    %c0_247 = arith.constant 0 : index
    %c0_248 = arith.constant 0 : index
    %c0_249 = arith.constant 0 : index
    %388 = vector.load %arg3[%c0_247, %c0_248, %c0_249] : memref<3x32x128xf32, #tpu.memory_space<vmem>>, vector<1x32x128xf32>
    %389 = vector.shape_cast %388 : vector<1x32x128xf32> to vector<32x128xf32>
    %cst_250 = arith.constant dense<0.000000e+00> : vector<8x128xf32>
    %390 = tpu.matmul %385, %389, %cst_250 {dimension_numbers = #tpu.dot_dimension_numbers<[1], [0], [0], [1], [0, 0, 1, 1], [], []>} : vector<8x32xf32>, vector<32x128xf32>, vector<8x128xf32> -> vector<8x128xf32>
    %c0_251 = arith.constant 0 : index
    %c32_252 = arith.constant 32 : index
    %391 = vector.load %arg9[%c0_251, %c32_252] : memref<8x128xf32, #tpu.memory_space<vmem>>, vector<8x32xf32>
    %c1_253 = arith.constant 1 : index
    %c0_254 = arith.constant 0 : index
    %c0_255 = arith.constant 0 : index
    %392 = vector.load %arg5[%c1_253, %c0_254, %c0_255] : memref<4x32x128xf32, #tpu.memory_space<vmem>>, vector<1x32x128xf32>
    %393 = vector.shape_cast %392 : vector<1x32x128xf32> to vector<32x128xf32>
    %cst_256 = arith.constant dense<0.000000e+00> : vector<8x128xf32>
    %394 = tpu.matmul %391, %393, %cst_256 {dimension_numbers = #tpu.dot_dimension_numbers<[1], [0], [0], [1], [0, 0, 1, 1], [], []>} : vector<8x32xf32>, vector<32x128xf32>, vector<8x128xf32> -> vector<8x128xf32>
    %395 = arith.addf %390, %394 : vector<8x128xf32>
    %396 = vector.broadcast %21 : vector<1x128xf32> to vector<8x128xf32>
    %397 = arith.addf %395, %396 : vector<8x128xf32>
    %398 = math.tanh %397 : vector<8x128xf32>
    %cst_257 = arith.constant 5.000000e-01 : f32
    %399 = vector.broadcast %cst_257 : f32 to vector<8x128xf32>
    %400 = arith.mulf %399, %398 : vector<8x128xf32>
    %cst_258 = arith.constant 5.000000e-01 : f32
    %401 = vector.broadcast %cst_258 : f32 to vector<8x128xf32>
    %402 = arith.addf %400, %401 : vector<8x128xf32>
    %403 = arith.select %19, %398, %402 : vector<8x128xi1>, vector<8x128xf32>
    %404 = vector.extract_strided_slice %403 {offsets = [0, 0], sizes = [8, 32], strides = [1, 1]} : vector<8x128xf32> to vector<8x32xf32>
    %405 = vector.extract_strided_slice %403 {offsets = [0, 32], sizes = [8, 32], strides = [1, 1]} : vector<8x128xf32> to vector<8x32xf32>
    %406 = vector.extract_strided_slice %403 {offsets = [0, 64], sizes = [8, 32], strides = [1, 1]} : vector<8x128xf32> to vector<8x32xf32>
    %407 = vector.extract_strided_slice %403 {offsets = [0, 96], sizes = [8, 32], strides = [1, 1]} : vector<8x128xf32> to vector<8x32xf32>
    %c0_259 = arith.constant 0 : index
    %c32_260 = arith.constant 32 : index
    %408 = vector.load %arg10[%c0_259, %c32_260] : memref<8x128xf32, #tpu.memory_space<vmem>>, vector<8x32xf32>
    %409 = arith.mulf %405, %408 : vector<8x32xf32>
    %410 = arith.mulf %404, %406 : vector<8x32xf32>
    %411 = arith.addf %409, %410 : vector<8x32xf32>
    %412 = math.tanh %411 : vector<8x32xf32>
    %413 = arith.mulf %407, %412 : vector<8x32xf32>
    %c0_261 = arith.constant 0 : index
    %c32_262 = arith.constant 32 : index
    %414 = vector.load %arg10[%c0_261, %c32_262] : memref<8x128xf32, #tpu.memory_space<vmem>>, vector<8x32xf32>
    tpu.vector_store %arg10[%c0_261, %c32_262], %411 {strides = array<i32>} : memref<8x128xf32, #tpu.memory_space<vmem>>, vector<8x32xf32>,
    %c0_263 = arith.constant 0 : index
    %c32_264 = arith.constant 32 : index
    %415 = vector.load %arg9[%c0_263, %c32_264] : memref<8x128xf32, #tpu.memory_space<vmem>>, vector<8x32xf32>
    tpu.vector_store %arg9[%c0_263, %c32_264], %413 {strides = array<i32>} : memref<8x128xf32, #tpu.memory_space<vmem>>, vector<8x32xf32>,
    %cst_265 = arith.constant 0.000000e+00 : f32
    %416 = vector.broadcast %cst_265 : f32 to vector<8x32xf32>
    %417 = arith.maximumf %413, %416 : vector<8x32xf32>
    %c1_266 = arith.constant 1 : index
    %c0_267 = arith.constant 0 : index
    %c0_268 = arith.constant 0 : index
    %418 = vector.load %arg3[%c1_266, %c0_267, %c0_268] : memref<3x32x128xf32, #tpu.memory_space<vmem>>, vector<1x32x128xf32>
    %419 = vector.shape_cast %418 : vector<1x32x128xf32> to vector<32x128xf32>
    %cst_269 = arith.constant dense<0.000000e+00> : vector<8x128xf32>
    %420 = tpu.matmul %417, %419, %cst_269 {dimension_numbers = #tpu.dot_dimension_numbers<[1], [0], [0], [1], [0, 0, 1, 1], [], []>} : vector<8x32xf32>, vector<32x128xf32>, vector<8x128xf32> -> vector<8x128xf32>
    %c0_270 = arith.constant 0 : index
    %c64_271 = arith.constant 64 : index
    %421 = vector.load %arg9[%c0_270, %c64_271] : memref<8x128xf32, #tpu.memory_space<vmem>>, vector<8x32xf32>
    %c2_272 = arith.constant 2 : index
    %c0_273 = arith.constant 0 : index
    %c0_274 = arith.constant 0 : index
    %422 = vector.load %arg5[%c2_272, %c0_273, %c0_274] : memref<4x32x128xf32, #tpu.memory_space<vmem>>, vector<1x32x128xf32>
    %423 = vector.shape_cast %422 : vector<1x32x128xf32> to vector<32x128xf32>
    %cst_275 = arith.constant dense<0.000000e+00> : vector<8x128xf32>
    %424 = tpu.matmul %421, %423, %cst_275 {dimension_numbers = #tpu.dot_dimension_numbers<[1], [0], [0], [1], [0, 0, 1, 1], [], []>} : vector<8x32xf32>, vector<32x128xf32>, vector<8x128xf32> -> vector<8x128xf32>
    %425 = arith.addf %420, %424 : vector<8x128xf32>
    %426 = vector.broadcast %23 : vector<1x128xf32> to vector<8x128xf32>
    %427 = arith.addf %425, %426 : vector<8x128xf32>
    %428 = math.tanh %427 : vector<8x128xf32>
    %cst_276 = arith.constant 5.000000e-01 : f32
    %429 = vector.broadcast %cst_276 : f32 to vector<8x128xf32>
    %430 = arith.mulf %429, %428 : vector<8x128xf32>
    %cst_277 = arith.constant 5.000000e-01 : f32
    %431 = vector.broadcast %cst_277 : f32 to vector<8x128xf32>
    %432 = arith.addf %430, %431 : vector<8x128xf32>
    %433 = arith.select %19, %428, %432 : vector<8x128xi1>, vector<8x128xf32>
    %434 = vector.extract_strided_slice %433 {offsets = [0, 0], sizes = [8, 32], strides = [1, 1]} : vector<8x128xf32> to vector<8x32xf32>
    %435 = vector.extract_strided_slice %433 {offsets = [0, 32], sizes = [8, 32], strides = [1, 1]} : vector<8x128xf32> to vector<8x32xf32>
    %436 = vector.extract_strided_slice %433 {offsets = [0, 64], sizes = [8, 32], strides = [1, 1]} : vector<8x128xf32> to vector<8x32xf32>
    %437 = vector.extract_strided_slice %433 {offsets = [0, 96], sizes = [8, 32], strides = [1, 1]} : vector<8x128xf32> to vector<8x32xf32>
    %c0_278 = arith.constant 0 : index
    %c64_279 = arith.constant 64 : index
    %438 = vector.load %arg10[%c0_278, %c64_279] : memref<8x128xf32, #tpu.memory_space<vmem>>, vector<8x32xf32>
    %439 = arith.mulf %435, %438 : vector<8x32xf32>
    %440 = arith.mulf %434, %436 : vector<8x32xf32>
    %441 = arith.addf %439, %440 : vector<8x32xf32>
    %442 = math.tanh %441 : vector<8x32xf32>
    %443 = arith.mulf %437, %442 : vector<8x32xf32>
    %c0_280 = arith.constant 0 : index
    %c64_281 = arith.constant 64 : index
    %444 = vector.load %arg10[%c0_280, %c64_281] : memref<8x128xf32, #tpu.memory_space<vmem>>, vector<8x32xf32>
    tpu.vector_store %arg10[%c0_280, %c64_281], %441 {strides = array<i32>} : memref<8x128xf32, #tpu.memory_space<vmem>>, vector<8x32xf32>,
    %c0_282 = arith.constant 0 : index
    %c64_283 = arith.constant 64 : index
    %445 = vector.load %arg9[%c0_282, %c64_283] : memref<8x128xf32, #tpu.memory_space<vmem>>, vector<8x32xf32>
    tpu.vector_store %arg9[%c0_282, %c64_283], %443 {strides = array<i32>} : memref<8x128xf32, #tpu.memory_space<vmem>>, vector<8x32xf32>,
    %c2_284 = arith.constant 2 : index
    %c0_285 = arith.constant 0 : index
    %c0_286 = arith.constant 0 : index
    %446 = vector.load %arg3[%c2_284, %c0_285, %c0_286] : memref<3x32x128xf32, #tpu.memory_space<vmem>>, vector<1x32x128xf32>
    %447 = vector.shape_cast %446 : vector<1x32x128xf32> to vector<32x128xf32>
    %cst_287 = arith.constant dense<0.000000e+00> : vector<8x128xf32>
    %448 = tpu.matmul %443, %447, %cst_287 {dimension_numbers = #tpu.dot_dimension_numbers<[1], [0], [0], [1], [0, 0, 1, 1], [], []>} : vector<8x32xf32>, vector<32x128xf32>, vector<8x128xf32> -> vector<8x128xf32>
    %c0_288 = arith.constant 0 : index
    %c96_289 = arith.constant 96 : index
    %449 = vector.load %arg9[%c0_288, %c96_289] : memref<8x128xf32, #tpu.memory_space<vmem>>, vector<8x32xf32>
    %c3_290 = arith.constant 3 : index
    %c0_291 = arith.constant 0 : index
    %c0_292 = arith.constant 0 : index
    %450 = vector.load %arg5[%c3_290, %c0_291, %c0_292] : memref<4x32x128xf32, #tpu.memory_space<vmem>>, vector<1x32x128xf32>
    %451 = vector.shape_cast %450 : vector<1x32x128xf32> to vector<32x128xf32>
    %cst_293 = arith.constant dense<0.000000e+00> : vector<8x128xf32>
    %452 = tpu.matmul %449, %451, %cst_293 {dimension_numbers = #tpu.dot_dimension_numbers<[1], [0], [0], [1], [0, 0, 1, 1], [], []>} : vector<8x32xf32>, vector<32x128xf32>, vector<8x128xf32> -> vector<8x128xf32>
    %453 = arith.addf %448, %452 : vector<8x128xf32>
    %454 = vector.broadcast %25 : vector<1x128xf32> to vector<8x128xf32>
    %455 = arith.addf %453, %454 : vector<8x128xf32>
    %456 = math.tanh %455 : vector<8x128xf32>
    %cst_294 = arith.constant 5.000000e-01 : f32
    %457 = vector.broadcast %cst_294 : f32 to vector<8x128xf32>
    %458 = arith.mulf %457, %456 : vector<8x128xf32>
    %cst_295 = arith.constant 5.000000e-01 : f32
    %459 = vector.broadcast %cst_295 : f32 to vector<8x128xf32>
    %460 = arith.addf %458, %459 : vector<8x128xf32>
    %461 = arith.select %19, %456, %460 : vector<8x128xi1>, vector<8x128xf32>
    %462 = vector.extract_strided_slice %461 {offsets = [0, 0], sizes = [8, 32], strides = [1, 1]} : vector<8x128xf32> to vector<8x32xf32>
    %463 = vector.extract_strided_slice %461 {offsets = [0, 32], sizes = [8, 32], strides = [1, 1]} : vector<8x128xf32> to vector<8x32xf32>
    %464 = vector.extract_strided_slice %461 {offsets = [0, 64], sizes = [8, 32], strides = [1, 1]} : vector<8x128xf32> to vector<8x32xf32>
    %465 = vector.extract_strided_slice %461 {offsets = [0, 96], sizes = [8, 32], strides = [1, 1]} : vector<8x128xf32> to vector<8x32xf32>
    %c0_296 = arith.constant 0 : index
    %c96_297 = arith.constant 96 : index
    %466 = vector.load %arg10[%c0_296, %c96_297] : memref<8x128xf32, #tpu.memory_space<vmem>>, vector<8x32xf32>
    %467 = arith.mulf %463, %466 : vector<8x32xf32>
    %468 = arith.mulf %462, %464 : vector<8x32xf32>
    %469 = arith.addf %467, %468 : vector<8x32xf32>
    %470 = math.tanh %469 : vector<8x32xf32>
    %471 = arith.mulf %465, %470 : vector<8x32xf32>
    %c0_298 = arith.constant 0 : index
    %c96_299 = arith.constant 96 : index
    %472 = vector.load %arg10[%c0_298, %c96_299] : memref<8x128xf32, #tpu.memory_space<vmem>>, vector<8x32xf32>
    tpu.vector_store %arg10[%c0_298, %c96_299], %469 {strides = array<i32>} : memref<8x128xf32, #tpu.memory_space<vmem>>, vector<8x32xf32>,
    %c0_300 = arith.constant 0 : index
    %c96_301 = arith.constant 96 : index
    %473 = vector.load %arg9[%c0_300, %c96_301] : memref<8x128xf32, #tpu.memory_space<vmem>>, vector<8x32xf32>
    tpu.vector_store %arg9[%c0_300, %c96_301], %471 {strides = array<i32>} : memref<8x128xf32, #tpu.memory_space<vmem>>, vector<8x32xf32>,
    %c4_i32 = arith.constant 4 : i32
    %474 = arith.index_cast %c4_i32 : i32 to index
    %c0_302 = arith.constant 0 : index
    %c0_303 = arith.constant 0 : index
    %475 = vector.load %arg11[%474, %c0_302, %c0_303] : memref<8x8x128xf32, #tpu.memory_space<vmem>>, vector<1x8x128xf32>
    %476 = vector.shape_cast %475 : vector<1x8x128xf32> to vector<8x128xf32>
    %c0_304 = arith.constant 0 : index
    %c0_305 = arith.constant 0 : index
    %477 = vector.load %arg9[%c0_304, %c0_305] : memref<8x128xf32, #tpu.memory_space<vmem>>, vector<8x32xf32>
    %c0_306 = arith.constant 0 : index
    %c0_307 = arith.constant 0 : index
    %c0_308 = arith.constant 0 : index
    %478 = vector.load %arg5[%c0_306, %c0_307, %c0_308] : memref<4x32x128xf32, #tpu.memory_space<vmem>>, vector<1x32x128xf32>
    %479 = vector.shape_cast %478 : vector<1x32x128xf32> to vector<32x128xf32>
    %cst_309 = arith.constant dense<0.000000e+00> : vector<8x128xf32>
    %480 = tpu.matmul %477, %479, %cst_309 {dimension_numbers = #tpu.dot_dimension_numbers<[1], [0], [0], [1], [0, 0, 1, 1], [], []>} : vector<8x32xf32>, vector<32x128xf32>, vector<8x128xf32> -> vector<8x128xf32>
    %481 = arith.addf %476, %480 : vector<8x128xf32>
    %482 = math.tanh %481 : vector<8x128xf32>
    %cst_310 = arith.constant 5.000000e-01 : f32
    %483 = vector.broadcast %cst_310 : f32 to vector<8x128xf32>
    %484 = arith.mulf %483, %482 : vector<8x128xf32>
    %cst_311 = arith.constant 5.000000e-01 : f32
    %485 = vector.broadcast %cst_311 : f32 to vector<8x128xf32>
    %486 = arith.addf %484, %485 : vector<8x128xf32>
    %487 = arith.select %19, %482, %486 : vector<8x128xi1>, vector<8x128xf32>
    %488 = vector.extract_strided_slice %487 {offsets = [0, 0], sizes = [8, 32], strides = [1, 1]} : vector<8x128xf32> to vector<8x32xf32>
    %489 = vector.extract_strided_slice %487 {offsets = [0, 32], sizes = [8, 32], strides = [1, 1]} : vector<8x128xf32> to vector<8x32xf32>
    %490 = vector.extract_strided_slice %487 {offsets = [0, 64], sizes = [8, 32], strides = [1, 1]} : vector<8x128xf32> to vector<8x32xf32>
    %491 = vector.extract_strided_slice %487 {offsets = [0, 96], sizes = [8, 32], strides = [1, 1]} : vector<8x128xf32> to vector<8x32xf32>
    %c0_312 = arith.constant 0 : index
    %c0_313 = arith.constant 0 : index
    %492 = vector.load %arg10[%c0_312, %c0_313] : memref<8x128xf32, #tpu.memory_space<vmem>>, vector<8x32xf32>
    %493 = arith.mulf %489, %492 : vector<8x32xf32>
    %494 = arith.mulf %488, %490 : vector<8x32xf32>
    %495 = arith.addf %493, %494 : vector<8x32xf32>
    %496 = math.tanh %495 : vector<8x32xf32>
    %497 = arith.mulf %491, %496 : vector<8x32xf32>
    %c0_314 = arith.constant 0 : index
    %c0_315 = arith.constant 0 : index
    %498 = vector.load %arg10[%c0_314, %c0_315] : memref<8x128xf32, #tpu.memory_space<vmem>>, vector<8x32xf32>
    tpu.vector_store %arg10[%c0_314, %c0_315], %495 {strides = array<i32>} : memref<8x128xf32, #tpu.memory_space<vmem>>, vector<8x32xf32>,
    %c0_316 = arith.constant 0 : index
    %c0_317 = arith.constant 0 : index
    %499 = vector.load %arg9[%c0_316, %c0_317] : memref<8x128xf32, #tpu.memory_space<vmem>>, vector<8x32xf32>
    tpu.vector_store %arg9[%c0_316, %c0_317], %497 {strides = array<i32>} : memref<8x128xf32, #tpu.memory_space<vmem>>, vector<8x32xf32>,
    %c0_318 = arith.constant 0 : index
    %c0_319 = arith.constant 0 : index
    %c0_320 = arith.constant 0 : index
    %500 = vector.load %arg3[%c0_318, %c0_319, %c0_320] : memref<3x32x128xf32, #tpu.memory_space<vmem>>, vector<1x32x128xf32>
    %501 = vector.shape_cast %500 : vector<1x32x128xf32> to vector<32x128xf32>
    %cst_321 = arith.constant dense<0.000000e+00> : vector<8x128xf32>
    %502 = tpu.matmul %497, %501, %cst_321 {dimension_numbers = #tpu.dot_dimension_numbers<[1], [0], [0], [1], [0, 0, 1, 1], [], []>} : vector<8x32xf32>, vector<32x128xf32>, vector<8x128xf32> -> vector<8x128xf32>
    %c0_322 = arith.constant 0 : index
    %c32_323 = arith.constant 32 : index
    %503 = vector.load %arg9[%c0_322, %c32_323] : memref<8x128xf32, #tpu.memory_space<vmem>>, vector<8x32xf32>
    %c1_324 = arith.constant 1 : index
    %c0_325 = arith.constant 0 : index
    %c0_326 = arith.constant 0 : index
    %504 = vector.load %arg5[%c1_324, %c0_325, %c0_326] : memref<4x32x128xf32, #tpu.memory_space<vmem>>, vector<1x32x128xf32>
    %505 = vector.shape_cast %504 : vector<1x32x128xf32> to vector<32x128xf32>
    %cst_327 = arith.constant dense<0.000000e+00> : vector<8x128xf32>
    %506 = tpu.matmul %503, %505, %cst_327 {dimension_numbers = #tpu.dot_dimension_numbers<[1], [0], [0], [1], [0, 0, 1, 1], [], []>} : vector<8x32xf32>, vector<32x128xf32>, vector<8x128xf32> -> vector<8x128xf32>
    %507 = arith.addf %502, %506 : vector<8x128xf32>
    %508 = vector.broadcast %21 : vector<1x128xf32> to vector<8x128xf32>
    %509 = arith.addf %507, %508 : vector<8x128xf32>
    %510 = math.tanh %509 : vector<8x128xf32>
    %cst_328 = arith.constant 5.000000e-01 : f32
    %511 = vector.broadcast %cst_328 : f32 to vector<8x128xf32>
    %512 = arith.mulf %511, %510 : vector<8x128xf32>
    %cst_329 = arith.constant 5.000000e-01 : f32
    %513 = vector.broadcast %cst_329 : f32 to vector<8x128xf32>
    %514 = arith.addf %512, %513 : vector<8x128xf32>
    %515 = arith.select %19, %510, %514 : vector<8x128xi1>, vector<8x128xf32>
    %516 = vector.extract_strided_slice %515 {offsets = [0, 0], sizes = [8, 32], strides = [1, 1]} : vector<8x128xf32> to vector<8x32xf32>
    %517 = vector.extract_strided_slice %515 {offsets = [0, 32], sizes = [8, 32], strides = [1, 1]} : vector<8x128xf32> to vector<8x32xf32>
    %518 = vector.extract_strided_slice %515 {offsets = [0, 64], sizes = [8, 32], strides = [1, 1]} : vector<8x128xf32> to vector<8x32xf32>
    %519 = vector.extract_strided_slice %515 {offsets = [0, 96], sizes = [8, 32], strides = [1, 1]} : vector<8x128xf32> to vector<8x32xf32>
    %c0_330 = arith.constant 0 : index
    %c32_331 = arith.constant 32 : index
    %520 = vector.load %arg10[%c0_330, %c32_331] : memref<8x128xf32, #tpu.memory_space<vmem>>, vector<8x32xf32>
    %521 = arith.mulf %517, %520 : vector<8x32xf32>
    %522 = arith.mulf %516, %518 : vector<8x32xf32>
    %523 = arith.addf %521, %522 : vector<8x32xf32>
    %524 = math.tanh %523 : vector<8x32xf32>
    %525 = arith.mulf %519, %524 : vector<8x32xf32>
    %c0_332 = arith.constant 0 : index
    %c32_333 = arith.constant 32 : index
    %526 = vector.load %arg10[%c0_332, %c32_333] : memref<8x128xf32, #tpu.memory_space<vmem>>, vector<8x32xf32>
    tpu.vector_store %arg10[%c0_332, %c32_333], %523 {strides = array<i32>} : memref<8x128xf32, #tpu.memory_space<vmem>>, vector<8x32xf32>,
    %c0_334 = arith.constant 0 : index
    %c32_335 = arith.constant 32 : index
    %527 = vector.load %arg9[%c0_334, %c32_335] : memref<8x128xf32, #tpu.memory_space<vmem>>, vector<8x32xf32>
    tpu.vector_store %arg9[%c0_334, %c32_335], %525 {strides = array<i32>} : memref<8x128xf32, #tpu.memory_space<vmem>>, vector<8x32xf32>,
    %cst_336 = arith.constant 0.000000e+00 : f32
    %528 = vector.broadcast %cst_336 : f32 to vector<8x32xf32>
    %529 = arith.maximumf %525, %528 : vector<8x32xf32>
    %c1_337 = arith.constant 1 : index
    %c0_338 = arith.constant 0 : index
    %c0_339 = arith.constant 0 : index
    %530 = vector.load %arg3[%c1_337, %c0_338, %c0_339] : memref<3x32x128xf32, #tpu.memory_space<vmem>>, vector<1x32x128xf32>
    %531 = vector.shape_cast %530 : vector<1x32x128xf32> to vector<32x128xf32>
    %cst_340 = arith.constant dense<0.000000e+00> : vector<8x128xf32>
    %532 = tpu.matmul %529, %531, %cst_340 {dimension_numbers = #tpu.dot_dimension_numbers<[1], [0], [0], [1], [0, 0, 1, 1], [], []>} : vector<8x32xf32>, vector<32x128xf32>, vector<8x128xf32> -> vector<8x128xf32>
    %c0_341 = arith.constant 0 : index
    %c64_342 = arith.constant 64 : index
    %533 = vector.load %arg9[%c0_341, %c64_342] : memref<8x128xf32, #tpu.memory_space<vmem>>, vector<8x32xf32>
    %c2_343 = arith.constant 2 : index
    %c0_344 = arith.constant 0 : index
    %c0_345 = arith.constant 0 : index
    %534 = vector.load %arg5[%c2_343, %c0_344, %c0_345] : memref<4x32x128xf32, #tpu.memory_space<vmem>>, vector<1x32x128xf32>
    %535 = vector.shape_cast %534 : vector<1x32x128xf32> to vector<32x128xf32>
    %cst_346 = arith.constant dense<0.000000e+00> : vector<8x128xf32>
    %536 = tpu.matmul %533, %535, %cst_346 {dimension_numbers = #tpu.dot_dimension_numbers<[1], [0], [0], [1], [0, 0, 1, 1], [], []>} : vector<8x32xf32>, vector<32x128xf32>, vector<8x128xf32> -> vector<8x128xf32>
    %537 = arith.addf %532, %536 : vector<8x128xf32>
    %538 = vector.broadcast %23 : vector<1x128xf32> to vector<8x128xf32>
    %539 = arith.addf %537, %538 : vector<8x128xf32>
    %540 = math.tanh %539 : vector<8x128xf32>
    %cst_347 = arith.constant 5.000000e-01 : f32
    %541 = vector.broadcast %cst_347 : f32 to vector<8x128xf32>
    %542 = arith.mulf %541, %540 : vector<8x128xf32>
    %cst_348 = arith.constant 5.000000e-01 : f32
    %543 = vector.broadcast %cst_348 : f32 to vector<8x128xf32>
    %544 = arith.addf %542, %543 : vector<8x128xf32>
    %545 = arith.select %19, %540, %544 : vector<8x128xi1>, vector<8x128xf32>
    %546 = vector.extract_strided_slice %545 {offsets = [0, 0], sizes = [8, 32], strides = [1, 1]} : vector<8x128xf32> to vector<8x32xf32>
    %547 = vector.extract_strided_slice %545 {offsets = [0, 32], sizes = [8, 32], strides = [1, 1]} : vector<8x128xf32> to vector<8x32xf32>
    %548 = vector.extract_strided_slice %545 {offsets = [0, 64], sizes = [8, 32], strides = [1, 1]} : vector<8x128xf32> to vector<8x32xf32>
    %549 = vector.extract_strided_slice %545 {offsets = [0, 96], sizes = [8, 32], strides = [1, 1]} : vector<8x128xf32> to vector<8x32xf32>
    %c0_349 = arith.constant 0 : index
    %c64_350 = arith.constant 64 : index
    %550 = vector.load %arg10[%c0_349, %c64_350] : memref<8x128xf32, #tpu.memory_space<vmem>>, vector<8x32xf32>
    %551 = arith.mulf %547, %550 : vector<8x32xf32>
    %552 = arith.mulf %546, %548 : vector<8x32xf32>
    %553 = arith.addf %551, %552 : vector<8x32xf32>
    %554 = math.tanh %553 : vector<8x32xf32>
    %555 = arith.mulf %549, %554 : vector<8x32xf32>
    %c0_351 = arith.constant 0 : index
    %c64_352 = arith.constant 64 : index
    %556 = vector.load %arg10[%c0_351, %c64_352] : memref<8x128xf32, #tpu.memory_space<vmem>>, vector<8x32xf32>
    tpu.vector_store %arg10[%c0_351, %c64_352], %553 {strides = array<i32>} : memref<8x128xf32, #tpu.memory_space<vmem>>, vector<8x32xf32>,
    %c0_353 = arith.constant 0 : index
    %c64_354 = arith.constant 64 : index
    %557 = vector.load %arg9[%c0_353, %c64_354] : memref<8x128xf32, #tpu.memory_space<vmem>>, vector<8x32xf32>
    tpu.vector_store %arg9[%c0_353, %c64_354], %555 {strides = array<i32>} : memref<8x128xf32, #tpu.memory_space<vmem>>, vector<8x32xf32>,
    %c2_355 = arith.constant 2 : index
    %c0_356 = arith.constant 0 : index
    %c0_357 = arith.constant 0 : index
    %558 = vector.load %arg3[%c2_355, %c0_356, %c0_357] : memref<3x32x128xf32, #tpu.memory_space<vmem>>, vector<1x32x128xf32>
    %559 = vector.shape_cast %558 : vector<1x32x128xf32> to vector<32x128xf32>
    %cst_358 = arith.constant dense<0.000000e+00> : vector<8x128xf32>
    %560 = tpu.matmul %555, %559, %cst_358 {dimension_numbers = #tpu.dot_dimension_numbers<[1], [0], [0], [1], [0, 0, 1, 1], [], []>} : vector<8x32xf32>, vector<32x128xf32>, vector<8x128xf32> -> vector<8x128xf32>
    %c0_359 = arith.constant 0 : index
    %c96_360 = arith.constant 96 : index
    %561 = vector.load %arg9[%c0_359, %c96_360] : memref<8x128xf32, #tpu.memory_space<vmem>>, vector<8x32xf32>
    %c3_361 = arith.constant 3 : index
    %c0_362 = arith.constant 0 : index
    %c0_363 = arith.constant 0 : index
    %562 = vector.load %arg5[%c3_361, %c0_362, %c0_363] : memref<4x32x128xf32, #tpu.memory_space<vmem>>, vector<1x32x128xf32>
    %563 = vector.shape_cast %562 : vector<1x32x128xf32> to vector<32x128xf32>
    %cst_364 = arith.constant dense<0.000000e+00> : vector<8x128xf32>
    %564 = tpu.matmul %561, %563, %cst_364 {dimension_numbers = #tpu.dot_dimension_numbers<[1], [0], [0], [1], [0, 0, 1, 1], [], []>} : vector<8x32xf32>, vector<32x128xf32>, vector<8x128xf32> -> vector<8x128xf32>
    %565 = arith.addf %560, %564 : vector<8x128xf32>
    %566 = vector.broadcast %25 : vector<1x128xf32> to vector<8x128xf32>
    %567 = arith.addf %565, %566 : vector<8x128xf32>
    %568 = math.tanh %567 : vector<8x128xf32>
    %cst_365 = arith.constant 5.000000e-01 : f32
    %569 = vector.broadcast %cst_365 : f32 to vector<8x128xf32>
    %570 = arith.mulf %569, %568 : vector<8x128xf32>
    %cst_366 = arith.constant 5.000000e-01 : f32
    %571 = vector.broadcast %cst_366 : f32 to vector<8x128xf32>
    %572 = arith.addf %570, %571 : vector<8x128xf32>
    %573 = arith.select %19, %568, %572 : vector<8x128xi1>, vector<8x128xf32>
    %574 = vector.extract_strided_slice %573 {offsets = [0, 0], sizes = [8, 32], strides = [1, 1]} : vector<8x128xf32> to vector<8x32xf32>
    %575 = vector.extract_strided_slice %573 {offsets = [0, 32], sizes = [8, 32], strides = [1, 1]} : vector<8x128xf32> to vector<8x32xf32>
    %576 = vector.extract_strided_slice %573 {offsets = [0, 64], sizes = [8, 32], strides = [1, 1]} : vector<8x128xf32> to vector<8x32xf32>
    %577 = vector.extract_strided_slice %573 {offsets = [0, 96], sizes = [8, 32], strides = [1, 1]} : vector<8x128xf32> to vector<8x32xf32>
    %c0_367 = arith.constant 0 : index
    %c96_368 = arith.constant 96 : index
    %578 = vector.load %arg10[%c0_367, %c96_368] : memref<8x128xf32, #tpu.memory_space<vmem>>, vector<8x32xf32>
    %579 = arith.mulf %575, %578 : vector<8x32xf32>
    %580 = arith.mulf %574, %576 : vector<8x32xf32>
    %581 = arith.addf %579, %580 : vector<8x32xf32>
    %582 = math.tanh %581 : vector<8x32xf32>
    %583 = arith.mulf %577, %582 : vector<8x32xf32>
    %c0_369 = arith.constant 0 : index
    %c96_370 = arith.constant 96 : index
    %584 = vector.load %arg10[%c0_369, %c96_370] : memref<8x128xf32, #tpu.memory_space<vmem>>, vector<8x32xf32>
    tpu.vector_store %arg10[%c0_369, %c96_370], %581 {strides = array<i32>} : memref<8x128xf32, #tpu.memory_space<vmem>>, vector<8x32xf32>,
    %c0_371 = arith.constant 0 : index
    %c96_372 = arith.constant 96 : index
    %585 = vector.load %arg9[%c0_371, %c96_372] : memref<8x128xf32, #tpu.memory_space<vmem>>, vector<8x32xf32>
    tpu.vector_store %arg9[%c0_371, %c96_372], %583 {strides = array<i32>} : memref<8x128xf32, #tpu.memory_space<vmem>>, vector<8x32xf32>,
    %c5_i32 = arith.constant 5 : i32
    %586 = arith.index_cast %c5_i32 : i32 to index
    %c0_373 = arith.constant 0 : index
    %c0_374 = arith.constant 0 : index
    %587 = vector.load %arg11[%586, %c0_373, %c0_374] : memref<8x8x128xf32, #tpu.memory_space<vmem>>, vector<1x8x128xf32>
    %588 = vector.shape_cast %587 : vector<1x8x128xf32> to vector<8x128xf32>
    %c0_375 = arith.constant 0 : index
    %c0_376 = arith.constant 0 : index
    %589 = vector.load %arg9[%c0_375, %c0_376] : memref<8x128xf32, #tpu.memory_space<vmem>>, vector<8x32xf32>
    %c0_377 = arith.constant 0 : index
    %c0_378 = arith.constant 0 : index
    %c0_379 = arith.constant 0 : index
    %590 = vector.load %arg5[%c0_377, %c0_378, %c0_379] : memref<4x32x128xf32, #tpu.memory_space<vmem>>, vector<1x32x128xf32>
    %591 = vector.shape_cast %590 : vector<1x32x128xf32> to vector<32x128xf32>
    %cst_380 = arith.constant dense<0.000000e+00> : vector<8x128xf32>
    %592 = tpu.matmul %589, %591, %cst_380 {dimension_numbers = #tpu.dot_dimension_numbers<[1], [0], [0], [1], [0, 0, 1, 1], [], []>} : vector<8x32xf32>, vector<32x128xf32>, vector<8x128xf32> -> vector<8x128xf32>
    %593 = arith.addf %588, %592 : vector<8x128xf32>
    %594 = math.tanh %593 : vector<8x128xf32>
    %cst_381 = arith.constant 5.000000e-01 : f32
    %595 = vector.broadcast %cst_381 : f32 to vector<8x128xf32>
    %596 = arith.mulf %595, %594 : vector<8x128xf32>
    %cst_382 = arith.constant 5.000000e-01 : f32
    %597 = vector.broadcast %cst_382 : f32 to vector<8x128xf32>
    %598 = arith.addf %596, %597 : vector<8x128xf32>
    %599 = arith.select %19, %594, %598 : vector<8x128xi1>, vector<8x128xf32>
    %600 = vector.extract_strided_slice %599 {offsets = [0, 0], sizes = [8, 32], strides = [1, 1]} : vector<8x128xf32> to vector<8x32xf32>
    %601 = vector.extract_strided_slice %599 {offsets = [0, 32], sizes = [8, 32], strides = [1, 1]} : vector<8x128xf32> to vector<8x32xf32>
    %602 = vector.extract_strided_slice %599 {offsets = [0, 64], sizes = [8, 32], strides = [1, 1]} : vector<8x128xf32> to vector<8x32xf32>
    %603 = vector.extract_strided_slice %599 {offsets = [0, 96], sizes = [8, 32], strides = [1, 1]} : vector<8x128xf32> to vector<8x32xf32>
    %c0_383 = arith.constant 0 : index
    %c0_384 = arith.constant 0 : index
    %604 = vector.load %arg10[%c0_383, %c0_384] : memref<8x128xf32, #tpu.memory_space<vmem>>, vector<8x32xf32>
    %605 = arith.mulf %601, %604 : vector<8x32xf32>
    %606 = arith.mulf %600, %602 : vector<8x32xf32>
    %607 = arith.addf %605, %606 : vector<8x32xf32>
    %608 = math.tanh %607 : vector<8x32xf32>
    %609 = arith.mulf %603, %608 : vector<8x32xf32>
    %c0_385 = arith.constant 0 : index
    %c0_386 = arith.constant 0 : index
    %610 = vector.load %arg10[%c0_385, %c0_386] : memref<8x128xf32, #tpu.memory_space<vmem>>, vector<8x32xf32>
    tpu.vector_store %arg10[%c0_385, %c0_386], %607 {strides = array<i32>} : memref<8x128xf32, #tpu.memory_space<vmem>>, vector<8x32xf32>,
    %c0_387 = arith.constant 0 : index
    %c0_388 = arith.constant 0 : index
    %611 = vector.load %arg9[%c0_387, %c0_388] : memref<8x128xf32, #tpu.memory_space<vmem>>, vector<8x32xf32>
    tpu.vector_store %arg9[%c0_387, %c0_388], %609 {strides = array<i32>} : memref<8x128xf32, #tpu.memory_space<vmem>>, vector<8x32xf32>,
    %c0_389 = arith.constant 0 : index
    %c0_390 = arith.constant 0 : index
    %c0_391 = arith.constant 0 : index
    %612 = vector.load %arg3[%c0_389, %c0_390, %c0_391] : memref<3x32x128xf32, #tpu.memory_space<vmem>>, vector<1x32x128xf32>
    %613 = vector.shape_cast %612 : vector<1x32x128xf32> to vector<32x128xf32>
    %cst_392 = arith.constant dense<0.000000e+00> : vector<8x128xf32>
    %614 = tpu.matmul %609, %613, %cst_392 {dimension_numbers = #tpu.dot_dimension_numbers<[1], [0], [0], [1], [0, 0, 1, 1], [], []>} : vector<8x32xf32>, vector<32x128xf32>, vector<8x128xf32> -> vector<8x128xf32>
    %c0_393 = arith.constant 0 : index
    %c32_394 = arith.constant 32 : index
    %615 = vector.load %arg9[%c0_393, %c32_394] : memref<8x128xf32, #tpu.memory_space<vmem>>, vector<8x32xf32>
    %c1_395 = arith.constant 1 : index
    %c0_396 = arith.constant 0 : index
    %c0_397 = arith.constant 0 : index
    %616 = vector.load %arg5[%c1_395, %c0_396, %c0_397] : memref<4x32x128xf32, #tpu.memory_space<vmem>>, vector<1x32x128xf32>
    %617 = vector.shape_cast %616 : vector<1x32x128xf32> to vector<32x128xf32>
    %cst_398 = arith.constant dense<0.000000e+00> : vector<8x128xf32>
    %618 = tpu.matmul %615, %617, %cst_398 {dimension_numbers = #tpu.dot_dimension_numbers<[1], [0], [0], [1], [0, 0, 1, 1], [], []>} : vector<8x32xf32>, vector<32x128xf32>, vector<8x128xf32> -> vector<8x128xf32>
    %619 = arith.addf %614, %618 : vector<8x128xf32>
    %620 = vector.broadcast %21 : vector<1x128xf32> to vector<8x128xf32>
    %621 = arith.addf %619, %620 : vector<8x128xf32>
    %622 = math.tanh %621 : vector<8x128xf32>
    %cst_399 = arith.constant 5.000000e-01 : f32
    %623 = vector.broadcast %cst_399 : f32 to vector<8x128xf32>
    %624 = arith.mulf %623, %622 : vector<8x128xf32>
    %cst_400 = arith.constant 5.000000e-01 : f32
    %625 = vector.broadcast %cst_400 : f32 to vector<8x128xf32>
    %626 = arith.addf %624, %625 : vector<8x128xf32>
    %627 = arith.select %19, %622, %626 : vector<8x128xi1>, vector<8x128xf32>
    %628 = vector.extract_strided_slice %627 {offsets = [0, 0], sizes = [8, 32], strides = [1, 1]} : vector<8x128xf32> to vector<8x32xf32>
    %629 = vector.extract_strided_slice %627 {offsets = [0, 32], sizes = [8, 32], strides = [1, 1]} : vector<8x128xf32> to vector<8x32xf32>
    %630 = vector.extract_strided_slice %627 {offsets = [0, 64], sizes = [8, 32], strides = [1, 1]} : vector<8x128xf32> to vector<8x32xf32>
    %631 = vector.extract_strided_slice %627 {offsets = [0, 96], sizes = [8, 32], strides = [1, 1]} : vector<8x128xf32> to vector<8x32xf32>
    %c0_401 = arith.constant 0 : index
    %c32_402 = arith.constant 32 : index
    %632 = vector.load %arg10[%c0_401, %c32_402] : memref<8x128xf32, #tpu.memory_space<vmem>>, vector<8x32xf32>
    %633 = arith.mulf %629, %632 : vector<8x32xf32>
    %634 = arith.mulf %628, %630 : vector<8x32xf32>
    %635 = arith.addf %633, %634 : vector<8x32xf32>
    %636 = math.tanh %635 : vector<8x32xf32>
    %637 = arith.mulf %631, %636 : vector<8x32xf32>
    %c0_403 = arith.constant 0 : index
    %c32_404 = arith.constant 32 : index
    %638 = vector.load %arg10[%c0_403, %c32_404] : memref<8x128xf32, #tpu.memory_space<vmem>>, vector<8x32xf32>
    tpu.vector_store %arg10[%c0_403, %c32_404], %635 {strides = array<i32>} : memref<8x128xf32, #tpu.memory_space<vmem>>, vector<8x32xf32>,
    %c0_405 = arith.constant 0 : index
    %c32_406 = arith.constant 32 : index
    %639 = vector.load %arg9[%c0_405, %c32_406] : memref<8x128xf32, #tpu.memory_space<vmem>>, vector<8x32xf32>
    tpu.vector_store %arg9[%c0_405, %c32_406], %637 {strides = array<i32>} : memref<8x128xf32, #tpu.memory_space<vmem>>, vector<8x32xf32>,
    %cst_407 = arith.constant 0.000000e+00 : f32
    %640 = vector.broadcast %cst_407 : f32 to vector<8x32xf32>
    %641 = arith.maximumf %637, %640 : vector<8x32xf32>
    %c1_408 = arith.constant 1 : index
    %c0_409 = arith.constant 0 : index
    %c0_410 = arith.constant 0 : index
    %642 = vector.load %arg3[%c1_408, %c0_409, %c0_410] : memref<3x32x128xf32, #tpu.memory_space<vmem>>, vector<1x32x128xf32>
    %643 = vector.shape_cast %642 : vector<1x32x128xf32> to vector<32x128xf32>
    %cst_411 = arith.constant dense<0.000000e+00> : vector<8x128xf32>
    %644 = tpu.matmul %641, %643, %cst_411 {dimension_numbers = #tpu.dot_dimension_numbers<[1], [0], [0], [1], [0, 0, 1, 1], [], []>} : vector<8x32xf32>, vector<32x128xf32>, vector<8x128xf32> -> vector<8x128xf32>
    %c0_412 = arith.constant 0 : index
    %c64_413 = arith.constant 64 : index
    %645 = vector.load %arg9[%c0_412, %c64_413] : memref<8x128xf32, #tpu.memory_space<vmem>>, vector<8x32xf32>
    %c2_414 = arith.constant 2 : index
    %c0_415 = arith.constant 0 : index
    %c0_416 = arith.constant 0 : index
    %646 = vector.load %arg5[%c2_414, %c0_415, %c0_416] : memref<4x32x128xf32, #tpu.memory_space<vmem>>, vector<1x32x128xf32>
    %647 = vector.shape_cast %646 : vector<1x32x128xf32> to vector<32x128xf32>
    %cst_417 = arith.constant dense<0.000000e+00> : vector<8x128xf32>
    %648 = tpu.matmul %645, %647, %cst_417 {dimension_numbers = #tpu.dot_dimension_numbers<[1], [0], [0], [1], [0, 0, 1, 1], [], []>} : vector<8x32xf32>, vector<32x128xf32>, vector<8x128xf32> -> vector<8x128xf32>
    %649 = arith.addf %644, %648 : vector<8x128xf32>
    %650 = vector.broadcast %23 : vector<1x128xf32> to vector<8x128xf32>
    %651 = arith.addf %649, %650 : vector<8x128xf32>
    %652 = math.tanh %651 : vector<8x128xf32>
    %cst_418 = arith.constant 5.000000e-01 : f32
    %653 = vector.broadcast %cst_418 : f32 to vector<8x128xf32>
    %654 = arith.mulf %653, %652 : vector<8x128xf32>
    %cst_419 = arith.constant 5.000000e-01 : f32
    %655 = vector.broadcast %cst_419 : f32 to vector<8x128xf32>
    %656 = arith.addf %654, %655 : vector<8x128xf32>
    %657 = arith.select %19, %652, %656 : vector<8x128xi1>, vector<8x128xf32>
    %658 = vector.extract_strided_slice %657 {offsets = [0, 0], sizes = [8, 32], strides = [1, 1]} : vector<8x128xf32> to vector<8x32xf32>
    %659 = vector.extract_strided_slice %657 {offsets = [0, 32], sizes = [8, 32], strides = [1, 1]} : vector<8x128xf32> to vector<8x32xf32>
    %660 = vector.extract_strided_slice %657 {offsets = [0, 64], sizes = [8, 32], strides = [1, 1]} : vector<8x128xf32> to vector<8x32xf32>
    %661 = vector.extract_strided_slice %657 {offsets = [0, 96], sizes = [8, 32], strides = [1, 1]} : vector<8x128xf32> to vector<8x32xf32>
    %c0_420 = arith.constant 0 : index
    %c64_421 = arith.constant 64 : index
    %662 = vector.load %arg10[%c0_420, %c64_421] : memref<8x128xf32, #tpu.memory_space<vmem>>, vector<8x32xf32>
    %663 = arith.mulf %659, %662 : vector<8x32xf32>
    %664 = arith.mulf %658, %660 : vector<8x32xf32>
    %665 = arith.addf %663, %664 : vector<8x32xf32>
    %666 = math.tanh %665 : vector<8x32xf32>
    %667 = arith.mulf %661, %666 : vector<8x32xf32>
    %c0_422 = arith.constant 0 : index
    %c64_423 = arith.constant 64 : index
    %668 = vector.load %arg10[%c0_422, %c64_423] : memref<8x128xf32, #tpu.memory_space<vmem>>, vector<8x32xf32>
    tpu.vector_store %arg10[%c0_422, %c64_423], %665 {strides = array<i32>} : memref<8x128xf32, #tpu.memory_space<vmem>>, vector<8x32xf32>,
    %c0_424 = arith.constant 0 : index
    %c64_425 = arith.constant 64 : index
    %669 = vector.load %arg9[%c0_424, %c64_425] : memref<8x128xf32, #tpu.memory_space<vmem>>, vector<8x32xf32>
    tpu.vector_store %arg9[%c0_424, %c64_425], %667 {strides = array<i32>} : memref<8x128xf32, #tpu.memory_space<vmem>>, vector<8x32xf32>,
    %c2_426 = arith.constant 2 : index
    %c0_427 = arith.constant 0 : index
    %c0_428 = arith.constant 0 : index
    %670 = vector.load %arg3[%c2_426, %c0_427, %c0_428] : memref<3x32x128xf32, #tpu.memory_space<vmem>>, vector<1x32x128xf32>
    %671 = vector.shape_cast %670 : vector<1x32x128xf32> to vector<32x128xf32>
    %cst_429 = arith.constant dense<0.000000e+00> : vector<8x128xf32>
    %672 = tpu.matmul %667, %671, %cst_429 {dimension_numbers = #tpu.dot_dimension_numbers<[1], [0], [0], [1], [0, 0, 1, 1], [], []>} : vector<8x32xf32>, vector<32x128xf32>, vector<8x128xf32> -> vector<8x128xf32>
    %c0_430 = arith.constant 0 : index
    %c96_431 = arith.constant 96 : index
    %673 = vector.load %arg9[%c0_430, %c96_431] : memref<8x128xf32, #tpu.memory_space<vmem>>, vector<8x32xf32>
    %c3_432 = arith.constant 3 : index
    %c0_433 = arith.constant 0 : index
    %c0_434 = arith.constant 0 : index
    %674 = vector.load %arg5[%c3_432, %c0_433, %c0_434] : memref<4x32x128xf32, #tpu.memory_space<vmem>>, vector<1x32x128xf32>
    %675 = vector.shape_cast %674 : vector<1x32x128xf32> to vector<32x128xf32>
    %cst_435 = arith.constant dense<0.000000e+00> : vector<8x128xf32>
    %676 = tpu.matmul %673, %675, %cst_435 {dimension_numbers = #tpu.dot_dimension_numbers<[1], [0], [0], [1], [0, 0, 1, 1], [], []>} : vector<8x32xf32>, vector<32x128xf32>, vector<8x128xf32> -> vector<8x128xf32>
    %677 = arith.addf %672, %676 : vector<8x128xf32>
    %678 = vector.broadcast %25 : vector<1x128xf32> to vector<8x128xf32>
    %679 = arith.addf %677, %678 : vector<8x128xf32>
    %680 = math.tanh %679 : vector<8x128xf32>
    %cst_436 = arith.constant 5.000000e-01 : f32
    %681 = vector.broadcast %cst_436 : f32 to vector<8x128xf32>
    %682 = arith.mulf %681, %680 : vector<8x128xf32>
    %cst_437 = arith.constant 5.000000e-01 : f32
    %683 = vector.broadcast %cst_437 : f32 to vector<8x128xf32>
    %684 = arith.addf %682, %683 : vector<8x128xf32>
    %685 = arith.select %19, %680, %684 : vector<8x128xi1>, vector<8x128xf32>
    %686 = vector.extract_strided_slice %685 {offsets = [0, 0], sizes = [8, 32], strides = [1, 1]} : vector<8x128xf32> to vector<8x32xf32>
    %687 = vector.extract_strided_slice %685 {offsets = [0, 32], sizes = [8, 32], strides = [1, 1]} : vector<8x128xf32> to vector<8x32xf32>
    %688 = vector.extract_strided_slice %685 {offsets = [0, 64], sizes = [8, 32], strides = [1, 1]} : vector<8x128xf32> to vector<8x32xf32>
    %689 = vector.extract_strided_slice %685 {offsets = [0, 96], sizes = [8, 32], strides = [1, 1]} : vector<8x128xf32> to vector<8x32xf32>
    %c0_438 = arith.constant 0 : index
    %c96_439 = arith.constant 96 : index
    %690 = vector.load %arg10[%c0_438, %c96_439] : memref<8x128xf32, #tpu.memory_space<vmem>>, vector<8x32xf32>
    %691 = arith.mulf %687, %690 : vector<8x32xf32>
    %692 = arith.mulf %686, %688 : vector<8x32xf32>
    %693 = arith.addf %691, %692 : vector<8x32xf32>
    %694 = math.tanh %693 : vector<8x32xf32>
    %695 = arith.mulf %689, %694 : vector<8x32xf32>
    %c0_440 = arith.constant 0 : index
    %c96_441 = arith.constant 96 : index
    %696 = vector.load %arg10[%c0_440, %c96_441] : memref<8x128xf32, #tpu.memory_space<vmem>>, vector<8x32xf32>
    tpu.vector_store %arg10[%c0_440, %c96_441], %693 {strides = array<i32>} : memref<8x128xf32, #tpu.memory_space<vmem>>, vector<8x32xf32>,
    %c0_442 = arith.constant 0 : index
    %c96_443 = arith.constant 96 : index
    %697 = vector.load %arg9[%c0_442, %c96_443] : memref<8x128xf32, #tpu.memory_space<vmem>>, vector<8x32xf32>
    tpu.vector_store %arg9[%c0_442, %c96_443], %695 {strides = array<i32>} : memref<8x128xf32, #tpu.memory_space<vmem>>, vector<8x32xf32>,
    %c6_i32 = arith.constant 6 : i32
    %698 = arith.index_cast %c6_i32 : i32 to index
    %c0_444 = arith.constant 0 : index
    %c0_445 = arith.constant 0 : index
    %699 = vector.load %arg11[%698, %c0_444, %c0_445] : memref<8x8x128xf32, #tpu.memory_space<vmem>>, vector<1x8x128xf32>
    %700 = vector.shape_cast %699 : vector<1x8x128xf32> to vector<8x128xf32>
    %c0_446 = arith.constant 0 : index
    %c0_447 = arith.constant 0 : index
    %701 = vector.load %arg9[%c0_446, %c0_447] : memref<8x128xf32, #tpu.memory_space<vmem>>, vector<8x32xf32>
    %c0_448 = arith.constant 0 : index
    %c0_449 = arith.constant 0 : index
    %c0_450 = arith.constant 0 : index
    %702 = vector.load %arg5[%c0_448, %c0_449, %c0_450] : memref<4x32x128xf32, #tpu.memory_space<vmem>>, vector<1x32x128xf32>
    %703 = vector.shape_cast %702 : vector<1x32x128xf32> to vector<32x128xf32>
    %cst_451 = arith.constant dense<0.000000e+00> : vector<8x128xf32>
    %704 = tpu.matmul %701, %703, %cst_451 {dimension_numbers = #tpu.dot_dimension_numbers<[1], [0], [0], [1], [0, 0, 1, 1], [], []>} : vector<8x32xf32>, vector<32x128xf32>, vector<8x128xf32> -> vector<8x128xf32>
    %705 = arith.addf %700, %704 : vector<8x128xf32>
    %706 = math.tanh %705 : vector<8x128xf32>
    %cst_452 = arith.constant 5.000000e-01 : f32
    %707 = vector.broadcast %cst_452 : f32 to vector<8x128xf32>
    %708 = arith.mulf %707, %706 : vector<8x128xf32>
    %cst_453 = arith.constant 5.000000e-01 : f32
    %709 = vector.broadcast %cst_453 : f32 to vector<8x128xf32>
    %710 = arith.addf %708, %709 : vector<8x128xf32>
    %711 = arith.select %19, %706, %710 : vector<8x128xi1>, vector<8x128xf32>
    %712 = vector.extract_strided_slice %711 {offsets = [0, 0], sizes = [8, 32], strides = [1, 1]} : vector<8x128xf32> to vector<8x32xf32>
    %713 = vector.extract_strided_slice %711 {offsets = [0, 32], sizes = [8, 32], strides = [1, 1]} : vector<8x128xf32> to vector<8x32xf32>
    %714 = vector.extract_strided_slice %711 {offsets = [0, 64], sizes = [8, 32], strides = [1, 1]} : vector<8x128xf32> to vector<8x32xf32>
    %715 = vector.extract_strided_slice %711 {offsets = [0, 96], sizes = [8, 32], strides = [1, 1]} : vector<8x128xf32> to vector<8x32xf32>
    %c0_454 = arith.constant 0 : index
    %c0_455 = arith.constant 0 : index
    %716 = vector.load %arg10[%c0_454, %c0_455] : memref<8x128xf32, #tpu.memory_space<vmem>>, vector<8x32xf32>
    %717 = arith.mulf %713, %716 : vector<8x32xf32>
    %718 = arith.mulf %712, %714 : vector<8x32xf32>
    %719 = arith.addf %717, %718 : vector<8x32xf32>
    %720 = math.tanh %719 : vector<8x32xf32>
    %721 = arith.mulf %715, %720 : vector<8x32xf32>
    %c0_456 = arith.constant 0 : index
    %c0_457 = arith.constant 0 : index
    %722 = vector.load %arg10[%c0_456, %c0_457] : memref<8x128xf32, #tpu.memory_space<vmem>>, vector<8x32xf32>
    tpu.vector_store %arg10[%c0_456, %c0_457], %719 {strides = array<i32>} : memref<8x128xf32, #tpu.memory_space<vmem>>, vector<8x32xf32>,
    %c0_458 = arith.constant 0 : index
    %c0_459 = arith.constant 0 : index
    %723 = vector.load %arg9[%c0_458, %c0_459] : memref<8x128xf32, #tpu.memory_space<vmem>>, vector<8x32xf32>
    tpu.vector_store %arg9[%c0_458, %c0_459], %721 {strides = array<i32>} : memref<8x128xf32, #tpu.memory_space<vmem>>, vector<8x32xf32>,
    %c0_460 = arith.constant 0 : index
    %c0_461 = arith.constant 0 : index
    %c0_462 = arith.constant 0 : index
    %724 = vector.load %arg3[%c0_460, %c0_461, %c0_462] : memref<3x32x128xf32, #tpu.memory_space<vmem>>, vector<1x32x128xf32>
    %725 = vector.shape_cast %724 : vector<1x32x128xf32> to vector<32x128xf32>
    %cst_463 = arith.constant dense<0.000000e+00> : vector<8x128xf32>
    %726 = tpu.matmul %721, %725, %cst_463 {dimension_numbers = #tpu.dot_dimension_numbers<[1], [0], [0], [1], [0, 0, 1, 1], [], []>} : vector<8x32xf32>, vector<32x128xf32>, vector<8x128xf32> -> vector<8x128xf32>
    %c0_464 = arith.constant 0 : index
    %c32_465 = arith.constant 32 : index
    %727 = vector.load %arg9[%c0_464, %c32_465] : memref<8x128xf32, #tpu.memory_space<vmem>>, vector<8x32xf32>
    %c1_466 = arith.constant 1 : index
    %c0_467 = arith.constant 0 : index
    %c0_468 = arith.constant 0 : index
    %728 = vector.load %arg5[%c1_466, %c0_467, %c0_468] : memref<4x32x128xf32, #tpu.memory_space<vmem>>, vector<1x32x128xf32>
    %729 = vector.shape_cast %728 : vector<1x32x128xf32> to vector<32x128xf32>
    %cst_469 = arith.constant dense<0.000000e+00> : vector<8x128xf32>
    %730 = tpu.matmul %727, %729, %cst_469 {dimension_numbers = #tpu.dot_dimension_numbers<[1], [0], [0], [1], [0, 0, 1, 1], [], []>} : vector<8x32xf32>, vector<32x128xf32>, vector<8x128xf32> -> vector<8x128xf32>
    %731 = arith.addf %726, %730 : vector<8x128xf32>
    %732 = vector.broadcast %21 : vector<1x128xf32> to vector<8x128xf32>
    %733 = arith.addf %731, %732 : vector<8x128xf32>
    %734 = math.tanh %733 : vector<8x128xf32>
    %cst_470 = arith.constant 5.000000e-01 : f32
    %735 = vector.broadcast %cst_470 : f32 to vector<8x128xf32>
    %736 = arith.mulf %735, %734 : vector<8x128xf32>
    %cst_471 = arith.constant 5.000000e-01 : f32
    %737 = vector.broadcast %cst_471 : f32 to vector<8x128xf32>
    %738 = arith.addf %736, %737 : vector<8x128xf32>
    %739 = arith.select %19, %734, %738 : vector<8x128xi1>, vector<8x128xf32>
    %740 = vector.extract_strided_slice %739 {offsets = [0, 0], sizes = [8, 32], strides = [1, 1]} : vector<8x128xf32> to vector<8x32xf32>
    %741 = vector.extract_strided_slice %739 {offsets = [0, 32], sizes = [8, 32], strides = [1, 1]} : vector<8x128xf32> to vector<8x32xf32>
    %742 = vector.extract_strided_slice %739 {offsets = [0, 64], sizes = [8, 32], strides = [1, 1]} : vector<8x128xf32> to vector<8x32xf32>
    %743 = vector.extract_strided_slice %739 {offsets = [0, 96], sizes = [8, 32], strides = [1, 1]} : vector<8x128xf32> to vector<8x32xf32>
    %c0_472 = arith.constant 0 : index
    %c32_473 = arith.constant 32 : index
    %744 = vector.load %arg10[%c0_472, %c32_473] : memref<8x128xf32, #tpu.memory_space<vmem>>, vector<8x32xf32>
    %745 = arith.mulf %741, %744 : vector<8x32xf32>
    %746 = arith.mulf %740, %742 : vector<8x32xf32>
    %747 = arith.addf %745, %746 : vector<8x32xf32>
    %748 = math.tanh %747 : vector<8x32xf32>
    %749 = arith.mulf %743, %748 : vector<8x32xf32>
    %c0_474 = arith.constant 0 : index
    %c32_475 = arith.constant 32 : index
    %750 = vector.load %arg10[%c0_474, %c32_475] : memref<8x128xf32, #tpu.memory_space<vmem>>, vector<8x32xf32>
    tpu.vector_store %arg10[%c0_474, %c32_475], %747 {strides = array<i32>} : memref<8x128xf32, #tpu.memory_space<vmem>>, vector<8x32xf32>,
    %c0_476 = arith.constant 0 : index
    %c32_477 = arith.constant 32 : index
    %751 = vector.load %arg9[%c0_476, %c32_477] : memref<8x128xf32, #tpu.memory_space<vmem>>, vector<8x32xf32>
    tpu.vector_store %arg9[%c0_476, %c32_477], %749 {strides = array<i32>} : memref<8x128xf32, #tpu.memory_space<vmem>>, vector<8x32xf32>,
    %cst_478 = arith.constant 0.000000e+00 : f32
    %752 = vector.broadcast %cst_478 : f32 to vector<8x32xf32>
    %753 = arith.maximumf %749, %752 : vector<8x32xf32>
    %c1_479 = arith.constant 1 : index
    %c0_480 = arith.constant 0 : index
    %c0_481 = arith.constant 0 : index
    %754 = vector.load %arg3[%c1_479, %c0_480, %c0_481] : memref<3x32x128xf32, #tpu.memory_space<vmem>>, vector<1x32x128xf32>
    %755 = vector.shape_cast %754 : vector<1x32x128xf32> to vector<32x128xf32>
    %cst_482 = arith.constant dense<0.000000e+00> : vector<8x128xf32>
    %756 = tpu.matmul %753, %755, %cst_482 {dimension_numbers = #tpu.dot_dimension_numbers<[1], [0], [0], [1], [0, 0, 1, 1], [], []>} : vector<8x32xf32>, vector<32x128xf32>, vector<8x128xf32> -> vector<8x128xf32>
    %c0_483 = arith.constant 0 : index
    %c64_484 = arith.constant 64 : index
    %757 = vector.load %arg9[%c0_483, %c64_484] : memref<8x128xf32, #tpu.memory_space<vmem>>, vector<8x32xf32>
    %c2_485 = arith.constant 2 : index
    %c0_486 = arith.constant 0 : index
    %c0_487 = arith.constant 0 : index
    %758 = vector.load %arg5[%c2_485, %c0_486, %c0_487] : memref<4x32x128xf32, #tpu.memory_space<vmem>>, vector<1x32x128xf32>
    %759 = vector.shape_cast %758 : vector<1x32x128xf32> to vector<32x128xf32>
    %cst_488 = arith.constant dense<0.000000e+00> : vector<8x128xf32>
    %760 = tpu.matmul %757, %759, %cst_488 {dimension_numbers = #tpu.dot_dimension_numbers<[1], [0], [0], [1], [0, 0, 1, 1], [], []>} : vector<8x32xf32>, vector<32x128xf32>, vector<8x128xf32> -> vector<8x128xf32>
    %761 = arith.addf %756, %760 : vector<8x128xf32>
    %762 = vector.broadcast %23 : vector<1x128xf32> to vector<8x128xf32>
    %763 = arith.addf %761, %762 : vector<8x128xf32>
    %764 = math.tanh %763 : vector<8x128xf32>
    %cst_489 = arith.constant 5.000000e-01 : f32
    %765 = vector.broadcast %cst_489 : f32 to vector<8x128xf32>
    %766 = arith.mulf %765, %764 : vector<8x128xf32>
    %cst_490 = arith.constant 5.000000e-01 : f32
    %767 = vector.broadcast %cst_490 : f32 to vector<8x128xf32>
    %768 = arith.addf %766, %767 : vector<8x128xf32>
    %769 = arith.select %19, %764, %768 : vector<8x128xi1>, vector<8x128xf32>
    %770 = vector.extract_strided_slice %769 {offsets = [0, 0], sizes = [8, 32], strides = [1, 1]} : vector<8x128xf32> to vector<8x32xf32>
    %771 = vector.extract_strided_slice %769 {offsets = [0, 32], sizes = [8, 32], strides = [1, 1]} : vector<8x128xf32> to vector<8x32xf32>
    %772 = vector.extract_strided_slice %769 {offsets = [0, 64], sizes = [8, 32], strides = [1, 1]} : vector<8x128xf32> to vector<8x32xf32>
    %773 = vector.extract_strided_slice %769 {offsets = [0, 96], sizes = [8, 32], strides = [1, 1]} : vector<8x128xf32> to vector<8x32xf32>
    %c0_491 = arith.constant 0 : index
    %c64_492 = arith.constant 64 : index
    %774 = vector.load %arg10[%c0_491, %c64_492] : memref<8x128xf32, #tpu.memory_space<vmem>>, vector<8x32xf32>
    %775 = arith.mulf %771, %774 : vector<8x32xf32>
    %776 = arith.mulf %770, %772 : vector<8x32xf32>
    %777 = arith.addf %775, %776 : vector<8x32xf32>
    %778 = math.tanh %777 : vector<8x32xf32>
    %779 = arith.mulf %773, %778 : vector<8x32xf32>
    %c0_493 = arith.constant 0 : index
    %c64_494 = arith.constant 64 : index
    %780 = vector.load %arg10[%c0_493, %c64_494] : memref<8x128xf32, #tpu.memory_space<vmem>>, vector<8x32xf32>
    tpu.vector_store %arg10[%c0_493, %c64_494], %777 {strides = array<i32>} : memref<8x128xf32, #tpu.memory_space<vmem>>, vector<8x32xf32>,
    %c0_495 = arith.constant 0 : index
    %c64_496 = arith.constant 64 : index
    %781 = vector.load %arg9[%c0_495, %c64_496] : memref<8x128xf32, #tpu.memory_space<vmem>>, vector<8x32xf32>
    tpu.vector_store %arg9[%c0_495, %c64_496], %779 {strides = array<i32>} : memref<8x128xf32, #tpu.memory_space<vmem>>, vector<8x32xf32>,
    %c2_497 = arith.constant 2 : index
    %c0_498 = arith.constant 0 : index
    %c0_499 = arith.constant 0 : index
    %782 = vector.load %arg3[%c2_497, %c0_498, %c0_499] : memref<3x32x128xf32, #tpu.memory_space<vmem>>, vector<1x32x128xf32>
    %783 = vector.shape_cast %782 : vector<1x32x128xf32> to vector<32x128xf32>
    %cst_500 = arith.constant dense<0.000000e+00> : vector<8x128xf32>
    %784 = tpu.matmul %779, %783, %cst_500 {dimension_numbers = #tpu.dot_dimension_numbers<[1], [0], [0], [1], [0, 0, 1, 1], [], []>} : vector<8x32xf32>, vector<32x128xf32>, vector<8x128xf32> -> vector<8x128xf32>
    %c0_501 = arith.constant 0 : index
    %c96_502 = arith.constant 96 : index
    %785 = vector.load %arg9[%c0_501, %c96_502] : memref<8x128xf32, #tpu.memory_space<vmem>>, vector<8x32xf32>
    %c3_503 = arith.constant 3 : index
    %c0_504 = arith.constant 0 : index
    %c0_505 = arith.constant 0 : index
    %786 = vector.load %arg5[%c3_503, %c0_504, %c0_505] : memref<4x32x128xf32, #tpu.memory_space<vmem>>, vector<1x32x128xf32>
    %787 = vector.shape_cast %786 : vector<1x32x128xf32> to vector<32x128xf32>
    %cst_506 = arith.constant dense<0.000000e+00> : vector<8x128xf32>
    %788 = tpu.matmul %785, %787, %cst_506 {dimension_numbers = #tpu.dot_dimension_numbers<[1], [0], [0], [1], [0, 0, 1, 1], [], []>} : vector<8x32xf32>, vector<32x128xf32>, vector<8x128xf32> -> vector<8x128xf32>
    %789 = arith.addf %784, %788 : vector<8x128xf32>
    %790 = vector.broadcast %25 : vector<1x128xf32> to vector<8x128xf32>
    %791 = arith.addf %789, %790 : vector<8x128xf32>
    %792 = math.tanh %791 : vector<8x128xf32>
    %cst_507 = arith.constant 5.000000e-01 : f32
    %793 = vector.broadcast %cst_507 : f32 to vector<8x128xf32>
    %794 = arith.mulf %793, %792 : vector<8x128xf32>
    %cst_508 = arith.constant 5.000000e-01 : f32
    %795 = vector.broadcast %cst_508 : f32 to vector<8x128xf32>
    %796 = arith.addf %794, %795 : vector<8x128xf32>
    %797 = arith.select %19, %792, %796 : vector<8x128xi1>, vector<8x128xf32>
    %798 = vector.extract_strided_slice %797 {offsets = [0, 0], sizes = [8, 32], strides = [1, 1]} : vector<8x128xf32> to vector<8x32xf32>
    %799 = vector.extract_strided_slice %797 {offsets = [0, 32], sizes = [8, 32], strides = [1, 1]} : vector<8x128xf32> to vector<8x32xf32>
    %800 = vector.extract_strided_slice %797 {offsets = [0, 64], sizes = [8, 32], strides = [1, 1]} : vector<8x128xf32> to vector<8x32xf32>
    %801 = vector.extract_strided_slice %797 {offsets = [0, 96], sizes = [8, 32], strides = [1, 1]} : vector<8x128xf32> to vector<8x32xf32>
    %c0_509 = arith.constant 0 : index
    %c96_510 = arith.constant 96 : index
    %802 = vector.load %arg10[%c0_509, %c96_510] : memref<8x128xf32, #tpu.memory_space<vmem>>, vector<8x32xf32>
    %803 = arith.mulf %799, %802 : vector<8x32xf32>
    %804 = arith.mulf %798, %800 : vector<8x32xf32>
    %805 = arith.addf %803, %804 : vector<8x32xf32>
    %806 = math.tanh %805 : vector<8x32xf32>
    %807 = arith.mulf %801, %806 : vector<8x32xf32>
    %c0_511 = arith.constant 0 : index
    %c96_512 = arith.constant 96 : index
    %808 = vector.load %arg10[%c0_511, %c96_512] : memref<8x128xf32, #tpu.memory_space<vmem>>, vector<8x32xf32>
    tpu.vector_store %arg10[%c0_511, %c96_512], %805 {strides = array<i32>} : memref<8x128xf32, #tpu.memory_space<vmem>>, vector<8x32xf32>,
    %c0_513 = arith.constant 0 : index
    %c96_514 = arith.constant 96 : index
    %809 = vector.load %arg9[%c0_513, %c96_514] : memref<8x128xf32, #tpu.memory_space<vmem>>, vector<8x32xf32>
    tpu.vector_store %arg9[%c0_513, %c96_514], %807 {strides = array<i32>} : memref<8x128xf32, #tpu.memory_space<vmem>>, vector<8x32xf32>,
    %c7_i32 = arith.constant 7 : i32
    %810 = arith.index_cast %c7_i32 : i32 to index
    %c0_515 = arith.constant 0 : index
    %c0_516 = arith.constant 0 : index
    %811 = vector.load %arg11[%810, %c0_515, %c0_516] : memref<8x8x128xf32, #tpu.memory_space<vmem>>, vector<1x8x128xf32>
    %812 = vector.shape_cast %811 : vector<1x8x128xf32> to vector<8x128xf32>
    %c0_517 = arith.constant 0 : index
    %c0_518 = arith.constant 0 : index
    %813 = vector.load %arg9[%c0_517, %c0_518] : memref<8x128xf32, #tpu.memory_space<vmem>>, vector<8x32xf32>
    %c0_519 = arith.constant 0 : index
    %c0_520 = arith.constant 0 : index
    %c0_521 = arith.constant 0 : index
    %814 = vector.load %arg5[%c0_519, %c0_520, %c0_521] : memref<4x32x128xf32, #tpu.memory_space<vmem>>, vector<1x32x128xf32>
    %815 = vector.shape_cast %814 : vector<1x32x128xf32> to vector<32x128xf32>
    %cst_522 = arith.constant dense<0.000000e+00> : vector<8x128xf32>
    %816 = tpu.matmul %813, %815, %cst_522 {dimension_numbers = #tpu.dot_dimension_numbers<[1], [0], [0], [1], [0, 0, 1, 1], [], []>} : vector<8x32xf32>, vector<32x128xf32>, vector<8x128xf32> -> vector<8x128xf32>
    %817 = arith.addf %812, %816 : vector<8x128xf32>
    %818 = math.tanh %817 : vector<8x128xf32>
    %cst_523 = arith.constant 5.000000e-01 : f32
    %819 = vector.broadcast %cst_523 : f32 to vector<8x128xf32>
    %820 = arith.mulf %819, %818 : vector<8x128xf32>
    %cst_524 = arith.constant 5.000000e-01 : f32
    %821 = vector.broadcast %cst_524 : f32 to vector<8x128xf32>
    %822 = arith.addf %820, %821 : vector<8x128xf32>
    %823 = arith.select %19, %818, %822 : vector<8x128xi1>, vector<8x128xf32>
    %824 = vector.extract_strided_slice %823 {offsets = [0, 0], sizes = [8, 32], strides = [1, 1]} : vector<8x128xf32> to vector<8x32xf32>
    %825 = vector.extract_strided_slice %823 {offsets = [0, 32], sizes = [8, 32], strides = [1, 1]} : vector<8x128xf32> to vector<8x32xf32>
    %826 = vector.extract_strided_slice %823 {offsets = [0, 64], sizes = [8, 32], strides = [1, 1]} : vector<8x128xf32> to vector<8x32xf32>
    %827 = vector.extract_strided_slice %823 {offsets = [0, 96], sizes = [8, 32], strides = [1, 1]} : vector<8x128xf32> to vector<8x32xf32>
    %c0_525 = arith.constant 0 : index
    %c0_526 = arith.constant 0 : index
    %828 = vector.load %arg10[%c0_525, %c0_526] : memref<8x128xf32, #tpu.memory_space<vmem>>, vector<8x32xf32>
    %829 = arith.mulf %825, %828 : vector<8x32xf32>
    %830 = arith.mulf %824, %826 : vector<8x32xf32>
    %831 = arith.addf %829, %830 : vector<8x32xf32>
    %832 = math.tanh %831 : vector<8x32xf32>
    %833 = arith.mulf %827, %832 : vector<8x32xf32>
    %c0_527 = arith.constant 0 : index
    %c0_528 = arith.constant 0 : index
    %834 = vector.load %arg10[%c0_527, %c0_528] : memref<8x128xf32, #tpu.memory_space<vmem>>, vector<8x32xf32>
    tpu.vector_store %arg10[%c0_527, %c0_528], %831 {strides = array<i32>} : memref<8x128xf32, #tpu.memory_space<vmem>>, vector<8x32xf32>,
    %c0_529 = arith.constant 0 : index
    %c0_530 = arith.constant 0 : index
    %835 = vector.load %arg9[%c0_529, %c0_530] : memref<8x128xf32, #tpu.memory_space<vmem>>, vector<8x32xf32>
    tpu.vector_store %arg9[%c0_529, %c0_530], %833 {strides = array<i32>} : memref<8x128xf32, #tpu.memory_space<vmem>>, vector<8x32xf32>,
    %c0_531 = arith.constant 0 : index
    %c0_532 = arith.constant 0 : index
    %c0_533 = arith.constant 0 : index
    %836 = vector.load %arg3[%c0_531, %c0_532, %c0_533] : memref<3x32x128xf32, #tpu.memory_space<vmem>>, vector<1x32x128xf32>
    %837 = vector.shape_cast %836 : vector<1x32x128xf32> to vector<32x128xf32>
    %cst_534 = arith.constant dense<0.000000e+00> : vector<8x128xf32>
    %838 = tpu.matmul %833, %837, %cst_534 {dimension_numbers = #tpu.dot_dimension_numbers<[1], [0], [0], [1], [0, 0, 1, 1], [], []>} : vector<8x32xf32>, vector<32x128xf32>, vector<8x128xf32> -> vector<8x128xf32>
    %c0_535 = arith.constant 0 : index
    %c32_536 = arith.constant 32 : index
    %839 = vector.load %arg9[%c0_535, %c32_536] : memref<8x128xf32, #tpu.memory_space<vmem>>, vector<8x32xf32>
    %c1_537 = arith.constant 1 : index
    %c0_538 = arith.constant 0 : index
    %c0_539 = arith.constant 0 : index
    %840 = vector.load %arg5[%c1_537, %c0_538, %c0_539] : memref<4x32x128xf32, #tpu.memory_space<vmem>>, vector<1x32x128xf32>
    %841 = vector.shape_cast %840 : vector<1x32x128xf32> to vector<32x128xf32>
    %cst_540 = arith.constant dense<0.000000e+00> : vector<8x128xf32>
    %842 = tpu.matmul %839, %841, %cst_540 {dimension_numbers = #tpu.dot_dimension_numbers<[1], [0], [0], [1], [0, 0, 1, 1], [], []>} : vector<8x32xf32>, vector<32x128xf32>, vector<8x128xf32> -> vector<8x128xf32>
    %843 = arith.addf %838, %842 : vector<8x128xf32>
    %844 = vector.broadcast %21 : vector<1x128xf32> to vector<8x128xf32>
    %845 = arith.addf %843, %844 : vector<8x128xf32>
    %846 = math.tanh %845 : vector<8x128xf32>
    %cst_541 = arith.constant 5.000000e-01 : f32
    %847 = vector.broadcast %cst_541 : f32 to vector<8x128xf32>
    %848 = arith.mulf %847, %846 : vector<8x128xf32>
    %cst_542 = arith.constant 5.000000e-01 : f32
    %849 = vector.broadcast %cst_542 : f32 to vector<8x128xf32>
    %850 = arith.addf %848, %849 : vector<8x128xf32>
    %851 = arith.select %19, %846, %850 : vector<8x128xi1>, vector<8x128xf32>
    %852 = vector.extract_strided_slice %851 {offsets = [0, 0], sizes = [8, 32], strides = [1, 1]} : vector<8x128xf32> to vector<8x32xf32>
    %853 = vector.extract_strided_slice %851 {offsets = [0, 32], sizes = [8, 32], strides = [1, 1]} : vector<8x128xf32> to vector<8x32xf32>
    %854 = vector.extract_strided_slice %851 {offsets = [0, 64], sizes = [8, 32], strides = [1, 1]} : vector<8x128xf32> to vector<8x32xf32>
    %855 = vector.extract_strided_slice %851 {offsets = [0, 96], sizes = [8, 32], strides = [1, 1]} : vector<8x128xf32> to vector<8x32xf32>
    %c0_543 = arith.constant 0 : index
    %c32_544 = arith.constant 32 : index
    %856 = vector.load %arg10[%c0_543, %c32_544] : memref<8x128xf32, #tpu.memory_space<vmem>>, vector<8x32xf32>
    %857 = arith.mulf %853, %856 : vector<8x32xf32>
    %858 = arith.mulf %852, %854 : vector<8x32xf32>
    %859 = arith.addf %857, %858 : vector<8x32xf32>
    %860 = math.tanh %859 : vector<8x32xf32>
    %861 = arith.mulf %855, %860 : vector<8x32xf32>
    %c0_545 = arith.constant 0 : index
    %c32_546 = arith.constant 32 : index
    %862 = vector.load %arg10[%c0_545, %c32_546] : memref<8x128xf32, #tpu.memory_space<vmem>>, vector<8x32xf32>
    tpu.vector_store %arg10[%c0_545, %c32_546], %859 {strides = array<i32>} : memref<8x128xf32, #tpu.memory_space<vmem>>, vector<8x32xf32>,
    %c0_547 = arith.constant 0 : index
    %c32_548 = arith.constant 32 : index
    %863 = vector.load %arg9[%c0_547, %c32_548] : memref<8x128xf32, #tpu.memory_space<vmem>>, vector<8x32xf32>
    tpu.vector_store %arg9[%c0_547, %c32_548], %861 {strides = array<i32>} : memref<8x128xf32, #tpu.memory_space<vmem>>, vector<8x32xf32>,
    %cst_549 = arith.constant 0.000000e+00 : f32
    %864 = vector.broadcast %cst_549 : f32 to vector<8x32xf32>
    %865 = arith.maximumf %861, %864 : vector<8x32xf32>
    %c1_550 = arith.constant 1 : index
    %c0_551 = arith.constant 0 : index
    %c0_552 = arith.constant 0 : index
    %866 = vector.load %arg3[%c1_550, %c0_551, %c0_552] : memref<3x32x128xf32, #tpu.memory_space<vmem>>, vector<1x32x128xf32>
    %867 = vector.shape_cast %866 : vector<1x32x128xf32> to vector<32x128xf32>
    %cst_553 = arith.constant dense<0.000000e+00> : vector<8x128xf32>
    %868 = tpu.matmul %865, %867, %cst_553 {dimension_numbers = #tpu.dot_dimension_numbers<[1], [0], [0], [1], [0, 0, 1, 1], [], []>} : vector<8x32xf32>, vector<32x128xf32>, vector<8x128xf32> -> vector<8x128xf32>
    %c0_554 = arith.constant 0 : index
    %c64_555 = arith.constant 64 : index
    %869 = vector.load %arg9[%c0_554, %c64_555] : memref<8x128xf32, #tpu.memory_space<vmem>>, vector<8x32xf32>
    %c2_556 = arith.constant 2 : index
    %c0_557 = arith.constant 0 : index
    %c0_558 = arith.constant 0 : index
    %870 = vector.load %arg5[%c2_556, %c0_557, %c0_558] : memref<4x32x128xf32, #tpu.memory_space<vmem>>, vector<1x32x128xf32>
    %871 = vector.shape_cast %870 : vector<1x32x128xf32> to vector<32x128xf32>
    %cst_559 = arith.constant dense<0.000000e+00> : vector<8x128xf32>
    %872 = tpu.matmul %869, %871, %cst_559 {dimension_numbers = #tpu.dot_dimension_numbers<[1], [0], [0], [1], [0, 0, 1, 1], [], []>} : vector<8x32xf32>, vector<32x128xf32>, vector<8x128xf32> -> vector<8x128xf32>
    %873 = arith.addf %868, %872 : vector<8x128xf32>
    %874 = vector.broadcast %23 : vector<1x128xf32> to vector<8x128xf32>
    %875 = arith.addf %873, %874 : vector<8x128xf32>
    %876 = math.tanh %875 : vector<8x128xf32>
    %cst_560 = arith.constant 5.000000e-01 : f32
    %877 = vector.broadcast %cst_560 : f32 to vector<8x128xf32>
    %878 = arith.mulf %877, %876 : vector<8x128xf32>
    %cst_561 = arith.constant 5.000000e-01 : f32
    %879 = vector.broadcast %cst_561 : f32 to vector<8x128xf32>
    %880 = arith.addf %878, %879 : vector<8x128xf32>
    %881 = arith.select %19, %876, %880 : vector<8x128xi1>, vector<8x128xf32>
    %882 = vector.extract_strided_slice %881 {offsets = [0, 0], sizes = [8, 32], strides = [1, 1]} : vector<8x128xf32> to vector<8x32xf32>
    %883 = vector.extract_strided_slice %881 {offsets = [0, 32], sizes = [8, 32], strides = [1, 1]} : vector<8x128xf32> to vector<8x32xf32>
    %884 = vector.extract_strided_slice %881 {offsets = [0, 64], sizes = [8, 32], strides = [1, 1]} : vector<8x128xf32> to vector<8x32xf32>
    %885 = vector.extract_strided_slice %881 {offsets = [0, 96], sizes = [8, 32], strides = [1, 1]} : vector<8x128xf32> to vector<8x32xf32>
    %c0_562 = arith.constant 0 : index
    %c64_563 = arith.constant 64 : index
    %886 = vector.load %arg10[%c0_562, %c64_563] : memref<8x128xf32, #tpu.memory_space<vmem>>, vector<8x32xf32>
    %887 = arith.mulf %883, %886 : vector<8x32xf32>
    %888 = arith.mulf %882, %884 : vector<8x32xf32>
    %889 = arith.addf %887, %888 : vector<8x32xf32>
    %890 = math.tanh %889 : vector<8x32xf32>
    %891 = arith.mulf %885, %890 : vector<8x32xf32>
    %c0_564 = arith.constant 0 : index
    %c64_565 = arith.constant 64 : index
    %892 = vector.load %arg10[%c0_564, %c64_565] : memref<8x128xf32, #tpu.memory_space<vmem>>, vector<8x32xf32>
    tpu.vector_store %arg10[%c0_564, %c64_565], %889 {strides = array<i32>} : memref<8x128xf32, #tpu.memory_space<vmem>>, vector<8x32xf32>,
    %c0_566 = arith.constant 0 : index
    %c64_567 = arith.constant 64 : index
    %893 = vector.load %arg9[%c0_566, %c64_567] : memref<8x128xf32, #tpu.memory_space<vmem>>, vector<8x32xf32>
    tpu.vector_store %arg9[%c0_566, %c64_567], %891 {strides = array<i32>} : memref<8x128xf32, #tpu.memory_space<vmem>>, vector<8x32xf32>,
    %c2_568 = arith.constant 2 : index
    %c0_569 = arith.constant 0 : index
    %c0_570 = arith.constant 0 : index
    %894 = vector.load %arg3[%c2_568, %c0_569, %c0_570] : memref<3x32x128xf32, #tpu.memory_space<vmem>>, vector<1x32x128xf32>
    %895 = vector.shape_cast %894 : vector<1x32x128xf32> to vector<32x128xf32>
    %cst_571 = arith.constant dense<0.000000e+00> : vector<8x128xf32>
    %896 = tpu.matmul %891, %895, %cst_571 {dimension_numbers = #tpu.dot_dimension_numbers<[1], [0], [0], [1], [0, 0, 1, 1], [], []>} : vector<8x32xf32>, vector<32x128xf32>, vector<8x128xf32> -> vector<8x128xf32>
    %c0_572 = arith.constant 0 : index
    %c96_573 = arith.constant 96 : index
    %897 = vector.load %arg9[%c0_572, %c96_573] : memref<8x128xf32, #tpu.memory_space<vmem>>, vector<8x32xf32>
    %c3_574 = arith.constant 3 : index
    %c0_575 = arith.constant 0 : index
    %c0_576 = arith.constant 0 : index
    %898 = vector.load %arg5[%c3_574, %c0_575, %c0_576] : memref<4x32x128xf32, #tpu.memory_space<vmem>>, vector<1x32x128xf32>
    %899 = vector.shape_cast %898 : vector<1x32x128xf32> to vector<32x128xf32>
    %cst_577 = arith.constant dense<0.000000e+00> : vector<8x128xf32>
    %900 = tpu.matmul %897, %899, %cst_577 {dimension_numbers = #tpu.dot_dimension_numbers<[1], [0], [0], [1], [0, 0, 1, 1], [], []>} : vector<8x32xf32>, vector<32x128xf32>, vector<8x128xf32> -> vector<8x128xf32>
    %901 = arith.addf %896, %900 : vector<8x128xf32>
    %902 = vector.broadcast %25 : vector<1x128xf32> to vector<8x128xf32>
    %903 = arith.addf %901, %902 : vector<8x128xf32>
    %904 = math.tanh %903 : vector<8x128xf32>
    %cst_578 = arith.constant 5.000000e-01 : f32
    %905 = vector.broadcast %cst_578 : f32 to vector<8x128xf32>
    %906 = arith.mulf %905, %904 : vector<8x128xf32>
    %cst_579 = arith.constant 5.000000e-01 : f32
    %907 = vector.broadcast %cst_579 : f32 to vector<8x128xf32>
    %908 = arith.addf %906, %907 : vector<8x128xf32>
    %909 = arith.select %19, %904, %908 : vector<8x128xi1>, vector<8x128xf32>
    %910 = vector.extract_strided_slice %909 {offsets = [0, 0], sizes = [8, 32], strides = [1, 1]} : vector<8x128xf32> to vector<8x32xf32>
    %911 = vector.extract_strided_slice %909 {offsets = [0, 32], sizes = [8, 32], strides = [1, 1]} : vector<8x128xf32> to vector<8x32xf32>
    %912 = vector.extract_strided_slice %909 {offsets = [0, 64], sizes = [8, 32], strides = [1, 1]} : vector<8x128xf32> to vector<8x32xf32>
    %913 = vector.extract_strided_slice %909 {offsets = [0, 96], sizes = [8, 32], strides = [1, 1]} : vector<8x128xf32> to vector<8x32xf32>
    %c0_580 = arith.constant 0 : index
    %c96_581 = arith.constant 96 : index
    %914 = vector.load %arg10[%c0_580, %c96_581] : memref<8x128xf32, #tpu.memory_space<vmem>>, vector<8x32xf32>
    %915 = arith.mulf %911, %914 : vector<8x32xf32>
    %916 = arith.mulf %910, %912 : vector<8x32xf32>
    %917 = arith.addf %915, %916 : vector<8x32xf32>
    %918 = math.tanh %917 : vector<8x32xf32>
    %919 = arith.mulf %913, %918 : vector<8x32xf32>
    %c0_582 = arith.constant 0 : index
    %c96_583 = arith.constant 96 : index
    %920 = vector.load %arg10[%c0_582, %c96_583] : memref<8x128xf32, #tpu.memory_space<vmem>>, vector<8x32xf32>
    tpu.vector_store %arg10[%c0_582, %c96_583], %917 {strides = array<i32>} : memref<8x128xf32, #tpu.memory_space<vmem>>, vector<8x32xf32>,
    %c0_584 = arith.constant 0 : index
    %c96_585 = arith.constant 96 : index
    %921 = vector.load %arg9[%c0_584, %c96_585] : memref<8x128xf32, #tpu.memory_space<vmem>>, vector<8x32xf32>
    tpu.vector_store %arg9[%c0_584, %c96_585], %919 {strides = array<i32>} : memref<8x128xf32, #tpu.memory_space<vmem>>, vector<8x32xf32>,
    %c8_i32 = arith.constant 8 : i32
    %c0_586 = arith.constant 0 : index
    %c96_587 = arith.constant 96 : index
    %922 = vector.load %arg9[%c0_586, %c96_587] : memref<8x128xf32, #tpu.memory_space<vmem>>, vector<8x32xf32>
    %c0_588 = arith.constant 0 : index
    %c0_589 = arith.constant 0 : index
    %923 = vector.load %arg6[%c0_588, %c0_589] : memref<32x128xf32, #tpu.memory_space<vmem>>, vector<32x128xf32>
    %cst_590 = arith.constant dense<0.000000e+00> : vector<8x128xf32>
    %924 = tpu.matmul %922, %923, %cst_590 {dimension_numbers = #tpu.dot_dimension_numbers<[1], [0], [0], [1], [0, 0, 1, 1], [], []>} : vector<8x32xf32>, vector<32x128xf32>, vector<8x128xf32> -> vector<8x128xf32>
    %c0_591 = arith.constant 0 : index
    %c0_592 = arith.constant 0 : index
    %925 = vector.load %arg7[%c0_591, %c0_592] : memref<1x128xf32, #tpu.memory_space<vmem>>, vector<1x128xf32>
    %926 = vector.broadcast %925 : vector<1x128xf32> to vector<8x128xf32>
    %927 = arith.addf %924, %926 : vector<8x128xf32>
    %c0_593 = arith.constant 0 : index
    %c0_594 = arith.constant 0 : index
    %928 = vector.load %arg8[%c0_593, %c0_594] : memref<8x128xf32, #tpu.memory_space<vmem>>, vector<8x128xf32>
    tpu.vector_store %arg8[%c0_593, %c0_594], %927 {strides = array<i32>} : memref<8x128xf32, #tpu.memory_space<vmem>>, vector<8x128xf32>,
    return
  }
}

</mosaic_0001>

<llo_original>
// kernel: tpu_custom_call.1
$region0: #{tpu_custom_call.1}
  #allocation0 [shape = 'u32[]', space=smem, size = 0x4, offset = 0x4, fixed_abs, tag = 'smem constant byte address 0x4 - core index']
  #allocation1 [shape = 'u32[144,128]{1,0:T(1,128)}', space=vmem, size = 0x12000, scoped, tag = 'internal scratch']
  #allocation2 [shape = 'f32[8,128]{1,0:T(8,128)}', space=vmem, size = 0x1000, scoped, tag = 'scratch operand']
  #allocation3 [shape = 'f32[8,128]{1,0:T(8,128)}', space=vmem, size = 0x1000, scoped, tag = 'scratch operand']
  #allocation4 [shape = 'f32[8,8,128]{2,1,0:T(8,128)}', space=vmem, size = 0x8000, scoped, tag = 'scratch operand']
  %s0 = inlined_call_operand.hbm [shape: f32[8,8,8], index: 0, kind: input, shape index: {}]
  %s1 = inlined_call_operand.hbm [shape: f32[8,128], index: 1, kind: input, shape index: {}]
  %s2 = inlined_call_operand.vmem [shape: f32[1,128], index: 2, kind: input, shape index: {}]
  %s3 = inlined_call_operand.hbm [shape: f32[3,32,128], index: 3, kind: input, shape index: {}]
  %s4 = inlined_call_operand.vmem [shape: f32[3,1,128], index: 4, kind: input, shape index: {}]
  %s5 = inlined_call_operand.hbm [shape: f32[4,32,128], index: 5, kind: input, shape index: {}]
  %s6 = inlined_call_operand.hbm [shape: f32[32,128], index: 6, kind: input, shape index: {}]
  %s7 = inlined_call_operand.vmem [shape: f32[1,128], index: 7, kind: input, shape index: {}]
  %s8 = inlined_call_operand.hbm [shape: f32[8,128], index: 8, kind: output, shape index: {}]
  %s9 = sld [smem:[#allocation0]]
  $region62: #{tpu_custom_call.1} parent=0
    _
  %s11 = ssub.s32 1, %s9
  %s12 = scalar_select 0, %s11, %s9
  $region1: #{tpu_custom_call.1} parent=0
    #allocation5 [shape = 'u8[32768]{0}', space=vmem, size = 0x8000, scoped, tag = 'input window, operand 0, single buffered']
    #allocation6 [shape = 's32[1]{0}', space=sflag, size = 0x4, scoped, tag = 'scoped memory for tpu_custom_call.1']
    #allocation7 [shape = 's32[1]{0}', space=sflag, size = 0x4, scoped, tag = 'scoped memory for tpu_custom_call.1']
    #allocation8 [shape = 'u8[4096]{0}', space=vmem, size = 0x1000, scoped, tag = 'input window, operand 1, single buffered']
    #allocation9 [shape = 's32[1]{0}', space=sflag, size = 0x4, scoped, tag = 'scoped memory for tpu_custom_call.1']
    #allocation10 [shape = 'u8[49152]{0}', space=vmem, size = 0xc000, scoped, tag = 'input window, operand 3, single buffered']
    #allocation11 [shape = 'u8[65536]{0}', space=vmem, size = 0x10000, scoped, tag = 'input window, operand 5, single buffered']
    #allocation12 [shape = 's32[1]{0}', space=sflag, size = 0x4, scoped, tag = 'scoped memory for tpu_custom_call.1']
    #allocation13 [shape = 'u8[16384]{0}', space=vmem, size = 0x4000, scoped, tag = 'input window, operand 6, single buffered']
    #allocation14 [shape = 'u8[4096]{0}', space=vmem, size = 0x1000, scoped, tag = 'output window, operand 0, single buffered']
    %13 = vsyncpa [#allocation6], 0
    %14 = vsyncpa [#allocation9], 0
    %15 = vsyncpa [#allocation12], 0
    %16 = vsyncpa [#allocation7], 0
    // Predicated region
    $region2: #{tpu_custom_call.1} parent=1 // pred_check
      _
    $region3: #{tpu_custom_call.1} parent=1 // pred_check_branch
      %18 = sbr.rel (0) target = $region5
    $region4: #{tpu_custom_call.1} parent=1 // pred_region
      %s20 = ssub.s32 1024, 1024
      %21 = vsyncadd [#allocation6], %s20
      %s22 = sshll.u32 [#allocation5], 4
      %s23 = int_to_ptr.vmem [resolvable:$true] %s22
      %28 = dma.hbm_to_vmem [thread:$0]  %s0, 1024, %s23, [#allocation6], 128, 128, 8
    $region5: #{tpu_custom_call.1} parent=1 // pred_fallthru
      _
    // Predicated region
    $region6: #{tpu_custom_call.1} parent=1 // pred_check
      _
    $region7: #{tpu_custom_call.1} parent=1 // pred_check_branch
      %30 = sbr.rel (0) target = $region9
    $region8: #{tpu_custom_call.1} parent=1 // pred_region
      %s32 = ssub.s32 128, 128
      %33 = vsyncadd [#allocation9], %s32
      %s35 = sshll.u32 [#allocation8], 4
      %s36 = int_to_ptr.vmem [resolvable:$true] %s35
      %38 = dma.hbm_to_vmem [thread:$0]  %s1, 128, %s36, [#allocation9]
    $region9: #{tpu_custom_call.1} parent=1 // pred_fallthru
      _
    // Predicated region
    $region10: #{tpu_custom_call.1} parent=1 // pred_check
      _
    $region11: #{tpu_custom_call.1} parent=1 // pred_check_branch
      %40 = sbr.rel (0) target = $region13
    $region12: #{tpu_custom_call.1} parent=1 // pred_region
      _
    $region13: #{tpu_custom_call.1} parent=1 // pred_fallthru
      _
    // Predicated region
    $region14: #{tpu_custom_call.1} parent=1 // pred_check
      _
    $region15: #{tpu_custom_call.1} parent=1 // pred_check_branch
      %42 = sbr.rel (0) target = $region17
    $region16: #{tpu_custom_call.1} parent=1 // pred_region
      %s44 = ssub.s32 1536, 1536
      %45 = vsyncadd [#allocation9], %s44
      %s46 = sshll.u32 [#allocation10], 4
      %s47 = int_to_ptr.vmem [resolvable:$true] %s46
      %52 = dma.hbm_to_vmem [thread:$0]  %s3, 1536, %s47, [#allocation9], 128, 128, 8
    $region17: #{tpu_custom_call.1} parent=1 // pred_fallthru
      _
    // Predicated region
    $region18: #{tpu_custom_call.1} parent=1 // pred_check
      _
    $region19: #{tpu_custom_call.1} parent=1 // pred_check_branch
      %54 = sbr.rel (0) target = $region21
    $region20: #{tpu_custom_call.1} parent=1 // pred_region
      _
    $region21: #{tpu_custom_call.1} parent=1 // pred_fallthru
      _
    // Predicated region
    $region22: #{tpu_custom_call.1} parent=1 // pred_check
      _
    $region23: #{tpu_custom_call.1} parent=1 // pred_check_branch
      %56 = sbr.rel (0) target = $region25
    $region24: #{tpu_custom_call.1} parent=1 // pred_region
      %s58 = ssub.s32 2048, 2048
      %59 = vsyncadd [#allocation12], %s58
      %s60 = sshll.u32 [#allocation11], 4
      %s61 = int_to_ptr.vmem [resolvable:$true] %s60
      %66 = dma.hbm_to_vmem [thread:$0]  %s5, 2048, %s61, [#allocation12], 128, 128, 8
    $region25: #{tpu_custom_call.1} parent=1 // pred_fallthru
      _
    // Predicated region
    $region26: #{tpu_custom_call.1} parent=1 // pred_check
      _
    $region27: #{tpu_custom_call.1} parent=1 // pred_check_branch
      %68 = sbr.rel (0) target = $region29
    $region28: #{tpu_custom_call.1} parent=1 // pred_region
      %s70 = ssub.s32 512, 512
      %71 = vsyncadd [#allocation12], %s70
      %s72 = sshll.u32 [#allocation13], 4
      %s73 = int_to_ptr.vmem [resolvable:$true] %s72
      %78 = dma.hbm_to_vmem [thread:$0]  %s6, 512, %s73, [#allocation12], 128, 128, 8
    $region29: #{tpu_custom_call.1} parent=1 // pred_fallthru
      _
    // Predicated region
    $region30: #{tpu_custom_call.1} parent=1 // pred_check
      _
    $region31: #{tpu_custom_call.1} parent=1 // pred_check_branch
      %80 = sbr.rel (0) target = $region33
    $region32: #{tpu_custom_call.1} parent=1 // pred_region
      _
    $region33: #{tpu_custom_call.1} parent=1 // pred_fallthru
      _
    // Predicated region
    $region34: #{tpu_custom_call.1} parent=1 // pred_check
      _
    $region35: #{tpu_custom_call.1} parent=1 // pred_check_branch
      %82 = sbr.rel (0) target = $region37
    $region36: #{tpu_custom_call.1} parent=1 // pred_region
      %83 = dma.done [#allocation6], 1024
    $region37: #{tpu_custom_call.1} parent=1 // pred_fallthru
      _
    // Predicated region
    $region38: #{tpu_custom_call.1} parent=1 // pred_check
      _
    $region39: #{tpu_custom_call.1} parent=1 // pred_check_branch
      %85 = sbr.rel (0) target = $region41
    $region40: #{tpu_custom_call.1} parent=1 // pred_region
      %86 = dma.done [#allocation9], 128
    $region41: #{tpu_custom_call.1} parent=1 // pred_fallthru
      _
    // Predicated region
    $region42: #{tpu_custom_call.1} parent=1 // pred_check
      _
    $region43: #{tpu_custom_call.1} parent=1 // pred_check_branch
      %88 = sbr.rel (0) target = $region45
    $region44: #{tpu_custom_call.1} parent=1 // pred_region
      %89 = dma.done [#allocation9], 1536
    $region45: #{tpu_custom_call.1} parent=1 // pred_fallthru
      _
    // Predicated region
    $region46: #{tpu_custom_call.1} parent=1 // pred_check
      _
    $region47: #{tpu_custom_call.1} parent=1 // pred_check_branch
      %91 = sbr.rel (0) target = $region49
    $region48: #{tpu_custom_call.1} parent=1 // pred_region
      %92 = dma.done [#allocation12], 2048
    $region49: #{tpu_custom_call.1} parent=1 // pred_fallthru
      _
    // Predicated region
    $region50: #{tpu_custom_call.1} parent=1 // pred_check
      _
    $region51: #{tpu_custom_call.1} parent=1 // pred_check_branch
      %94 = sbr.rel (0) target = $region53
    $region52: #{tpu_custom_call.1} parent=1 // pred_region
      %95 = dma.done [#allocation12], 512
    $region53: #{tpu_custom_call.1} parent=1 // pred_fallthru
      _
    %96 = vst [vmem:[#allocation2] sm:$0xff] 0.0
    %97 = vst [vmem:[#allocation3] sm:$0xff] 0.0
    %v98 = vld [vmem:[#allocation5] sm:$0xff]
    %v99 = vld [vmem:[#allocation5 + $0x8] sm:$0xff]
    %v100 = vld [vmem:[#allocation5 + $0x10] sm:$0xff]
    %v101 = vld [vmem:[#allocation5 + $0x18] sm:$0xff]
    %v102 = vld [vmem:[#allocation5 + $0x20] sm:$0xff]
    %v103 = vld [vmem:[#allocation5 + $0x28] sm:$0xff]
    %v104 = vld [vmem:[#allocation5 + $0x30] sm:$0xff]
    %v105 = vld [vmem:[#allocation5 + $0x38] sm:$0xff]
    %v106 = vld [vmem:[#allocation8] sm:$0xff]
    %vm107 = vcmask 64512
    %v109 = vsel %vm107, %v98, 0
    %v112 = vsel %vm107, %v99, 0
    %v115 = vsel %vm107, %v100, 0
    %v118 = vsel %vm107, %v101, 0
    %v121 = vsel %vm107, %v102, 0
    %v124 = vsel %vm107, %v103, 0
    %v127 = vsel %vm107, %v104, 0
    %v130 = vsel %vm107, %v105, 0
    %132 = vmatprep.subr.mxu0 0.0
    %133 = vmatpush1.msra.mxu0 %v106
    %134 = vmatprep.subr.mxu0 0.0
    %135 = vmatpush1.msra.mxu0 0.0
    %136 = vmatprep.subr.mxu0 0.0
    %137 = vmatpush1.msra.mxu0 0.0
    %138 = vmatprep.subr.mxu0 0.0
    %139 = vmatpush1.msra.mxu0 0.0
    %140 = vmatprep.subr.mxu0 0.0
    %141 = vmatpush1.msra.mxu0 0.0
    %142 = vmatprep.subr.mxu0 0.0
    %143 = vmatpush1.msra.mxu0 0.0
    %144 = vmatprep.subr.mxu0 0.0
    %145 = vmatpush1.msra.mxu0 0.0
    %146 = vmatprep.subr.mxu0 0.0
    %147 = vmatpush1.msra.mxu0 0.0
    %148 = vmatprep.subr.mxu0 0.0
    %149 = vmatpush1.msra.mxu0 0.0
    %150 = vmatprep.subr.mxu0 0.0
    %151 = vmatpush1.msra.mxu0 0.0
    %152 = vmatprep.subr.mxu0 0.0
    %153 = vmatpush1.msra.mxu0 0.0
    %154 = vmatprep.subr.mxu0 0.0
    %155 = vmatpush1.msra.mxu0 0.0
    %156 = vmatprep.subr.mxu0 0.0
    %157 = vmatpush1.msra.mxu0 0.0
    %158 = vmatprep.subr.mxu0 0.0
    %159 = vmatpush1.msra.mxu0 0.0
    %160 = vmatprep.subr.mxu0 0.0
    %161 = vmatpush1.msra.mxu0 0.0
    %162 = vmatprep.subr.mxu0 0.0
    %163 = vmatpush1.msra.mxu0 0.0
    %164 = vmatprep.subr.mxu0 0.0
    %165 = vmatpush1.msra.mxu0 0.0
    %166 = vmatprep.subr.mxu0 0.0
    %167 = vmatpush1.msra.mxu0 0.0
    %168 = vmatprep.subr.mxu0 0.0
    %169 = vmatpush1.msra.mxu0 0.0
    %170 = vmatprep.subr.mxu0 0.0
    %171 = vmatpush1.msra.mxu0 0.0
    %172 = vmatprep.subr.mxu0 0.0
    %173 = vmatpush1.msra.mxu0 0.0
    %174 = vmatprep.subr.mxu0 0.0
    %175 = vmatpush1.msra.mxu0 0.0
    %176 = vmatprep.subr.mxu0 0.0
    %177 = vmatpush1.msra.mxu0 0.0
    %178 = vmatprep.subr.mxu0 0.0
    %179 = vmatpush1.msra.mxu0 0.0
    %180 = vmatprep.subr.mxu0 0.0
    %181 = vmatpush1.msra.mxu0 0.0
    %182 = vmatprep.subr.mxu0 0.0
    %183 = vmatpush1.msra.mxu0 0.0
    %184 = vmatprep.subr.mxu0 0.0
    %185 = vmatpush1.msra.mxu0 0.0
    %186 = vmatprep.subr.mxu0 0.0
    %187 = vmatpush1.msra.mxu0 0.0
    %188 = vmatprep.subr.mxu0 0.0
    %189 = vmatpush1.msra.mxu0 0.0
    %190 = vmatprep.subr.mxu0 0.0
    %191 = vmatpush1.msra.mxu0 0.0
    %192 = vmatprep.subr.mxu0 0.0
    %193 = vmatpush1.msra.mxu0 0.0
    %194 = vmatprep.subr.mxu0 0.0
    %195 = vmatpush1.msra.mxu0 0.0
    %196 = vmatprep.mubr.f32.mxu0 0.0
    %197 = vmatmul.mubr.f32.gmra.mrb[0].mxu0 %v109
    %v198 = vpop.f32.mrb[0].mxu0
    %v199 = vadd.f32 0.0, %v198
    %v200 = vpop.f32.mrb[0].mxu0
    %201 = vmatprep.mubr.f32.mxu0 0.0
    %202 = vmatmul.mubr.f32.gmra.mrb[0].mxu0 %v112
    %v203 = vpop.f32.mrb[0].mxu0
    %v204 = vadd.f32 0.0, %v203
    %v205 = vpop.f32.mrb[0].mxu0
    %206 = vmatprep.mubr.f32.mxu0 0.0
    %207 = vmatmul.mubr.f32.gmra.mrb[0].mxu0 %v115
    %v208 = vpop.f32.mrb[0].mxu0
    %v209 = vadd.f32 0.0, %v208
    %v210 = vpop.f32.mrb[0].mxu0
    %211 = vmatprep.mubr.f32.mxu0 0.0
    %212 = vmatmul.mubr.f32.gmra.mrb[0].mxu0 %v118
    %v213 = vpop.f32.mrb[0].mxu0
    %v214 = vadd.f32 0.0, %v213
    %v215 = vpop.f32.mrb[0].mxu0
    %216 = vmatprep.mubr.f32.mxu0 0.0
    %217 = vmatmul.mubr.f32.gmra.mrb[0].mxu0 %v121
    %v218 = vpop.f32.mrb[0].mxu0
    %v219 = vadd.f32 0.0, %v218
    %v220 = vpop.f32.mrb[0].mxu0
    %221 = vmatprep.mubr.f32.mxu0 0.0
    %222 = vmatmul.mubr.f32.gmra.mrb[0].mxu0 %v124
    %v223 = vpop.f32.mrb[0].mxu0
    %v224 = vadd.f32 0.0, %v223
    %v225 = vpop.f32.mrb[0].mxu0
    %226 = vmatprep.mubr.f32.mxu0 0.0
    %227 = vmatmul.mubr.f32.gmra.mrb[0].mxu0 %v127
    %v228 = vpop.f32.mrb[0].mxu0
    %v229 = vadd.f32 0.0, %v228
    %v230 = vpop.f32.mrb[0].mxu0
    %231 = vmatprep.mubr.f32.mxu0 0.0
    %232 = vmatmul.mubr.f32.gmra.mrb[0].mxu0 %v130
    %v233 = vpop.f32.mrb[0].mxu0
    %v234 = vadd.f32 0.0, %v233
    %v235 = vpop.f32.mrb[0].mxu0
    %236 = vdwg.mxu0
    %v237 = vld [vmem:[%s2] sm:$0x1]
    %v239 = vlaneseq
    %v240 = vshrl.u32 %v239, 7
    %v241 = vsub.s32 0, %v240
    %v242 = vrot.slane %v237, %v241
    %v244 = vadd.f32 %v199, %v242
    %v245 = vadd.f32 %v204, %v242
    %v246 = vadd.f32 %v209, %v242
    %v247 = vadd.f32 %v214, %v242
    %v248 = vadd.f32 %v219, %v242
    %v249 = vadd.f32 %v224, %v242
    %v250 = vadd.f32 %v229, %v242
    %v251 = vadd.f32 %v234, %v242
    %252 = vst [vmem:[#allocation4] sm:$0xff] %v244
    %253 = vst [vmem:[#allocation4 + $0x8] sm:$0xff] %v245
    %254 = vst [vmem:[#allocation4 + $0x10] sm:$0xff] %v246
    %255 = vst [vmem:[#allocation4 + $0x18] sm:$0xff] %v247
    %256 = vst [vmem:[#allocation4 + $0x20] sm:$0xff] %v248
    %257 = vst [vmem:[#allocation4 + $0x28] sm:$0xff] %v249
    %258 = vst [vmem:[#allocation4 + $0x30] sm:$0xff] %v250
    %259 = vst [vmem:[#allocation4 + $0x38] sm:$0xff] %v251
    %v260 = vlaneseq
    %v261 = vand.u32 %v260, 127
    %vm262 = vcmp.ge.s32.totalorder %v261, 64
    %vm263 = vcmp.lt.s32.totalorder %v261, 96
    %vm264 = vmand %vm262, %vm263
    %v265 = vld [vmem:[%s4] sm:$0x1]
    %s266 = scalar_lea.vmem %s4, 1
    %v267 = vld [vmem:[%s266] sm:$0x1]
    %s268 = scalar_lea.vmem %s4, 2
    %v269 = vld [vmem:[%s268] sm:$0x1]
    %v270 = vld [vmem:[#allocation4] sm:$0xff]
    %v271 = vld [vmem:[#allocation2] sm:$0xff]
    %v272 = vld [vmem:[#allocation11] sm:$0xff]
    %v273 = vld [vmem:[#allocation11 + $0x8] sm:$0xff]
    %v274 = vld [vmem:[#allocation11 + $0x10] sm:$0xff]
    %v275 = vld [vmem:[#allocation11 + $0x18] sm:$0xff]
    %vm276 = vcmask 261120
    %v278 = vsel %vm276, %v271, 0
    %280 = vmatprep.subr.mxu0 0.0
    %281 = vmatpush1.msra.mxu0 %v272
    %282 = vmatprep.subr.mxu0 0.0
    %283 = vmatpush1.msra.mxu0 %v273
    %284 = vmatprep.subr.mxu0 0.0
    %285 = vmatpush1.msra.mxu0 %v274
    %286 = vmatprep.subr.mxu0 0.0
    %287 = vmatpush1.msra.mxu0 %v275
    %288 = vmatprep.subr.mxu0 0.0
    %289 = vmatpush1.msra.mxu0 0.0
    %290 = vmatprep.subr.mxu0 0.0
    %291 = vmatpush1.msra.mxu0 0.0
    %292 = vmatprep.subr.mxu0 0.0
    %293 = vmatpush1.msra.mxu0 0.0
    %294 = vmatprep.subr.mxu0 0.0
    %295 = vmatpush1.msra.mxu0 0.0
    %296 = vmatprep.subr.mxu0 0.0
    %297 = vmatpush1.msra.mxu0 0.0
    %298 = vmatprep.subr.mxu0 0.0
    %299 = vmatpush1.msra.mxu0 0.0
    %300 = vmatprep.subr.mxu0 0.0
    %301 = vmatpush1.msra.mxu0 0.0
    %302 = vmatprep.subr.mxu0 0.0
    %303 = vmatpush1.msra.mxu0 0.0
    %304 = vmatprep.subr.mxu0 0.0
    %305 = vmatpush1.msra.mxu0 0.0
    %306 = vmatprep.subr.mxu0 0.0
    %307 = vmatpush1.msra.mxu0 0.0
    %308 = vmatprep.subr.mxu0 0.0
    %309 = vmatpush1.msra.mxu0 0.0
    %310 = vmatprep.subr.mxu0 0.0
    %311 = vmatpush1.msra.mxu0 0.0
    %312 = vmatprep.subr.mxu0 0.0
    %313 = vmatpush1.msra.mxu0 0.0
    %314 = vmatprep.subr.mxu0 0.0
    %315 = vmatpush1.msra.mxu0 0.0
    %316 = vmatprep.subr.mxu0 0.0
    %317 = vmatpush1.msra.mxu0 0.0
    %318 = vmatprep.subr.mxu0 0.0
    %319 = vmatpush1.msra.mxu0 0.0
    %320 = vmatprep.subr.mxu0 0.0
    %321 = vmatpush1.msra.mxu0 0.0
    %322 = vmatprep.subr.mxu0 0.0
    %323 = vmatpush1.msra.mxu0 0.0
    %324 = vmatprep.subr.mxu0 0.0
    %325 = vmatpush1.msra.mxu0 0.0
    %326 = vmatprep.subr.mxu0 0.0
    %327 = vmatpush1.msra.mxu0 0.0
    %328 = vmatprep.subr.mxu0 0.0
    %329 = vmatpush1.msra.mxu0 0.0
    %330 = vmatprep.subr.mxu0 0.0
    %331 = vmatpush1.msra.mxu0 0.0
    %332 = vmatprep.subr.mxu0 0.0
    %333 = vmatpush1.msra.mxu0 0.0
    %334 = vmatprep.subr.mxu0 0.0
    %335 = vmatpush1.msra.mxu0 0.0
    %336 = vmatprep.subr.mxu0 0.0
    %337 = vmatpush1.msra.mxu0 0.0
    %338 = vmatprep.subr.mxu0 0.0
    %339 = vmatpush1.msra.mxu0 0.0
    %340 = vmatprep.subr.mxu0 0.0
    %341 = vmatpush1.msra.mxu0 0.0
    %342 = vmatprep.subr.mxu0 0.0
    %343 = vmatpush1.msra.mxu0 0.0
    %344 = vmatprep.mubr.f32.mxu0 0.0
    %345 = vmatmul.mubr.f32.gmra.mrb[0].mxu0 %v278
    %v346 = vpop.f32.mrb[0].mxu0
    %v347 = vadd.f32 0.0, %v346
    %v348 = vpop.f32.mrb[0].mxu0
    %349 = vdwg.mxu0
    %v350 = vadd.f32 %v270, %v347
    %v351 = vtanh.pop %v350
    %v352 = vmul.f32 %v351, 0.5
    %v353 = vadd.f32 %v352, 0.5
    %v354 = vsel %vm264, %v351, %v353
    %v355 = vld [vmem:[#allocation3] sm:$0xff]
    %357 = vrot.lane.b32.xlu0 %v355, 32
    %v358 = vpop.permute.xlu0 %357
    %v360 = vmul.f32 %v354, %v358
    %362 = vrot.lane.b32.xlu0 %v354, 64
    %v363 = vpop.permute.xlu0 %362
    %v365 = vmul.f32 %v354, %v363
    %367 = vrot.lane.b32.xlu0 %v365, 32
    %v368 = vpop.permute.xlu0 %367
    %v370 = vadd.f32 %v360, %v368
    %v371 = vtanh.pop %v370
    %373 = vrot.lane.b32.xlu0 %v371, 64
    %v374 = vpop.permute.xlu0 %373
    %v376 = vmul.f32 %v354, %v374
    %378 = vrot.lane.b32.xlu0 %v370, 96
    %v379 = vpop.permute.xlu0 %378
    %381 = vst.msk [vmem:[#allocation3] sm:$0xff] %vm276, %v379
    %383 = vrot.lane.b32.xlu0 %v376, 32
    %v384 = vpop.permute.xlu0 %383
    %386 = vst.msk [vmem:[#allocation2] sm:$0xff] %vm276, %v384
    %v387 = vld [vmem:[#allocation10] sm:$0xff]
    %v388 = vld [vmem:[#allocation10 + $0x8] sm:$0xff]
    %v389 = vld [vmem:[#allocation10 + $0x10] sm:$0xff]
    %v390 = vld [vmem:[#allocation10 + $0x18] sm:$0xff]
    %v391 = vld [vmem:[#allocation2] sm:$0xff]
    %s392 = scalar_lea.vmem [#allocation11], 32
    %v393 = vld [vmem:[%s392] sm:$0xff]
    %v394 = vld [vmem:[%s392 + $0x8] sm:$0xff]
    %v395 = vld [vmem:[%s392 + $0x10] sm:$0xff]
    %v396 = vld [vmem:[%s392 + $0x18] sm:$0xff]
    %398 = vrot.lane.b32.xlu0 %v391, 96
    %v399 = vpop.permute.xlu0 %398
    %v400 = vsel %vm276, %v399, 0
    %402 = vmatprep.subr.mxu0 0.0
    %403 = vmatpush1.msra.mxu0 %v393
    %404 = vmatprep.subr.mxu0 0.0
    %405 = vmatpush1.msra.mxu0 %v394
    %406 = vmatprep.subr.mxu0 0.0
    %407 = vmatpush1.msra.mxu0 %v395
    %408 = vmatprep.subr.mxu0 0.0
    %409 = vmatpush1.msra.mxu0 %v396
    %410 = vmatprep.subr.mxu0 0.0
    %411 = vmatpush1.msra.mxu0 0.0
    %412 = vmatprep.subr.mxu0 0.0
    %413 = vmatpush1.msra.mxu0 0.0
    %414 = vmatprep.subr.mxu0 0.0
    %415 = vmatpush1.msra.mxu0 0.0
    %416 = vmatprep.subr.mxu0 0.0
    %417 = vmatpush1.msra.mxu0 0.0
    %418 = vmatprep.subr.mxu0 0.0
    %419 = vmatpush1.msra.mxu0 0.0
    %420 = vmatprep.subr.mxu0 0.0
    %421 = vmatpush1.msra.mxu0 0.0
    %422 = vmatprep.subr.mxu0 0.0
    %423 = vmatpush1.msra.mxu0 0.0
    %424 = vmatprep.subr.mxu0 0.0
    %425 = vmatpush1.msra.mxu0 0.0
    %426 = vmatprep.subr.mxu0 0.0
    %427 = vmatpush1.msra.mxu0 0.0
    %428 = vmatprep.subr.mxu0 0.0
    %429 = vmatpush1.msra.mxu0 0.0
    %430 = vmatprep.subr.mxu0 0.0
    %431 = vmatpush1.msra.mxu0 0.0
    %432 = vmatprep.subr.mxu0 0.0
    %433 = vmatpush1.msra.mxu0 0.0
    %434 = vmatprep.subr.mxu0 0.0
    %435 = vmatpush1.msra.mxu0 0.0
    %436 = vmatprep.subr.mxu0 0.0
    %437 = vmatpush1.msra.mxu0 0.0
    %438 = vmatprep.subr.mxu0 0.0
    %439 = vmatpush1.msra.mxu0 0.0
    %440 = vmatprep.subr.mxu0 0.0
    %441 = vmatpush1.msra.mxu0 0.0
    %442 = vmatprep.subr.mxu0 0.0
    %443 = vmatpush1.msra.mxu0 0.0
    %444 = vmatprep.subr.mxu0 0.0
    %445 = vmatpush1.msra.mxu0 0.0
    %446 = vmatprep.subr.mxu0 0.0
    %447 = vmatpush1.msra.mxu0 0.0
    %448 = vmatprep.subr.mxu0 0.0
    %449 = vmatpush1.msra.mxu0 0.0
    %450 = vmatprep.subr.mxu0 0.0
    %451 = vmatpush1.msra.mxu0 0.0
    %452 = vmatprep.subr.mxu0 0.0
    %453 = vmatpush1.msra.mxu0 0.0
    %454 = vmatprep.subr.mxu0 0.0
    %455 = vmatpush1.msra.mxu0 0.0
    %456 = vmatprep.subr.mxu0 0.0
    %457 = vmatpush1.msra.mxu0 0.0
    %458 = vmatprep.subr.mxu0 0.0
    %459 = vmatpush1.msra.mxu0 0.0
    %460 = vmatprep.subr.mxu0 0.0
    %461 = vmatpush1.msra.mxu0 0.0
    %462 = vmatprep.subr.mxu0 0.0
    %463 = vmatpush1.msra.mxu0 0.0
    %464 = vmatprep.subr.mxu0 0.0
    %465 = vmatpush1.msra.mxu0 0.0
    %466 = vmatprep.mubr.f32.mxu0 0.0
    %467 = vmatmul.mubr.f32.gmra.mrb[0].mxu0 %v400
    %v468 = vpop.f32.mrb[0].mxu0
    %v469 = vadd.f32 0.0, %v468
    %v470 = vpop.f32.mrb[0].mxu0
    %471 = vdwg.mxu0
    %v472 = vsel %vm276, %v384, 0
    %474 = vmatprep.subr.mxu0 0.0
    %475 = vmatpush1.msra.mxu0 %v387
    %476 = vmatprep.subr.mxu0 0.0
    %477 = vmatpush1.msra.mxu0 %v388
    %478 = vmatprep.subr.mxu0 0.0
    %479 = vmatpush1.msra.mxu0 %v389
    %480 = vmatprep.subr.mxu0 0.0
    %481 = vmatpush1.msra.mxu0 %v390
    %482 = vmatprep.subr.mxu0 0.0
    %483 = vmatpush1.msra.mxu0 0.0
    %484 = vmatprep.subr.mxu0 0.0
    %485 = vmatpush1.msra.mxu0 0.0
    %486 = vmatprep.subr.mxu0 0.0
    %487 = vmatpush1.msra.mxu0 0.0
    %488 = vmatprep.subr.mxu0 0.0
    %489 = vmatpush1.msra.mxu0 0.0
    %490 = vmatprep.subr.mxu0 0.0
    %491 = vmatpush1.msra.mxu0 0.0
    %492 = vmatprep.subr.mxu0 0.0
    %493 = vmatpush1.msra.mxu0 0.0
    %494 = vmatprep.subr.mxu0 0.0
    %495 = vmatpush1.msra.mxu0 0.0
    %496 = vmatprep.subr.mxu0 0.0
    %497 = vmatpush1.msra.mxu0 0.0
    %498 = vmatprep.subr.mxu0 0.0
    %499 = vmatpush1.msra.mxu0 0.0
    %500 = vmatprep.subr.mxu0 0.0
    %501 = vmatpush1.msra.mxu0 0.0
    %502 = vmatprep.subr.mxu0 0.0
    %503 = vmatpush1.msra.mxu0 0.0
    %504 = vmatprep.subr.mxu0 0.0
    %505 = vmatpush1.msra.mxu0 0.0
    %506 = vmatprep.subr.mxu0 0.0
    %507 = vmatpush1.msra.mxu0 0.0
    %508 = vmatprep.subr.mxu0 0.0
    %509 = vmatpush1.msra.mxu0 0.0
    %510 = vmatprep.subr.mxu0 0.0
    %511 = vmatpush1.msra.mxu0 0.0
    %512 = vmatprep.subr.mxu0 0.0
    %513 = vmatpush1.msra.mxu0 0.0
    %514 = vmatprep.subr.mxu0 0.0
    %515 = vmatpush1.msra.mxu0 0.0
    %516 = vmatprep.subr.mxu0 0.0
    %517 = vmatpush1.msra.mxu0 0.0
    %518 = vmatprep.subr.mxu0 0.0
    %519 = vmatpush1.msra.mxu0 0.0
    %520 = vmatprep.subr.mxu0 0.0
    %521 = vmatpush1.msra.mxu0 0.0
    %522 = vmatprep.subr.mxu0 0.0
    %523 = vmatpush1.msra.mxu0 0.0
    %524 = vmatprep.subr.mxu0 0.0
    %525 = vmatpush1.msra.mxu0 0.0
    %526 = vmatprep.subr.mxu0 0.0
    %527 = vmatpush1.msra.mxu0 0.0
    %528 = vmatprep.subr.mxu0 0.0
    %529 = vmatpush1.msra.mxu0 0.0
    %530 = vmatprep.subr.mxu0 0.0
    %531 = vmatpush1.msra.mxu0 0.0
    %532 = vmatprep.subr.mxu0 0.0
    %533 = vmatpush1.msra.mxu0 0.0
    %534 = vmatprep.subr.mxu0 0.0
    %535 = vmatpush1.msra.mxu0 0.0
    %536 = vmatprep.subr.mxu0 0.0
    %537 = vmatpush1.msra.mxu0 0.0
    %538 = vmatprep.mubr.f32.mxu0 0.0
    %539 = vmatmul.mubr.f32.gmra.mrb[0].mxu0 %v472
    %v540 = vpop.f32.mrb[0].mxu0
    %v541 = vadd.f32 %v469, %v540
    %v542 = vpop.f32.mrb[0].mxu0
    %543 = vdwg.mxu0
    %v545 = vlaneseq
    %v546 = vshrl.u32 %v545, 7
    %v547 = vsub.s32 0, %v546
    %v548 = vrot.slane %v265, %v547
    %v550 = vadd.f32 %v541, %v548
    %v551 = vtanh.pop %v550
    %v552 = vmul.f32 %v551, 0.5
    %v553 = vadd.f32 %v552, 0.5
    %v554 = vsel %vm264, %v551, %v553
    %v555 = vld [vmem:[#allocation3] sm:$0xff]
    %v556 = vmul.f32 %v554, %v555
    %558 = vrot.lane.b32.xlu0 %v554, 64
    %v559 = vpop.permute.xlu0 %558
    %v561 = vmul.f32 %v554, %v559
    %563 = vrot.lane.b32.xlu0 %v561, 32
    %v564 = vpop.permute.xlu0 %563
    %v566 = vadd.f32 %v556, %v564
    %v567 = vtanh.pop %v566
    %569 = vrot.lane.b32.xlu0 %v567, 64
    %v570 = vpop.permute.xlu0 %569
    %v572 = vmul.f32 %v554, %v570
    %vm573 = vcmask 523520
    %574 = vst.msk [vmem:[#allocation3] sm:$0xff] %vm573, %v566
    %576 = vrot.lane.b32.xlu0 %v572, 64
    %v577 = vpop.permute.xlu0 %576
    %579 = vst.msk [vmem:[#allocation2] sm:$0xff] %vm573, %v577
    %v580 = vmax.f32 %v572, 0.0
    %s581 = scalar_lea.vmem [#allocation10], 32
    %v582 = vld [vmem:[%s581] sm:$0xff]
    %v583 = vld [vmem:[%s581 + $0x8] sm:$0xff]
    %v584 = vld [vmem:[%s581 + $0x10] sm:$0xff]
    %v585 = vld [vmem:[%s581 + $0x18] sm:$0xff]
    %v586 = vld [vmem:[#allocation2] sm:$0xff]
    %s587 = scalar_lea.vmem [#allocation11], 64
    %v588 = vld [vmem:[%s587] sm:$0xff]
    %v589 = vld [vmem:[%s587 + $0x8] sm:$0xff]
    %v590 = vld [vmem:[%s587 + $0x10] sm:$0xff]
    %v591 = vld [vmem:[%s587 + $0x18] sm:$0xff]
    %593 = vrot.lane.b32.xlu0 %v586, 64
    %v594 = vpop.permute.xlu0 %593
    %v595 = vsel %vm276, %v594, 0
    %597 = vmatprep.subr.mxu0 0.0
    %598 = vmatpush1.msra.mxu0 %v588
    %599 = vmatprep.subr.mxu0 0.0
    %600 = vmatpush1.msra.mxu0 %v589
    %601 = vmatprep.subr.mxu0 0.0
    %602 = vmatpush1.msra.mxu0 %v590
    %603 = vmatprep.subr.mxu0 0.0
    %604 = vmatpush1.msra.mxu0 %v591
    %605 = vmatprep.subr.mxu0 0.0
    %606 = vmatpush1.msra.mxu0 0.0
    %607 = vmatprep.subr.mxu0 0.0
    %608 = vmatpush1.msra.mxu0 0.0
    %609 = vmatprep.subr.mxu0 0.0
    %610 = vmatpush1.msra.mxu0 0.0
    %611 = vmatprep.subr.mxu0 0.0
    %612 = vmatpush1.msra.mxu0 0.0
    %613 = vmatprep.subr.mxu0 0.0
    %614 = vmatpush1.msra.mxu0 0.0
    %615 = vmatprep.subr.mxu0 0.0
    %616 = vmatpush1.msra.mxu0 0.0
    %617 = vmatprep.subr.mxu0 0.0
    %618 = vmatpush1.msra.mxu0 0.0
    %619 = vmatprep.subr.mxu0 0.0
    %620 = vmatpush1.msra.mxu0 0.0
    %621 = vmatprep.subr.mxu0 0.0
    %622 = vmatpush1.msra.mxu0 0.0
    %623 = vmatprep.subr.mxu0 0.0
    %624 = vmatpush1.msra.mxu0 0.0
    %625 = vmatprep.subr.mxu0 0.0
    %626 = vmatpush1.msra.mxu0 0.0
    %627 = vmatprep.subr.mxu0 0.0
    %628 = vmatpush1.msra.mxu0 0.0
    %629 = vmatprep.subr.mxu0 0.0
    %630 = vmatpush1.msra.mxu0 0.0
    %631 = vmatprep.subr.mxu0 0.0
    %632 = vmatpush1.msra.mxu0 0.0
    %633 = vmatprep.subr.mxu0 0.0
    %634 = vmatpush1.msra.mxu0 0.0
    %635 = vmatprep.subr.mxu0 0.0
    %636 = vmatpush1.msra.mxu0 0.0
    %637 = vmatprep.subr.mxu0 0.0
    %638 = vmatpush1.msra.mxu0 0.0
    %639 = vmatprep.subr.mxu0 0.0
    %640 = vmatpush1.msra.mxu0 0.0
    %641 = vmatprep.subr.mxu0 0.0
    %642 = vmatpush1.msra.mxu0 0.0
    %643 = vmatprep.subr.mxu0 0.0
    %644 = vmatpush1.msra.mxu0 0.0
    %645 = vmatprep.subr.mxu0 0.0
    %646 = vmatpush1.msra.mxu0 0.0
    %647 = vmatprep.subr.mxu0 0.0
    %648 = vmatpush1.msra.mxu0 0.0
    %649 = vmatprep.subr.mxu0 0.0
    %650 = vmatpush1.msra.mxu0 0.0
    %651 = vmatprep.subr.mxu0 0.0
    %652 = vmatpush1.msra.mxu0 0.0
    %653 = vmatprep.subr.mxu0 0.0
    %654 = vmatpush1.msra.mxu0 0.0
    %655 = vmatprep.subr.mxu0 0.0
    %656 = vmatpush1.msra.mxu0 0.0
    %657 = vmatprep.subr.mxu0 0.0
    %658 = vmatpush1.msra.mxu0 0.0
    %659 = vmatprep.subr.mxu0 0.0
    %660 = vmatpush1.msra.mxu0 0.0
    %661 = vmatprep.mubr.f32.mxu0 0.0
    %662 = vmatmul.mubr.f32.gmra.mrb[0].mxu0 %v595
    %v663 = vpop.f32.mrb[0].mxu0
    %v664 = vadd.f32 0.0, %v663
    %v665 = vpop.f32.mrb[0].mxu0
    %666 = vdwg.mxu0
    %668 = vrot.lane.b32.xlu0 %v580, 32
    %v669 = vpop.permute.xlu0 %668
    %v670 = vsel %vm276, %v669, 0
    %672 = vmatprep.subr.mxu0 0.0
    %673 = vmatpush1.msra.mxu0 %v582
    %674 = vmatprep.subr.mxu0 0.0
    %675 = vmatpush1.msra.mxu0 %v583
    %676 = vmatprep.subr.mxu0 0.0
    %677 = vmatpush1.msra.mxu0 %v584
    %678 = vmatprep.subr.mxu0 0.0
    %679 = vmatpush1.msra.mxu0 %v585
    %680 = vmatprep.subr.mxu0 0.0
    %681 = vmatpush1.msra.mxu0 0.0
    %682 = vmatprep.subr.mxu0 0.0
    %683 = vmatpush1.msra.mxu0 0.0
    %684 = vmatprep.subr.mxu0 0.0
    %685 = vmatpush1.msra.mxu0 0.0
    %686 = vmatprep.subr.mxu0 0.0
    %687 = vmatpush1.msra.mxu0 0.0
    %688 = vmatprep.subr.mxu0 0.0
    %689 = vmatpush1.msra.mxu0 0.0
    %690 = vmatprep.subr.mxu0 0.0
    %691 = vmatpush1.msra.mxu0 0.0
    %692 = vmatprep.subr.mxu0 0.0
    %693 = vmatpush1.msra.mxu0 0.0
    %694 = vmatprep.subr.mxu0 0.0
    %695 = vmatpush1.msra.mxu0 0.0
    %696 = vmatprep.subr.mxu0 0.0
    %697 = vmatpush1.msra.mxu0 0.0
    %698 = vmatprep.subr.mxu0 0.0
    %699 = vmatpush1.msra.mxu0 0.0
    %700 = vmatprep.subr.mxu0 0.0
    %701 = vmatpush1.msra.mxu0 0.0
    %702 = vmatprep.subr.mxu0 0.0
    %703 = vmatpush1.msra.mxu0 0.0
    %704 = vmatprep.subr.mxu0 0.0
    %705 = vmatpush1.msra.mxu0 0.0
    %706 = vmatprep.subr.mxu0 0.0
    %707 = vmatpush1.msra.mxu0 0.0
    %708 = vmatprep.subr.mxu0 0.0
    %709 = vmatpush1.msra.mxu0 0.0
    %710 = vmatprep.subr.mxu0 0.0
    %711 = vmatpush1.msra.mxu0 0.0
    %712 = vmatprep.subr.mxu0 0.0
    %713 = vmatpush1.msra.mxu0 0.0
    %714 = vmatprep.subr.mxu0 0.0
    %715 = vmatpush1.msra.mxu0 0.0
    %716 = vmatprep.subr.mxu0 0.0
    %717 = vmatpush1.msra.mxu0 0.0
    %718 = vmatprep.subr.mxu0 0.0
    %719 = vmatpush1.msra.mxu0 0.0
    %720 = vmatprep.subr.mxu0 0.0
    %721 = vmatpush1.msra.mxu0 0.0
    %722 = vmatprep.subr.mxu0 0.0
    %723 = vmatpush1.msra.mxu0 0.0
    %724 = vmatprep.subr.mxu0 0.0
    %725 = vmatpush1.msra.mxu0 0.0
    %726 = vmatprep.subr.mxu0 0.0
    %727 = vmatpush1.msra.mxu0 0.0
    %728 = vmatprep.subr.mxu0 0.0
    %729 = vmatpush1.msra.mxu0 0.0
    %730 = vmatprep.subr.mxu0 0.0
    %731 = vmatpush1.msra.mxu0 0.0
    %732 = vmatprep.subr.mxu0 0.0
    %733 = vmatpush1.msra.mxu0 0.0
    %734 = vmatprep.subr.mxu0 0.0
    %735 = vmatpush1.msra.mxu0 0.0
    %736 = vmatprep.mubr.f32.mxu0 0.0
    %737 = vmatmul.mubr.f32.gmra.mrb[0].mxu0 %v670
    %v738 = vpop.f32.mrb[0].mxu0
    %v739 = vadd.f32 %v664, %v738
    %v740 = vpop.f32.mrb[0].mxu0
    %741 = vdwg.mxu0
    %v743 = vlaneseq
    %v744 = vshrl.u32 %v743, 7
    %v745 = vsub.s32 0, %v744
    %v746 = vrot.slane %v267, %v745
    %v748 = vadd.f32 %v739, %v746
    %v749 = vtanh.pop %v748
    %v750 = vmul.f32 %v749, 0.5
    %v751 = vadd.f32 %v750, 0.5
    %v752 = vsel %vm264, %v749, %v751
    %v753 = vld [vmem:[#allocation3] sm:$0xff]
    %755 = vrot.lane.b32.xlu0 %v753, 96
    %v756 = vpop.permute.xlu0 %755
    %v758 = vmul.f32 %v752, %v756
    %760 = vrot.lane.b32.xlu0 %v752, 64
    %v761 = vpop.permute.xlu0 %760
    %v763 = vmul.f32 %v752, %v761
    %765 = vrot.lane.b32.xlu0 %v763, 32
    %v766 = vpop.permute.xlu0 %765
    %v768 = vadd.f32 %v758, %v766
    %v769 = vtanh.pop %v768
    %771 = vrot.lane.b32.xlu0 %v769, 64
    %v772 = vpop.permute.xlu0 %771
    %v774 = vmul.f32 %v752, %v772
    %776 = vrot.lane.b32.xlu0 %v768, 32
    %v777 = vpop.permute.xlu0 %776
    %vm779 = vcmask 785920
    %780 = vst.msk [vmem:[#allocation3] sm:$0xff] %vm779, %v777
    %782 = vrot.lane.b32.xlu0 %v774, 96
    %v783 = vpop.permute.xlu0 %782
    %785 = vst.msk [vmem:[#allocation2] sm:$0xff] %vm779, %v783
    %s786 = scalar_lea.vmem [#allocation10], 64
    %v787 = vld [vmem:[%s786] sm:$0xff]
    %v788 = vld [vmem:[%s786 + $0x8] sm:$0xff]
    %v789 = vld [vmem:[%s786 + $0x10] sm:$0xff]
    %v790 = vld [vmem:[%s786 + $0x18] sm:$0xff]
    %v791 = vld [vmem:[#allocation2] sm:$0xff]
    %s792 = scalar_lea.vmem [#allocation11], 96
    %v793 = vld [vmem:[%s792] sm:$0xff]
    %v794 = vld [vmem:[%s792 + $0x8] sm:$0xff]
    %v795 = vld [vmem:[%s792 + $0x10] sm:$0xff]
    %v796 = vld [vmem:[%s792 + $0x18] sm:$0xff]
    %798 = vrot.lane.b32.xlu0 %v791, 32
    %v799 = vpop.permute.xlu0 %798
    %v800 = vsel %vm276, %v799, 0
    %802 = vmatprep.subr.mxu0 0.0
    %803 = vmatpush1.msra.mxu0 %v793
    %804 = vmatprep.subr.mxu0 0.0
    %805 = vmatpush1.msra.mxu0 %v794
    %806 = vmatprep.subr.mxu0 0.0
    %807 = vmatpush1.msra.mxu0 %v795
    %808 = vmatprep.subr.mxu0 0.0
    %809 = vmatpush1.msra.mxu0 %v796
    %810 = vmatprep.subr.mxu0 0.0
    %811 = vmatpush1.msra.mxu0 0.0
    %812 = vmatprep.subr.mxu0 0.0
    %813 = vmatpush1.msra.mxu0 0.0
    %814 = vmatprep.subr.mxu0 0.0
    %815 = vmatpush1.msra.mxu0 0.0
    %816 = vmatprep.subr.mxu0 0.0
    %817 = vmatpush1.msra.mxu0 0.0
    %818 = vmatprep.subr.mxu0 0.0
    %819 = vmatpush1.msra.mxu0 0.0
    %820 = vmatprep.subr.mxu0 0.0
    %821 = vmatpush1.msra.mxu0 0.0
    %822 = vmatprep.subr.mxu0 0.0
    %823 = vmatpush1.msra.mxu0 0.0
    %824 = vmatprep.subr.mxu0 0.0
    %825 = vmatpush1.msra.mxu0 0.0
    %826 = vmatprep.subr.mxu0 0.0
    %827 = vmatpush1.msra.mxu0 0.0
    %828 = vmatprep.subr.mxu0 0.0
    %829 = vmatpush1.msra.mxu0 0.0
    %830 = vmatprep.subr.mxu0 0.0
    %831 = vmatpush1.msra.mxu0 0.0
    %832 = vmatprep.subr.mxu0 0.0
    %833 = vmatpush1.msra.mxu0 0.0
    %834 = vmatprep.subr.mxu0 0.0
    %835 = vmatpush1.msra.mxu0 0.0
    %836 = vmatprep.subr.mxu0 0.0
    %837 = vmatpush1.msra.mxu0 0.0
    %838 = vmatprep.subr.mxu0 0.0
    %839 = vmatpush1.msra.mxu0 0.0
    %840 = vmatprep.subr.mxu0 0.0
    %841 = vmatpush1.msra.mxu0 0.0
    %842 = vmatprep.subr.mxu0 0.0
    %843 = vmatpush1.msra.mxu0 0.0
    %844 = vmatprep.subr.mxu0 0.0
    %845 = vmatpush1.msra.mxu0 0.0
    %846 = vmatprep.subr.mxu0 0.0
    %847 = vmatpush1.msra.mxu0 0.0
    %848 = vmatprep.subr.mxu0 0.0
    %849 = vmatpush1.msra.mxu0 0.0
    %850 = vmatprep.subr.mxu0 0.0
    %851 = vmatpush1.msra.mxu0 0.0
    %852 = vmatprep.subr.mxu0 0.0
    %853 = vmatpush1.msra.mxu0 0.0
    %854 = vmatprep.subr.mxu0 0.0
    %855 = vmatpush1.msra.mxu0 0.0
    %856 = vmatprep.subr.mxu0 0.0
    %857 = vmatpush1.msra.mxu0 0.0
    %858 = vmatprep.subr.mxu0 0.0
    %859 = vmatpush1.msra.mxu0 0.0
    %860 = vmatprep.subr.mxu0 0.0
    %861 = vmatpush1.msra.mxu0 0.0
    %862 = vmatprep.subr.mxu0 0.0
    %863 = vmatpush1.msra.mxu0 0.0
    %864 = vmatprep.subr.mxu0 0.0
    %865 = vmatpush1.msra.mxu0 0.0
    %866 = vmatprep.mubr.f32.mxu0 0.0
    %867 = vmatmul.mubr.f32.gmra.mrb[0].mxu0 %v800
    %v868 = vpop.f32.mrb[0].mxu0
    %v869 = vadd.f32 0.0, %v868
    %v870 = vpop.f32.mrb[0].mxu0
    %871 = vdwg.mxu0
    %872 = vrot.lane.b32.xlu0 %v774, 32
    %v873 = vpop.permute.xlu0 %872
    %v874 = vsel %vm276, %v873, 0
    %876 = vmatprep.subr.mxu0 0.0
    %877 = vmatpush1.msra.mxu0 %v787
    %878 = vmatprep.subr.mxu0 0.0
    %879 = vmatpush1.msra.mxu0 %v788
    %880 = vmatprep.subr.mxu0 0.0
    %881 = vmatpush1.msra.mxu0 %v789
    %882 = vmatprep.subr.mxu0 0.0
    %883 = vmatpush1.msra.mxu0 %v790
    %884 = vmatprep.subr.mxu0 0.0
    %885 = vmatpush1.msra.mxu0 0.0
    %886 = vmatprep.subr.mxu0 0.0
    %887 = vmatpush1.msra.mxu0 0.0
    %888 = vmatprep.subr.mxu0 0.0
    %889 = vmatpush1.msra.mxu0 0.0
    %890 = vmatprep.subr.mxu0 0.0
    %891 = vmatpush1.msra.mxu0 0.0
    %892 = vmatprep.subr.mxu0 0.0
    %893 = vmatpush1.msra.mxu0 0.0
    %894 = vmatprep.subr.mxu0 0.0
    %895 = vmatpush1.msra.mxu0 0.0
    %896 = vmatprep.subr.mxu0 0.0
    %897 = vmatpush1.msra.mxu0 0.0
    %898 = vmatprep.subr.mxu0 0.0
    %899 = vmatpush1.msra.mxu0 0.0
    %900 = vmatprep.subr.mxu0 0.0
    %901 = vmatpush1.msra.mxu0 0.0
    %902 = vmatprep.subr.mxu0 0.0
    %903 = vmatpush1.msra.mxu0 0.0
    %904 = vmatprep.subr.mxu0 0.0
    %905 = vmatpush1.msra.mxu0 0.0
    %906 = vmatprep.subr.mxu0 0.0
    %907 = vmatpush1.msra.mxu0 0.0
    %908 = vmatprep.subr.mxu0 0.0
    %909 = vmatpush1.msra.mxu0 0.0
    %910 = vmatprep.subr.mxu0 0.0
    %911 = vmatpush1.msra.mxu0 0.0
    %912 = vmatprep.subr.mxu0 0.0
    %913 = vmatpush1.msra.mxu0 0.0
    %914 = vmatprep.subr.mxu0 0.0
    %915 = vmatpush1.msra.mxu0 0.0
    %916 = vmatprep.subr.mxu0 0.0
    %917 = vmatpush1.msra.mxu0 0.0
    %918 = vmatprep.subr.mxu0 0.0
    %919 = vmatpush1.msra.mxu0 0.0
    %920 = vmatprep.subr.mxu0 0.0
    %921 = vmatpush1.msra.mxu0 0.0
    %922 = vmatprep.subr.mxu0 0.0
    %923 = vmatpush1.msra.mxu0 0.0
    %924 = vmatprep.subr.mxu0 0.0
    %925 = vmatpush1.msra.mxu0 0.0
    %926 = vmatprep.subr.mxu0 0.0
    %927 = vmatpush1.msra.mxu0 0.0
    %928 = vmatprep.subr.mxu0 0.0
    %929 = vmatpush1.msra.mxu0 0.0
    %930 = vmatprep.subr.mxu0 0.0
    %931 = vmatpush1.msra.mxu0 0.0
    %932 = vmatprep.subr.mxu0 0.0
    %933 = vmatpush1.msra.mxu0 0.0
    %934 = vmatprep.subr.mxu0 0.0
    %935 = vmatpush1.msra.mxu0 0.0
    %936 = vmatprep.subr.mxu0 0.0
    %937 = vmatpush1.msra.mxu0 0.0
    %938 = vmatprep.subr.mxu0 0.0
    %939 = vmatpush1.msra.mxu0 0.0
    %940 = vmatprep.mubr.f32.mxu0 0.0
    %941 = vmatmul.mubr.f32.gmra.mrb[0].mxu0 %v874
    %v942 = vpop.f32.mrb[0].mxu0
    %v943 = vadd.f32 %v869, %v942
    %v944 = vpop.f32.mrb[0].mxu0
    %945 = vdwg.mxu0
    %v947 = vlaneseq
    %v948 = vshrl.u32 %v947, 7
    %v949 = vsub.s32 0, %v948
    %v950 = vrot.slane %v269, %v949
    %v952 = vadd.f32 %v943, %v950
    %v953 = vtanh.pop %v952
    %v954 = vmul.f32 %v953, 0.5
    %v955 = vadd.f32 %v954, 0.5
    %v956 = vsel %vm264, %v953, %v955
    %v957 = vld [vmem:[#allocation3] sm:$0xff]
    %959 = vrot.lane.b32.xlu0 %v957, 64
    %v960 = vpop.permute.xlu0 %959
    %v962 = vmul.f32 %v956, %v960
    %964 = vrot.lane.b32.xlu0 %v956, 64
    %v965 = vpop.permute.xlu0 %964
    %v967 = vmul.f32 %v956, %v965
    %969 = vrot.lane.b32.xlu0 %v967, 32
    %v970 = vpop.permute.xlu0 %969
    %v972 = vadd.f32 %v962, %v970
    %v973 = vtanh.pop %v972
    %975 = vrot.lane.b32.xlu0 %v973, 64
    %v976 = vpop.permute.xlu0 %975
    %v978 = vmul.f32 %v956, %v976
    %980 = vrot.lane.b32.xlu0 %v972, 64
    %v981 = vpop.permute.xlu0 %980
    %vm983 = vcmask 1048320
    %984 = vst.msk [vmem:[#allocation3] sm:$0xff] %vm983, %v981
    %985 = vst.msk [vmem:[#allocation2] sm:$0xff] %vm983, %v978
    %s986 = scalar_lea.vmem [#allocation4], 8
    %v987 = vld [vmem:[%s986] sm:$0xff]
    %v988 = vld [vmem:[#allocation2] sm:$0xff]
    %v989 = vld [vmem:[#allocation11] sm:$0xff]
    %v990 = vld [vmem:[#allocation11 + $0x8] sm:$0xff]
    %v991 = vld [vmem:[#allocation11 + $0x10] sm:$0xff]
    %v992 = vld [vmem:[#allocation11 + $0x18] sm:$0xff]
    %v994 = vsel %vm276, %v988, 0
    %996 = vmatprep.subr.mxu0 0.0
    %997 = vmatpush1.msra.mxu0 %v989
    %998 = vmatprep.subr.mxu0 0.0
    %999 = vmatpush1.msra.mxu0 %v990
    %1000 = vmatprep.subr.mxu0 0.0
    %1001 = vmatpush1.msra.mxu0 %v991
    %1002 = vmatprep.subr.mxu0 0.0
    %1003 = vmatpush1.msra.mxu0 %v992
    %1004 = vmatprep.subr.mxu0 0.0
    %1005 = vmatpush1.msra.mxu0 0.0
    %1006 = vmatprep.subr.mxu0 0.0
    %1007 = vmatpush1.msra.mxu0 0.0
    %1008 = vmatprep.subr.mxu0 0.0
    %1009 = vmatpush1.msra.mxu0 0.0
    %1010 = vmatprep.subr.mxu0 0.0
    %1011 = vmatpush1.msra.mxu0 0.0
    %1012 = vmatprep.subr.mxu0 0.0
    %1013 = vmatpush1.msra.mxu0 0.0
    %1014 = vmatprep.subr.mxu0 0.0
    %1015 = vmatpush1.msra.mxu0 0.0
    %1016 = vmatprep.subr.mxu0 0.0
    %1017 = vmatpush1.msra.mxu0 0.0
    %1018 = vmatprep.subr.mxu0 0.0
    %1019 = vmatpush1.msra.mxu0 0.0
    %1020 = vmatprep.subr.mxu0 0.0
    %1021 = vmatpush1.msra.mxu0 0.0
    %1022 = vmatprep.subr.mxu0 0.0
    %1023 = vmatpush1.msra.mxu0 0.0
    %1024 = vmatprep.subr.mxu0 0.0
    %1025 = vmatpush1.msra.mxu0 0.0
    %1026 = vmatprep.subr.mxu0 0.0
    %1027 = vmatpush1.msra.mxu0 0.0
    %1028 = vmatprep.subr.mxu0 0.0
    %1029 = vmatpush1.msra.mxu0 0.0
    %1030 = vmatprep.subr.mxu0 0.0
    %1031 = vmatpush1.msra.mxu0 0.0
    %1032 = vmatprep.subr.mxu0 0.0
    %1033 = vmatpush1.msra.mxu0 0.0
    %1034 = vmatprep.subr.mxu0 0.0
    %1035 = vmatpush1.msra.mxu0 0.0
    %1036 = vmatprep.subr.mxu0 0.0
    %1037 = vmatpush1.msra.mxu0 0.0
    %1038 = vmatprep.subr.mxu0 0.0
    %1039 = vmatpush1.msra.mxu0 0.0
    %1040 = vmatprep.subr.mxu0 0.0
    %1041 = vmatpush1.msra.mxu0 0.0
    %1042 = vmatprep.subr.mxu0 0.0
    %1043 = vmatpush1.msra.mxu0 0.0
    %1044 = vmatprep.subr.mxu0 0.0
    %1045 = vmatpush1.msra.mxu0 0.0
    %1046 = vmatprep.subr.mxu0 0.0
    %1047 = vmatpush1.msra.mxu0 0.0
    %1048 = vmatprep.subr.mxu0 0.0
    %1049 = vmatpush1.msra.mxu0 0.0
    %1050 = vmatprep.subr.mxu0 0.0
    %1051 = vmatpush1.msra.mxu0 0.0
    %1052 = vmatprep.subr.mxu0 0.0
    %1053 = vmatpush1.msra.mxu0 0.0
    %1054 = vmatprep.subr.mxu0 0.0
    %1055 = vmatpush1.msra.mxu0 0.0
    %1056 = vmatprep.subr.mxu0 0.0
    %1057 = vmatpush1.msra.mxu0 0.0
    %1058 = vmatprep.subr.mxu0 0.0
    %1059 = vmatpush1.msra.mxu0 0.0
    %1060 = vmatprep.mubr.f32.mxu0 0.0
    %1061 = vmatmul.mubr.f32.gmra.mrb[0].mxu0 %v994
    %v1062 = vpop.f32.mrb[0].mxu0
    %v1063 = vadd.f32 0.0, %v1062
    %v1064 = vpop.f32.mrb[0].mxu0
    %1065 = vdwg.mxu0
    %v1066 = vadd.f32 %v987, %v1063
    %v1067 = vtanh.pop %v1066
    %v1068 = vmul.f32 %v1067, 0.5
    %v1069 = vadd.f32 %v1068, 0.5
    %v1070 = vsel %vm264, %v1067, %v1069
    %v1071 = vld [vmem:[#allocation3] sm:$0xff]
    %1073 = vrot.lane.b32.xlu0 %v1071, 32
    %v1074 = vpop.permute.xlu0 %1073
    %v1076 = vmul.f32 %v1070, %v1074
    %1078 = vrot.lane.b32.xlu0 %v1070, 64
    %v1079 = vpop.permute.xlu0 %1078
    %v1081 = vmul.f32 %v1070, %v1079
    %1083 = vrot.lane.b32.xlu0 %v1081, 32
    %v1084 = vpop.permute.xlu0 %1083
    %v1086 = vadd.f32 %v1076, %v1084
    %v1087 = vtanh.pop %v1086
    %1089 = vrot.lane.b32.xlu0 %v1087, 64
    %v1090 = vpop.permute.xlu0 %1089
    %v1092 = vmul.f32 %v1070, %v1090
    %1094 = vrot.lane.b32.xlu0 %v1086, 96
    %v1095 = vpop.permute.xlu0 %1094
    %1097 = vst.msk [vmem:[#allocation3] sm:$0xff] %vm276, %v1095
    %1099 = vrot.lane.b32.xlu0 %v1092, 32
    %v1100 = vpop.permute.xlu0 %1099
    %1102 = vst.msk [vmem:[#allocation2] sm:$0xff] %vm276, %v1100
    %v1103 = vld [vmem:[#allocation10] sm:$0xff]
    %v1104 = vld [vmem:[#allocation10 + $0x8] sm:$0xff]
    %v1105 = vld [vmem:[#allocation10 + $0x10] sm:$0xff]
    %v1106 = vld [vmem:[#allocation10 + $0x18] sm:$0xff]
    %v1107 = vld [vmem:[#allocation2] sm:$0xff]
    %v1108 = vld [vmem:[%s392] sm:$0xff]
    %v1109 = vld [vmem:[%s392 + $0x8] sm:$0xff]
    %v1110 = vld [vmem:[%s392 + $0x10] sm:$0xff]
    %v1111 = vld [vmem:[%s392 + $0x18] sm:$0xff]
    %1113 = vrot.lane.b32.xlu0 %v1107, 96
    %v1114 = vpop.permute.xlu0 %1113
    %v1115 = vsel %vm276, %v1114, 0
    %1117 = vmatprep.subr.mxu0 0.0
    %1118 = vmatpush1.msra.mxu0 %v1108
    %1119 = vmatprep.subr.mxu0 0.0
    %1120 = vmatpush1.msra.mxu0 %v1109
    %1121 = vmatprep.subr.mxu0 0.0
    %1122 = vmatpush1.msra.mxu0 %v1110
    %1123 = vmatprep.subr.mxu0 0.0
    %1124 = vmatpush1.msra.mxu0 %v1111
    %1125 = vmatprep.subr.mxu0 0.0
    %1126 = vmatpush1.msra.mxu0 0.0
    %1127 = vmatprep.subr.mxu0 0.0
    %1128 = vmatpush1.msra.mxu0 0.0
    %1129 = vmatprep.subr.mxu0 0.0
    %1130 = vmatpush1.msra.mxu0 0.0
    %1131 = vmatprep.subr.mxu0 0.0
    %1132 = vmatpush1.msra.mxu0 0.0
    %1133 = vmatprep.subr.mxu0 0.0
    %1134 = vmatpush1.msra.mxu0 0.0
    %1135 = vmatprep.subr.mxu0 0.0
    %1136 = vmatpush1.msra.mxu0 0.0
    %1137 = vmatprep.subr.mxu0 0.0
    %1138 = vmatpush1.msra.mxu0 0.0
    %1139 = vmatprep.subr.mxu0 0.0
    %1140 = vmatpush1.msra.mxu0 0.0
    %1141 = vmatprep.subr.mxu0 0.0
    %1142 = vmatpush1.msra.mxu0 0.0
    %1143 = vmatprep.subr.mxu0 0.0
    %1144 = vmatpush1.msra.mxu0 0.0
    %1145 = vmatprep.subr.mxu0 0.0
    %1146 = vmatpush1.msra.mxu0 0.0
    %1147 = vmatprep.subr.mxu0 0.0
    %1148 = vmatpush1.msra.mxu0 0.0
    %1149 = vmatprep.subr.mxu0 0.0
    %1150 = vmatpush1.msra.mxu0 0.0
    %1151 = vmatprep.subr.mxu0 0.0
    %1152 = vmatpush1.msra.mxu0 0.0
    %1153 = vmatprep.subr.mxu0 0.0
    %1154 = vmatpush1.msra.mxu0 0.0
    %1155 = vmatprep.subr.mxu0 0.0
    %1156 = vmatpush1.msra.mxu0 0.0
    %1157 = vmatprep.subr.mxu0 0.0
    %1158 = vmatpush1.msra.mxu0 0.0
    %1159 = vmatprep.subr.mxu0 0.0
    %1160 = vmatpush1.msra.mxu0 0.0
    %1161 = vmatprep.subr.mxu0 0.0
    %1162 = vmatpush1.msra.mxu0 0.0
    %1163 = vmatprep.subr.mxu0 0.0
    %1164 = vmatpush1.msra.mxu0 0.0
    %1165 = vmatprep.subr.mxu0 0.0
    %1166 = vmatpush1.msra.mxu0 0.0
    %1167 = vmatprep.subr.mxu0 0.0
    %1168 = vmatpush1.msra.mxu0 0.0
    %1169 = vmatprep.subr.mxu0 0.0
    %1170 = vmatpush1.msra.mxu0 0.0
    %1171 = vmatprep.subr.mxu0 0.0
    %1172 = vmatpush1.msra.mxu0 0.0
    %1173 = vmatprep.subr.mxu0 0.0
    %1174 = vmatpush1.msra.mxu0 0.0
    %1175 = vmatprep.subr.mxu0 0.0
    %1176 = vmatpush1.msra.mxu0 0.0
    %1177 = vmatprep.subr.mxu0 0.0
    %1178 = vmatpush1.msra.mxu0 0.0
    %1179 = vmatprep.subr.mxu0 0.0
    %1180 = vmatpush1.msra.mxu0 0.0
    %1181 = vmatprep.mubr.f32.mxu0 0.0
    %1182 = vmatmul.mubr.f32.gmra.mrb[0].mxu0 %v1115
    %v1183 = vpop.f32.mrb[0].mxu0
    %v1184 = vadd.f32 0.0, %v1183
    %v1185 = vpop.f32.mrb[0].mxu0
    %1186 = vdwg.mxu0
    %v1187 = vsel %vm276, %v1100, 0
    %1189 = vmatprep.subr.mxu0 0.0
    %1190 = vmatpush1.msra.mxu0 %v1103
    %1191 = vmatprep.subr.mxu0 0.0
    %1192 = vmatpush1.msra.mxu0 %v1104
    %1193 = vmatprep.subr.mxu0 0.0
    %1194 = vmatpush1.msra.mxu0 %v1105
    %1195 = vmatprep.subr.mxu0 0.0
    %1196 = vmatpush1.msra.mxu0 %v1106
    %1197 = vmatprep.subr.mxu0 0.0
    %1198 = vmatpush1.msra.mxu0 0.0
    %1199 = vmatprep.subr.mxu0 0.0
    %1200 = vmatpush1.msra.mxu0 0.0
    %1201 = vmatprep.subr.mxu0 0.0
    %1202 = vmatpush1.msra.mxu0 0.0
    %1203 = vmatprep.subr.mxu0 0.0
    %1204 = vmatpush1.msra.mxu0 0.0
    %1205 = vmatprep.subr.mxu0 0.0
    %1206 = vmatpush1.msra.mxu0 0.0
    %1207 = vmatprep.subr.mxu0 0.0
    %1208 = vmatpush1.msra.mxu0 0.0
    %1209 = vmatprep.subr.mxu0 0.0
    %1210 = vmatpush1.msra.mxu0 0.0
    %1211 = vmatprep.subr.mxu0 0.0
    %1212 = vmatpush1.msra.mxu0 0.0
    %1213 = vmatprep.subr.mxu0 0.0
    %1214 = vmatpush1.msra.mxu0 0.0
    %1215 = vmatprep.subr.mxu0 0.0
    %1216 = vmatpush1.msra.mxu0 0.0
    %1217 = vmatprep.subr.mxu0 0.0
    %1218 = vmatpush1.msra.mxu0 0.0
    %1219 = vmatprep.subr.mxu0 0.0
    %1220 = vmatpush1.msra.mxu0 0.0
    %1221 = vmatprep.subr.mxu0 0.0
    %1222 = vmatpush1.msra.mxu0 0.0
    %1223 = vmatprep.subr.mxu0 0.0
    %1224 = vmatpush1.msra.mxu0 0.0
    %1225 = vmatprep.subr.mxu0 0.0
    %1226 = vmatpush1.msra.mxu0 0.0
    %1227 = vmatprep.subr.mxu0 0.0
    %1228 = vmatpush1.msra.mxu0 0.0
    %1229 = vmatprep.subr.mxu0 0.0
    %1230 = vmatpush1.msra.mxu0 0.0
    %1231 = vmatprep.subr.mxu0 0.0
    %1232 = vmatpush1.msra.mxu0 0.0
    %1233 = vmatprep.subr.mxu0 0.0
    %1234 = vmatpush1.msra.mxu0 0.0
    %1235 = vmatprep.subr.mxu0 0.0
    %1236 = vmatpush1.msra.mxu0 0.0
    %1237 = vmatprep.subr.mxu0 0.0
    %1238 = vmatpush1.msra.mxu0 0.0
    %1239 = vmatprep.subr.mxu0 0.0
    %1240 = vmatpush1.msra.mxu0 0.0
    %1241 = vmatprep.subr.mxu0 0.0
    %1242 = vmatpush1.msra.mxu0 0.0
    %1243 = vmatprep.subr.mxu0 0.0
    %1244 = vmatpush1.msra.mxu0 0.0
    %1245 = vmatprep.subr.mxu0 0.0
    %1246 = vmatpush1.msra.mxu0 0.0
    %1247 = vmatprep.subr.mxu0 0.0
    %1248 = vmatpush1.msra.mxu0 0.0
    %1249 = vmatprep.subr.mxu0 0.0
    %1250 = vmatpush1.msra.mxu0 0.0
    %1251 = vmatprep.subr.mxu0 0.0
    %1252 = vmatpush1.msra.mxu0 0.0
    %1253 = vmatprep.mubr.f32.mxu0 0.0
    %1254 = vmatmul.mubr.f32.gmra.mrb[0].mxu0 %v1187
    %v1255 = vpop.f32.mrb[0].mxu0
    %v1256 = vadd.f32 %v1184, %v1255
    %v1257 = vpop.f32.mrb[0].mxu0
    %1258 = vdwg.mxu0
    %v1259 = vadd.f32 %v1256, %v548
    %v1260 = vtanh.pop %v1259
    %v1261 = vmul.f32 %v1260, 0.5
    %v1262 = vadd.f32 %v1261, 0.5
    %v1263 = vsel %vm264, %v1260, %v1262
    %v1264 = vld [vmem:[#allocation3] sm:$0xff]
    %v1265 = vmul.f32 %v1263, %v1264
    %1267 = vrot.lane.b32.xlu0 %v1263, 64
    %v1268 = vpop.permute.xlu0 %1267
    %v1270 = vmul.f32 %v1263, %v1268
    %1272 = vrot.lane.b32.xlu0 %v1270, 32
    %v1273 = vpop.permute.xlu0 %1272
    %v1275 = vadd.f32 %v1265, %v1273
    %v1276 = vtanh.pop %v1275
    %1278 = vrot.lane.b32.xlu0 %v1276, 64
    %v1279 = vpop.permute.xlu0 %1278
    %v1281 = vmul.f32 %v1263, %v1279
    %1282 = vst.msk [vmem:[#allocation3] sm:$0xff] %vm573, %v1275
    %1284 = vrot.lane.b32.xlu0 %v1281, 64
    %v1285 = vpop.permute.xlu0 %1284
    %1287 = vst.msk [vmem:[#allocation2] sm:$0xff] %vm573, %v1285
    %v1288 = vmax.f32 %v1281, 0.0
    %v1289 = vld [vmem:[%s581] sm:$0xff]
    %v1290 = vld [vmem:[%s581 + $0x8] sm:$0xff]
    %v1291 = vld [vmem:[%s581 + $0x10] sm:$0xff]
    %v1292 = vld [vmem:[%s581 + $0x18] sm:$0xff]
    %v1293 = vld [vmem:[#allocation2] sm:$0xff]
    %v1294 = vld [vmem:[%s587] sm:$0xff]
    %v1295 = vld [vmem:[%s587 + $0x8] sm:$0xff]
    %v1296 = vld [vmem:[%s587 + $0x10] sm:$0xff]
    %v1297 = vld [vmem:[%s587 + $0x18] sm:$0xff]
    %1299 = vrot.lane.b32.xlu0 %v1293, 64
    %v1300 = vpop.permute.xlu0 %1299
    %v1301 = vsel %vm276, %v1300, 0
    %1303 = vmatprep.subr.mxu0 0.0
    %1304 = vmatpush1.msra.mxu0 %v1294
    %1305 = vmatprep.subr.mxu0 0.0
    %1306 = vmatpush1.msra.mxu0 %v1295
    %1307 = vmatprep.subr.mxu0 0.0
    %1308 = vmatpush1.msra.mxu0 %v1296
    %1309 = vmatprep.subr.mxu0 0.0
    %1310 = vmatpush1.msra.mxu0 %v1297
    %1311 = vmatprep.subr.mxu0 0.0
    %1312 = vmatpush1.msra.mxu0 0.0
    %1313 = vmatprep.subr.mxu0 0.0
    %1314 = vmatpush1.msra.mxu0 0.0
    %1315 = vmatprep.subr.mxu0 0.0
    %1316 = vmatpush1.msra.mxu0 0.0
    %1317 = vmatprep.subr.mxu0 0.0
    %1318 = vmatpush1.msra.mxu0 0.0
    %1319 = vmatprep.subr.mxu0 0.0
    %1320 = vmatpush1.msra.mxu0 0.0
    %1321 = vmatprep.subr.mxu0 0.0
    %1322 = vmatpush1.msra.mxu0 0.0
    %1323 = vmatprep.subr.mxu0 0.0
    %1324 = vmatpush1.msra.mxu0 0.0
    %1325 = vmatprep.subr.mxu0 0.0
    %1326 = vmatpush1.msra.mxu0 0.0
    %1327 = vmatprep.subr.mxu0 0.0
    %1328 = vmatpush1.msra.mxu0 0.0
    %1329 = vmatprep.subr.mxu0 0.0
    %1330 = vmatpush1.msra.mxu0 0.0
    %1331 = vmatprep.subr.mxu0 0.0
    %1332 = vmatpush1.msra.mxu0 0.0
    %1333 = vmatprep.subr.mxu0 0.0
    %1334 = vmatpush1.msra.mxu0 0.0
    %1335 = vmatprep.subr.mxu0 0.0
    %1336 = vmatpush1.msra.mxu0 0.0
    %1337 = vmatprep.subr.mxu0 0.0
    %1338 = vmatpush1.msra.mxu0 0.0
    %1339 = vmatprep.subr.mxu0 0.0
    %1340 = vmatpush1.msra.mxu0 0.0
    %1341 = vmatprep.subr.mxu0 0.0
    %1342 = vmatpush1.msra.mxu0 0.0
    %1343 = vmatprep.subr.mxu0 0.0
    %1344 = vmatpush1.msra.mxu0 0.0
    %1345 = vmatprep.subr.mxu0 0.0
    %1346 = vmatpush1.msra.mxu0 0.0
    %1347 = vmatprep.subr.mxu0 0.0
    %1348 = vmatpush1.msra.mxu0 0.0
    %1349 = vmatprep.subr.mxu0 0.0
    %1350 = vmatpush1.msra.mxu0 0.0
    %1351 = vmatprep.subr.mxu0 0.0
    %1352 = vmatpush1.msra.mxu0 0.0
    %1353 = vmatprep.subr.mxu0 0.0
    %1354 = vmatpush1.msra.mxu0 0.0
    %1355 = vmatprep.subr.mxu0 0.0
    %1356 = vmatpush1.msra.mxu0 0.0
    %1357 = vmatprep.subr.mxu0 0.0
    %1358 = vmatpush1.msra.mxu0 0.0
    %1359 = vmatprep.subr.mxu0 0.0
    %1360 = vmatpush1.msra.mxu0 0.0
    %1361 = vmatprep.subr.mxu0 0.0
    %1362 = vmatpush1.msra.mxu0 0.0
    %1363 = vmatprep.subr.mxu0 0.0
    %1364 = vmatpush1.msra.mxu0 0.0
    %1365 = vmatprep.subr.mxu0 0.0
    %1366 = vmatpush1.msra.mxu0 0.0
    %1367 = vmatprep.mubr.f32.mxu0 0.0
    %1368 = vmatmul.mubr.f32.gmra.mrb[0].mxu0 %v1301
    %v1369 = vpop.f32.mrb[0].mxu0
    %v1370 = vadd.f32 0.0, %v1369
    %v1371 = vpop.f32.mrb[0].mxu0
    %1372 = vdwg.mxu0
    %1374 = vrot.lane.b32.xlu0 %v1288, 32
    %v1375 = vpop.permute.xlu0 %1374
    %v1376 = vsel %vm276, %v1375, 0
    %1378 = vmatprep.subr.mxu0 0.0
    %1379 = vmatpush1.msra.mxu0 %v1289
    %1380 = vmatprep.subr.mxu0 0.0
    %1381 = vmatpush1.msra.mxu0 %v1290
    %1382 = vmatprep.subr.mxu0 0.0
    %1383 = vmatpush1.msra.mxu0 %v1291
    %1384 = vmatprep.subr.mxu0 0.0
    %1385 = vmatpush1.msra.mxu0 %v1292
    %1386 = vmatprep.subr.mxu0 0.0
    %1387 = vmatpush1.msra.mxu0 0.0
    %1388 = vmatprep.subr.mxu0 0.0
    %1389 = vmatpush1.msra.mxu0 0.0
    %1390 = vmatprep.subr.mxu0 0.0
    %1391 = vmatpush1.msra.mxu0 0.0
    %1392 = vmatprep.subr.mxu0 0.0
    %1393 = vmatpush1.msra.mxu0 0.0
    %1394 = vmatprep.subr.mxu0 0.0
    %1395 = vmatpush1.msra.mxu0 0.0
    %1396 = vmatprep.subr.mxu0 0.0
    %1397 = vmatpush1.msra.mxu0 0.0
    %1398 = vmatprep.subr.mxu0 0.0
    %1399 = vmatpush1.msra.mxu0 0.0
    %1400 = vmatprep.subr.mxu0 0.0
    %1401 = vmatpush1.msra.mxu0 0.0
    %1402 = vmatprep.subr.mxu0 0.0
    %1403 = vmatpush1.msra.mxu0 0.0
    %1404 = vmatprep.subr.mxu0 0.0
    %1405 = vmatpush1.msra.mxu0 0.0
    %1406 = vmatprep.subr.mxu0 0.0
    %1407 = vmatpush1.msra.mxu0 0.0
    %1408 = vmatprep.subr.mxu0 0.0
    %1409 = vmatpush1.msra.mxu0 0.0
    %1410 = vmatprep.subr.mxu0 0.0
    %1411 = vmatpush1.msra.mxu0 0.0
    %1412 = vmatprep.subr.mxu0 0.0
    %1413 = vmatpush1.msra.mxu0 0.0
    %1414 = vmatprep.subr.mxu0 0.0
    %1415 = vmatpush1.msra.mxu0 0.0
    %1416 = vmatprep.subr.mxu0 0.0
    %1417 = vmatpush1.msra.mxu0 0.0
    %1418 = vmatprep.subr.mxu0 0.0
    %1419 = vmatpush1.msra.mxu0 0.0
    %1420 = vmatprep.subr.mxu0 0.0
    %1421 = vmatpush1.msra.mxu0 0.0
    %1422 = vmatprep.subr.mxu0 0.0
    %1423 = vmatpush1.msra.mxu0 0.0
    %1424 = vmatprep.subr.mxu0 0.0
    %1425 = vmatpush1.msra.mxu0 0.0
    %1426 = vmatprep.subr.mxu0 0.0
    %1427 = vmatpush1.msra.mxu0 0.0
    %1428 = vmatprep.subr.mxu0 0.0
    %1429 = vmatpush1.msra.mxu0 0.0
    %1430 = vmatprep.subr.mxu0 0.0
    %1431 = vmatpush1.msra.mxu0 0.0
    %1432 = vmatprep.subr.mxu0 0.0
    %1433 = vmatpush1.msra.mxu0 0.0
    %1434 = vmatprep.subr.mxu0 0.0
    %1435 = vmatpush1.msra.mxu0 0.0
    %1436 = vmatprep.subr.mxu0 0.0
    %1437 = vmatpush1.msra.mxu0 0.0
    %1438 = vmatprep.subr.mxu0 0.0
    %1439 = vmatpush1.msra.mxu0 0.0
    %1440 = vmatprep.subr.mxu0 0.0
    %1441 = vmatpush1.msra.mxu0 0.0
    %1442 = vmatprep.mubr.f32.mxu0 0.0
    %1443 = vmatmul.mubr.f32.gmra.mrb[0].mxu0 %v1376
    %v1444 = vpop.f32.mrb[0].mxu0
    %v1445 = vadd.f32 %v1370, %v1444
    %v1446 = vpop.f32.mrb[0].mxu0
    %1447 = vdwg.mxu0
    %v1448 = vadd.f32 %v1445, %v746
    %v1449 = vtanh.pop %v1448
    %v1450 = vmul.f32 %v1449, 0.5
    %v1451 = vadd.f32 %v1450, 0.5
    %v1452 = vsel %vm264, %v1449, %v1451
    %v1453 = vld [vmem:[#allocation3] sm:$0xff]
    %1455 = vrot.lane.b32.xlu0 %v1453, 96
    %v1456 = vpop.permute.xlu0 %1455
    %v1458 = vmul.f32 %v1452, %v1456
    %1460 = vrot.lane.b32.xlu0 %v1452, 64
    %v1461 = vpop.permute.xlu0 %1460
    %v1463 = vmul.f32 %v1452, %v1461
    %1465 = vrot.lane.b32.xlu0 %v1463, 32
    %v1466 = vpop.permute.xlu0 %1465
    %v1468 = vadd.f32 %v1458, %v1466
    %v1469 = vtanh.pop %v1468
    %1471 = vrot.lane.b32.xlu0 %v1469, 64
    %v1472 = vpop.permute.xlu0 %1471
    %v1474 = vmul.f32 %v1452, %v1472
    %1476 = vrot.lane.b32.xlu0 %v1468, 32
    %v1477 = vpop.permute.xlu0 %1476
    %1479 = vst.msk [vmem:[#allocation3] sm:$0xff] %vm779, %v1477
    %1481 = vrot.lane.b32.xlu0 %v1474, 96
    %v1482 = vpop.permute.xlu0 %1481
    %1484 = vst.msk [vmem:[#allocation2] sm:$0xff] %vm779, %v1482
    %v1485 = vld [vmem:[%s786] sm:$0xff]
    %v1486 = vld [vmem:[%s786 + $0x8] sm:$0xff]
    %v1487 = vld [vmem:[%s786 + $0x10] sm:$0xff]
    %v1488 = vld [vmem:[%s786 + $0x18] sm:$0xff]
    %v1489 = vld [vmem:[#allocation2] sm:$0xff]
    %v1490 = vld [vmem:[%s792] sm:$0xff]
    %v1491 = vld [vmem:[%s792 + $0x8] sm:$0xff]
    %v1492 = vld [vmem:[%s792 + $0x10] sm:$0xff]
    %v1493 = vld [vmem:[%s792 + $0x18] sm:$0xff]
    %1495 = vrot.lane.b32.xlu0 %v1489, 32
    %v1496 = vpop.permute.xlu0 %1495
    %v1497 = vsel %vm276, %v1496, 0
    %1499 = vmatprep.subr.mxu0 0.0
    %1500 = vmatpush1.msra.mxu0 %v1490
    %1501 = vmatprep.subr.mxu0 0.0
    %1502 = vmatpush1.msra.mxu0 %v1491
    %1503 = vmatprep.subr.mxu0 0.0
    %1504 = vmatpush1.msra.mxu0 %v1492
    %1505 = vmatprep.subr.mxu0 0.0
    %1506 = vmatpush1.msra.mxu0 %v1493
    %1507 = vmatprep.subr.mxu0 0.0
    %1508 = vmatpush1.msra.mxu0 0.0
    %1509 = vmatprep.subr.mxu0 0.0
    %1510 = vmatpush1.msra.mxu0 0.0
    %1511 = vmatprep.subr.mxu0 0.0
    %1512 = vmatpush1.msra.mxu0 0.0
    %1513 = vmatprep.subr.mxu0 0.0
    %1514 = vmatpush1.msra.mxu0 0.0
    %1515 = vmatprep.subr.mxu0 0.0
    %1516 = vmatpush1.msra.mxu0 0.0
    %1517 = vmatprep.subr.mxu0 0.0
    %1518 = vmatpush1.msra.mxu0 0.0
    %1519 = vmatprep.subr.mxu0 0.0
    %1520 = vmatpush1.msra.mxu0 0.0
    %1521 = vmatprep.subr.mxu0 0.0
    %1522 = vmatpush1.msra.mxu0 0.0
    %1523 = vmatprep.subr.mxu0 0.0
    %1524 = vmatpush1.msra.mxu0 0.0
    %1525 = vmatprep.subr.mxu0 0.0
    %1526 = vmatpush1.msra.mxu0 0.0
    %1527 = vmatprep.subr.mxu0 0.0
    %1528 = vmatpush1.msra.mxu0 0.0
    %1529 = vmatprep.subr.mxu0 0.0
    %1530 = vmatpush1.msra.mxu0 0.0
    %1531 = vmatprep.subr.mxu0 0.0
    %1532 = vmatpush1.msra.mxu0 0.0
    %1533 = vmatprep.subr.mxu0 0.0
    %1534 = vmatpush1.msra.mxu0 0.0
    %1535 = vmatprep.subr.mxu0 0.0
    %1536 = vmatpush1.msra.mxu0 0.0
    %1537 = vmatprep.subr.mxu0 0.0
    %1538 = vmatpush1.msra.mxu0 0.0
    %1539 = vmatprep.subr.mxu0 0.0
    %1540 = vmatpush1.msra.mxu0 0.0
    %1541 = vmatprep.subr.mxu0 0.0
    %1542 = vmatpush1.msra.mxu0 0.0
    %1543 = vmatprep.subr.mxu0 0.0
    %1544 = vmatpush1.msra.mxu0 0.0
    %1545 = vmatprep.subr.mxu0 0.0
    %1546 = vmatpush1.msra.mxu0 0.0
    %1547 = vmatprep.subr.mxu0 0.0
    %1548 = vmatpush1.msra.mxu0 0.0
    %1549 = vmatprep.subr.mxu0 0.0
    %1550 = vmatpush1.msra.mxu0 0.0
    %1551 = vmatprep.subr.mxu0 0.0
    %1552 = vmatpush1.msra.mxu0 0.0
    %1553 = vmatprep.subr.mxu0 0.0
    %1554 = vmatpush1.msra.mxu0 0.0
    %1555 = vmatprep.subr.mxu0 0.0
    %1556 = vmatpush1.msra.mxu0 0.0
    %1557 = vmatprep.subr.mxu0 0.0
    %1558 = vmatpush1.msra.mxu0 0.0
    %1559 = vmatprep.subr.mxu0 0.0
    %1560 = vmatpush1.msra.mxu0 0.0
    %1561 = vmatprep.subr.mxu0 0.0
    %1562 = vmatpush1.msra.mxu0 0.0
    %1563 = vmatprep.mubr.f32.mxu0 0.0
    %1564 = vmatmul.mubr.f32.gmra.mrb[0].mxu0 %v1497
    %v1565 = vpop.f32.mrb[0].mxu0
    %v1566 = vadd.f32 0.0, %v1565
    %v1567 = vpop.f32.mrb[0].mxu0
    %1568 = vdwg.mxu0
    %1569 = vrot.lane.b32.xlu0 %v1474, 32
    %v1570 = vpop.permute.xlu0 %1569
    %v1571 = vsel %vm276, %v1570, 0
    %1573 = vmatprep.subr.mxu0 0.0
    %1574 = vmatpush1.msra.mxu0 %v1485
    %1575 = vmatprep.subr.mxu0 0.0
    %1576 = vmatpush1.msra.mxu0 %v1486
    %1577 = vmatprep.subr.mxu0 0.0
    %1578 = vmatpush1.msra.mxu0 %v1487
    %1579 = vmatprep.subr.mxu0 0.0
    %1580 = vmatpush1.msra.mxu0 %v1488
    %1581 = vmatprep.subr.mxu0 0.0
    %1582 = vmatpush1.msra.mxu0 0.0
    %1583 = vmatprep.subr.mxu0 0.0
    %1584 = vmatpush1.msra.mxu0 0.0
    %1585 = vmatprep.subr.mxu0 0.0
    %1586 = vmatpush1.msra.mxu0 0.0
    %1587 = vmatprep.subr.mxu0 0.0
    %1588 = vmatpush1.msra.mxu0 0.0
    %1589 = vmatprep.subr.mxu0 0.0
    %1590 = vmatpush1.msra.mxu0 0.0
    %1591 = vmatprep.subr.mxu0 0.0
    %1592 = vmatpush1.msra.mxu0 0.0
    %1593 = vmatprep.subr.mxu0 0.0
    %1594 = vmatpush1.msra.mxu0 0.0
    %1595 = vmatprep.subr.mxu0 0.0
    %1596 = vmatpush1.msra.mxu0 0.0
    %1597 = vmatprep.subr.mxu0 0.0
    %1598 = vmatpush1.msra.mxu0 0.0
    %1599 = vmatprep.subr.mxu0 0.0
    %1600 = vmatpush1.msra.mxu0 0.0
    %1601 = vmatprep.subr.mxu0 0.0
    %1602 = vmatpush1.msra.mxu0 0.0
    %1603 = vmatprep.subr.mxu0 0.0
    %1604 = vmatpush1.msra.mxu0 0.0
    %1605 = vmatprep.subr.mxu0 0.0
    %1606 = vmatpush1.msra.mxu0 0.0
    %1607 = vmatprep.subr.mxu0 0.0
    %1608 = vmatpush1.msra.mxu0 0.0
    %1609 = vmatprep.subr.mxu0 0.0
    %1610 = vmatpush1.msra.mxu0 0.0
    %1611 = vmatprep.subr.mxu0 0.0
    %1612 = vmatpush1.msra.mxu0 0.0
    %1613 = vmatprep.subr.mxu0 0.0
    %1614 = vmatpush1.msra.mxu0 0.0
    %1615 = vmatprep.subr.mxu0 0.0
    %1616 = vmatpush1.msra.mxu0 0.0
    %1617 = vmatprep.subr.mxu0 0.0
    %1618 = vmatpush1.msra.mxu0 0.0
    %1619 = vmatprep.subr.mxu0 0.0
    %1620 = vmatpush1.msra.mxu0 0.0
    %1621 = vmatprep.subr.mxu0 0.0
    %1622 = vmatpush1.msra.mxu0 0.0
    %1623 = vmatprep.subr.mxu0 0.0
    %1624 = vmatpush1.msra.mxu0 0.0
    %1625 = vmatprep.subr.mxu0 0.0
    %1626 = vmatpush1.msra.mxu0 0.0
    %1627 = vmatprep.subr.mxu0 0.0
    %1628 = vmatpush1.msra.mxu0 0.0
    %1629 = vmatprep.subr.mxu0 0.0
    %1630 = vmatpush1.msra.mxu0 0.0
    %1631 = vmatprep.subr.mxu0 0.0
    %1632 = vmatpush1.msra.mxu0 0.0
    %1633 = vmatprep.subr.mxu0 0.0
    %1634 = vmatpush1.msra.mxu0 0.0
    %1635 = vmatprep.subr.mxu0 0.0
    %1636 = vmatpush1.msra.mxu0 0.0
    %1637 = vmatprep.mubr.f32.mxu0 0.0
    %1638 = vmatmul.mubr.f32.gmra.mrb[0].mxu0 %v1571
    %v1639 = vpop.f32.mrb[0].mxu0
    %v1640 = vadd.f32 %v1566, %v1639
    %v1641 = vpop.f32.mrb[0].mxu0
    %1642 = vdwg.mxu0
    %v1643 = vadd.f32 %v1640, %v950
    %v1644 = vtanh.pop %v1643
    %v1645 = vmul.f32 %v1644, 0.5
    %v1646 = vadd.f32 %v1645, 0.5
    %v1647 = vsel %vm264, %v1644, %v1646
    %v1648 = vld [vmem:[#allocation3] sm:$0xff]
    %1650 = vrot.lane.b32.xlu0 %v1648, 64
    %v1651 = vpop.permute.xlu0 %1650
    %v1653 = vmul.f32 %v1647, %v1651
    %1655 = vrot.lane.b32.xlu0 %v1647, 64
    %v1656 = vpop.permute.xlu0 %1655
    %v1658 = vmul.f32 %v1647, %v1656
    %1660 = vrot.lane.b32.xlu0 %v1658, 32
    %v1661 = vpop.permute.xlu0 %1660
    %v1663 = vadd.f32 %v1653, %v1661
    %v1664 = vtanh.pop %v1663
    %1666 = vrot.lane.b32.xlu0 %v1664, 64
    %v1667 = vpop.permute.xlu0 %1666
    %v1669 = vmul.f32 %v1647, %v1667
    %1671 = vrot.lane.b32.xlu0 %v1663, 64
    %v1672 = vpop.permute.xlu0 %1671
    %1674 = vst.msk [vmem:[#allocation3] sm:$0xff] %vm983, %v1672
    %1675 = vst.msk [vmem:[#allocation2] sm:$0xff] %vm983, %v1669
    %s1676 = scalar_lea.vmem [#allocation4], 16
    %v1677 = vld [vmem:[%s1676] sm:$0xff]
    %v1678 = vld [vmem:[#allocation2] sm:$0xff]
    %v1679 = vld [vmem:[#allocation11] sm:$0xff]
    %v1680 = vld [vmem:[#allocation11 + $0x8] sm:$0xff]
    %v1681 = vld [vmem:[#allocation11 + $0x10] sm:$0xff]
    %v1682 = vld [vmem:[#allocation11 + $0x18] sm:$0xff]
    %v1684 = vsel %vm276, %v1678, 0
    %1686 = vmatprep.subr.mxu0 0.0
    %1687 = vmatpush1.msra.mxu0 %v1679
    %1688 = vmatprep.subr.mxu0 0.0
    %1689 = vmatpush1.msra.mxu0 %v1680
    %1690 = vmatprep.subr.mxu0 0.0
    %1691 = vmatpush1.msra.mxu0 %v1681
    %1692 = vmatprep.subr.mxu0 0.0
    %1693 = vmatpush1.msra.mxu0 %v1682
    %1694 = vmatprep.subr.mxu0 0.0
    %1695 = vmatpush1.msra.mxu0 0.0
    %1696 = vmatprep.subr.mxu0 0.0
    %1697 = vmatpush1.msra.mxu0 0.0
    %1698 = vmatprep.subr.mxu0 0.0
    %1699 = vmatpush1.msra.mxu0 0.0
    %1700 = vmatprep.subr.mxu0 0.0
    %1701 = vmatpush1.msra.mxu0 0.0
    %1702 = vmatprep.subr.mxu0 0.0
    %1703 = vmatpush1.msra.mxu0 0.0
    %1704 = vmatprep.subr.mxu0 0.0
    %1705 = vmatpush1.msra.mxu0 0.0
    %1706 = vmatprep.subr.mxu0 0.0
    %1707 = vmatpush1.msra.mxu0 0.0
    %1708 = vmatprep.subr.mxu0 0.0
    %1709 = vmatpush1.msra.mxu0 0.0
    %1710 = vmatprep.subr.mxu0 0.0
    %1711 = vmatpush1.msra.mxu0 0.0
    %1712 = vmatprep.subr.mxu0 0.0
    %1713 = vmatpush1.msra.mxu0 0.0
    %1714 = vmatprep.subr.mxu0 0.0
    %1715 = vmatpush1.msra.mxu0 0.0
    %1716 = vmatprep.subr.mxu0 0.0
    %1717 = vmatpush1.msra.mxu0 0.0
    %1718 = vmatprep.subr.mxu0 0.0
    %1719 = vmatpush1.msra.mxu0 0.0
    %1720 = vmatprep.subr.mxu0 0.0
    %1721 = vmatpush1.msra.mxu0 0.0
    %1722 = vmatprep.subr.mxu0 0.0
    %1723 = vmatpush1.msra.mxu0 0.0
    %1724 = vmatprep.subr.mxu0 0.0
    %1725 = vmatpush1.msra.mxu0 0.0
    %1726 = vmatprep.subr.mxu0 0.0
    %1727 = vmatpush1.msra.mxu0 0.0
    %1728 = vmatprep.subr.mxu0 0.0
    %1729 = vmatpush1.msra.mxu0 0.0
    %1730 = vmatprep.subr.mxu0 0.0
    %1731 = vmatpush1.msra.mxu0 0.0
    %1732 = vmatprep.subr.mxu0 0.0
    %1733 = vmatpush1.msra.mxu0 0.0
    %1734 = vmatprep.subr.mxu0 0.0
    %1735 = vmatpush1.msra.mxu0 0.0
    %1736 = vmatprep.subr.mxu0 0.0
    %1737 = vmatpush1.msra.mxu0 0.0
    %1738 = vmatprep.subr.mxu0 0.0
    %1739 = vmatpush1.msra.mxu0 0.0
    %1740 = vmatprep.subr.mxu0 0.0
    %1741 = vmatpush1.msra.mxu0 0.0
    %1742 = vmatprep.subr.mxu0 0.0
    %1743 = vmatpush1.msra.mxu0 0.0
    %1744 = vmatprep.subr.mxu0 0.0
    %1745 = vmatpush1.msra.mxu0 0.0
    %1746 = vmatprep.subr.mxu0 0.0
    %1747 = vmatpush1.msra.mxu0 0.0
    %1748 = vmatprep.subr.mxu0 0.0
    %1749 = vmatpush1.msra.mxu0 0.0
    %1750 = vmatprep.mubr.f32.mxu0 0.0
    %1751 = vmatmul.mubr.f32.gmra.mrb[0].mxu0 %v1684
    %v1752 = vpop.f32.mrb[0].mxu0
    %v1753 = vadd.f32 0.0, %v1752
    %v1754 = vpop.f32.mrb[0].mxu0
    %1755 = vdwg.mxu0
    %v1756 = vadd.f32 %v1677, %v1753
    %v1757 = vtanh.pop %v1756
    %v1758 = vmul.f32 %v1757, 0.5
    %v1759 = vadd.f32 %v1758, 0.5
    %v1760 = vsel %vm264, %v1757, %v1759
    %v1761 = vld [vmem:[#allocation3] sm:$0xff]
    %1763 = vrot.lane.b32.xlu0 %v1761, 32
    %v1764 = vpop.permute.xlu0 %1763
    %v1766 = vmul.f32 %v1760, %v1764
    %1768 = vrot.lane.b32.xlu0 %v1760, 64
    %v1769 = vpop.permute.xlu0 %1768
    %v1771 = vmul.f32 %v1760, %v1769
    %1773 = vrot.lane.b32.xlu0 %v1771, 32
    %v1774 = vpop.permute.xlu0 %1773
    %v1776 = vadd.f32 %v1766, %v1774
    %v1777 = vtanh.pop %v1776
    %1779 = vrot.lane.b32.xlu0 %v1777, 64
    %v1780 = vpop.permute.xlu0 %1779
    %v1782 = vmul.f32 %v1760, %v1780
    %1784 = vrot.lane.b32.xlu0 %v1776, 96
    %v1785 = vpop.permute.xlu0 %1784
    %1787 = vst.msk [vmem:[#allocation3] sm:$0xff] %vm276, %v1785
    %1789 = vrot.lane.b32.xlu0 %v1782, 32
    %v1790 = vpop.permute.xlu0 %1789
    %1792 = vst.msk [vmem:[#allocation2] sm:$0xff] %vm276, %v1790
    %v1793 = vld [vmem:[#allocation10] sm:$0xff]
    %v1794 = vld [vmem:[#allocation10 + $0x8] sm:$0xff]
    %v1795 = vld [vmem:[#allocation10 + $0x10] sm:$0xff]
    %v1796 = vld [vmem:[#allocation10 + $0x18] sm:$0xff]
    %v1797 = vld [vmem:[#allocation2] sm:$0xff]
    %v1798 = vld [vmem:[%s392] sm:$0xff]
    %v1799 = vld [vmem:[%s392 + $0x8] sm:$0xff]
    %v1800 = vld [vmem:[%s392 + $0x10] sm:$0xff]
    %v1801 = vld [vmem:[%s392 + $0x18] sm:$0xff]
    %1803 = vrot.lane.b32.xlu0 %v1797, 96
    %v1804 = vpop.permute.xlu0 %1803
    %v1805 = vsel %vm276, %v1804, 0
    %1807 = vmatprep.subr.mxu0 0.0
    %1808 = vmatpush1.msra.mxu0 %v1798
    %1809 = vmatprep.subr.mxu0 0.0
    %1810 = vmatpush1.msra.mxu0 %v1799
    %1811 = vmatprep.subr.mxu0 0.0
    %1812 = vmatpush1.msra.mxu0 %v1800
    %1813 = vmatprep.subr.mxu0 0.0
    %1814 = vmatpush1.msra.mxu0 %v1801
    %1815 = vmatprep.subr.mxu0 0.0
    %1816 = vmatpush1.msra.mxu0 0.0
    %1817 = vmatprep.subr.mxu0 0.0
    %1818 = vmatpush1.msra.mxu0 0.0
    %1819 = vmatprep.subr.mxu0 0.0
    %1820 = vmatpush1.msra.mxu0 0.0
    %1821 = vmatprep.subr.mxu0 0.0
    %1822 = vmatpush1.msra.mxu0 0.0
    %1823 = vmatprep.subr.mxu0 0.0
    %1824 = vmatpush1.msra.mxu0 0.0
    %1825 = vmatprep.subr.mxu0 0.0
    %1826 = vmatpush1.msra.mxu0 0.0
    %1827 = vmatprep.subr.mxu0 0.0
    %1828 = vmatpush1.msra.mxu0 0.0
    %1829 = vmatprep.subr.mxu0 0.0
    %1830 = vmatpush1.msra.mxu0 0.0
    %1831 = vmatprep.subr.mxu0 0.0
    %1832 = vmatpush1.msra.mxu0 0.0
    %1833 = vmatprep.subr.mxu0 0.0
    %1834 = vmatpush1.msra.mxu0 0.0
    %1835 = vmatprep.subr.mxu0 0.0
    %1836 = vmatpush1.msra.mxu0 0.0
    %1837 = vmatprep.subr.mxu0 0.0
    %1838 = vmatpush1.msra.mxu0 0.0
    %1839 = vmatprep.subr.mxu0 0.0
    %1840 = vmatpush1.msra.mxu0 0.0
    %1841 = vmatprep.subr.mxu0 0.0
    %1842 = vmatpush1.msra.mxu0 0.0
    %1843 = vmatprep.subr.mxu0 0.0
    %1844 = vmatpush1.msra.mxu0 0.0
    %1845 = vmatprep.subr.mxu0 0.0
    %1846 = vmatpush1.msra.mxu0 0.0
    %1847 = vmatprep.subr.mxu0 0.0
    %1848 = vmatpush1.msra.mxu0 0.0
    %1849 = vmatprep.subr.mxu0 0.0
    %1850 = vmatpush1.msra.mxu0 0.0
    %1851 = vmatprep.subr.mxu0 0.0
    %1852 = vmatpush1.msra.mxu0 0.0
    %1853 = vmatprep.subr.mxu0 0.0
    %1854 = vmatpush1.msra.mxu0 0.0
    %1855 = vmatprep.subr.mxu0 0.0
    %1856 = vmatpush1.msra.mxu0 0.0
    %1857 = vmatprep.subr.mxu0 0.0
    %1858 = vmatpush1.msra.mxu0 0.0
    %1859 = vmatprep.subr.mxu0 0.0
    %1860 = vmatpush1.msra.mxu0 0.0
    %1861 = vmatprep.subr.mxu0 0.0
    %1862 = vmatpush1.msra.mxu0 0.0
    %1863 = vmatprep.subr.mxu0 0.0
    %1864 = vmatpush1.msra.mxu0 0.0
    %1865 = vmatprep.subr.mxu0 0.0
    %1866 = vmatpush1.msra.mxu0 0.0
    %1867 = vmatprep.subr.mxu0 0.0
    %1868 = vmatpush1.msra.mxu0 0.0
    %1869 = vmatprep.subr.mxu0 0.0
    %1870 = vmatpush1.msra.mxu0 0.0
    %1871 = vmatprep.mubr.f32.mxu0 0.0
    %1872 = vmatmul.mubr.f32.gmra.mrb[0].mxu0 %v1805
    %v1873 = vpop.f32.mrb[0].mxu0
    %v1874 = vadd.f32 0.0, %v1873
    %v1875 = vpop.f32.mrb[0].mxu0
    %1876 = vdwg.mxu0
    %v1877 = vsel %vm276, %v1790, 0
    %1879 = vmatprep.subr.mxu0 0.0
    %1880 = vmatpush1.msra.mxu0 %v1793
    %1881 = vmatprep.subr.mxu0 0.0
    %1882 = vmatpush1.msra.mxu0 %v1794
    %1883 = vmatprep.subr.mxu0 0.0
    %1884 = vmatpush1.msra.mxu0 %v1795
    %1885 = vmatprep.subr.mxu0 0.0
    %1886 = vmatpush1.msra.mxu0 %v1796
    %1887 = vmatprep.subr.mxu0 0.0
    %1888 = vmatpush1.msra.mxu0 0.0
    %1889 = vmatprep.subr.mxu0 0.0
    %1890 = vmatpush1.msra.mxu0 0.0
    %1891 = vmatprep.subr.mxu0 0.0
    %1892 = vmatpush1.msra.mxu0 0.0
    %1893 = vmatprep.subr.mxu0 0.0
    %1894 = vmatpush1.msra.mxu0 0.0
    %1895 = vmatprep.subr.mxu0 0.0
    %1896 = vmatpush1.msra.mxu0 0.0
    %1897 = vmatprep.subr.mxu0 0.0
    %1898 = vmatpush1.msra.mxu0 0.0
    %1899 = vmatprep.subr.mxu0 0.0
    %1900 = vmatpush1.msra.mxu0 0.0
    %1901 = vmatprep.subr.mxu0 0.0
    %1902 = vmatpush1.msra.mxu0 0.0
    %1903 = vmatprep.subr.mxu0 0.0
    %1904 = vmatpush1.msra.mxu0 0.0
    %1905 = vmatprep.subr.mxu0 0.0
    %1906 = vmatpush1.msra.mxu0 0.0
    %1907 = vmatprep.subr.mxu0 0.0
    %1908 = vmatpush1.msra.mxu0 0.0
    %1909 = vmatprep.subr.mxu0 0.0
    %1910 = vmatpush1.msra.mxu0 0.0
    %1911 = vmatprep.subr.mxu0 0.0
    %1912 = vmatpush1.msra.mxu0 0.0
    %1913 = vmatprep.subr.mxu0 0.0
    %1914 = vmatpush1.msra.mxu0 0.0
    %1915 = vmatprep.subr.mxu0 0.0
    %1916 = vmatpush1.msra.mxu0 0.0
    %1917 = vmatprep.subr.mxu0 0.0
    %1918 = vmatpush1.msra.mxu0 0.0
    %1919 = vmatprep.subr.mxu0 0.0
    %1920 = vmatpush1.msra.mxu0 0.0
    %1921 = vmatprep.subr.mxu0 0.0
    %1922 = vmatpush1.msra.mxu0 0.0
    %1923 = vmatprep.subr.mxu0 0.0
    %1924 = vmatpush1.msra.mxu0 0.0
    %1925 = vmatprep.subr.mxu0 0.0
    %1926 = vmatpush1.msra.mxu0 0.0
    %1927 = vmatprep.subr.mxu0 0.0
    %1928 = vmatpush1.msra.mxu0 0.0
    %1929 = vmatprep.subr.mxu0 0.0
    %1930 = vmatpush1.msra.mxu0 0.0
    %1931 = vmatprep.subr.mxu0 0.0
    %1932 = vmatpush1.msra.mxu0 0.0
    %1933 = vmatprep.subr.mxu0 0.0
    %1934 = vmatpush1.msra.mxu0 0.0
    %1935 = vmatprep.subr.mxu0 0.0
    %1936 = vmatpush1.msra.mxu0 0.0
    %1937 = vmatprep.subr.mxu0 0.0
    %1938 = vmatpush1.msra.mxu0 0.0
    %1939 = vmatprep.subr.mxu0 0.0
    %1940 = vmatpush1.msra.mxu0 0.0
    %1941 = vmatprep.subr.mxu0 0.0
    %1942 = vmatpush1.msra.mxu0 0.0
    %1943 = vmatprep.mubr.f32.mxu0 0.0
    %1944 = vmatmul.mubr.f32.gmra.mrb[0].mxu0 %v1877
    %v1945 = vpop.f32.mrb[0].mxu0
    %v1946 = vadd.f32 %v1874, %v1945
    %v1947 = vpop.f32.mrb[0].mxu0
    %1948 = vdwg.mxu0
    %v1949 = vadd.f32 %v1946, %v548
    %v1950 = vtanh.pop %v1949
    %v1951 = vmul.f32 %v1950, 0.5
    %v1952 = vadd.f32 %v1951, 0.5
    %v1953 = vsel %vm264, %v1950, %v1952
    %v1954 = vld [vmem:[#allocation3] sm:$0xff]
    %v1955 = vmul.f32 %v1953, %v1954
    %1957 = vrot.lane.b32.xlu0 %v1953, 64
    %v1958 = vpop.permute.xlu0 %1957
    %v1960 = vmul.f32 %v1953, %v1958
    %1962 = vrot.lane.b32.xlu0 %v1960, 32
    %v1963 = vpop.permute.xlu0 %1962
    %v1965 = vadd.f32 %v1955, %v1963
    %v1966 = vtanh.pop %v1965
    %1968 = vrot.lane.b32.xlu0 %v1966, 64
    %v1969 = vpop.permute.xlu0 %1968
    %v1971 = vmul.f32 %v1953, %v1969
    %1972 = vst.msk [vmem:[#allocation3] sm:$0xff] %vm573, %v1965
    %1974 = vrot.lane.b32.xlu0 %v1971, 64
    %v1975 = vpop.permute.xlu0 %1974
    %1977 = vst.msk [vmem:[#allocation2] sm:$0xff] %vm573, %v1975
    %v1978 = vmax.f32 %v1971, 0.0
    %v1979 = vld [vmem:[%s581] sm:$0xff]
    %v1980 = vld [vmem:[%s581 + $0x8] sm:$0xff]
    %v1981 = vld [vmem:[%s581 + $0x10] sm:$0xff]
    %v1982 = vld [vmem:[%s581 + $0x18] sm:$0xff]
    %v1983 = vld [vmem:[#allocation2] sm:$0xff]
    %v1984 = vld [vmem:[%s587] sm:$0xff]
    %v1985 = vld [vmem:[%s587 + $0x8] sm:$0xff]
    %v1986 = vld [vmem:[%s587 + $0x10] sm:$0xff]
    %v1987 = vld [vmem:[%s587 + $0x18] sm:$0xff]
    %1989 = vrot.lane.b32.xlu0 %v1983, 64
    %v1990 = vpop.permute.xlu0 %1989
    %v1991 = vsel %vm276, %v1990, 0
    %1993 = vmatprep.subr.mxu0 0.0
    %1994 = vmatpush1.msra.mxu0 %v1984
    %1995 = vmatprep.subr.mxu0 0.0
    %1996 = vmatpush1.msra.mxu0 %v1985
    %1997 = vmatprep.subr.mxu0 0.0
    %1998 = vmatpush1.msra.mxu0 %v1986
    %1999 = vmatprep.subr.mxu0 0.0
    %2000 = vmatpush1.msra.mxu0 %v1987
    %2001 = vmatprep.subr.mxu0 0.0
    %2002 = vmatpush1.msra.mxu0 0.0
    %2003 = vmatprep.subr.mxu0 0.0
    %2004 = vmatpush1.msra.mxu0 0.0
    %2005 = vmatprep.subr.mxu0 0.0
    %2006 = vmatpush1.msra.mxu0 0.0
    %2007 = vmatprep.subr.mxu0 0.0
    %2008 = vmatpush1.msra.mxu0 0.0
    %2009 = vmatprep.subr.mxu0 0.0
    %2010 = vmatpush1.msra.mxu0 0.0
    %2011 = vmatprep.subr.mxu0 0.0
    %2012 = vmatpush1.msra.mxu0 0.0
    %2013 = vmatprep.subr.mxu0 0.0
    %2014 = vmatpush1.msra.mxu0 0.0
    %2015 = vmatprep.subr.mxu0 0.0
    %2016 = vmatpush1.msra.mxu0 0.0
    %2017 = vmatprep.subr.mxu0 0.0
    %2018 = vmatpush1.msra.mxu0 0.0
    %2019 = vmatprep.subr.mxu0 0.0
    %2020 = vmatpush1.msra.mxu0 0.0
    %2021 = vmatprep.subr.mxu0 0.0
    %2022 = vmatpush1.msra.mxu0 0.0
    %2023 = vmatprep.subr.mxu0 0.0
    %2024 = vmatpush1.msra.mxu0 0.0
    %2025 = vmatprep.subr.mxu0 0.0
    %2026 = vmatpush1.msra.mxu0 0.0
    %2027 = vmatprep.subr.mxu0 0.0
    %2028 = vmatpush1.msra.mxu0 0.0
    %2029 = vmatprep.subr.mxu0 0.0
    %2030 = vmatpush1.msra.mxu0 0.0
    %2031 = vmatprep.subr.mxu0 0.0
    %2032 = vmatpush1.msra.mxu0 0.0
    %2033 = vmatprep.subr.mxu0 0.0
    %2034 = vmatpush1.msra.mxu0 0.0
    %2035 = vmatprep.subr.mxu0 0.0
    %2036 = vmatpush1.msra.mxu0 0.0
    %2037 = vmatprep.subr.mxu0 0.0
    %2038 = vmatpush1.msra.mxu0 0.0
    %2039 = vmatprep.subr.mxu0 0.0
    %2040 = vmatpush1.msra.mxu0 0.0
    %2041 = vmatprep.subr.mxu0 0.0
    %2042 = vmatpush1.msra.mxu0 0.0
    %2043 = vmatprep.subr.mxu0 0.0
    %2044 = vmatpush1.msra.mxu0 0.0
    %2045 = vmatprep.subr.mxu0 0.0
    %2046 = vmatpush1.msra.mxu0 0.0
    %2047 = vmatprep.subr.mxu0 0.0
    %2048 = vmatpush1.msra.mxu0 0.0
    %2049 = vmatprep.subr.mxu0 0.0
    %2050 = vmatpush1.msra.mxu0 0.0
    %2051 = vmatprep.subr.mxu0 0.0
    %2052 = vmatpush1.msra.mxu0 0.0
    %2053 = vmatprep.subr.mxu0 0.0
    %2054 = vmatpush1.msra.mxu0 0.0
    %2055 = vmatprep.subr.mxu0 0.0
    %2056 = vmatpush1.msra.mxu0 0.0
    %2057 = vmatprep.mubr.f32.mxu0 0.0
    %2058 = vmatmul.mubr.f32.gmra.mrb[0].mxu0 %v1991
    %v2059 = vpop.f32.mrb[0].mxu0
    %v2060 = vadd.f32 0.0, %v2059
    %v2061 = vpop.f32.mrb[0].mxu0
    %2062 = vdwg.mxu0
    %2064 = vrot.lane.b32.xlu0 %v1978, 32
    %v2065 = vpop.permute.xlu0 %2064
    %v2066 = vsel %vm276, %v2065, 0
    %2068 = vmatprep.subr.mxu0 0.0
    %2069 = vmatpush1.msra.mxu0 %v1979
    %2070 = vmatprep.subr.mxu0 0.0
    %2071 = vmatpush1.msra.mxu0 %v1980
    %2072 = vmatprep.subr.mxu0 0.0
    %2073 = vmatpush1.msra.mxu0 %v1981
    %2074 = vmatprep.subr.mxu0 0.0
    %2075 = vmatpush1.msra.mxu0 %v1982
    %2076 = vmatprep.subr.mxu0 0.0
    %2077 = vmatpush1.msra.mxu0 0.0
    %2078 = vmatprep.subr.mxu0 0.0
    %2079 = vmatpush1.msra.mxu0 0.0
    %2080 = vmatprep.subr.mxu0 0.0
    %2081 = vmatpush1.msra.mxu0 0.0
    %2082 = vmatprep.subr.mxu0 0.0
    %2083 = vmatpush1.msra.mxu0 0.0
    %2084 = vmatprep.subr.mxu0 0.0
    %2085 = vmatpush1.msra.mxu0 0.0
    %2086 = vmatprep.subr.mxu0 0.0
    %2087 = vmatpush1.msra.mxu0 0.0
    %2088 = vmatprep.subr.mxu0 0.0
    %2089 = vmatpush1.msra.mxu0 0.0
    %2090 = vmatprep.subr.mxu0 0.0
    %2091 = vmatpush1.msra.mxu0 0.0
    %2092 = vmatprep.subr.mxu0 0.0
    %2093 = vmatpush1.msra.mxu0 0.0
    %2094 = vmatprep.subr.mxu0 0.0
    %2095 = vmatpush1.msra.mxu0 0.0
    %2096 = vmatprep.subr.mxu0 0.0
    %2097 = vmatpush1.msra.mxu0 0.0
    %2098 = vmatprep.subr.mxu0 0.0
    %2099 = vmatpush1.msra.mxu0 0.0
    %2100 = vmatprep.subr.mxu0 0.0
    %2101 = vmatpush1.msra.mxu0 0.0
    %2102 = vmatprep.subr.mxu0 0.0
    %2103 = vmatpush1.msra.mxu0 0.0
    %2104 = vmatprep.subr.mxu0 0.0
    %2105 = vmatpush1.msra.mxu0 0.0
    %2106 = vmatprep.subr.mxu0 0.0
    %2107 = vmatpush1.msra.mxu0 0.0
    %2108 = vmatprep.subr.mxu0 0.0
    %2109 = vmatpush1.msra.mxu0 0.0
    %2110 = vmatprep.subr.mxu0 0.0
    %2111 = vmatpush1.msra.mxu0 0.0
    %2112 = vmatprep.subr.mxu0 0.0
    %2113 = vmatpush1.msra.mxu0 0.0
    %2114 = vmatprep.subr.mxu0 0.0
    %2115 = vmatpush1.msra.mxu0 0.0
    %2116 = vmatprep.subr.mxu0 0.0
    %2117 = vmatpush1.msra.mxu0 0.0
    %2118 = vmatprep.subr.mxu0 0.0
    %2119 = vmatpush1.msra.mxu0 0.0
    %2120 = vmatprep.subr.mxu0 0.0
    %2121 = vmatpush1.msra.mxu0 0.0
    %2122 = vmatprep.subr.mxu0 0.0
    %2123 = vmatpush1.msra.mxu0 0.0
    %2124 = vmatprep.subr.mxu0 0.0
    %2125 = vmatpush1.msra.mxu0 0.0
    %2126 = vmatprep.subr.mxu0 0.0
    %2127 = vmatpush1.msra.mxu0 0.0
    %2128 = vmatprep.subr.mxu0 0.0
    %2129 = vmatpush1.msra.mxu0 0.0
    %2130 = vmatprep.subr.mxu0 0.0
    %2131 = vmatpush1.msra.mxu0 0.0
    %2132 = vmatprep.mubr.f32.mxu0 0.0
    %2133 = vmatmul.mubr.f32.gmra.mrb[0].mxu0 %v2066
    %v2134 = vpop.f32.mrb[0].mxu0
    %v2135 = vadd.f32 %v2060, %v2134
    %v2136 = vpop.f32.mrb[0].mxu0
    %2137 = vdwg.mxu0
    %v2138 = vadd.f32 %v2135, %v746
    %v2139 = vtanh.pop %v2138
    %v2140 = vmul.f32 %v2139, 0.5
    %v2141 = vadd.f32 %v2140, 0.5
    %v2142 = vsel %vm264, %v2139, %v2141
    %v2143 = vld [vmem:[#allocation3] sm:$0xff]
    %2145 = vrot.lane.b32.xlu0 %v2143, 96
    %v2146 = vpop.permute.xlu0 %2145
    %v2148 = vmul.f32 %v2142, %v2146
    %2150 = vrot.lane.b32.xlu0 %v2142, 64
    %v2151 = vpop.permute.xlu0 %2150
    %v2153 = vmul.f32 %v2142, %v2151
    %2155 = vrot.lane.b32.xlu0 %v2153, 32
    %v2156 = vpop.permute.xlu0 %2155
    %v2158 = vadd.f32 %v2148, %v2156
    %v2159 = vtanh.pop %v2158
    %2161 = vrot.lane.b32.xlu0 %v2159, 64
    %v2162 = vpop.permute.xlu0 %2161
    %v2164 = vmul.f32 %v2142, %v2162
    %2166 = vrot.lane.b32.xlu0 %v2158, 32
    %v2167 = vpop.permute.xlu0 %2166
    %2169 = vst.msk [vmem:[#allocation3] sm:$0xff] %vm779, %v2167
    %2171 = vrot.lane.b32.xlu0 %v2164, 96
    %v2172 = vpop.permute.xlu0 %2171
    %2174 = vst.msk [vmem:[#allocation2] sm:$0xff] %vm779, %v2172
    %v2175 = vld [vmem:[%s786] sm:$0xff]
    %v2176 = vld [vmem:[%s786 + $0x8] sm:$0xff]
    %v2177 = vld [vmem:[%s786 + $0x10] sm:$0xff]
    %v2178 = vld [vmem:[%s786 + $0x18] sm:$0xff]
    %v2179 = vld [vmem:[#allocation2] sm:$0xff]
    %v2180 = vld [vmem:[%s792] sm:$0xff]
    %v2181 = vld [vmem:[%s792 + $0x8] sm:$0xff]
    %v2182 = vld [vmem:[%s792 + $0x10] sm:$0xff]
    %v2183 = vld [vmem:[%s792 + $0x18] sm:$0xff]
    %2185 = vrot.lane.b32.xlu0 %v2179, 32
    %v2186 = vpop.permute.xlu0 %2185
    %v2187 = vsel %vm276, %v2186, 0
    %2189 = vmatprep.subr.mxu0 0.0
    %2190 = vmatpush1.msra.mxu0 %v2180
    %2191 = vmatprep.subr.mxu0 0.0
    %2192 = vmatpush1.msra.mxu0 %v2181
    %2193 = vmatprep.subr.mxu0 0.0
    %2194 = vmatpush1.msra.mxu0 %v2182
    %2195 = vmatprep.subr.mxu0 0.0
    %2196 = vmatpush1.msra.mxu0 %v2183
    %2197 = vmatprep.subr.mxu0 0.0
    %2198 = vmatpush1.msra.mxu0 0.0
    %2199 = vmatprep.subr.mxu0 0.0
    %2200 = vmatpush1.msra.mxu0 0.0
    %2201 = vmatprep.subr.mxu0 0.0
    %2202 = vmatpush1.msra.mxu0 0.0
    %2203 = vmatprep.subr.mxu0 0.0
    %2204 = vmatpush1.msra.mxu0 0.0
    %2205 = vmatprep.subr.mxu0 0.0
    %2206 = vmatpush1.msra.mxu0 0.0
    %2207 = vmatprep.subr.mxu0 0.0
    %2208 = vmatpush1.msra.mxu0 0.0
    %2209 = vmatprep.subr.mxu0 0.0
    %2210 = vmatpush1.msra.mxu0 0.0
    %2211 = vmatprep.subr.mxu0 0.0
    %2212 = vmatpush1.msra.mxu0 0.0
    %2213 = vmatprep.subr.mxu0 0.0
    %2214 = vmatpush1.msra.mxu0 0.0
    %2215 = vmatprep.subr.mxu0 0.0
    %2216 = vmatpush1.msra.mxu0 0.0
    %2217 = vmatprep.subr.mxu0 0.0
    %2218 = vmatpush1.msra.mxu0 0.0
    %2219 = vmatprep.subr.mxu0 0.0
    %2220 = vmatpush1.msra.mxu0 0.0
    %2221 = vmatprep.subr.mxu0 0.0
    %2222 = vmatpush1.msra.mxu0 0.0
    %2223 = vmatprep.subr.mxu0 0.0
    %2224 = vmatpush1.msra.mxu0 0.0
    %2225 = vmatprep.subr.mxu0 0.0
    %2226 = vmatpush1.msra.mxu0 0.0
    %2227 = vmatprep.subr.mxu0 0.0
    %2228 = vmatpush1.msra.mxu0 0.0
    %2229 = vmatprep.subr.mxu0 0.0
    %2230 = vmatpush1.msra.mxu0 0.0
    %2231 = vmatprep.subr.mxu0 0.0
    %2232 = vmatpush1.msra.mxu0 0.0
    %2233 = vmatprep.subr.mxu0 0.0
    %2234 = vmatpush1.msra.mxu0 0.0
    %2235 = vmatprep.subr.mxu0 0.0
    %2236 = vmatpush1.msra.mxu0 0.0
    %2237 = vmatprep.subr.mxu0 0.0
    %2238 = vmatpush1.msra.mxu0 0.0
    %2239 = vmatprep.subr.mxu0 0.0
    %2240 = vmatpush1.msra.mxu0 0.0
    %2241 = vmatprep.subr.mxu0 0.0
    %2242 = vmatpush1.msra.mxu0 0.0
    %2243 = vmatprep.subr.mxu0 0.0
    %2244 = vmatpush1.msra.mxu0 0.0
    %2245 = vmatprep.subr.mxu0 0.0
    %2246 = vmatpush1.msra.mxu0 0.0
    %2247 = vmatprep.subr.mxu0 0.0
    %2248 = vmatpush1.msra.mxu0 0.0
    %2249 = vmatprep.subr.mxu0 0.0
    %2250 = vmatpush1.msra.mxu0 0.0
    %2251 = vmatprep.subr.mxu0 0.0
    %2252 = vmatpush1.msra.mxu0 0.0
    %2253 = vmatprep.mubr.f32.mxu0 0.0
    %2254 = vmatmul.mubr.f32.gmra.mrb[0].mxu0 %v2187
    %v2255 = vpop.f32.mrb[0].mxu0
    %v2256 = vadd.f32 0.0, %v2255
    %v2257 = vpop.f32.mrb[0].mxu0
    %2258 = vdwg.mxu0
    %2259 = vrot.lane.b32.xlu0 %v2164, 32
    %v2260 = vpop.permute.xlu0 %2259
    %v2261 = vsel %vm276, %v2260, 0
    %2263 = vmatprep.subr.mxu0 0.0
    %2264 = vmatpush1.msra.mxu0 %v2175
    %2265 = vmatprep.subr.mxu0 0.0
    %2266 = vmatpush1.msra.mxu0 %v2176
    %2267 = vmatprep.subr.mxu0 0.0
    %2268 = vmatpush1.msra.mxu0 %v2177
    %2269 = vmatprep.subr.mxu0 0.0
    %2270 = vmatpush1.msra.mxu0 %v2178
    %2271 = vmatprep.subr.mxu0 0.0
    %2272 = vmatpush1.msra.mxu0 0.0
    %2273 = vmatprep.subr.mxu0 0.0
    %2274 = vmatpush1.msra.mxu0 0.0
    %2275 = vmatprep.subr.mxu0 0.0
    %2276 = vmatpush1.msra.mxu0 0.0
    %2277 = vmatprep.subr.mxu0 0.0
    %2278 = vmatpush1.msra.mxu0 0.0
    %2279 = vmatprep.subr.mxu0 0.0
    %2280 = vmatpush1.msra.mxu0 0.0
    %2281 = vmatprep.subr.mxu0 0.0
    %2282 = vmatpush1.msra.mxu0 0.0
    %2283 = vmatprep.subr.mxu0 0.0
    %2284 = vmatpush1.msra.mxu0 0.0
    %2285 = vmatprep.subr.mxu0 0.0
    %2286 = vmatpush1.msra.mxu0 0.0
    %2287 = vmatprep.subr.mxu0 0.0
    %2288 = vmatpush1.msra.mxu0 0.0
    %2289 = vmatprep.subr.mxu0 0.0
    %2290 = vmatpush1.msra.mxu0 0.0
    %2291 = vmatprep.subr.mxu0 0.0
    %2292 = vmatpush1.msra.mxu0 0.0
    %2293 = vmatprep.subr.mxu0 0.0
    %2294 = vmatpush1.msra.mxu0 0.0
    %2295 = vmatprep.subr.mxu0 0.0
    %2296 = vmatpush1.msra.mxu0 0.0
    %2297 = vmatprep.subr.mxu0 0.0
    %2298 = vmatpush1.msra.mxu0 0.0
    %2299 = vmatprep.subr.mxu0 0.0
    %2300 = vmatpush1.msra.mxu0 0.0
    %2301 = vmatprep.subr.mxu0 0.0
    %2302 = vmatpush1.msra.mxu0 0.0
    %2303 = vmatprep.subr.mxu0 0.0
    %2304 = vmatpush1.msra.mxu0 0.0
    %2305 = vmatprep.subr.mxu0 0.0
    %2306 = vmatpush1.msra.mxu0 0.0
    %2307 = vmatprep.subr.mxu0 0.0
    %2308 = vmatpush1.msra.mxu0 0.0
    %2309 = vmatprep.subr.mxu0 0.0
    %2310 = vmatpush1.msra.mxu0 0.0
    %2311 = vmatprep.subr.mxu0 0.0
    %2312 = vmatpush1.msra.mxu0 0.0
    %2313 = vmatprep.subr.mxu0 0.0
    %2314 = vmatpush1.msra.mxu0 0.0
    %2315 = vmatprep.subr.mxu0 0.0
    %2316 = vmatpush1.msra.mxu0 0.0
    %2317 = vmatprep.subr.mxu0 0.0
    %2318 = vmatpush1.msra.mxu0 0.0
    %2319 = vmatprep.subr.mxu0 0.0
    %2320 = vmatpush1.msra.mxu0 0.0
    %2321 = vmatprep.subr.mxu0 0.0
    %2322 = vmatpush1.msra.mxu0 0.0
    %2323 = vmatprep.subr.mxu0 0.0
    %2324 = vmatpush1.msra.mxu0 0.0
    %2325 = vmatprep.subr.mxu0 0.0
    %2326 = vmatpush1.msra.mxu0 0.0
    %2327 = vmatprep.mubr.f32.mxu0 0.0
    %2328 = vmatmul.mubr.f32.gmra.mrb[0].mxu0 %v2261
    %v2329 = vpop.f32.mrb[0].mxu0
    %v2330 = vadd.f32 %v2256, %v2329
    %v2331 = vpop.f32.mrb[0].mxu0
    %2332 = vdwg.mxu0
    %v2333 = vadd.f32 %v2330, %v950
    %v2334 = vtanh.pop %v2333
    %v2335 = vmul.f32 %v2334, 0.5
    %v2336 = vadd.f32 %v2335, 0.5
    %v2337 = vsel %vm264, %v2334, %v2336
    %v2338 = vld [vmem:[#allocation3] sm:$0xff]
    %2340 = vrot.lane.b32.xlu0 %v2338, 64
    %v2341 = vpop.permute.xlu0 %2340
    %v2343 = vmul.f32 %v2337, %v2341
    %2345 = vrot.lane.b32.xlu0 %v2337, 64
    %v2346 = vpop.permute.xlu0 %2345
    %v2348 = vmul.f32 %v2337, %v2346
    %2350 = vrot.lane.b32.xlu0 %v2348, 32
    %v2351 = vpop.permute.xlu0 %2350
    %v2353 = vadd.f32 %v2343, %v2351
    %v2354 = vtanh.pop %v2353
    %2356 = vrot.lane.b32.xlu0 %v2354, 64
    %v2357 = vpop.permute.xlu0 %2356
    %v2359 = vmul.f32 %v2337, %v2357
    %2361 = vrot.lane.b32.xlu0 %v2353, 64
    %v2362 = vpop.permute.xlu0 %2361
    %2364 = vst.msk [vmem:[#allocation3] sm:$0xff] %vm983, %v2362
    %2365 = vst.msk [vmem:[#allocation2] sm:$0xff] %vm983, %v2359
    %s2366 = scalar_lea.vmem [#allocation4], 24
    %v2367 = vld [vmem:[%s2366] sm:$0xff]
    %v2368 = vld [vmem:[#allocation2] sm:$0xff]
    %v2369 = vld [vmem:[#allocation11] sm:$0xff]
    %v2370 = vld [vmem:[#allocation11 + $0x8] sm:$0xff]
    %v2371 = vld [vmem:[#allocation11 + $0x10] sm:$0xff]
    %v2372 = vld [vmem:[#allocation11 + $0x18] sm:$0xff]
    %v2374 = vsel %vm276, %v2368, 0
    %2376 = vmatprep.subr.mxu0 0.0
    %2377 = vmatpush1.msra.mxu0 %v2369
    %2378 = vmatprep.subr.mxu0 0.0
    %2379 = vmatpush1.msra.mxu0 %v2370
    %2380 = vmatprep.subr.mxu0 0.0
    %2381 = vmatpush1.msra.mxu0 %v2371
    %2382 = vmatprep.subr.mxu0 0.0
    %2383 = vmatpush1.msra.mxu0 %v2372
    %2384 = vmatprep.subr.mxu0 0.0
    %2385 = vmatpush1.msra.mxu0 0.0
    %2386 = vmatprep.subr.mxu0 0.0
    %2387 = vmatpush1.msra.mxu0 0.0
    %2388 = vmatprep.subr.mxu0 0.0
    %2389 = vmatpush1.msra.mxu0 0.0
    %2390 = vmatprep.subr.mxu0 0.0
    %2391 = vmatpush1.msra.mxu0 0.0
    %2392 = vmatprep.subr.mxu0 0.0
    %2393 = vmatpush1.msra.mxu0 0.0
    %2394 = vmatprep.subr.mxu0 0.0
    %2395 = vmatpush1.msra.mxu0 0.0
    %2396 = vmatprep.subr.mxu0 0.0
    %2397 = vmatpush1.msra.mxu0 0.0
    %2398 = vmatprep.subr.mxu0 0.0
    %2399 = vmatpush1.msra.mxu0 0.0
    %2400 = vmatprep.subr.mxu0 0.0
    %2401 = vmatpush1.msra.mxu0 0.0
    %2402 = vmatprep.subr.mxu0 0.0
    %2403 = vmatpush1.msra.mxu0 0.0
    %2404 = vmatprep.subr.mxu0 0.0
    %2405 = vmatpush1.msra.mxu0 0.0
    %2406 = vmatprep.subr.mxu0 0.0
    %2407 = vmatpush1.msra.mxu0 0.0
    %2408 = vmatprep.subr.mxu0 0.0
    %2409 = vmatpush1.msra.mxu0 0.0
    %2410 = vmatprep.subr.mxu0 0.0
    %2411 = vmatpush1.msra.mxu0 0.0
    %2412 = vmatprep.subr.mxu0 0.0
    %2413 = vmatpush1.msra.mxu0 0.0
    %2414 = vmatprep.subr.mxu0 0.0
    %2415 = vmatpush1.msra.mxu0 0.0
    %2416 = vmatprep.subr.mxu0 0.0
    %2417 = vmatpush1.msra.mxu0 0.0
    %2418 = vmatprep.subr.mxu0 0.0
    %2419 = vmatpush1.msra.mxu0 0.0
    %2420 = vmatprep.subr.mxu0 0.0
    %2421 = vmatpush1.msra.mxu0 0.0
    %2422 = vmatprep.subr.mxu0 0.0
    %2423 = vmatpush1.msra.mxu0 0.0
    %2424 = vmatprep.subr.mxu0 0.0
    %2425 = vmatpush1.msra.mxu0 0.0
    %2426 = vmatprep.subr.mxu0 0.0
    %2427 = vmatpush1.msra.mxu0 0.0
    %2428 = vmatprep.subr.mxu0 0.0
    %2429 = vmatpush1.msra.mxu0 0.0
    %2430 = vmatprep.subr.mxu0 0.0
    %2431 = vmatpush1.msra.mxu0 0.0
    %2432 = vmatprep.subr.mxu0 0.0
    %2433 = vmatpush1.msra.mxu0 0.0
    %2434 = vmatprep.subr.mxu0 0.0
    %2435 = vmatpush1.msra.mxu0 0.0
    %2436 = vmatprep.subr.mxu0 0.0
    %2437 = vmatpush1.msra.mxu0 0.0
    %2438 = vmatprep.subr.mxu0 0.0
    %2439 = vmatpush1.msra.mxu0 0.0
    %2440 = vmatprep.mubr.f32.mxu0 0.0
    %2441 = vmatmul.mubr.f32.gmra.mrb[0].mxu0 %v2374
    %v2442 = vpop.f32.mrb[0].mxu0
    %v2443 = vadd.f32 0.0, %v2442
    %v2444 = vpop.f32.mrb[0].mxu0
    %2445 = vdwg.mxu0
    %v2446 = vadd.f32 %v2367, %v2443
    %v2447 = vtanh.pop %v2446
    %v2448 = vmul.f32 %v2447, 0.5
    %v2449 = vadd.f32 %v2448, 0.5
    %v2450 = vsel %vm264, %v2447, %v2449
    %v2451 = vld [vmem:[#allocation3] sm:$0xff]
    %2453 = vrot.lane.b32.xlu0 %v2451, 32
    %v2454 = vpop.permute.xlu0 %2453
    %v2456 = vmul.f32 %v2450, %v2454
    %2458 = vrot.lane.b32.xlu0 %v2450, 64
    %v2459 = vpop.permute.xlu0 %2458
    %v2461 = vmul.f32 %v2450, %v2459
    %2463 = vrot.lane.b32.xlu0 %v2461, 32
    %v2464 = vpop.permute.xlu0 %2463
    %v2466 = vadd.f32 %v2456, %v2464
    %v2467 = vtanh.pop %v2466
    %2469 = vrot.lane.b32.xlu0 %v2467, 64
    %v2470 = vpop.permute.xlu0 %2469
    %v2472 = vmul.f32 %v2450, %v2470
    %2474 = vrot.lane.b32.xlu0 %v2466, 96
    %v2475 = vpop.permute.xlu0 %2474
    %2477 = vst.msk [vmem:[#allocation3] sm:$0xff] %vm276, %v2475
    %2479 = vrot.lane.b32.xlu0 %v2472, 32
    %v2480 = vpop.permute.xlu0 %2479
    %2482 = vst.msk [vmem:[#allocation2] sm:$0xff] %vm276, %v2480
    %v2483 = vld [vmem:[#allocation10] sm:$0xff]
    %v2484 = vld [vmem:[#allocation10 + $0x8] sm:$0xff]
    %v2485 = vld [vmem:[#allocation10 + $0x10] sm:$0xff]
    %v2486 = vld [vmem:[#allocation10 + $0x18] sm:$0xff]
    %v2487 = vld [vmem:[#allocation2] sm:$0xff]
    %v2488 = vld [vmem:[%s392] sm:$0xff]
    %v2489 = vld [vmem:[%s392 + $0x8] sm:$0xff]
    %v2490 = vld [vmem:[%s392 + $0x10] sm:$0xff]
    %v2491 = vld [vmem:[%s392 + $0x18] sm:$0xff]
    %2493 = vrot.lane.b32.xlu0 %v2487, 96
    %v2494 = vpop.permute.xlu0 %2493
    %v2495 = vsel %vm276, %v2494, 0
    %2497 = vmatprep.subr.mxu0 0.0
    %2498 = vmatpush1.msra.mxu0 %v2488
    %2499 = vmatprep.subr.mxu0 0.0
    %2500 = vmatpush1.msra.mxu0 %v2489
    %2501 = vmatprep.subr.mxu0 0.0
    %2502 = vmatpush1.msra.mxu0 %v2490
    %2503 = vmatprep.subr.mxu0 0.0
    %2504 = vmatpush1.msra.mxu0 %v2491
    %2505 = vmatprep.subr.mxu0 0.0
    %2506 = vmatpush1.msra.mxu0 0.0
    %2507 = vmatprep.subr.mxu0 0.0
    %2508 = vmatpush1.msra.mxu0 0.0
    %2509 = vmatprep.subr.mxu0 0.0
    %2510 = vmatpush1.msra.mxu0 0.0
    %2511 = vmatprep.subr.mxu0 0.0
    %2512 = vmatpush1.msra.mxu0 0.0
    %2513 = vmatprep.subr.mxu0 0.0
    %2514 = vmatpush1.msra.mxu0 0.0
    %2515 = vmatprep.subr.mxu0 0.0
    %2516 = vmatpush1.msra.mxu0 0.0
    %2517 = vmatprep.subr.mxu0 0.0
    %2518 = vmatpush1.msra.mxu0 0.0
    %2519 = vmatprep.subr.mxu0 0.0
    %2520 = vmatpush1.msra.mxu0 0.0
    %2521 = vmatprep.subr.mxu0 0.0
    %2522 = vmatpush1.msra.mxu0 0.0
    %2523 = vmatprep.subr.mxu0 0.0
    %2524 = vmatpush1.msra.mxu0 0.0
    %2525 = vmatprep.subr.mxu0 0.0
    %2526 = vmatpush1.msra.mxu0 0.0
    %2527 = vmatprep.subr.mxu0 0.0
    %2528 = vmatpush1.msra.mxu0 0.0
    %2529 = vmatprep.subr.mxu0 0.0
    %2530 = vmatpush1.msra.mxu0 0.0
    %2531 = vmatprep.subr.mxu0 0.0
    %2532 = vmatpush1.msra.mxu0 0.0
    %2533 = vmatprep.subr.mxu0 0.0
    %2534 = vmatpush1.msra.mxu0 0.0
    %2535 = vmatprep.subr.mxu0 0.0
    %2536 = vmatpush1.msra.mxu0 0.0
    %2537 = vmatprep.subr.mxu0 0.0
    %2538 = vmatpush1.msra.mxu0 0.0
    %2539 = vmatprep.subr.mxu0 0.0
    %2540 = vmatpush1.msra.mxu0 0.0
    %2541 = vmatprep.subr.mxu0 0.0
    %2542 = vmatpush1.msra.mxu0 0.0
    %2543 = vmatprep.subr.mxu0 0.0
    %2544 = vmatpush1.msra.mxu0 0.0
    %2545 = vmatprep.subr.mxu0 0.0
    %2546 = vmatpush1.msra.mxu0 0.0
    %2547 = vmatprep.subr.mxu0 0.0
    %2548 = vmatpush1.msra.mxu0 0.0
    %2549 = vmatprep.subr.mxu0 0.0
    %2550 = vmatpush1.msra.mxu0 0.0
    %2551 = vmatprep.subr.mxu0 0.0
    %2552 = vmatpush1.msra.mxu0 0.0
    %2553 = vmatprep.subr.mxu0 0.0
    %2554 = vmatpush1.msra.mxu0 0.0
    %2555 = vmatprep.subr.mxu0 0.0
    %2556 = vmatpush1.msra.mxu0 0.0
    %2557 = vmatprep.subr.mxu0 0.0
    %2558 = vmatpush1.msra.mxu0 0.0
    %2559 = vmatprep.subr.mxu0 0.0
    %2560 = vmatpush1.msra.mxu0 0.0
    %2561 = vmatprep.mubr.f32.mxu0 0.0
    %2562 = vmatmul.mubr.f32.gmra.mrb[0].mxu0 %v2495
    %v2563 = vpop.f32.mrb[0].mxu0
    %v2564 = vadd.f32 0.0, %v2563
    %v2565 = vpop.f32.mrb[0].mxu0
    %2566 = vdwg.mxu0
    %v2567 = vsel %vm276, %v2480, 0
    %2569 = vmatprep.subr.mxu0 0.0
    %2570 = vmatpush1.msra.mxu0 %v2483
    %2571 = vmatprep.subr.mxu0 0.0
    %2572 = vmatpush1.msra.mxu0 %v2484
    %2573 = vmatprep.subr.mxu0 0.0
    %2574 = vmatpush1.msra.mxu0 %v2485
    %2575 = vmatprep.subr.mxu0 0.0
    %2576 = vmatpush1.msra.mxu0 %v2486
    %2577 = vmatprep.subr.mxu0 0.0
    %2578 = vmatpush1.msra.mxu0 0.0
    %2579 = vmatprep.subr.mxu0 0.0
    %2580 = vmatpush1.msra.mxu0 0.0
    %2581 = vmatprep.subr.mxu0 0.0
    %2582 = vmatpush1.msra.mxu0 0.0
    %2583 = vmatprep.subr.mxu0 0.0
    %2584 = vmatpush1.msra.mxu0 0.0
    %2585 = vmatprep.subr.mxu0 0.0
    %2586 = vmatpush1.msra.mxu0 0.0
    %2587 = vmatprep.subr.mxu0 0.0
    %2588 = vmatpush1.msra.mxu0 0.0
    %2589 = vmatprep.subr.mxu0 0.0
    %2590 = vmatpush1.msra.mxu0 0.0
    %2591 = vmatprep.subr.mxu0 0.0
    %2592 = vmatpush1.msra.mxu0 0.0
    %2593 = vmatprep.subr.mxu0 0.0
    %2594 = vmatpush1.msra.mxu0 0.0
    %2595 = vmatprep.subr.mxu0 0.0
    %2596 = vmatpush1.msra.mxu0 0.0
    %2597 = vmatprep.subr.mxu0 0.0
    %2598 = vmatpush1.msra.mxu0 0.0
    %2599 = vmatprep.subr.mxu0 0.0
    %2600 = vmatpush1.msra.mxu0 0.0
    %2601 = vmatprep.subr.mxu0 0.0
    %2602 = vmatpush1.msra.mxu0 0.0
    %2603 = vmatprep.subr.mxu0 0.0
    %2604 = vmatpush1.msra.mxu0 0.0
    %2605 = vmatprep.subr.mxu0 0.0
    %2606 = vmatpush1.msra.mxu0 0.0
    %2607 = vmatprep.subr.mxu0 0.0
    %2608 = vmatpush1.msra.mxu0 0.0
    %2609 = vmatprep.subr.mxu0 0.0
    %2610 = vmatpush1.msra.mxu0 0.0
    %2611 = vmatprep.subr.mxu0 0.0
    %2612 = vmatpush1.msra.mxu0 0.0
    %2613 = vmatprep.subr.mxu0 0.0
    %2614 = vmatpush1.msra.mxu0 0.0
    %2615 = vmatprep.subr.mxu0 0.0
    %2616 = vmatpush1.msra.mxu0 0.0
    %2617 = vmatprep.subr.mxu0 0.0
    %2618 = vmatpush1.msra.mxu0 0.0
    %2619 = vmatprep.subr.mxu0 0.0
    %2620 = vmatpush1.msra.mxu0 0.0
    %2621 = vmatprep.subr.mxu0 0.0
    %2622 = vmatpush1.msra.mxu0 0.0
    %2623 = vmatprep.subr.mxu0 0.0
    %2624 = vmatpush1.msra.mxu0 0.0
    %2625 = vmatprep.subr.mxu0 0.0
    %2626 = vmatpush1.msra.mxu0 0.0
    %2627 = vmatprep.subr.mxu0 0.0
    %2628 = vmatpush1.msra.mxu0 0.0
    %2629 = vmatprep.subr.mxu0 0.0
    %2630 = vmatpush1.msra.mxu0 0.0
    %2631 = vmatprep.subr.mxu0 0.0
    %2632 = vmatpush1.msra.mxu0 0.0
    %2633 = vmatprep.mubr.f32.mxu0 0.0
    %2634 = vmatmul.mubr.f32.gmra.mrb[0].mxu0 %v2567
    %v2635 = vpop.f32.mrb[0].mxu0
    %v2636 = vadd.f32 %v2564, %v2635
    %v2637 = vpop.f32.mrb[0].mxu0
    %2638 = vdwg.mxu0
    %v2639 = vadd.f32 %v2636, %v548
    %v2640 = vtanh.pop %v2639
    %v2641 = vmul.f32 %v2640, 0.5
    %v2642 = vadd.f32 %v2641, 0.5
    %v2643 = vsel %vm264, %v2640, %v2642
    %v2644 = vld [vmem:[#allocation3] sm:$0xff]
    %v2645 = vmul.f32 %v2643, %v2644
    %2647 = vrot.lane.b32.xlu0 %v2643, 64
    %v2648 = vpop.permute.xlu0 %2647
    %v2650 = vmul.f32 %v2643, %v2648
    %2652 = vrot.lane.b32.xlu0 %v2650, 32
    %v2653 = vpop.permute.xlu0 %2652
    %v2655 = vadd.f32 %v2645, %v2653
    %v2656 = vtanh.pop %v2655
    %2658 = vrot.lane.b32.xlu0 %v2656, 64
    %v2659 = vpop.permute.xlu0 %2658
    %v2661 = vmul.f32 %v2643, %v2659
    %2662 = vst.msk [vmem:[#allocation3] sm:$0xff] %vm573, %v2655
    %2664 = vrot.lane.b32.xlu0 %v2661, 64
    %v2665 = vpop.permute.xlu0 %2664
    %2667 = vst.msk [vmem:[#allocation2] sm:$0xff] %vm573, %v2665
    %v2668 = vmax.f32 %v2661, 0.0
    %v2669 = vld [vmem:[%s581] sm:$0xff]
    %v2670 = vld [vmem:[%s581 + $0x8] sm:$0xff]
    %v2671 = vld [vmem:[%s581 + $0x10] sm:$0xff]
    %v2672 = vld [vmem:[%s581 + $0x18] sm:$0xff]
    %v2673 = vld [vmem:[#allocation2] sm:$0xff]
    %v2674 = vld [vmem:[%s587] sm:$0xff]
    %v2675 = vld [vmem:[%s587 + $0x8] sm:$0xff]
    %v2676 = vld [vmem:[%s587 + $0x10] sm:$0xff]
    %v2677 = vld [vmem:[%s587 + $0x18] sm:$0xff]
    %2679 = vrot.lane.b32.xlu0 %v2673, 64
    %v2680 = vpop.permute.xlu0 %2679
    %v2681 = vsel %vm276, %v2680, 0
    %2683 = vmatprep.subr.mxu0 0.0
    %2684 = vmatpush1.msra.mxu0 %v2674
    %2685 = vmatprep.subr.mxu0 0.0
    %2686 = vmatpush1.msra.mxu0 %v2675
    %2687 = vmatprep.subr.mxu0 0.0
    %2688 = vmatpush1.msra.mxu0 %v2676
    %2689 = vmatprep.subr.mxu0 0.0
    %2690 = vmatpush1.msra.mxu0 %v2677
    %2691 = vmatprep.subr.mxu0 0.0
    %2692 = vmatpush1.msra.mxu0 0.0
    %2693 = vmatprep.subr.mxu0 0.0
    %2694 = vmatpush1.msra.mxu0 0.0
    %2695 = vmatprep.subr.mxu0 0.0
    %2696 = vmatpush1.msra.mxu0 0.0
    %2697 = vmatprep.subr.mxu0 0.0
    %2698 = vmatpush1.msra.mxu0 0.0
    %2699 = vmatprep.subr.mxu0 0.0
    %2700 = vmatpush1.msra.mxu0 0.0
    %2701 = vmatprep.subr.mxu0 0.0
    %2702 = vmatpush1.msra.mxu0 0.0
    %2703 = vmatprep.subr.mxu0 0.0
    %2704 = vmatpush1.msra.mxu0 0.0
    %2705 = vmatprep.subr.mxu0 0.0
    %2706 = vmatpush1.msra.mxu0 0.0
    %2707 = vmatprep.subr.mxu0 0.0
    %2708 = vmatpush1.msra.mxu0 0.0
    %2709 = vmatprep.subr.mxu0 0.0
    %2710 = vmatpush1.msra.mxu0 0.0
    %2711 = vmatprep.subr.mxu0 0.0
    %2712 = vmatpush1.msra.mxu0 0.0
    %2713 = vmatprep.subr.mxu0 0.0
    %2714 = vmatpush1.msra.mxu0 0.0
    %2715 = vmatprep.subr.mxu0 0.0
    %2716 = vmatpush1.msra.mxu0 0.0
    %2717 = vmatprep.subr.mxu0 0.0
    %2718 = vmatpush1.msra.mxu0 0.0
    %2719 = vmatprep.subr.mxu0 0.0
    %2720 = vmatpush1.msra.mxu0 0.0
    %2721 = vmatprep.subr.mxu0 0.0
    %2722 = vmatpush1.msra.mxu0 0.0
    %2723 = vmatprep.subr.mxu0 0.0
    %2724 = vmatpush1.msra.mxu0 0.0
    %2725 = vmatprep.subr.mxu0 0.0
    %2726 = vmatpush1.msra.mxu0 0.0
    %2727 = vmatprep.subr.mxu0 0.0
    %2728 = vmatpush1.msra.mxu0 0.0
    %2729 = vmatprep.subr.mxu0 0.0
    %2730 = vmatpush1.msra.mxu0 0.0
    %2731 = vmatprep.subr.mxu0 0.0
    %2732 = vmatpush1.msra.mxu0 0.0
    %2733 = vmatprep.subr.mxu0 0.0
    %2734 = vmatpush1.msra.mxu0 0.0
    %2735 = vmatprep.subr.mxu0 0.0
    %2736 = vmatpush1.msra.mxu0 0.0
    %2737 = vmatprep.subr.mxu0 0.0
    %2738 = vmatpush1.msra.mxu0 0.0
    %2739 = vmatprep.subr.mxu0 0.0
    %2740 = vmatpush1.msra.mxu0 0.0
    %2741 = vmatprep.subr.mxu0 0.0
    %2742 = vmatpush1.msra.mxu0 0.0
    %2743 = vmatprep.subr.mxu0 0.0
    %2744 = vmatpush1.msra.mxu0 0.0
    %2745 = vmatprep.subr.mxu0 0.0
    %2746 = vmatpush1.msra.mxu0 0.0
    %2747 = vmatprep.mubr.f32.mxu0 0.0
    %2748 = vmatmul.mubr.f32.gmra.mrb[0].mxu0 %v2681
    %v2749 = vpop.f32.mrb[0].mxu0
    %v2750 = vadd.f32 0.0, %v2749
    %v2751 = vpop.f32.mrb[0].mxu0
    %2752 = vdwg.mxu0
    %2754 = vrot.lane.b32.xlu0 %v2668, 32
    %v2755 = vpop.permute.xlu0 %2754
    %v2756 = vsel %vm276, %v2755, 0
    %2758 = vmatprep.subr.mxu0 0.0
    %2759 = vmatpush1.msra.mxu0 %v2669
    %2760 = vmatprep.subr.mxu0 0.0
    %2761 = vmatpush1.msra.mxu0 %v2670
    %2762 = vmatprep.subr.mxu0 0.0
    %2763 = vmatpush1.msra.mxu0 %v2671
    %2764 = vmatprep.subr.mxu0 0.0
    %2765 = vmatpush1.msra.mxu0 %v2672
    %2766 = vmatprep.subr.mxu0 0.0
    %2767 = vmatpush1.msra.mxu0 0.0
    %2768 = vmatprep.subr.mxu0 0.0
    %2769 = vmatpush1.msra.mxu0 0.0
    %2770 = vmatprep.subr.mxu0 0.0
    %2771 = vmatpush1.msra.mxu0 0.0
    %2772 = vmatprep.subr.mxu0 0.0
    %2773 = vmatpush1.msra.mxu0 0.0
    %2774 = vmatprep.subr.mxu0 0.0
    %2775 = vmatpush1.msra.mxu0 0.0
    %2776 = vmatprep.subr.mxu0 0.0
    %2777 = vmatpush1.msra.mxu0 0.0
    %2778 = vmatprep.subr.mxu0 0.0
    %2779 = vmatpush1.msra.mxu0 0.0
    %2780 = vmatprep.subr.mxu0 0.0
    %2781 = vmatpush1.msra.mxu0 0.0
    %2782 = vmatprep.subr.mxu0 0.0
    %2783 = vmatpush1.msra.mxu0 0.0
    %2784 = vmatprep.subr.mxu0 0.0
    %2785 = vmatpush1.msra.mxu0 0.0
    %2786 = vmatprep.subr.mxu0 0.0
    %2787 = vmatpush1.msra.mxu0 0.0
    %2788 = vmatprep.subr.mxu0 0.0
    %2789 = vmatpush1.msra.mxu0 0.0
    %2790 = vmatprep.subr.mxu0 0.0
    %2791 = vmatpush1.msra.mxu0 0.0
    %2792 = vmatprep.subr.mxu0 0.0
    %2793 = vmatpush1.msra.mxu0 0.0
    %2794 = vmatprep.subr.mxu0 0.0
    %2795 = vmatpush1.msra.mxu0 0.0
    %2796 = vmatprep.subr.mxu0 0.0
    %2797 = vmatpush1.msra.mxu0 0.0
    %2798 = vmatprep.subr.mxu0 0.0
    %2799 = vmatpush1.msra.mxu0 0.0
    %2800 = vmatprep.subr.mxu0 0.0
    %2801 = vmatpush1.msra.mxu0 0.0
    %2802 = vmatprep.subr.mxu0 0.0
    %2803 = vmatpush1.msra.mxu0 0.0
    %2804 = vmatprep.subr.mxu0 0.0
    %2805 = vmatpush1.msra.mxu0 0.0
    %2806 = vmatprep.subr.mxu0 0.0
    %2807 = vmatpush1.msra.mxu0 0.0
    %2808 = vmatprep.subr.mxu0 0.0
    %2809 = vmatpush1.msra.mxu0 0.0
    %2810 = vmatprep.subr.mxu0 0.0
    %2811 = vmatpush1.msra.mxu0 0.0
    %2812 = vmatprep.subr.mxu0 0.0
    %2813 = vmatpush1.msra.mxu0 0.0
    %2814 = vmatprep.subr.mxu0 0.0
    %2815 = vmatpush1.msra.mxu0 0.0
    %2816 = vmatprep.subr.mxu0 0.0
    %2817 = vmatpush1.msra.mxu0 0.0
    %2818 = vmatprep.subr.mxu0 0.0
    %2819 = vmatpush1.msra.mxu0 0.0
    %2820 = vmatprep.subr.mxu0 0.0
    %2821 = vmatpush1.msra.mxu0 0.0
    %2822 = vmatprep.mubr.f32.mxu0 0.0
    %2823 = vmatmul.mubr.f32.gmra.mrb[0].mxu0 %v2756
    %v2824 = vpop.f32.mrb[0].mxu0
    %v2825 = vadd.f32 %v2750, %v2824
    %v2826 = vpop.f32.mrb[0].mxu0
    %2827 = vdwg.mxu0
    %v2828 = vadd.f32 %v2825, %v746
    %v2829 = vtanh.pop %v2828
    %v2830 = vmul.f32 %v2829, 0.5
    %v2831 = vadd.f32 %v2830, 0.5
    %v2832 = vsel %vm264, %v2829, %v2831
    %v2833 = vld [vmem:[#allocation3] sm:$0xff]
    %2835 = vrot.lane.b32.xlu0 %v2833, 96
    %v2836 = vpop.permute.xlu0 %2835
    %v2838 = vmul.f32 %v2832, %v2836
    %2840 = vrot.lane.b32.xlu0 %v2832, 64
    %v2841 = vpop.permute.xlu0 %2840
    %v2843 = vmul.f32 %v2832, %v2841
    %2845 = vrot.lane.b32.xlu0 %v2843, 32
    %v2846 = vpop.permute.xlu0 %2845
    %v2848 = vadd.f32 %v2838, %v2846
    %v2849 = vtanh.pop %v2848
    %2851 = vrot.lane.b32.xlu0 %v2849, 64
    %v2852 = vpop.permute.xlu0 %2851
    %v2854 = vmul.f32 %v2832, %v2852
    %2856 = vrot.lane.b32.xlu0 %v2848, 32
    %v2857 = vpop.permute.xlu0 %2856
    %2859 = vst.msk [vmem:[#allocation3] sm:$0xff] %vm779, %v2857
    %2861 = vrot.lane.b32.xlu0 %v2854, 96
    %v2862 = vpop.permute.xlu0 %2861
    %2864 = vst.msk [vmem:[#allocation2] sm:$0xff] %vm779, %v2862
    %v2865 = vld [vmem:[%s786] sm:$0xff]
    %v2866 = vld [vmem:[%s786 + $0x8] sm:$0xff]
    %v2867 = vld [vmem:[%s786 + $0x10] sm:$0xff]
    %v2868 = vld [vmem:[%s786 + $0x18] sm:$0xff]
    %v2869 = vld [vmem:[#allocation2] sm:$0xff]
    %v2870 = vld [vmem:[%s792] sm:$0xff]
    %v2871 = vld [vmem:[%s792 + $0x8] sm:$0xff]
    %v2872 = vld [vmem:[%s792 + $0x10] sm:$0xff]
    %v2873 = vld [vmem:[%s792 + $0x18] sm:$0xff]
    %2875 = vrot.lane.b32.xlu0 %v2869, 32
    %v2876 = vpop.permute.xlu0 %2875
    %v2877 = vsel %vm276, %v2876, 0
    %2879 = vmatprep.subr.mxu0 0.0
    %2880 = vmatpush1.msra.mxu0 %v2870
    %2881 = vmatprep.subr.mxu0 0.0
    %2882 = vmatpush1.msra.mxu0 %v2871
    %2883 = vmatprep.subr.mxu0 0.0
    %2884 = vmatpush1.msra.mxu0 %v2872
    %2885 = vmatprep.subr.mxu0 0.0
    %2886 = vmatpush1.msra.mxu0 %v2873
    %2887 = vmatprep.subr.mxu0 0.0
    %2888 = vmatpush1.msra.mxu0 0.0
    %2889 = vmatprep.subr.mxu0 0.0
    %2890 = vmatpush1.msra.mxu0 0.0
    %2891 = vmatprep.subr.mxu0 0.0
    %2892 = vmatpush1.msra.mxu0 0.0
    %2893 = vmatprep.subr.mxu0 0.0
    %2894 = vmatpush1.msra.mxu0 0.0
    %2895 = vmatprep.subr.mxu0 0.0
    %2896 = vmatpush1.msra.mxu0 0.0
    %2897 = vmatprep.subr.mxu0 0.0
    %2898 = vmatpush1.msra.mxu0 0.0
    %2899 = vmatprep.subr.mxu0 0.0
    %2900 = vmatpush1.msra.mxu0 0.0
    %2901 = vmatprep.subr.mxu0 0.0
    %2902 = vmatpush1.msra.mxu0 0.0
    %2903 = vmatprep.subr.mxu0 0.0
    %2904 = vmatpush1.msra.mxu0 0.0
    %2905 = vmatprep.subr.mxu0 0.0
    %2906 = vmatpush1.msra.mxu0 0.0
    %2907 = vmatprep.subr.mxu0 0.0
    %2908 = vmatpush1.msra.mxu0 0.0
    %2909 = vmatprep.subr.mxu0 0.0
    %2910 = vmatpush1.msra.mxu0 0.0
    %2911 = vmatprep.subr.mxu0 0.0
    %2912 = vmatpush1.msra.mxu0 0.0
    %2913 = vmatprep.subr.mxu0 0.0
    %2914 = vmatpush1.msra.mxu0 0.0
    %2915 = vmatprep.subr.mxu0 0.0
    %2916 = vmatpush1.msra.mxu0 0.0
    %2917 = vmatprep.subr.mxu0 0.0
    %2918 = vmatpush1.msra.mxu0 0.0
    %2919 = vmatprep.subr.mxu0 0.0
    %2920 = vmatpush1.msra.mxu0 0.0
    %2921 = vmatprep.subr.mxu0 0.0
    %2922 = vmatpush1.msra.mxu0 0.0
    %2923 = vmatprep.subr.mxu0 0.0
    %2924 = vmatpush1.msra.mxu0 0.0
    %2925 = vmatprep.subr.mxu0 0.0
    %2926 = vmatpush1.msra.mxu0 0.0
    %2927 = vmatprep.subr.mxu0 0.0
    %2928 = vmatpush1.msra.mxu0 0.0
    %2929 = vmatprep.subr.mxu0 0.0
    %2930 = vmatpush1.msra.mxu0 0.0
    %2931 = vmatprep.subr.mxu0 0.0
    %2932 = vmatpush1.msra.mxu0 0.0
    %2933 = vmatprep.subr.mxu0 0.0
    %2934 = vmatpush1.msra.mxu0 0.0
    %2935 = vmatprep.subr.mxu0 0.0
    %2936 = vmatpush1.msra.mxu0 0.0
    %2937 = vmatprep.subr.mxu0 0.0
    %2938 = vmatpush1.msra.mxu0 0.0
    %2939 = vmatprep.subr.mxu0 0.0
    %2940 = vmatpush1.msra.mxu0 0.0
    %2941 = vmatprep.subr.mxu0 0.0
    %2942 = vmatpush1.msra.mxu0 0.0
    %2943 = vmatprep.mubr.f32.mxu0 0.0
    %2944 = vmatmul.mubr.f32.gmra.mrb[0].mxu0 %v2877
    %v2945 = vpop.f32.mrb[0].mxu0
    %v2946 = vadd.f32 0.0, %v2945
    %v2947 = vpop.f32.mrb[0].mxu0
    %2948 = vdwg.mxu0
    %2949 = vrot.lane.b32.xlu0 %v2854, 32
    %v2950 = vpop.permute.xlu0 %2949
    %v2951 = vsel %vm276, %v2950, 0
    %2953 = vmatprep.subr.mxu0 0.0
    %2954 = vmatpush1.msra.mxu0 %v2865
    %2955 = vmatprep.subr.mxu0 0.0
    %2956 = vmatpush1.msra.mxu0 %v2866
    %2957 = vmatprep.subr.mxu0 0.0
    %2958 = vmatpush1.msra.mxu0 %v2867
    %2959 = vmatprep.subr.mxu0 0.0
    %2960 = vmatpush1.msra.mxu0 %v2868
    %2961 = vmatprep.subr.mxu0 0.0
    %2962 = vmatpush1.msra.mxu0 0.0
    %2963 = vmatprep.subr.mxu0 0.0
    %2964 = vmatpush1.msra.mxu0 0.0
    %2965 = vmatprep.subr.mxu0 0.0
    %2966 = vmatpush1.msra.mxu0 0.0
    %2967 = vmatprep.subr.mxu0 0.0
    %2968 = vmatpush1.msra.mxu0 0.0
    %2969 = vmatprep.subr.mxu0 0.0
    %2970 = vmatpush1.msra.mxu0 0.0
    %2971 = vmatprep.subr.mxu0 0.0
    %2972 = vmatpush1.msra.mxu0 0.0
    %2973 = vmatprep.subr.mxu0 0.0
    %2974 = vmatpush1.msra.mxu0 0.0
    %2975 = vmatprep.subr.mxu0 0.0
    %2976 = vmatpush1.msra.mxu0 0.0
    %2977 = vmatprep.subr.mxu0 0.0
    %2978 = vmatpush1.msra.mxu0 0.0
    %2979 = vmatprep.subr.mxu0 0.0
    %2980 = vmatpush1.msra.mxu0 0.0
    %2981 = vmatprep.subr.mxu0 0.0
    %2982 = vmatpush1.msra.mxu0 0.0
    %2983 = vmatprep.subr.mxu0 0.0
    %2984 = vmatpush1.msra.mxu0 0.0
    %2985 = vmatprep.subr.mxu0 0.0
    %2986 = vmatpush1.msra.mxu0 0.0
    %2987 = vmatprep.subr.mxu0 0.0
    %2988 = vmatpush1.msra.mxu0 0.0
    %2989 = vmatprep.subr.mxu0 0.0
    %2990 = vmatpush1.msra.mxu0 0.0
    %2991 = vmatprep.subr.mxu0 0.0
    %2992 = vmatpush1.msra.mxu0 0.0
    %2993 = vmatprep.subr.mxu0 0.0
    %2994 = vmatpush1.msra.mxu0 0.0
    %2995 = vmatprep.subr.mxu0 0.0
    %2996 = vmatpush1.msra.mxu0 0.0
    %2997 = vmatprep.subr.mxu0 0.0
    %2998 = vmatpush1.msra.mxu0 0.0
    %2999 = vmatprep.subr.mxu0 0.0
    %3000 = vmatpush1.msra.mxu0 0.0
    %3001 = vmatprep.subr.mxu0 0.0
    %3002 = vmatpush1.msra.mxu0 0.0
    %3003 = vmatprep.subr.mxu0 0.0
    %3004 = vmatpush1.msra.mxu0 0.0
    %3005 = vmatprep.subr.mxu0 0.0
    %3006 = vmatpush1.msra.mxu0 0.0
    %3007 = vmatprep.subr.mxu0 0.0
    %3008 = vmatpush1.msra.mxu0 0.0
    %3009 = vmatprep.subr.mxu0 0.0
    %3010 = vmatpush1.msra.mxu0 0.0
    %3011 = vmatprep.subr.mxu0 0.0
    %3012 = vmatpush1.msra.mxu0 0.0
    %3013 = vmatprep.subr.mxu0 0.0
    %3014 = vmatpush1.msra.mxu0 0.0
    %3015 = vmatprep.subr.mxu0 0.0
    %3016 = vmatpush1.msra.mxu0 0.0
    %3017 = vmatprep.mubr.f32.mxu0 0.0
    %3018 = vmatmul.mubr.f32.gmra.mrb[0].mxu0 %v2951
    %v3019 = vpop.f32.mrb[0].mxu0
    %v3020 = vadd.f32 %v2946, %v3019
    %v3021 = vpop.f32.mrb[0].mxu0
    %3022 = vdwg.mxu0
    %v3023 = vadd.f32 %v3020, %v950
    %v3024 = vtanh.pop %v3023
    %v3025 = vmul.f32 %v3024, 0.5
    %v3026 = vadd.f32 %v3025, 0.5
    %v3027 = vsel %vm264, %v3024, %v3026
    %v3028 = vld [vmem:[#allocation3] sm:$0xff]
    %3030 = vrot.lane.b32.xlu0 %v3028, 64
    %v3031 = vpop.permute.xlu0 %3030
    %v3033 = vmul.f32 %v3027, %v3031
    %3035 = vrot.lane.b32.xlu0 %v3027, 64
    %v3036 = vpop.permute.xlu0 %3035
    %v3038 = vmul.f32 %v3027, %v3036
    %3040 = vrot.lane.b32.xlu0 %v3038, 32
    %v3041 = vpop.permute.xlu0 %3040
    %v3043 = vadd.f32 %v3033, %v3041
    %v3044 = vtanh.pop %v3043
    %3046 = vrot.lane.b32.xlu0 %v3044, 64
    %v3047 = vpop.permute.xlu0 %3046
    %v3049 = vmul.f32 %v3027, %v3047
    %3051 = vrot.lane.b32.xlu0 %v3043, 64
    %v3052 = vpop.permute.xlu0 %3051
    %3054 = vst.msk [vmem:[#allocation3] sm:$0xff] %vm983, %v3052
    %3055 = vst.msk [vmem:[#allocation2] sm:$0xff] %vm983, %v3049
    %s3056 = scalar_lea.vmem [#allocation4], 32
    %v3057 = vld [vmem:[%s3056] sm:$0xff]
    %v3058 = vld [vmem:[#allocation2] sm:$0xff]
    %v3059 = vld [vmem:[#allocation11] sm:$0xff]
    %v3060 = vld [vmem:[#allocation11 + $0x8] sm:$0xff]
    %v3061 = vld [vmem:[#allocation11 + $0x10] sm:$0xff]
    %v3062 = vld [vmem:[#allocation11 + $0x18] sm:$0xff]
    %v3064 = vsel %vm276, %v3058, 0
    %3066 = vmatprep.subr.mxu0 0.0
    %3067 = vmatpush1.msra.mxu0 %v3059
    %3068 = vmatprep.subr.mxu0 0.0
    %3069 = vmatpush1.msra.mxu0 %v3060
    %3070 = vmatprep.subr.mxu0 0.0
    %3071 = vmatpush1.msra.mxu0 %v3061
    %3072 = vmatprep.subr.mxu0 0.0
    %3073 = vmatpush1.msra.mxu0 %v3062
    %3074 = vmatprep.subr.mxu0 0.0
    %3075 = vmatpush1.msra.mxu0 0.0
    %3076 = vmatprep.subr.mxu0 0.0
    %3077 = vmatpush1.msra.mxu0 0.0
    %3078 = vmatprep.subr.mxu0 0.0
    %3079 = vmatpush1.msra.mxu0 0.0
    %3080 = vmatprep.subr.mxu0 0.0
    %3081 = vmatpush1.msra.mxu0 0.0
    %3082 = vmatprep.subr.mxu0 0.0
    %3083 = vmatpush1.msra.mxu0 0.0
    %3084 = vmatprep.subr.mxu0 0.0
    %3085 = vmatpush1.msra.mxu0 0.0
    %3086 = vmatprep.subr.mxu0 0.0
    %3087 = vmatpush1.msra.mxu0 0.0
    %3088 = vmatprep.subr.mxu0 0.0
    %3089 = vmatpush1.msra.mxu0 0.0
    %3090 = vmatprep.subr.mxu0 0.0
    %3091 = vmatpush1.msra.mxu0 0.0
    %3092 = vmatprep.subr.mxu0 0.0
    %3093 = vmatpush1.msra.mxu0 0.0
    %3094 = vmatprep.subr.mxu0 0.0
    %3095 = vmatpush1.msra.mxu0 0.0
    %3096 = vmatprep.subr.mxu0 0.0
    %3097 = vmatpush1.msra.mxu0 0.0
    %3098 = vmatprep.subr.mxu0 0.0
    %3099 = vmatpush1.msra.mxu0 0.0
    %3100 = vmatprep.subr.mxu0 0.0
    %3101 = vmatpush1.msra.mxu0 0.0
    %3102 = vmatprep.subr.mxu0 0.0
    %3103 = vmatpush1.msra.mxu0 0.0
    %3104 = vmatprep.subr.mxu0 0.0
    %3105 = vmatpush1.msra.mxu0 0.0
    %3106 = vmatprep.subr.mxu0 0.0
    %3107 = vmatpush1.msra.mxu0 0.0
    %3108 = vmatprep.subr.mxu0 0.0
    %3109 = vmatpush1.msra.mxu0 0.0
    %3110 = vmatprep.subr.mxu0 0.0
    %3111 = vmatpush1.msra.mxu0 0.0
    %3112 = vmatprep.subr.mxu0 0.0
    %3113 = vmatpush1.msra.mxu0 0.0
    %3114 = vmatprep.subr.mxu0 0.0
    %3115 = vmatpush1.msra.mxu0 0.0
    %3116 = vmatprep.subr.mxu0 0.0
    %3117 = vmatpush1.msra.mxu0 0.0
    %3118 = vmatprep.subr.mxu0 0.0
    %3119 = vmatpush1.msra.mxu0 0.0
    %3120 = vmatprep.subr.mxu0 0.0
    %3121 = vmatpush1.msra.mxu0 0.0
    %3122 = vmatprep.subr.mxu0 0.0
    %3123 = vmatpush1.msra.mxu0 0.0
    %3124 = vmatprep.subr.mxu0 0.0
    %3125 = vmatpush1.msra.mxu0 0.0
    %3126 = vmatprep.subr.mxu0 0.0
    %3127 = vmatpush1.msra.mxu0 0.0
    %3128 = vmatprep.subr.mxu0 0.0
    %3129 = vmatpush1.msra.mxu0 0.0
    %3130 = vmatprep.mubr.f32.mxu0 0.0
    %3131 = vmatmul.mubr.f32.gmra.mrb[0].mxu0 %v3064
    %v3132 = vpop.f32.mrb[0].mxu0
    %v3133 = vadd.f32 0.0, %v3132
    %v3134 = vpop.f32.mrb[0].mxu0
    %3135 = vdwg.mxu0
    %v3136 = vadd.f32 %v3057, %v3133
    %v3137 = vtanh.pop %v3136
    %v3138 = vmul.f32 %v3137, 0.5
    %v3139 = vadd.f32 %v3138, 0.5
    %v3140 = vsel %vm264, %v3137, %v3139
    %v3141 = vld [vmem:[#allocation3] sm:$0xff]
    %3143 = vrot.lane.b32.xlu0 %v3141, 32
    %v3144 = vpop.permute.xlu0 %3143
    %v3146 = vmul.f32 %v3140, %v3144
    %3148 = vrot.lane.b32.xlu0 %v3140, 64
    %v3149 = vpop.permute.xlu0 %3148
    %v3151 = vmul.f32 %v3140, %v3149
    %3153 = vrot.lane.b32.xlu0 %v3151, 32
    %v3154 = vpop.permute.xlu0 %3153
    %v3156 = vadd.f32 %v3146, %v3154
    %v3157 = vtanh.pop %v3156
    %3159 = vrot.lane.b32.xlu0 %v3157, 64
    %v3160 = vpop.permute.xlu0 %3159
    %v3162 = vmul.f32 %v3140, %v3160
    %3164 = vrot.lane.b32.xlu0 %v3156, 96
    %v3165 = vpop.permute.xlu0 %3164
    %3167 = vst.msk [vmem:[#allocation3] sm:$0xff] %vm276, %v3165
    %3169 = vrot.lane.b32.xlu0 %v3162, 32
    %v3170 = vpop.permute.xlu0 %3169
    %3172 = vst.msk [vmem:[#allocation2] sm:$0xff] %vm276, %v3170
    %v3173 = vld [vmem:[#allocation10] sm:$0xff]
    %v3174 = vld [vmem:[#allocation10 + $0x8] sm:$0xff]
    %v3175 = vld [vmem:[#allocation10 + $0x10] sm:$0xff]
    %v3176 = vld [vmem:[#allocation10 + $0x18] sm:$0xff]
    %v3177 = vld [vmem:[#allocation2] sm:$0xff]
    %v3178 = vld [vmem:[%s392] sm:$0xff]
    %v3179 = vld [vmem:[%s392 + $0x8] sm:$0xff]
    %v3180 = vld [vmem:[%s392 + $0x10] sm:$0xff]
    %v3181 = vld [vmem:[%s392 + $0x18] sm:$0xff]
    %3183 = vrot.lane.b32.xlu0 %v3177, 96
    %v3184 = vpop.permute.xlu0 %3183
    %v3185 = vsel %vm276, %v3184, 0
    %3187 = vmatprep.subr.mxu0 0.0
    %3188 = vmatpush1.msra.mxu0 %v3178
    %3189 = vmatprep.subr.mxu0 0.0
    %3190 = vmatpush1.msra.mxu0 %v3179
    %3191 = vmatprep.subr.mxu0 0.0
    %3192 = vmatpush1.msra.mxu0 %v3180
    %3193 = vmatprep.subr.mxu0 0.0
    %3194 = vmatpush1.msra.mxu0 %v3181
    %3195 = vmatprep.subr.mxu0 0.0
    %3196 = vmatpush1.msra.mxu0 0.0
    %3197 = vmatprep.subr.mxu0 0.0
    %3198 = vmatpush1.msra.mxu0 0.0
    %3199 = vmatprep.subr.mxu0 0.0
    %3200 = vmatpush1.msra.mxu0 0.0
    %3201 = vmatprep.subr.mxu0 0.0
    %3202 = vmatpush1.msra.mxu0 0.0
    %3203 = vmatprep.subr.mxu0 0.0
    %3204 = vmatpush1.msra.mxu0 0.0
    %3205 = vmatprep.subr.mxu0 0.0
    %3206 = vmatpush1.msra.mxu0 0.0
    %3207 = vmatprep.subr.mxu0 0.0
    %3208 = vmatpush1.msra.mxu0 0.0
    %3209 = vmatprep.subr.mxu0 0.0
    %3210 = vmatpush1.msra.mxu0 0.0
    %3211 = vmatprep.subr.mxu0 0.0
    %3212 = vmatpush1.msra.mxu0 0.0
    %3213 = vmatprep.subr.mxu0 0.0
    %3214 = vmatpush1.msra.mxu0 0.0
    %3215 = vmatprep.subr.mxu0 0.0
    %3216 = vmatpush1.msra.mxu0 0.0
    %3217 = vmatprep.subr.mxu0 0.0
    %3218 = vmatpush1.msra.mxu0 0.0
    %3219 = vmatprep.subr.mxu0 0.0
    %3220 = vmatpush1.msra.mxu0 0.0
    %3221 = vmatprep.subr.mxu0 0.0
    %3222 = vmatpush1.msra.mxu0 0.0
    %3223 = vmatprep.subr.mxu0 0.0
    %3224 = vmatpush1.msra.mxu0 0.0
    %3225 = vmatprep.subr.mxu0 0.0
    %3226 = vmatpush1.msra.mxu0 0.0
    %3227 = vmatprep.subr.mxu0 0.0
    %3228 = vmatpush1.msra.mxu0 0.0
    %3229 = vmatprep.subr.mxu0 0.0
    %3230 = vmatpush1.msra.mxu0 0.0
    %3231 = vmatprep.subr.mxu0 0.0
    %3232 = vmatpush1.msra.mxu0 0.0
    %3233 = vmatprep.subr.mxu0 0.0
    %3234 = vmatpush1.msra.mxu0 0.0
    %3235 = vmatprep.subr.mxu0 0.0
    %3236 = vmatpush1.msra.mxu0 0.0
    %3237 = vmatprep.subr.mxu0 0.0
    %3238 = vmatpush1.msra.mxu0 0.0
    %3239 = vmatprep.subr.mxu0 0.0
    %3240 = vmatpush1.msra.mxu0 0.0
    %3241 = vmatprep.subr.mxu0 0.0
    %3242 = vmatpush1.msra.mxu0 0.0
    %3243 = vmatprep.subr.mxu0 0.0
    %3244 = vmatpush1.msra.mxu0 0.0
    %3245 = vmatprep.subr.mxu0 0.0
    %3246 = vmatpush1.msra.mxu0 0.0
    %3247 = vmatprep.subr.mxu0 0.0
    %3248 = vmatpush1.msra.mxu0 0.0
    %3249 = vmatprep.subr.mxu0 0.0
    %3250 = vmatpush1.msra.mxu0 0.0
    %3251 = vmatprep.mubr.f32.mxu0 0.0
    %3252 = vmatmul.mubr.f32.gmra.mrb[0].mxu0 %v3185
    %v3253 = vpop.f32.mrb[0].mxu0
    %v3254 = vadd.f32 0.0, %v3253
    %v3255 = vpop.f32.mrb[0].mxu0
    %3256 = vdwg.mxu0
    %v3257 = vsel %vm276, %v3170, 0
    %3259 = vmatprep.subr.mxu0 0.0
    %3260 = vmatpush1.msra.mxu0 %v3173
    %3261 = vmatprep.subr.mxu0 0.0
    %3262 = vmatpush1.msra.mxu0 %v3174
    %3263 = vmatprep.subr.mxu0 0.0
    %3264 = vmatpush1.msra.mxu0 %v3175
    %3265 = vmatprep.subr.mxu0 0.0
    %3266 = vmatpush1.msra.mxu0 %v3176
    %3267 = vmatprep.subr.mxu0 0.0
    %3268 = vmatpush1.msra.mxu0 0.0
    %3269 = vmatprep.subr.mxu0 0.0
    %3270 = vmatpush1.msra.mxu0 0.0
    %3271 = vmatprep.subr.mxu0 0.0
    %3272 = vmatpush1.msra.mxu0 0.0
    %3273 = vmatprep.subr.mxu0 0.0
    %3274 = vmatpush1.msra.mxu0 0.0
    %3275 = vmatprep.subr.mxu0 0.0
    %3276 = vmatpush1.msra.mxu0 0.0
    %3277 = vmatprep.subr.mxu0 0.0
    %3278 = vmatpush1.msra.mxu0 0.0
    %3279 = vmatprep.subr.mxu0 0.0
    %3280 = vmatpush1.msra.mxu0 0.0
    %3281 = vmatprep.subr.mxu0 0.0
    %3282 = vmatpush1.msra.mxu0 0.0
    %3283 = vmatprep.subr.mxu0 0.0
    %3284 = vmatpush1.msra.mxu0 0.0
    %3285 = vmatprep.subr.mxu0 0.0
    %3286 = vmatpush1.msra.mxu0 0.0
    %3287 = vmatprep.subr.mxu0 0.0
    %3288 = vmatpush1.msra.mxu0 0.0
    %3289 = vmatprep.subr.mxu0 0.0
    %3290 = vmatpush1.msra.mxu0 0.0
    %3291 = vmatprep.subr.mxu0 0.0
    %3292 = vmatpush1.msra.mxu0 0.0
    %3293 = vmatprep.subr.mxu0 0.0
    %3294 = vmatpush1.msra.mxu0 0.0
    %3295 = vmatprep.subr.mxu0 0.0
    %3296 = vmatpush1.msra.mxu0 0.0
    %3297 = vmatprep.subr.mxu0 0.0
    %3298 = vmatpush1.msra.mxu0 0.0
    %3299 = vmatprep.subr.mxu0 0.0
    %3300 = vmatpush1.msra.mxu0 0.0
    %3301 = vmatprep.subr.mxu0 0.0
    %3302 = vmatpush1.msra.mxu0 0.0
    %3303 = vmatprep.subr.mxu0 0.0
    %3304 = vmatpush1.msra.mxu0 0.0
    %3305 = vmatprep.subr.mxu0 0.0
    %3306 = vmatpush1.msra.mxu0 0.0
    %3307 = vmatprep.subr.mxu0 0.0
    %3308 = vmatpush1.msra.mxu0 0.0
    %3309 = vmatprep.subr.mxu0 0.0
    %3310 = vmatpush1.msra.mxu0 0.0
    %3311 = vmatprep.subr.mxu0 0.0
    %3312 = vmatpush1.msra.mxu0 0.0
    %3313 = vmatprep.subr.mxu0 0.0
    %3314 = vmatpush1.msra.mxu0 0.0
    %3315 = vmatprep.subr.mxu0 0.0
    %3316 = vmatpush1.msra.mxu0 0.0
    %3317 = vmatprep.subr.mxu0 0.0
    %3318 = vmatpush1.msra.mxu0 0.0
    %3319 = vmatprep.subr.mxu0 0.0
    %3320 = vmatpush1.msra.mxu0 0.0
    %3321 = vmatprep.subr.mxu0 0.0
    %3322 = vmatpush1.msra.mxu0 0.0
    %3323 = vmatprep.mubr.f32.mxu0 0.0
    %3324 = vmatmul.mubr.f32.gmra.mrb[0].mxu0 %v3257
    %v3325 = vpop.f32.mrb[0].mxu0
    %v3326 = vadd.f32 %v3254, %v3325
    %v3327 = vpop.f32.mrb[0].mxu0
    %3328 = vdwg.mxu0
    %v3329 = vadd.f32 %v3326, %v548
    %v3330 = vtanh.pop %v3329
    %v3331 = vmul.f32 %v3330, 0.5
    %v3332 = vadd.f32 %v3331, 0.5
    %v3333 = vsel %vm264, %v3330, %v3332
    %v3334 = vld [vmem:[#allocation3] sm:$0xff]
    %v3335 = vmul.f32 %v3333, %v3334
    %3337 = vrot.lane.b32.xlu0 %v3333, 64
    %v3338 = vpop.permute.xlu0 %3337
    %v3340 = vmul.f32 %v3333, %v3338
    %3342 = vrot.lane.b32.xlu0 %v3340, 32
    %v3343 = vpop.permute.xlu0 %3342
    %v3345 = vadd.f32 %v3335, %v3343
    %v3346 = vtanh.pop %v3345
    %3348 = vrot.lane.b32.xlu0 %v3346, 64
    %v3349 = vpop.permute.xlu0 %3348
    %v3351 = vmul.f32 %v3333, %v3349
    %3352 = vst.msk [vmem:[#allocation3] sm:$0xff] %vm573, %v3345
    %3354 = vrot.lane.b32.xlu0 %v3351, 64
    %v3355 = vpop.permute.xlu0 %3354
    %3357 = vst.msk [vmem:[#allocation2] sm:$0xff] %vm573, %v3355
    %v3358 = vmax.f32 %v3351, 0.0
    %v3359 = vld [vmem:[%s581] sm:$0xff]
    %v3360 = vld [vmem:[%s581 + $0x8] sm:$0xff]
    %v3361 = vld [vmem:[%s581 + $0x10] sm:$0xff]
    %v3362 = vld [vmem:[%s581 + $0x18] sm:$0xff]
    %v3363 = vld [vmem:[#allocation2] sm:$0xff]
    %v3364 = vld [vmem:[%s587] sm:$0xff]
    %v3365 = vld [vmem:[%s587 + $0x8] sm:$0xff]
    %v3366 = vld [vmem:[%s587 + $0x10] sm:$0xff]
    %v3367 = vld [vmem:[%s587 + $0x18] sm:$0xff]
    %3369 = vrot.lane.b32.xlu0 %v3363, 64
    %v3370 = vpop.permute.xlu0 %3369
    %v3371 = vsel %vm276, %v3370, 0
    %3373 = vmatprep.subr.mxu0 0.0
    %3374 = vmatpush1.msra.mxu0 %v3364
    %3375 = vmatprep.subr.mxu0 0.0
    %3376 = vmatpush1.msra.mxu0 %v3365
    %3377 = vmatprep.subr.mxu0 0.0
    %3378 = vmatpush1.msra.mxu0 %v3366
    %3379 = vmatprep.subr.mxu0 0.0
    %3380 = vmatpush1.msra.mxu0 %v3367
    %3381 = vmatprep.subr.mxu0 0.0
    %3382 = vmatpush1.msra.mxu0 0.0
    %3383 = vmatprep.subr.mxu0 0.0
    %3384 = vmatpush1.msra.mxu0 0.0
    %3385 = vmatprep.subr.mxu0 0.0
    %3386 = vmatpush1.msra.mxu0 0.0
    %3387 = vmatprep.subr.mxu0 0.0
    %3388 = vmatpush1.msra.mxu0 0.0
    %3389 = vmatprep.subr.mxu0 0.0
    %3390 = vmatpush1.msra.mxu0 0.0
    %3391 = vmatprep.subr.mxu0 0.0
    %3392 = vmatpush1.msra.mxu0 0.0
    %3393 = vmatprep.subr.mxu0 0.0
    %3394 = vmatpush1.msra.mxu0 0.0
    %3395 = vmatprep.subr.mxu0 0.0
    %3396 = vmatpush1.msra.mxu0 0.0
    %3397 = vmatprep.subr.mxu0 0.0
    %3398 = vmatpush1.msra.mxu0 0.0
    %3399 = vmatprep.subr.mxu0 0.0
    %3400 = vmatpush1.msra.mxu0 0.0
    %3401 = vmatprep.subr.mxu0 0.0
    %3402 = vmatpush1.msra.mxu0 0.0
    %3403 = vmatprep.subr.mxu0 0.0
    %3404 = vmatpush1.msra.mxu0 0.0
    %3405 = vmatprep.subr.mxu0 0.0
    %3406 = vmatpush1.msra.mxu0 0.0
    %3407 = vmatprep.subr.mxu0 0.0
    %3408 = vmatpush1.msra.mxu0 0.0
    %3409 = vmatprep.subr.mxu0 0.0
    %3410 = vmatpush1.msra.mxu0 0.0
    %3411 = vmatprep.subr.mxu0 0.0
    %3412 = vmatpush1.msra.mxu0 0.0
    %3413 = vmatprep.subr.mxu0 0.0
    %3414 = vmatpush1.msra.mxu0 0.0
    %3415 = vmatprep.subr.mxu0 0.0
    %3416 = vmatpush1.msra.mxu0 0.0
    %3417 = vmatprep.subr.mxu0 0.0
    %3418 = vmatpush1.msra.mxu0 0.0
    %3419 = vmatprep.subr.mxu0 0.0
    %3420 = vmatpush1.msra.mxu0 0.0
    %3421 = vmatprep.subr.mxu0 0.0
    %3422 = vmatpush1.msra.mxu0 0.0
    %3423 = vmatprep.subr.mxu0 0.0
    %3424 = vmatpush1.msra.mxu0 0.0
    %3425 = vmatprep.subr.mxu0 0.0
    %3426 = vmatpush1.msra.mxu0 0.0
    %3427 = vmatprep.subr.mxu0 0.0
    %3428 = vmatpush1.msra.mxu0 0.0
    %3429 = vmatprep.subr.mxu0 0.0
    %3430 = vmatpush1.msra.mxu0 0.0
    %3431 = vmatprep.subr.mxu0 0.0
    %3432 = vmatpush1.msra.mxu0 0.0
    %3433 = vmatprep.subr.mxu0 0.0
    %3434 = vmatpush1.msra.mxu0 0.0
    %3435 = vmatprep.subr.mxu0 0.0
    %3436 = vmatpush1.msra.mxu0 0.0
    %3437 = vmatprep.mubr.f32.mxu0 0.0
    %3438 = vmatmul.mubr.f32.gmra.mrb[0].mxu0 %v3371
    %v3439 = vpop.f32.mrb[0].mxu0
    %v3440 = vadd.f32 0.0, %v3439
    %v3441 = vpop.f32.mrb[0].mxu0
    %3442 = vdwg.mxu0
    %3444 = vrot.lane.b32.xlu0 %v3358, 32
    %v3445 = vpop.permute.xlu0 %3444
    %v3446 = vsel %vm276, %v3445, 0
    %3448 = vmatprep.subr.mxu0 0.0
    %3449 = vmatpush1.msra.mxu0 %v3359
    %3450 = vmatprep.subr.mxu0 0.0
    %3451 = vmatpush1.msra.mxu0 %v3360
    %3452 = vmatprep.subr.mxu0 0.0
    %3453 = vmatpush1.msra.mxu0 %v3361
    %3454 = vmatprep.subr.mxu0 0.0
    %3455 = vmatpush1.msra.mxu0 %v3362
    %3456 = vmatprep.subr.mxu0 0.0
    %3457 = vmatpush1.msra.mxu0 0.0
    %3458 = vmatprep.subr.mxu0 0.0
    %3459 = vmatpush1.msra.mxu0 0.0
    %3460 = vmatprep.subr.mxu0 0.0
    %3461 = vmatpush1.msra.mxu0 0.0
    %3462 = vmatprep.subr.mxu0 0.0
    %3463 = vmatpush1.msra.mxu0 0.0
    %3464 = vmatprep.subr.mxu0 0.0
    %3465 = vmatpush1.msra.mxu0 0.0
    %3466 = vmatprep.subr.mxu0 0.0
    %3467 = vmatpush1.msra.mxu0 0.0
    %3468 = vmatprep.subr.mxu0 0.0
    %3469 = vmatpush1.msra.mxu0 0.0
    %3470 = vmatprep.subr.mxu0 0.0
    %3471 = vmatpush1.msra.mxu0 0.0
    %3472 = vmatprep.subr.mxu0 0.0
    %3473 = vmatpush1.msra.mxu0 0.0
    %3474 = vmatprep.subr.mxu0 0.0
    %3475 = vmatpush1.msra.mxu0 0.0
    %3476 = vmatprep.subr.mxu0 0.0
    %3477 = vmatpush1.msra.mxu0 0.0
    %3478 = vmatprep.subr.mxu0 0.0
    %3479 = vmatpush1.msra.mxu0 0.0
    %3480 = vmatprep.subr.mxu0 0.0
    %3481 = vmatpush1.msra.mxu0 0.0
    %3482 = vmatprep.subr.mxu0 0.0
    %3483 = vmatpush1.msra.mxu0 0.0
    %3484 = vmatprep.subr.mxu0 0.0
    %3485 = vmatpush1.msra.mxu0 0.0
    %3486 = vmatprep.subr.mxu0 0.0
    %3487 = vmatpush1.msra.mxu0 0.0
    %3488 = vmatprep.subr.mxu0 0.0
    %3489 = vmatpush1.msra.mxu0 0.0
    %3490 = vmatprep.subr.mxu0 0.0
    %3491 = vmatpush1.msra.mxu0 0.0
    %3492 = vmatprep.subr.mxu0 0.0
    %3493 = vmatpush1.msra.mxu0 0.0
    %3494 = vmatprep.subr.mxu0 0.0
    %3495 = vmatpush1.msra.mxu0 0.0
    %3496 = vmatprep.subr.mxu0 0.0
    %3497 = vmatpush1.msra.mxu0 0.0
    %3498 = vmatprep.subr.mxu0 0.0
    %3499 = vmatpush1.msra.mxu0 0.0
    %3500 = vmatprep.subr.mxu0 0.0
    %3501 = vmatpush1.msra.mxu0 0.0
    %3502 = vmatprep.subr.mxu0 0.0
    %3503 = vmatpush1.msra.mxu0 0.0
    %3504 = vmatprep.subr.mxu0 0.0
    %3505 = vmatpush1.msra.mxu0 0.0
    %3506 = vmatprep.subr.mxu0 0.0
    %3507 = vmatpush1.msra.mxu0 0.0
    %3508 = vmatprep.subr.mxu0 0.0
    %3509 = vmatpush1.msra.mxu0 0.0
    %3510 = vmatprep.subr.mxu0 0.0
    %3511 = vmatpush1.msra.mxu0 0.0
    %3512 = vmatprep.mubr.f32.mxu0 0.0
    %3513 = vmatmul.mubr.f32.gmra.mrb[0].mxu0 %v3446
    %v3514 = vpop.f32.mrb[0].mxu0
    %v3515 = vadd.f32 %v3440, %v3514
    %v3516 = vpop.f32.mrb[0].mxu0
    %3517 = vdwg.mxu0
    %v3518 = vadd.f32 %v3515, %v746
    %v3519 = vtanh.pop %v3518
    %v3520 = vmul.f32 %v3519, 0.5
    %v3521 = vadd.f32 %v3520, 0.5
    %v3522 = vsel %vm264, %v3519, %v3521
    %v3523 = vld [vmem:[#allocation3] sm:$0xff]
    %3525 = vrot.lane.b32.xlu0 %v3523, 96
    %v3526 = vpop.permute.xlu0 %3525
    %v3528 = vmul.f32 %v3522, %v3526
    %3530 = vrot.lane.b32.xlu0 %v3522, 64
    %v3531 = vpop.permute.xlu0 %3530
    %v3533 = vmul.f32 %v3522, %v3531
    %3535 = vrot.lane.b32.xlu0 %v3533, 32
    %v3536 = vpop.permute.xlu0 %3535
    %v3538 = vadd.f32 %v3528, %v3536
    %v3539 = vtanh.pop %v3538
    %3541 = vrot.lane.b32.xlu0 %v3539, 64
    %v3542 = vpop.permute.xlu0 %3541
    %v3544 = vmul.f32 %v3522, %v3542
    %3546 = vrot.lane.b32.xlu0 %v3538, 32
    %v3547 = vpop.permute.xlu0 %3546
    %3549 = vst.msk [vmem:[#allocation3] sm:$0xff] %vm779, %v3547
    %3551 = vrot.lane.b32.xlu0 %v3544, 96
    %v3552 = vpop.permute.xlu0 %3551
    %3554 = vst.msk [vmem:[#allocation2] sm:$0xff] %vm779, %v3552
    %v3555 = vld [vmem:[%s786] sm:$0xff]
    %v3556 = vld [vmem:[%s786 + $0x8] sm:$0xff]
    %v3557 = vld [vmem:[%s786 + $0x10] sm:$0xff]
    %v3558 = vld [vmem:[%s786 + $0x18] sm:$0xff]
    %v3559 = vld [vmem:[#allocation2] sm:$0xff]
    %v3560 = vld [vmem:[%s792] sm:$0xff]
    %v3561 = vld [vmem:[%s792 + $0x8] sm:$0xff]
    %v3562 = vld [vmem:[%s792 + $0x10] sm:$0xff]
    %v3563 = vld [vmem:[%s792 + $0x18] sm:$0xff]
    %3565 = vrot.lane.b32.xlu0 %v3559, 32
    %v3566 = vpop.permute.xlu0 %3565
    %v3567 = vsel %vm276, %v3566, 0
    %3569 = vmatprep.subr.mxu0 0.0
    %3570 = vmatpush1.msra.mxu0 %v3560
    %3571 = vmatprep.subr.mxu0 0.0
    %3572 = vmatpush1.msra.mxu0 %v3561
    %3573 = vmatprep.subr.mxu0 0.0
    %3574 = vmatpush1.msra.mxu0 %v3562
    %3575 = vmatprep.subr.mxu0 0.0
    %3576 = vmatpush1.msra.mxu0 %v3563
    %3577 = vmatprep.subr.mxu0 0.0
    %3578 = vmatpush1.msra.mxu0 0.0
    %3579 = vmatprep.subr.mxu0 0.0
    %3580 = vmatpush1.msra.mxu0 0.0
    %3581 = vmatprep.subr.mxu0 0.0
    %3582 = vmatpush1.msra.mxu0 0.0
    %3583 = vmatprep.subr.mxu0 0.0
    %3584 = vmatpush1.msra.mxu0 0.0
    %3585 = vmatprep.subr.mxu0 0.0
    %3586 = vmatpush1.msra.mxu0 0.0
    %3587 = vmatprep.subr.mxu0 0.0
    %3588 = vmatpush1.msra.mxu0 0.0
    %3589 = vmatprep.subr.mxu0 0.0
    %3590 = vmatpush1.msra.mxu0 0.0
    %3591 = vmatprep.subr.mxu0 0.0
    %3592 = vmatpush1.msra.mxu0 0.0
    %3593 = vmatprep.subr.mxu0 0.0
    %3594 = vmatpush1.msra.mxu0 0.0
    %3595 = vmatprep.subr.mxu0 0.0
    %3596 = vmatpush1.msra.mxu0 0.0
    %3597 = vmatprep.subr.mxu0 0.0
    %3598 = vmatpush1.msra.mxu0 0.0
    %3599 = vmatprep.subr.mxu0 0.0
    %3600 = vmatpush1.msra.mxu0 0.0
    %3601 = vmatprep.subr.mxu0 0.0
    %3602 = vmatpush1.msra.mxu0 0.0
    %3603 = vmatprep.subr.mxu0 0.0
    %3604 = vmatpush1.msra.mxu0 0.0
    %3605 = vmatprep.subr.mxu0 0.0
    %3606 = vmatpush1.msra.mxu0 0.0
    %3607 = vmatprep.subr.mxu0 0.0
    %3608 = vmatpush1.msra.mxu0 0.0
    %3609 = vmatprep.subr.mxu0 0.0
    %3610 = vmatpush1.msra.mxu0 0.0
    %3611 = vmatprep.subr.mxu0 0.0
    %3612 = vmatpush1.msra.mxu0 0.0
    %3613 = vmatprep.subr.mxu0 0.0
    %3614 = vmatpush1.msra.mxu0 0.0
    %3615 = vmatprep.subr.mxu0 0.0
    %3616 = vmatpush1.msra.mxu0 0.0
    %3617 = vmatprep.subr.mxu0 0.0
    %3618 = vmatpush1.msra.mxu0 0.0
    %3619 = vmatprep.subr.mxu0 0.0
    %3620 = vmatpush1.msra.mxu0 0.0
    %3621 = vmatprep.subr.mxu0 0.0
    %3622 = vmatpush1.msra.mxu0 0.0
    %3623 = vmatprep.subr.mxu0 0.0
    %3624 = vmatpush1.msra.mxu0 0.0
    %3625 = vmatprep.subr.mxu0 0.0
    %3626 = vmatpush1.msra.mxu0 0.0
    %3627 = vmatprep.subr.mxu0 0.0
    %3628 = vmatpush1.msra.mxu0 0.0
    %3629 = vmatprep.subr.mxu0 0.0
    %3630 = vmatpush1.msra.mxu0 0.0
    %3631 = vmatprep.subr.mxu0 0.0
    %3632 = vmatpush1.msra.mxu0 0.0
    %3633 = vmatprep.mubr.f32.mxu0 0.0
    %3634 = vmatmul.mubr.f32.gmra.mrb[0].mxu0 %v3567
    %v3635 = vpop.f32.mrb[0].mxu0
    %v3636 = vadd.f32 0.0, %v3635
    %v3637 = vpop.f32.mrb[0].mxu0
    %3638 = vdwg.mxu0
    %3639 = vrot.lane.b32.xlu0 %v3544, 32
    %v3640 = vpop.permute.xlu0 %3639
    %v3641 = vsel %vm276, %v3640, 0
    %3643 = vmatprep.subr.mxu0 0.0
    %3644 = vmatpush1.msra.mxu0 %v3555
    %3645 = vmatprep.subr.mxu0 0.0
    %3646 = vmatpush1.msra.mxu0 %v3556
    %3647 = vmatprep.subr.mxu0 0.0
    %3648 = vmatpush1.msra.mxu0 %v3557
    %3649 = vmatprep.subr.mxu0 0.0
    %3650 = vmatpush1.msra.mxu0 %v3558
    %3651 = vmatprep.subr.mxu0 0.0
    %3652 = vmatpush1.msra.mxu0 0.0
    %3653 = vmatprep.subr.mxu0 0.0
    %3654 = vmatpush1.msra.mxu0 0.0
    %3655 = vmatprep.subr.mxu0 0.0
    %3656 = vmatpush1.msra.mxu0 0.0
    %3657 = vmatprep.subr.mxu0 0.0
    %3658 = vmatpush1.msra.mxu0 0.0
    %3659 = vmatprep.subr.mxu0 0.0
    %3660 = vmatpush1.msra.mxu0 0.0
    %3661 = vmatprep.subr.mxu0 0.0
    %3662 = vmatpush1.msra.mxu0 0.0
    %3663 = vmatprep.subr.mxu0 0.0
    %3664 = vmatpush1.msra.mxu0 0.0
    %3665 = vmatprep.subr.mxu0 0.0
    %3666 = vmatpush1.msra.mxu0 0.0
    %3667 = vmatprep.subr.mxu0 0.0
    %3668 = vmatpush1.msra.mxu0 0.0
    %3669 = vmatprep.subr.mxu0 0.0
    %3670 = vmatpush1.msra.mxu0 0.0
    %3671 = vmatprep.subr.mxu0 0.0
    %3672 = vmatpush1.msra.mxu0 0.0
    %3673 = vmatprep.subr.mxu0 0.0
    %3674 = vmatpush1.msra.mxu0 0.0
    %3675 = vmatprep.subr.mxu0 0.0
    %3676 = vmatpush1.msra.mxu0 0.0
    %3677 = vmatprep.subr.mxu0 0.0
    %3678 = vmatpush1.msra.mxu0 0.0
    %3679 = vmatprep.subr.mxu0 0.0
    %3680 = vmatpush1.msra.mxu0 0.0
    %3681 = vmatprep.subr.mxu0 0.0
    %3682 = vmatpush1.msra.mxu0 0.0
    %3683 = vmatprep.subr.mxu0 0.0
    %3684 = vmatpush1.msra.mxu0 0.0
    %3685 = vmatprep.subr.mxu0 0.0
    %3686 = vmatpush1.msra.mxu0 0.0
    %3687 = vmatprep.subr.mxu0 0.0
    %3688 = vmatpush1.msra.mxu0 0.0
    %3689 = vmatprep.subr.mxu0 0.0
    %3690 = vmatpush1.msra.mxu0 0.0
    %3691 = vmatprep.subr.mxu0 0.0
    %3692 = vmatpush1.msra.mxu0 0.0
    %3693 = vmatprep.subr.mxu0 0.0
    %3694 = vmatpush1.msra.mxu0 0.0
    %3695 = vmatprep.subr.mxu0 0.0
    %3696 = vmatpush1.msra.mxu0 0.0
    %3697 = vmatprep.subr.mxu0 0.0
    %3698 = vmatpush1.msra.mxu0 0.0
    %3699 = vmatprep.subr.mxu0 0.0
    %3700 = vmatpush1.msra.mxu0 0.0
    %3701 = vmatprep.subr.mxu0 0.0
    %3702 = vmatpush1.msra.mxu0 0.0
    %3703 = vmatprep.subr.mxu0 0.0
    %3704 = vmatpush1.msra.mxu0 0.0
    %3705 = vmatprep.subr.mxu0 0.0
    %3706 = vmatpush1.msra.mxu0 0.0
    %3707 = vmatprep.mubr.f32.mxu0 0.0
    %3708 = vmatmul.mubr.f32.gmra.mrb[0].mxu0 %v3641
    %v3709 = vpop.f32.mrb[0].mxu0
    %v3710 = vadd.f32 %v3636, %v3709
    %v3711 = vpop.f32.mrb[0].mxu0
    %3712 = vdwg.mxu0
    %v3713 = vadd.f32 %v3710, %v950
    %v3714 = vtanh.pop %v3713
    %v3715 = vmul.f32 %v3714, 0.5
    %v3716 = vadd.f32 %v3715, 0.5
    %v3717 = vsel %vm264, %v3714, %v3716
    %v3718 = vld [vmem:[#allocation3] sm:$0xff]
    %3720 = vrot.lane.b32.xlu0 %v3718, 64
    %v3721 = vpop.permute.xlu0 %3720
    %v3723 = vmul.f32 %v3717, %v3721
    %3725 = vrot.lane.b32.xlu0 %v3717, 64
    %v3726 = vpop.permute.xlu0 %3725
    %v3728 = vmul.f32 %v3717, %v3726
    %3730 = vrot.lane.b32.xlu0 %v3728, 32
    %v3731 = vpop.permute.xlu0 %3730
    %v3733 = vadd.f32 %v3723, %v3731
    %v3734 = vtanh.pop %v3733
    %3736 = vrot.lane.b32.xlu0 %v3734, 64
    %v3737 = vpop.permute.xlu0 %3736
    %v3739 = vmul.f32 %v3717, %v3737
    %3741 = vrot.lane.b32.xlu0 %v3733, 64
    %v3742 = vpop.permute.xlu0 %3741
    %3744 = vst.msk [vmem:[#allocation3] sm:$0xff] %vm983, %v3742
    %3745 = vst.msk [vmem:[#allocation2] sm:$0xff] %vm983, %v3739
    %s3746 = scalar_lea.vmem [#allocation4], 40
    %v3747 = vld [vmem:[%s3746] sm:$0xff]
    %v3748 = vld [vmem:[#allocation2] sm:$0xff]
    %v3749 = vld [vmem:[#allocation11] sm:$0xff]
    %v3750 = vld [vmem:[#allocation11 + $0x8] sm:$0xff]
    %v3751 = vld [vmem:[#allocation11 + $0x10] sm:$0xff]
    %v3752 = vld [vmem:[#allocation11 + $0x18] sm:$0xff]
    %v3754 = vsel %vm276, %v3748, 0
    %3756 = vmatprep.subr.mxu0 0.0
    %3757 = vmatpush1.msra.mxu0 %v3749
    %3758 = vmatprep.subr.mxu0 0.0
    %3759 = vmatpush1.msra.mxu0 %v3750
    %3760 = vmatprep.subr.mxu0 0.0
    %3761 = vmatpush1.msra.mxu0 %v3751
    %3762 = vmatprep.subr.mxu0 0.0
    %3763 = vmatpush1.msra.mxu0 %v3752
    %3764 = vmatprep.subr.mxu0 0.0
    %3765 = vmatpush1.msra.mxu0 0.0
    %3766 = vmatprep.subr.mxu0 0.0
    %3767 = vmatpush1.msra.mxu0 0.0
    %3768 = vmatprep.subr.mxu0 0.0
    %3769 = vmatpush1.msra.mxu0 0.0
    %3770 = vmatprep.subr.mxu0 0.0
    %3771 = vmatpush1.msra.mxu0 0.0
    %3772 = vmatprep.subr.mxu0 0.0
    %3773 = vmatpush1.msra.mxu0 0.0
    %3774 = vmatprep.subr.mxu0 0.0
    %3775 = vmatpush1.msra.mxu0 0.0
    %3776 = vmatprep.subr.mxu0 0.0
    %3777 = vmatpush1.msra.mxu0 0.0
    %3778 = vmatprep.subr.mxu0 0.0
    %3779 = vmatpush1.msra.mxu0 0.0
    %3780 = vmatprep.subr.mxu0 0.0
    %3781 = vmatpush1.msra.mxu0 0.0
    %3782 = vmatprep.subr.mxu0 0.0
    %3783 = vmatpush1.msra.mxu0 0.0
    %3784 = vmatprep.subr.mxu0 0.0
    %3785 = vmatpush1.msra.mxu0 0.0
    %3786 = vmatprep.subr.mxu0 0.0
    %3787 = vmatpush1.msra.mxu0 0.0
    %3788 = vmatprep.subr.mxu0 0.0
    %3789 = vmatpush1.msra.mxu0 0.0
    %3790 = vmatprep.subr.mxu0 0.0
    %3791 = vmatpush1.msra.mxu0 0.0
    %3792 = vmatprep.subr.mxu0 0.0
    %3793 = vmatpush1.msra.mxu0 0.0
    %3794 = vmatprep.subr.mxu0 0.0
    %3795 = vmatpush1.msra.mxu0 0.0
    %3796 = vmatprep.subr.mxu0 0.0
    %3797 = vmatpush1.msra.mxu0 0.0
    %3798 = vmatprep.subr.mxu0 0.0
    %3799 = vmatpush1.msra.mxu0 0.0
    %3800 = vmatprep.subr.mxu0 0.0
    %3801 = vmatpush1.msra.mxu0 0.0
    %3802 = vmatprep.subr.mxu0 0.0
    %3803 = vmatpush1.msra.mxu0 0.0
    %3804 = vmatprep.subr.mxu0 0.0
    %3805 = vmatpush1.msra.mxu0 0.0
    %3806 = vmatprep.subr.mxu0 0.0
    %3807 = vmatpush1.msra.mxu0 0.0
    %3808 = vmatprep.subr.mxu0 0.0
    %3809 = vmatpush1.msra.mxu0 0.0
    %3810 = vmatprep.subr.mxu0 0.0
    %3811 = vmatpush1.msra.mxu0 0.0
    %3812 = vmatprep.subr.mxu0 0.0
    %3813 = vmatpush1.msra.mxu0 0.0
    %3814 = vmatprep.subr.mxu0 0.0
    %3815 = vmatpush1.msra.mxu0 0.0
    %3816 = vmatprep.subr.mxu0 0.0
    %3817 = vmatpush1.msra.mxu0 0.0
    %3818 = vmatprep.subr.mxu0 0.0
    %3819 = vmatpush1.msra.mxu0 0.0
    %3820 = vmatprep.mubr.f32.mxu0 0.0
    %3821 = vmatmul.mubr.f32.gmra.mrb[0].mxu0 %v3754
    %v3822 = vpop.f32.mrb[0].mxu0
    %v3823 = vadd.f32 0.0, %v3822
    %v3824 = vpop.f32.mrb[0].mxu0
    %3825 = vdwg.mxu0
    %v3826 = vadd.f32 %v3747, %v3823
    %v3827 = vtanh.pop %v3826
    %v3828 = vmul.f32 %v3827, 0.5
    %v3829 = vadd.f32 %v3828, 0.5
    %v3830 = vsel %vm264, %v3827, %v3829
    %v3831 = vld [vmem:[#allocation3] sm:$0xff]
    %3833 = vrot.lane.b32.xlu0 %v3831, 32
    %v3834 = vpop.permute.xlu0 %3833
    %v3836 = vmul.f32 %v3830, %v3834
    %3838 = vrot.lane.b32.xlu0 %v3830, 64
    %v3839 = vpop.permute.xlu0 %3838
    %v3841 = vmul.f32 %v3830, %v3839
    %3843 = vrot.lane.b32.xlu0 %v3841, 32
    %v3844 = vpop.permute.xlu0 %3843
    %v3846 = vadd.f32 %v3836, %v3844
    %v3847 = vtanh.pop %v3846
    %3849 = vrot.lane.b32.xlu0 %v3847, 64
    %v3850 = vpop.permute.xlu0 %3849
    %v3852 = vmul.f32 %v3830, %v3850
    %3854 = vrot.lane.b32.xlu0 %v3846, 96
    %v3855 = vpop.permute.xlu0 %3854
    %3857 = vst.msk [vmem:[#allocation3] sm:$0xff] %vm276, %v3855
    %3859 = vrot.lane.b32.xlu0 %v3852, 32
    %v3860 = vpop.permute.xlu0 %3859
    %3862 = vst.msk [vmem:[#allocation2] sm:$0xff] %vm276, %v3860
    %v3863 = vld [vmem:[#allocation10] sm:$0xff]
    %v3864 = vld [vmem:[#allocation10 + $0x8] sm:$0xff]
    %v3865 = vld [vmem:[#allocation10 + $0x10] sm:$0xff]
    %v3866 = vld [vmem:[#allocation10 + $0x18] sm:$0xff]
    %v3867 = vld [vmem:[#allocation2] sm:$0xff]
    %v3868 = vld [vmem:[%s392] sm:$0xff]
    %v3869 = vld [vmem:[%s392 + $0x8] sm:$0xff]
    %v3870 = vld [vmem:[%s392 + $0x10] sm:$0xff]
    %v3871 = vld [vmem:[%s392 + $0x18] sm:$0xff]
    %3873 = vrot.lane.b32.xlu0 %v3867, 96
    %v3874 = vpop.permute.xlu0 %3873
    %v3875 = vsel %vm276, %v3874, 0
    %3877 = vmatprep.subr.mxu0 0.0
    %3878 = vmatpush1.msra.mxu0 %v3868
    %3879 = vmatprep.subr.mxu0 0.0
    %3880 = vmatpush1.msra.mxu0 %v3869
    %3881 = vmatprep.subr.mxu0 0.0
    %3882 = vmatpush1.msra.mxu0 %v3870
    %3883 = vmatprep.subr.mxu0 0.0
    %3884 = vmatpush1.msra.mxu0 %v3871
    %3885 = vmatprep.subr.mxu0 0.0
    %3886 = vmatpush1.msra.mxu0 0.0
    %3887 = vmatprep.subr.mxu0 0.0
    %3888 = vmatpush1.msra.mxu0 0.0
    %3889 = vmatprep.subr.mxu0 0.0
    %3890 = vmatpush1.msra.mxu0 0.0
    %3891 = vmatprep.subr.mxu0 0.0
    %3892 = vmatpush1.msra.mxu0 0.0
    %3893 = vmatprep.subr.mxu0 0.0
    %3894 = vmatpush1.msra.mxu0 0.0
    %3895 = vmatprep.subr.mxu0 0.0
    %3896 = vmatpush1.msra.mxu0 0.0
    %3897 = vmatprep.subr.mxu0 0.0
    %3898 = vmatpush1.msra.mxu0 0.0
    %3899 = vmatprep.subr.mxu0 0.0
    %3900 = vmatpush1.msra.mxu0 0.0
    %3901 = vmatprep.subr.mxu0 0.0
    %3902 = vmatpush1.msra.mxu0 0.0
    %3903 = vmatprep.subr.mxu0 0.0
    %3904 = vmatpush1.msra.mxu0 0.0
    %3905 = vmatprep.subr.mxu0 0.0
    %3906 = vmatpush1.msra.mxu0 0.0
    %3907 = vmatprep.subr.mxu0 0.0
    %3908 = vmatpush1.msra.mxu0 0.0
    %3909 = vmatprep.subr.mxu0 0.0
    %3910 = vmatpush1.msra.mxu0 0.0
    %3911 = vmatprep.subr.mxu0 0.0
    %3912 = vmatpush1.msra.mxu0 0.0
    %3913 = vmatprep.subr.mxu0 0.0
    %3914 = vmatpush1.msra.mxu0 0.0
    %3915 = vmatprep.subr.mxu0 0.0
    %3916 = vmatpush1.msra.mxu0 0.0
    %3917 = vmatprep.subr.mxu0 0.0
    %3918 = vmatpush1.msra.mxu0 0.0
    %3919 = vmatprep.subr.mxu0 0.0
    %3920 = vmatpush1.msra.mxu0 0.0
    %3921 = vmatprep.subr.mxu0 0.0
    %3922 = vmatpush1.msra.mxu0 0.0
    %3923 = vmatprep.subr.mxu0 0.0
    %3924 = vmatpush1.msra.mxu0 0.0
    %3925 = vmatprep.subr.mxu0 0.0
    %3926 = vmatpush1.msra.mxu0 0.0
    %3927 = vmatprep.subr.mxu0 0.0
    %3928 = vmatpush1.msra.mxu0 0.0
    %3929 = vmatprep.subr.mxu0 0.0
    %3930 = vmatpush1.msra.mxu0 0.0
    %3931 = vmatprep.subr.mxu0 0.0
    %3932 = vmatpush1.msra.mxu0 0.0
    %3933 = vmatprep.subr.mxu0 0.0
    %3934 = vmatpush1.msra.mxu0 0.0
    %3935 = vmatprep.subr.mxu0 0.0
    %3936 = vmatpush1.msra.mxu0 0.0
    %3937 = vmatprep.subr.mxu0 0.0
    %3938 = vmatpush1.msra.mxu0 0.0
    %3939 = vmatprep.subr.mxu0 0.0
    %3940 = vmatpush1.msra.mxu0 0.0
    %3941 = vmatprep.mubr.f32.mxu0 0.0
    %3942 = vmatmul.mubr.f32.gmra.mrb[0].mxu0 %v3875
    %v3943 = vpop.f32.mrb[0].mxu0
    %v3944 = vadd.f32 0.0, %v3943
    %v3945 = vpop.f32.mrb[0].mxu0
    %3946 = vdwg.mxu0
    %v3947 = vsel %vm276, %v3860, 0
    %3949 = vmatprep.subr.mxu0 0.0
    %3950 = vmatpush1.msra.mxu0 %v3863
    %3951 = vmatprep.subr.mxu0 0.0
    %3952 = vmatpush1.msra.mxu0 %v3864
    %3953 = vmatprep.subr.mxu0 0.0
    %3954 = vmatpush1.msra.mxu0 %v3865
    %3955 = vmatprep.subr.mxu0 0.0
    %3956 = vmatpush1.msra.mxu0 %v3866
    %3957 = vmatprep.subr.mxu0 0.0
    %3958 = vmatpush1.msra.mxu0 0.0
    %3959 = vmatprep.subr.mxu0 0.0
    %3960 = vmatpush1.msra.mxu0 0.0
    %3961 = vmatprep.subr.mxu0 0.0
    %3962 = vmatpush1.msra.mxu0 0.0
    %3963 = vmatprep.subr.mxu0 0.0
    %3964 = vmatpush1.msra.mxu0 0.0
    %3965 = vmatprep.subr.mxu0 0.0
    %3966 = vmatpush1.msra.mxu0 0.0
    %3967 = vmatprep.subr.mxu0 0.0
    %3968 = vmatpush1.msra.mxu0 0.0
    %3969 = vmatprep.subr.mxu0 0.0
    %3970 = vmatpush1.msra.mxu0 0.0
    %3971 = vmatprep.subr.mxu0 0.0
    %3972 = vmatpush1.msra.mxu0 0.0
    %3973 = vmatprep.subr.mxu0 0.0
    %3974 = vmatpush1.msra.mxu0 0.0
    %3975 = vmatprep.subr.mxu0 0.0
    %3976 = vmatpush1.msra.mxu0 0.0
    %3977 = vmatprep.subr.mxu0 0.0
    %3978 = vmatpush1.msra.mxu0 0.0
    %3979 = vmatprep.subr.mxu0 0.0
    %3980 = vmatpush1.msra.mxu0 0.0
    %3981 = vmatprep.subr.mxu0 0.0
    %3982 = vmatpush1.msra.mxu0 0.0
    %3983 = vmatprep.subr.mxu0 0.0
    %3984 = vmatpush1.msra.mxu0 0.0
    %3985 = vmatprep.subr.mxu0 0.0
    %3986 = vmatpush1.msra.mxu0 0.0
    %3987 = vmatprep.subr.mxu0 0.0
    %3988 = vmatpush1.msra.mxu0 0.0
    %3989 = vmatprep.subr.mxu0 0.0
    %3990 = vmatpush1.msra.mxu0 0.0
    %3991 = vmatprep.subr.mxu0 0.0
    %3992 = vmatpush1.msra.mxu0 0.0
    %3993 = vmatprep.subr.mxu0 0.0
    %3994 = vmatpush1.msra.mxu0 0.0
    %3995 = vmatprep.subr.mxu0 0.0
    %3996 = vmatpush1.msra.mxu0 0.0
    %3997 = vmatprep.subr.mxu0 0.0
    %3998 = vmatpush1.msra.mxu0 0.0
    %3999 = vmatprep.subr.mxu0 0.0
    %4000 = vmatpush1.msra.mxu0 0.0
    %4001 = vmatprep.subr.mxu0 0.0
    %4002 = vmatpush1.msra.mxu0 0.0
    %4003 = vmatprep.subr.mxu0 0.0
    %4004 = vmatpush1.msra.mxu0 0.0
    %4005 = vmatprep.subr.mxu0 0.0
    %4006 = vmatpush1.msra.mxu0 0.0
    %4007 = vmatprep.subr.mxu0 0.0
    %4008 = vmatpush1.msra.mxu0 0.0
    %4009 = vmatprep.subr.mxu0 0.0
    %4010 = vmatpush1.msra.mxu0 0.0
    %4011 = vmatprep.subr.mxu0 0.0
    %4012 = vmatpush1.msra.mxu0 0.0
    %4013 = vmatprep.mubr.f32.mxu0 0.0
    %4014 = vmatmul.mubr.f32.gmra.mrb[0].mxu0 %v3947
    %v4015 = vpop.f32.mrb[0].mxu0
    %v4016 = vadd.f32 %v3944, %v4015
    %v4017 = vpop.f32.mrb[0].mxu0
    %4018 = vdwg.mxu0
    %v4019 = vadd.f32 %v4016, %v548
    %v4020 = vtanh.pop %v4019
    %v4021 = vmul.f32 %v4020, 0.5
    %v4022 = vadd.f32 %v4021, 0.5
    %v4023 = vsel %vm264, %v4020, %v4022
    %v4024 = vld [vmem:[#allocation3] sm:$0xff]
    %v4025 = vmul.f32 %v4023, %v4024
    %4027 = vrot.lane.b32.xlu0 %v4023, 64
    %v4028 = vpop.permute.xlu0 %4027
    %v4030 = vmul.f32 %v4023, %v4028
    %4032 = vrot.lane.b32.xlu0 %v4030, 32
    %v4033 = vpop.permute.xlu0 %4032
    %v4035 = vadd.f32 %v4025, %v4033
    %v4036 = vtanh.pop %v4035
    %4038 = vrot.lane.b32.xlu0 %v4036, 64
    %v4039 = vpop.permute.xlu0 %4038
    %v4041 = vmul.f32 %v4023, %v4039
    %4042 = vst.msk [vmem:[#allocation3] sm:$0xff] %vm573, %v4035
    %4044 = vrot.lane.b32.xlu0 %v4041, 64
    %v4045 = vpop.permute.xlu0 %4044
    %4047 = vst.msk [vmem:[#allocation2] sm:$0xff] %vm573, %v4045
    %v4048 = vmax.f32 %v4041, 0.0
    %v4049 = vld [vmem:[%s581] sm:$0xff]
    %v4050 = vld [vmem:[%s581 + $0x8] sm:$0xff]
    %v4051 = vld [vmem:[%s581 + $0x10] sm:$0xff]
    %v4052 = vld [vmem:[%s581 + $0x18] sm:$0xff]
    %v4053 = vld [vmem:[#allocation2] sm:$0xff]
    %v4054 = vld [vmem:[%s587] sm:$0xff]
    %v4055 = vld [vmem:[%s587 + $0x8] sm:$0xff]
    %v4056 = vld [vmem:[%s587 + $0x10] sm:$0xff]
    %v4057 = vld [vmem:[%s587 + $0x18] sm:$0xff]
    %4059 = vrot.lane.b32.xlu0 %v4053, 64
    %v4060 = vpop.permute.xlu0 %4059
    %v4061 = vsel %vm276, %v4060, 0
    %4063 = vmatprep.subr.mxu0 0.0
    %4064 = vmatpush1.msra.mxu0 %v4054
    %4065 = vmatprep.subr.mxu0 0.0
    %4066 = vmatpush1.msra.mxu0 %v4055
    %4067 = vmatprep.subr.mxu0 0.0
    %4068 = vmatpush1.msra.mxu0 %v4056
    %4069 = vmatprep.subr.mxu0 0.0
    %4070 = vmatpush1.msra.mxu0 %v4057
    %4071 = vmatprep.subr.mxu0 0.0
    %4072 = vmatpush1.msra.mxu0 0.0
    %4073 = vmatprep.subr.mxu0 0.0
    %4074 = vmatpush1.msra.mxu0 0.0
    %4075 = vmatprep.subr.mxu0 0.0
    %4076 = vmatpush1.msra.mxu0 0.0
    %4077 = vmatprep.subr.mxu0 0.0
    %4078 = vmatpush1.msra.mxu0 0.0
    %4079 = vmatprep.subr.mxu0 0.0
    %4080 = vmatpush1.msra.mxu0 0.0
    %4081 = vmatprep.subr.mxu0 0.0
    %4082 = vmatpush1.msra.mxu0 0.0
    %4083 = vmatprep.subr.mxu0 0.0
    %4084 = vmatpush1.msra.mxu0 0.0
    %4085 = vmatprep.subr.mxu0 0.0
    %4086 = vmatpush1.msra.mxu0 0.0
    %4087 = vmatprep.subr.mxu0 0.0
    %4088 = vmatpush1.msra.mxu0 0.0
    %4089 = vmatprep.subr.mxu0 0.0
    %4090 = vmatpush1.msra.mxu0 0.0
    %4091 = vmatprep.subr.mxu0 0.0
    %4092 = vmatpush1.msra.mxu0 0.0
    %4093 = vmatprep.subr.mxu0 0.0
    %4094 = vmatpush1.msra.mxu0 0.0
    %4095 = vmatprep.subr.mxu0 0.0
    %4096 = vmatpush1.msra.mxu0 0.0
    %4097 = vmatprep.subr.mxu0 0.0
    %4098 = vmatpush1.msra.mxu0 0.0
    %4099 = vmatprep.subr.mxu0 0.0
    %4100 = vmatpush1.msra.mxu0 0.0
    %4101 = vmatprep.subr.mxu0 0.0
    %4102 = vmatpush1.msra.mxu0 0.0
    %4103 = vmatprep.subr.mxu0 0.0
    %4104 = vmatpush1.msra.mxu0 0.0
    %4105 = vmatprep.subr.mxu0 0.0
    %4106 = vmatpush1.msra.mxu0 0.0
    %4107 = vmatprep.subr.mxu0 0.0
    %4108 = vmatpush1.msra.mxu0 0.0
    %4109 = vmatprep.subr.mxu0 0.0
    %4110 = vmatpush1.msra.mxu0 0.0
    %4111 = vmatprep.subr.mxu0 0.0
    %4112 = vmatpush1.msra.mxu0 0.0
    %4113 = vmatprep.subr.mxu0 0.0
    %4114 = vmatpush1.msra.mxu0 0.0
    %4115 = vmatprep.subr.mxu0 0.0
    %4116 = vmatpush1.msra.mxu0 0.0
    %4117 = vmatprep.subr.mxu0 0.0
    %4118 = vmatpush1.msra.mxu0 0.0
    %4119 = vmatprep.subr.mxu0 0.0
    %4120 = vmatpush1.msra.mxu0 0.0
    %4121 = vmatprep.subr.mxu0 0.0
    %4122 = vmatpush1.msra.mxu0 0.0
    %4123 = vmatprep.subr.mxu0 0.0
    %4124 = vmatpush1.msra.mxu0 0.0
    %4125 = vmatprep.subr.mxu0 0.0
    %4126 = vmatpush1.msra.mxu0 0.0
    %4127 = vmatprep.mubr.f32.mxu0 0.0
    %4128 = vmatmul.mubr.f32.gmra.mrb[0].mxu0 %v4061
    %v4129 = vpop.f32.mrb[0].mxu0
    %v4130 = vadd.f32 0.0, %v4129
    %v4131 = vpop.f32.mrb[0].mxu0
    %4132 = vdwg.mxu0
    %4134 = vrot.lane.b32.xlu0 %v4048, 32
    %v4135 = vpop.permute.xlu0 %4134
    %v4136 = vsel %vm276, %v4135, 0
    %4138 = vmatprep.subr.mxu0 0.0
    %4139 = vmatpush1.msra.mxu0 %v4049
    %4140 = vmatprep.subr.mxu0 0.0
    %4141 = vmatpush1.msra.mxu0 %v4050
    %4142 = vmatprep.subr.mxu0 0.0
    %4143 = vmatpush1.msra.mxu0 %v4051
    %4144 = vmatprep.subr.mxu0 0.0
    %4145 = vmatpush1.msra.mxu0 %v4052
    %4146 = vmatprep.subr.mxu0 0.0
    %4147 = vmatpush1.msra.mxu0 0.0
    %4148 = vmatprep.subr.mxu0 0.0
    %4149 = vmatpush1.msra.mxu0 0.0
    %4150 = vmatprep.subr.mxu0 0.0
    %4151 = vmatpush1.msra.mxu0 0.0
    %4152 = vmatprep.subr.mxu0 0.0
    %4153 = vmatpush1.msra.mxu0 0.0
    %4154 = vmatprep.subr.mxu0 0.0
    %4155 = vmatpush1.msra.mxu0 0.0
    %4156 = vmatprep.subr.mxu0 0.0
    %4157 = vmatpush1.msra.mxu0 0.0
    %4158 = vmatprep.subr.mxu0 0.0
    %4159 = vmatpush1.msra.mxu0 0.0
    %4160 = vmatprep.subr.mxu0 0.0
    %4161 = vmatpush1.msra.mxu0 0.0
    %4162 = vmatprep.subr.mxu0 0.0
    %4163 = vmatpush1.msra.mxu0 0.0
    %4164 = vmatprep.subr.mxu0 0.0
    %4165 = vmatpush1.msra.mxu0 0.0
    %4166 = vmatprep.subr.mxu0 0.0
    %4167 = vmatpush1.msra.mxu0 0.0
    %4168 = vmatprep.subr.mxu0 0.0
    %4169 = vmatpush1.msra.mxu0 0.0
    %4170 = vmatprep.subr.mxu0 0.0
    %4171 = vmatpush1.msra.mxu0 0.0
    %4172 = vmatprep.subr.mxu0 0.0
    %4173 = vmatpush1.msra.mxu0 0.0
    %4174 = vmatprep.subr.mxu0 0.0
    %4175 = vmatpush1.msra.mxu0 0.0
    %4176 = vmatprep.subr.mxu0 0.0
    %4177 = vmatpush1.msra.mxu0 0.0
    %4178 = vmatprep.subr.mxu0 0.0
    %4179 = vmatpush1.msra.mxu0 0.0
    %4180 = vmatprep.subr.mxu0 0.0
    %4181 = vmatpush1.msra.mxu0 0.0
    %4182 = vmatprep.subr.mxu0 0.0
    %4183 = vmatpush1.msra.mxu0 0.0
    %4184 = vmatprep.subr.mxu0 0.0
    %4185 = vmatpush1.msra.mxu0 0.0
    %4186 = vmatprep.subr.mxu0 0.0
    %4187 = vmatpush1.msra.mxu0 0.0
    %4188 = vmatprep.subr.mxu0 0.0
    %4189 = vmatpush1.msra.mxu0 0.0
    %4190 = vmatprep.subr.mxu0 0.0
    %4191 = vmatpush1.msra.mxu0 0.0
    %4192 = vmatprep.subr.mxu0 0.0
    %4193 = vmatpush1.msra.mxu0 0.0
    %4194 = vmatprep.subr.mxu0 0.0
    %4195 = vmatpush1.msra.mxu0 0.0
    %4196 = vmatprep.subr.mxu0 0.0
    %4197 = vmatpush1.msra.mxu0 0.0
    %4198 = vmatprep.subr.mxu0 0.0
    %4199 = vmatpush1.msra.mxu0 0.0
    %4200 = vmatprep.subr.mxu0 0.0
    %4201 = vmatpush1.msra.mxu0 0.0
    %4202 = vmatprep.mubr.f32.mxu0 0.0
    %4203 = vmatmul.mubr.f32.gmra.mrb[0].mxu0 %v4136
    %v4204 = vpop.f32.mrb[0].mxu0
    %v4205 = vadd.f32 %v4130, %v4204
    %v4206 = vpop.f32.mrb[0].mxu0
    %4207 = vdwg.mxu0
    %v4208 = vadd.f32 %v4205, %v746
    %v4209 = vtanh.pop %v4208
    %v4210 = vmul.f32 %v4209, 0.5
    %v4211 = vadd.f32 %v4210, 0.5
    %v4212 = vsel %vm264, %v4209, %v4211
    %v4213 = vld [vmem:[#allocation3] sm:$0xff]
    %4215 = vrot.lane.b32.xlu0 %v4213, 96
    %v4216 = vpop.permute.xlu0 %4215
    %v4218 = vmul.f32 %v4212, %v4216
    %4220 = vrot.lane.b32.xlu0 %v4212, 64
    %v4221 = vpop.permute.xlu0 %4220
    %v4223 = vmul.f32 %v4212, %v4221
    %4225 = vrot.lane.b32.xlu0 %v4223, 32
    %v4226 = vpop.permute.xlu0 %4225
    %v4228 = vadd.f32 %v4218, %v4226
    %v4229 = vtanh.pop %v4228
    %4231 = vrot.lane.b32.xlu0 %v4229, 64
    %v4232 = vpop.permute.xlu0 %4231
    %v4234 = vmul.f32 %v4212, %v4232
    %4236 = vrot.lane.b32.xlu0 %v4228, 32
    %v4237 = vpop.permute.xlu0 %4236
    %4239 = vst.msk [vmem:[#allocation3] sm:$0xff] %vm779, %v4237
    %4241 = vrot.lane.b32.xlu0 %v4234, 96
    %v4242 = vpop.permute.xlu0 %4241
    %4244 = vst.msk [vmem:[#allocation2] sm:$0xff] %vm779, %v4242
    %v4245 = vld [vmem:[%s786] sm:$0xff]
    %v4246 = vld [vmem:[%s786 + $0x8] sm:$0xff]
    %v4247 = vld [vmem:[%s786 + $0x10] sm:$0xff]
    %v4248 = vld [vmem:[%s786 + $0x18] sm:$0xff]
    %v4249 = vld [vmem:[#allocation2] sm:$0xff]
    %v4250 = vld [vmem:[%s792] sm:$0xff]
    %v4251 = vld [vmem:[%s792 + $0x8] sm:$0xff]
    %v4252 = vld [vmem:[%s792 + $0x10] sm:$0xff]
    %v4253 = vld [vmem:[%s792 + $0x18] sm:$0xff]
    %4255 = vrot.lane.b32.xlu0 %v4249, 32
    %v4256 = vpop.permute.xlu0 %4255
    %v4257 = vsel %vm276, %v4256, 0
    %4259 = vmatprep.subr.mxu0 0.0
    %4260 = vmatpush1.msra.mxu0 %v4250
    %4261 = vmatprep.subr.mxu0 0.0
    %4262 = vmatpush1.msra.mxu0 %v4251
    %4263 = vmatprep.subr.mxu0 0.0
    %4264 = vmatpush1.msra.mxu0 %v4252
    %4265 = vmatprep.subr.mxu0 0.0
    %4266 = vmatpush1.msra.mxu0 %v4253
    %4267 = vmatprep.subr.mxu0 0.0
    %4268 = vmatpush1.msra.mxu0 0.0
    %4269 = vmatprep.subr.mxu0 0.0
    %4270 = vmatpush1.msra.mxu0 0.0
    %4271 = vmatprep.subr.mxu0 0.0
    %4272 = vmatpush1.msra.mxu0 0.0
    %4273 = vmatprep.subr.mxu0 0.0
    %4274 = vmatpush1.msra.mxu0 0.0
    %4275 = vmatprep.subr.mxu0 0.0
    %4276 = vmatpush1.msra.mxu0 0.0
    %4277 = vmatprep.subr.mxu0 0.0
    %4278 = vmatpush1.msra.mxu0 0.0
    %4279 = vmatprep.subr.mxu0 0.0
    %4280 = vmatpush1.msra.mxu0 0.0
    %4281 = vmatprep.subr.mxu0 0.0
    %4282 = vmatpush1.msra.mxu0 0.0
    %4283 = vmatprep.subr.mxu0 0.0
    %4284 = vmatpush1.msra.mxu0 0.0
    %4285 = vmatprep.subr.mxu0 0.0
    %4286 = vmatpush1.msra.mxu0 0.0
    %4287 = vmatprep.subr.mxu0 0.0
    %4288 = vmatpush1.msra.mxu0 0.0
    %4289 = vmatprep.subr.mxu0 0.0
    %4290 = vmatpush1.msra.mxu0 0.0
    %4291 = vmatprep.subr.mxu0 0.0
    %4292 = vmatpush1.msra.mxu0 0.0
    %4293 = vmatprep.subr.mxu0 0.0
    %4294 = vmatpush1.msra.mxu0 0.0
    %4295 = vmatprep.subr.mxu0 0.0
    %4296 = vmatpush1.msra.mxu0 0.0
    %4297 = vmatprep.subr.mxu0 0.0
    %4298 = vmatpush1.msra.mxu0 0.0
    %4299 = vmatprep.subr.mxu0 0.0
    %4300 = vmatpush1.msra.mxu0 0.0
    %4301 = vmatprep.subr.mxu0 0.0
    %4302 = vmatpush1.msra.mxu0 0.0
    %4303 = vmatprep.subr.mxu0 0.0
    %4304 = vmatpush1.msra.mxu0 0.0
    %4305 = vmatprep.subr.mxu0 0.0
    %4306 = vmatpush1.msra.mxu0 0.0
    %4307 = vmatprep.subr.mxu0 0.0
    %4308 = vmatpush1.msra.mxu0 0.0
    %4309 = vmatprep.subr.mxu0 0.0
    %4310 = vmatpush1.msra.mxu0 0.0
    %4311 = vmatprep.subr.mxu0 0.0
    %4312 = vmatpush1.msra.mxu0 0.0
    %4313 = vmatprep.subr.mxu0 0.0
    %4314 = vmatpush1.msra.mxu0 0.0
    %4315 = vmatprep.subr.mxu0 0.0
    %4316 = vmatpush1.msra.mxu0 0.0
    %4317 = vmatprep.subr.mxu0 0.0
    %4318 = vmatpush1.msra.mxu0 0.0
    %4319 = vmatprep.subr.mxu0 0.0
    %4320 = vmatpush1.msra.mxu0 0.0
    %4321 = vmatprep.subr.mxu0 0.0
    %4322 = vmatpush1.msra.mxu0 0.0
    %4323 = vmatprep.mubr.f32.mxu0 0.0
    %4324 = vmatmul.mubr.f32.gmra.mrb[0].mxu0 %v4257
    %v4325 = vpop.f32.mrb[0].mxu0
    %v4326 = vadd.f32 0.0, %v4325
    %v4327 = vpop.f32.mrb[0].mxu0
    %4328 = vdwg.mxu0
    %4329 = vrot.lane.b32.xlu0 %v4234, 32
    %v4330 = vpop.permute.xlu0 %4329
    %v4331 = vsel %vm276, %v4330, 0
    %4333 = vmatprep.subr.mxu0 0.0
    %4334 = vmatpush1.msra.mxu0 %v4245
    %4335 = vmatprep.subr.mxu0 0.0
    %4336 = vmatpush1.msra.mxu0 %v4246
    %4337 = vmatprep.subr.mxu0 0.0
    %4338 = vmatpush1.msra.mxu0 %v4247
    %4339 = vmatprep.subr.mxu0 0.0
    %4340 = vmatpush1.msra.mxu0 %v4248
    %4341 = vmatprep.subr.mxu0 0.0
    %4342 = vmatpush1.msra.mxu0 0.0
    %4343 = vmatprep.subr.mxu0 0.0
    %4344 = vmatpush1.msra.mxu0 0.0
    %4345 = vmatprep.subr.mxu0 0.0
    %4346 = vmatpush1.msra.mxu0 0.0
    %4347 = vmatprep.subr.mxu0 0.0
    %4348 = vmatpush1.msra.mxu0 0.0
    %4349 = vmatprep.subr.mxu0 0.0
    %4350 = vmatpush1.msra.mxu0 0.0
    %4351 = vmatprep.subr.mxu0 0.0
    %4352 = vmatpush1.msra.mxu0 0.0
    %4353 = vmatprep.subr.mxu0 0.0
    %4354 = vmatpush1.msra.mxu0 0.0
    %4355 = vmatprep.subr.mxu0 0.0
    %4356 = vmatpush1.msra.mxu0 0.0
    %4357 = vmatprep.subr.mxu0 0.0
    %4358 = vmatpush1.msra.mxu0 0.0
    %4359 = vmatprep.subr.mxu0 0.0
    %4360 = vmatpush1.msra.mxu0 0.0
    %4361 = vmatprep.subr.mxu0 0.0
    %4362 = vmatpush1.msra.mxu0 0.0
    %4363 = vmatprep.subr.mxu0 0.0
    %4364 = vmatpush1.msra.mxu0 0.0
    %4365 = vmatprep.subr.mxu0 0.0
    %4366 = vmatpush1.msra.mxu0 0.0
    %4367 = vmatprep.subr.mxu0 0.0
    %4368 = vmatpush1.msra.mxu0 0.0
    %4369 = vmatprep.subr.mxu0 0.0
    %4370 = vmatpush1.msra.mxu0 0.0
    %4371 = vmatprep.subr.mxu0 0.0
    %4372 = vmatpush1.msra.mxu0 0.0
    %4373 = vmatprep.subr.mxu0 0.0
    %4374 = vmatpush1.msra.mxu0 0.0
    %4375 = vmatprep.subr.mxu0 0.0
    %4376 = vmatpush1.msra.mxu0 0.0
    %4377 = vmatprep.subr.mxu0 0.0
    %4378 = vmatpush1.msra.mxu0 0.0
    %4379 = vmatprep.subr.mxu0 0.0
    %4380 = vmatpush1.msra.mxu0 0.0
    %4381 = vmatprep.subr.mxu0 0.0
    %4382 = vmatpush1.msra.mxu0 0.0
    %4383 = vmatprep.subr.mxu0 0.0
    %4384 = vmatpush1.msra.mxu0 0.0
    %4385 = vmatprep.subr.mxu0 0.0
    %4386 = vmatpush1.msra.mxu0 0.0
    %4387 = vmatprep.subr.mxu0 0.0
    %4388 = vmatpush1.msra.mxu0 0.0
    %4389 = vmatprep.subr.mxu0 0.0
    %4390 = vmatpush1.msra.mxu0 0.0
    %4391 = vmatprep.subr.mxu0 0.0
    %4392 = vmatpush1.msra.mxu0 0.0
    %4393 = vmatprep.subr.mxu0 0.0
    %4394 = vmatpush1.msra.mxu0 0.0
    %4395 = vmatprep.subr.mxu0 0.0
    %4396 = vmatpush1.msra.mxu0 0.0
    %4397 = vmatprep.mubr.f32.mxu0 0.0
    %4398 = vmatmul.mubr.f32.gmra.mrb[0].mxu0 %v4331
    %v4399 = vpop.f32.mrb[0].mxu0
    %v4400 = vadd.f32 %v4326, %v4399
    %v4401 = vpop.f32.mrb[0].mxu0
    %4402 = vdwg.mxu0
    %v4403 = vadd.f32 %v4400, %v950
    %v4404 = vtanh.pop %v4403
    %v4405 = vmul.f32 %v4404, 0.5
    %v4406 = vadd.f32 %v4405, 0.5
    %v4407 = vsel %vm264, %v4404, %v4406
    %v4408 = vld [vmem:[#allocation3] sm:$0xff]
    %4410 = vrot.lane.b32.xlu0 %v4408, 64
    %v4411 = vpop.permute.xlu0 %4410
    %v4413 = vmul.f32 %v4407, %v4411
    %4415 = vrot.lane.b32.xlu0 %v4407, 64
    %v4416 = vpop.permute.xlu0 %4415
    %v4418 = vmul.f32 %v4407, %v4416
    %4420 = vrot.lane.b32.xlu0 %v4418, 32
    %v4421 = vpop.permute.xlu0 %4420
    %v4423 = vadd.f32 %v4413, %v4421
    %v4424 = vtanh.pop %v4423
    %4426 = vrot.lane.b32.xlu0 %v4424, 64
    %v4427 = vpop.permute.xlu0 %4426
    %v4429 = vmul.f32 %v4407, %v4427
    %4431 = vrot.lane.b32.xlu0 %v4423, 64
    %v4432 = vpop.permute.xlu0 %4431
    %4434 = vst.msk [vmem:[#allocation3] sm:$0xff] %vm983, %v4432
    %4435 = vst.msk [vmem:[#allocation2] sm:$0xff] %vm983, %v4429
    %s4436 = scalar_lea.vmem [#allocation4], 48
    %v4437 = vld [vmem:[%s4436] sm:$0xff]
    %v4438 = vld [vmem:[#allocation2] sm:$0xff]
    %v4439 = vld [vmem:[#allocation11] sm:$0xff]
    %v4440 = vld [vmem:[#allocation11 + $0x8] sm:$0xff]
    %v4441 = vld [vmem:[#allocation11 + $0x10] sm:$0xff]
    %v4442 = vld [vmem:[#allocation11 + $0x18] sm:$0xff]
    %v4444 = vsel %vm276, %v4438, 0
    %4446 = vmatprep.subr.mxu0 0.0
    %4447 = vmatpush1.msra.mxu0 %v4439
    %4448 = vmatprep.subr.mxu0 0.0
    %4449 = vmatpush1.msra.mxu0 %v4440
    %4450 = vmatprep.subr.mxu0 0.0
    %4451 = vmatpush1.msra.mxu0 %v4441
    %4452 = vmatprep.subr.mxu0 0.0
    %4453 = vmatpush1.msra.mxu0 %v4442
    %4454 = vmatprep.subr.mxu0 0.0
    %4455 = vmatpush1.msra.mxu0 0.0
    %4456 = vmatprep.subr.mxu0 0.0
    %4457 = vmatpush1.msra.mxu0 0.0
    %4458 = vmatprep.subr.mxu0 0.0
    %4459 = vmatpush1.msra.mxu0 0.0
    %4460 = vmatprep.subr.mxu0 0.0
    %4461 = vmatpush1.msra.mxu0 0.0
    %4462 = vmatprep.subr.mxu0 0.0
    %4463 = vmatpush1.msra.mxu0 0.0
    %4464 = vmatprep.subr.mxu0 0.0
    %4465 = vmatpush1.msra.mxu0 0.0
    %4466 = vmatprep.subr.mxu0 0.0
    %4467 = vmatpush1.msra.mxu0 0.0
    %4468 = vmatprep.subr.mxu0 0.0
    %4469 = vmatpush1.msra.mxu0 0.0
    %4470 = vmatprep.subr.mxu0 0.0
    %4471 = vmatpush1.msra.mxu0 0.0
    %4472 = vmatprep.subr.mxu0 0.0
    %4473 = vmatpush1.msra.mxu0 0.0
    %4474 = vmatprep.subr.mxu0 0.0
    %4475 = vmatpush1.msra.mxu0 0.0
    %4476 = vmatprep.subr.mxu0 0.0
    %4477 = vmatpush1.msra.mxu0 0.0
    %4478 = vmatprep.subr.mxu0 0.0
    %4479 = vmatpush1.msra.mxu0 0.0
    %4480 = vmatprep.subr.mxu0 0.0
    %4481 = vmatpush1.msra.mxu0 0.0
    %4482 = vmatprep.subr.mxu0 0.0
    %4483 = vmatpush1.msra.mxu0 0.0
    %4484 = vmatprep.subr.mxu0 0.0
    %4485 = vmatpush1.msra.mxu0 0.0
    %4486 = vmatprep.subr.mxu0 0.0
    %4487 = vmatpush1.msra.mxu0 0.0
    %4488 = vmatprep.subr.mxu0 0.0
    %4489 = vmatpush1.msra.mxu0 0.0
    %4490 = vmatprep.subr.mxu0 0.0
    %4491 = vmatpush1.msra.mxu0 0.0
    %4492 = vmatprep.subr.mxu0 0.0
    %4493 = vmatpush1.msra.mxu0 0.0
    %4494 = vmatprep.subr.mxu0 0.0
    %4495 = vmatpush1.msra.mxu0 0.0
    %4496 = vmatprep.subr.mxu0 0.0
    %4497 = vmatpush1.msra.mxu0 0.0
    %4498 = vmatprep.subr.mxu0 0.0
    %4499 = vmatpush1.msra.mxu0 0.0
    %4500 = vmatprep.subr.mxu0 0.0
    %4501 = vmatpush1.msra.mxu0 0.0
    %4502 = vmatprep.subr.mxu0 0.0
    %4503 = vmatpush1.msra.mxu0 0.0
    %4504 = vmatprep.subr.mxu0 0.0
    %4505 = vmatpush1.msra.mxu0 0.0
    %4506 = vmatprep.subr.mxu0 0.0
    %4507 = vmatpush1.msra.mxu0 0.0
    %4508 = vmatprep.subr.mxu0 0.0
    %4509 = vmatpush1.msra.mxu0 0.0
    %4510 = vmatprep.mubr.f32.mxu0 0.0
    %4511 = vmatmul.mubr.f32.gmra.mrb[0].mxu0 %v4444
    %v4512 = vpop.f32.mrb[0].mxu0
    %v4513 = vadd.f32 0.0, %v4512
    %v4514 = vpop.f32.mrb[0].mxu0
    %4515 = vdwg.mxu0
    %v4516 = vadd.f32 %v4437, %v4513
    %v4517 = vtanh.pop %v4516
    %v4518 = vmul.f32 %v4517, 0.5
    %v4519 = vadd.f32 %v4518, 0.5
    %v4520 = vsel %vm264, %v4517, %v4519
    %v4521 = vld [vmem:[#allocation3] sm:$0xff]
    %4523 = vrot.lane.b32.xlu0 %v4521, 32
    %v4524 = vpop.permute.xlu0 %4523
    %v4526 = vmul.f32 %v4520, %v4524
    %4528 = vrot.lane.b32.xlu0 %v4520, 64
    %v4529 = vpop.permute.xlu0 %4528
    %v4531 = vmul.f32 %v4520, %v4529
    %4533 = vrot.lane.b32.xlu0 %v4531, 32
    %v4534 = vpop.permute.xlu0 %4533
    %v4536 = vadd.f32 %v4526, %v4534
    %v4537 = vtanh.pop %v4536
    %4539 = vrot.lane.b32.xlu0 %v4537, 64
    %v4540 = vpop.permute.xlu0 %4539
    %v4542 = vmul.f32 %v4520, %v4540
    %4544 = vrot.lane.b32.xlu0 %v4536, 96
    %v4545 = vpop.permute.xlu0 %4544
    %4547 = vst.msk [vmem:[#allocation3] sm:$0xff] %vm276, %v4545
    %4549 = vrot.lane.b32.xlu0 %v4542, 32
    %v4550 = vpop.permute.xlu0 %4549
    %4552 = vst.msk [vmem:[#allocation2] sm:$0xff] %vm276, %v4550
    %v4553 = vld [vmem:[#allocation10] sm:$0xff]
    %v4554 = vld [vmem:[#allocation10 + $0x8] sm:$0xff]
    %v4555 = vld [vmem:[#allocation10 + $0x10] sm:$0xff]
    %v4556 = vld [vmem:[#allocation10 + $0x18] sm:$0xff]
    %v4557 = vld [vmem:[#allocation2] sm:$0xff]
    %v4558 = vld [vmem:[%s392] sm:$0xff]
    %v4559 = vld [vmem:[%s392 + $0x8] sm:$0xff]
    %v4560 = vld [vmem:[%s392 + $0x10] sm:$0xff]
    %v4561 = vld [vmem:[%s392 + $0x18] sm:$0xff]
    %4563 = vrot.lane.b32.xlu0 %v4557, 96
    %v4564 = vpop.permute.xlu0 %4563
    %v4565 = vsel %vm276, %v4564, 0
    %4567 = vmatprep.subr.mxu0 0.0
    %4568 = vmatpush1.msra.mxu0 %v4558
    %4569 = vmatprep.subr.mxu0 0.0
    %4570 = vmatpush1.msra.mxu0 %v4559
    %4571 = vmatprep.subr.mxu0 0.0
    %4572 = vmatpush1.msra.mxu0 %v4560
    %4573 = vmatprep.subr.mxu0 0.0
    %4574 = vmatpush1.msra.mxu0 %v4561
    %4575 = vmatprep.subr.mxu0 0.0
    %4576 = vmatpush1.msra.mxu0 0.0
    %4577 = vmatprep.subr.mxu0 0.0
    %4578 = vmatpush1.msra.mxu0 0.0
    %4579 = vmatprep.subr.mxu0 0.0
    %4580 = vmatpush1.msra.mxu0 0.0
    %4581 = vmatprep.subr.mxu0 0.0
    %4582 = vmatpush1.msra.mxu0 0.0
    %4583 = vmatprep.subr.mxu0 0.0
    %4584 = vmatpush1.msra.mxu0 0.0
    %4585 = vmatprep.subr.mxu0 0.0
    %4586 = vmatpush1.msra.mxu0 0.0
    %4587 = vmatprep.subr.mxu0 0.0
    %4588 = vmatpush1.msra.mxu0 0.0
    %4589 = vmatprep.subr.mxu0 0.0
    %4590 = vmatpush1.msra.mxu0 0.0
    %4591 = vmatprep.subr.mxu0 0.0
    %4592 = vmatpush1.msra.mxu0 0.0
    %4593 = vmatprep.subr.mxu0 0.0
    %4594 = vmatpush1.msra.mxu0 0.0
    %4595 = vmatprep.subr.mxu0 0.0
    %4596 = vmatpush1.msra.mxu0 0.0
    %4597 = vmatprep.subr.mxu0 0.0
    %4598 = vmatpush1.msra.mxu0 0.0
    %4599 = vmatprep.subr.mxu0 0.0
    %4600 = vmatpush1.msra.mxu0 0.0
    %4601 = vmatprep.subr.mxu0 0.0
    %4602 = vmatpush1.msra.mxu0 0.0
    %4603 = vmatprep.subr.mxu0 0.0
    %4604 = vmatpush1.msra.mxu0 0.0
    %4605 = vmatprep.subr.mxu0 0.0
    %4606 = vmatpush1.msra.mxu0 0.0
    %4607 = vmatprep.subr.mxu0 0.0
    %4608 = vmatpush1.msra.mxu0 0.0
    %4609 = vmatprep.subr.mxu0 0.0
    %4610 = vmatpush1.msra.mxu0 0.0
    %4611 = vmatprep.subr.mxu0 0.0
    %4612 = vmatpush1.msra.mxu0 0.0
    %4613 = vmatprep.subr.mxu0 0.0
    %4614 = vmatpush1.msra.mxu0 0.0
    %4615 = vmatprep.subr.mxu0 0.0
    %4616 = vmatpush1.msra.mxu0 0.0
    %4617 = vmatprep.subr.mxu0 0.0
    %4618 = vmatpush1.msra.mxu0 0.0
    %4619 = vmatprep.subr.mxu0 0.0
    %4620 = vmatpush1.msra.mxu0 0.0
    %4621 = vmatprep.subr.mxu0 0.0
    %4622 = vmatpush1.msra.mxu0 0.0
    %4623 = vmatprep.subr.mxu0 0.0
    %4624 = vmatpush1.msra.mxu0 0.0
    %4625 = vmatprep.subr.mxu0 0.0
    %4626 = vmatpush1.msra.mxu0 0.0
    %4627 = vmatprep.subr.mxu0 0.0
    %4628 = vmatpush1.msra.mxu0 0.0
    %4629 = vmatprep.subr.mxu0 0.0
    %4630 = vmatpush1.msra.mxu0 0.0
    %4631 = vmatprep.mubr.f32.mxu0 0.0
    %4632 = vmatmul.mubr.f32.gmra.mrb[0].mxu0 %v4565
    %v4633 = vpop.f32.mrb[0].mxu0
    %v4634 = vadd.f32 0.0, %v4633
    %v4635 = vpop.f32.mrb[0].mxu0
    %4636 = vdwg.mxu0
    %v4637 = vsel %vm276, %v4550, 0
    %4639 = vmatprep.subr.mxu0 0.0
    %4640 = vmatpush1.msra.mxu0 %v4553
    %4641 = vmatprep.subr.mxu0 0.0
    %4642 = vmatpush1.msra.mxu0 %v4554
    %4643 = vmatprep.subr.mxu0 0.0
    %4644 = vmatpush1.msra.mxu0 %v4555
    %4645 = vmatprep.subr.mxu0 0.0
    %4646 = vmatpush1.msra.mxu0 %v4556
    %4647 = vmatprep.subr.mxu0 0.0
    %4648 = vmatpush1.msra.mxu0 0.0
    %4649 = vmatprep.subr.mxu0 0.0
    %4650 = vmatpush1.msra.mxu0 0.0
    %4651 = vmatprep.subr.mxu0 0.0
    %4652 = vmatpush1.msra.mxu0 0.0
    %4653 = vmatprep.subr.mxu0 0.0
    %4654 = vmatpush1.msra.mxu0 0.0
    %4655 = vmatprep.subr.mxu0 0.0
    %4656 = vmatpush1.msra.mxu0 0.0
    %4657 = vmatprep.subr.mxu0 0.0
    %4658 = vmatpush1.msra.mxu0 0.0
    %4659 = vmatprep.subr.mxu0 0.0
    %4660 = vmatpush1.msra.mxu0 0.0
    %4661 = vmatprep.subr.mxu0 0.0
    %4662 = vmatpush1.msra.mxu0 0.0
    %4663 = vmatprep.subr.mxu0 0.0
    %4664 = vmatpush1.msra.mxu0 0.0
    %4665 = vmatprep.subr.mxu0 0.0
    %4666 = vmatpush1.msra.mxu0 0.0
    %4667 = vmatprep.subr.mxu0 0.0
    %4668 = vmatpush1.msra.mxu0 0.0
    %4669 = vmatprep.subr.mxu0 0.0
    %4670 = vmatpush1.msra.mxu0 0.0
    %4671 = vmatprep.subr.mxu0 0.0
    %4672 = vmatpush1.msra.mxu0 0.0
    %4673 = vmatprep.subr.mxu0 0.0
    %4674 = vmatpush1.msra.mxu0 0.0
    %4675 = vmatprep.subr.mxu0 0.0
    %4676 = vmatpush1.msra.mxu0 0.0
    %4677 = vmatprep.subr.mxu0 0.0
    %4678 = vmatpush1.msra.mxu0 0.0
    %4679 = vmatprep.subr.mxu0 0.0
    %4680 = vmatpush1.msra.mxu0 0.0
    %4681 = vmatprep.subr.mxu0 0.0
    %4682 = vmatpush1.msra.mxu0 0.0
    %4683 = vmatprep.subr.mxu0 0.0
    %4684 = vmatpush1.msra.mxu0 0.0
    %4685 = vmatprep.subr.mxu0 0.0
    %4686 = vmatpush1.msra.mxu0 0.0
    %4687 = vmatprep.subr.mxu0 0.0
    %4688 = vmatpush1.msra.mxu0 0.0
    %4689 = vmatprep.subr.mxu0 0.0
    %4690 = vmatpush1.msra.mxu0 0.0
    %4691 = vmatprep.subr.mxu0 0.0
    %4692 = vmatpush1.msra.mxu0 0.0
    %4693 = vmatprep.subr.mxu0 0.0
    %4694 = vmatpush1.msra.mxu0 0.0
    %4695 = vmatprep.subr.mxu0 0.0
    %4696 = vmatpush1.msra.mxu0 0.0
    %4697 = vmatprep.subr.mxu0 0.0
    %4698 = vmatpush1.msra.mxu0 0.0
    %4699 = vmatprep.subr.mxu0 0.0
    %4700 = vmatpush1.msra.mxu0 0.0
    %4701 = vmatprep.subr.mxu0 0.0
    %4702 = vmatpush1.msra.mxu0 0.0
    %4703 = vmatprep.mubr.f32.mxu0 0.0
    %4704 = vmatmul.mubr.f32.gmra.mrb[0].mxu0 %v4637
    %v4705 = vpop.f32.mrb[0].mxu0
    %v4706 = vadd.f32 %v4634, %v4705
    %v4707 = vpop.f32.mrb[0].mxu0
    %4708 = vdwg.mxu0
    %v4709 = vadd.f32 %v4706, %v548
    %v4710 = vtanh.pop %v4709
    %v4711 = vmul.f32 %v4710, 0.5
    %v4712 = vadd.f32 %v4711, 0.5
    %v4713 = vsel %vm264, %v4710, %v4712
    %v4714 = vld [vmem:[#allocation3] sm:$0xff]
    %v4715 = vmul.f32 %v4713, %v4714
    %4717 = vrot.lane.b32.xlu0 %v4713, 64
    %v4718 = vpop.permute.xlu0 %4717
    %v4720 = vmul.f32 %v4713, %v4718
    %4722 = vrot.lane.b32.xlu0 %v4720, 32
    %v4723 = vpop.permute.xlu0 %4722
    %v4725 = vadd.f32 %v4715, %v4723
    %v4726 = vtanh.pop %v4725
    %4728 = vrot.lane.b32.xlu0 %v4726, 64
    %v4729 = vpop.permute.xlu0 %4728
    %v4731 = vmul.f32 %v4713, %v4729
    %4732 = vst.msk [vmem:[#allocation3] sm:$0xff] %vm573, %v4725
    %4734 = vrot.lane.b32.xlu0 %v4731, 64
    %v4735 = vpop.permute.xlu0 %4734
    %4737 = vst.msk [vmem:[#allocation2] sm:$0xff] %vm573, %v4735
    %v4738 = vmax.f32 %v4731, 0.0
    %v4739 = vld [vmem:[%s581] sm:$0xff]
    %v4740 = vld [vmem:[%s581 + $0x8] sm:$0xff]
    %v4741 = vld [vmem:[%s581 + $0x10] sm:$0xff]
    %v4742 = vld [vmem:[%s581 + $0x18] sm:$0xff]
    %v4743 = vld [vmem:[#allocation2] sm:$0xff]
    %v4744 = vld [vmem:[%s587] sm:$0xff]
    %v4745 = vld [vmem:[%s587 + $0x8] sm:$0xff]
    %v4746 = vld [vmem:[%s587 + $0x10] sm:$0xff]
    %v4747 = vld [vmem:[%s587 + $0x18] sm:$0xff]
    %4749 = vrot.lane.b32.xlu0 %v4743, 64
    %v4750 = vpop.permute.xlu0 %4749
    %v4751 = vsel %vm276, %v4750, 0
    %4753 = vmatprep.subr.mxu0 0.0
    %4754 = vmatpush1.msra.mxu0 %v4744
    %4755 = vmatprep.subr.mxu0 0.0
    %4756 = vmatpush1.msra.mxu0 %v4745
    %4757 = vmatprep.subr.mxu0 0.0
    %4758 = vmatpush1.msra.mxu0 %v4746
    %4759 = vmatprep.subr.mxu0 0.0
    %4760 = vmatpush1.msra.mxu0 %v4747
    %4761 = vmatprep.subr.mxu0 0.0
    %4762 = vmatpush1.msra.mxu0 0.0
    %4763 = vmatprep.subr.mxu0 0.0
    %4764 = vmatpush1.msra.mxu0 0.0
    %4765 = vmatprep.subr.mxu0 0.0
    %4766 = vmatpush1.msra.mxu0 0.0
    %4767 = vmatprep.subr.mxu0 0.0
    %4768 = vmatpush1.msra.mxu0 0.0
    %4769 = vmatprep.subr.mxu0 0.0
    %4770 = vmatpush1.msra.mxu0 0.0
    %4771 = vmatprep.subr.mxu0 0.0
    %4772 = vmatpush1.msra.mxu0 0.0
    %4773 = vmatprep.subr.mxu0 0.0
    %4774 = vmatpush1.msra.mxu0 0.0
    %4775 = vmatprep.subr.mxu0 0.0
    %4776 = vmatpush1.msra.mxu0 0.0
    %4777 = vmatprep.subr.mxu0 0.0
    %4778 = vmatpush1.msra.mxu0 0.0
    %4779 = vmatprep.subr.mxu0 0.0
    %4780 = vmatpush1.msra.mxu0 0.0
    %4781 = vmatprep.subr.mxu0 0.0
    %4782 = vmatpush1.msra.mxu0 0.0
    %4783 = vmatprep.subr.mxu0 0.0
    %4784 = vmatpush1.msra.mxu0 0.0
    %4785 = vmatprep.subr.mxu0 0.0
    %4786 = vmatpush1.msra.mxu0 0.0
    %4787 = vmatprep.subr.mxu0 0.0
    %4788 = vmatpush1.msra.mxu0 0.0
    %4789 = vmatprep.subr.mxu0 0.0
    %4790 = vmatpush1.msra.mxu0 0.0
    %4791 = vmatprep.subr.mxu0 0.0
    %4792 = vmatpush1.msra.mxu0 0.0
    %4793 = vmatprep.subr.mxu0 0.0
    %4794 = vmatpush1.msra.mxu0 0.0
    %4795 = vmatprep.subr.mxu0 0.0
    %4796 = vmatpush1.msra.mxu0 0.0
    %4797 = vmatprep.subr.mxu0 0.0
    %4798 = vmatpush1.msra.mxu0 0.0
    %4799 = vmatprep.subr.mxu0 0.0
    %4800 = vmatpush1.msra.mxu0 0.0
    %4801 = vmatprep.subr.mxu0 0.0
    %4802 = vmatpush1.msra.mxu0 0.0
    %4803 = vmatprep.subr.mxu0 0.0
    %4804 = vmatpush1.msra.mxu0 0.0
    %4805 = vmatprep.subr.mxu0 0.0
    %4806 = vmatpush1.msra.mxu0 0.0
    %4807 = vmatprep.subr.mxu0 0.0
    %4808 = vmatpush1.msra.mxu0 0.0
    %4809 = vmatprep.subr.mxu0 0.0
    %4810 = vmatpush1.msra.mxu0 0.0
    %4811 = vmatprep.subr.mxu0 0.0
    %4812 = vmatpush1.msra.mxu0 0.0
    %4813 = vmatprep.subr.mxu0 0.0
    %4814 = vmatpush1.msra.mxu0 0.0
    %4815 = vmatprep.subr.mxu0 0.0
    %4816 = vmatpush1.msra.mxu0 0.0
    %4817 = vmatprep.mubr.f32.mxu0 0.0
    %4818 = vmatmul.mubr.f32.gmra.mrb[0].mxu0 %v4751
    %v4819 = vpop.f32.mrb[0].mxu0
    %v4820 = vadd.f32 0.0, %v4819
    %v4821 = vpop.f32.mrb[0].mxu0
    %4822 = vdwg.mxu0
    %4824 = vrot.lane.b32.xlu0 %v4738, 32
    %v4825 = vpop.permute.xlu0 %4824
    %v4826 = vsel %vm276, %v4825, 0
    %4828 = vmatprep.subr.mxu0 0.0
    %4829 = vmatpush1.msra.mxu0 %v4739
    %4830 = vmatprep.subr.mxu0 0.0
    %4831 = vmatpush1.msra.mxu0 %v4740
    %4832 = vmatprep.subr.mxu0 0.0
    %4833 = vmatpush1.msra.mxu0 %v4741
    %4834 = vmatprep.subr.mxu0 0.0
    %4835 = vmatpush1.msra.mxu0 %v4742
    %4836 = vmatprep.subr.mxu0 0.0
    %4837 = vmatpush1.msra.mxu0 0.0
    %4838 = vmatprep.subr.mxu0 0.0
    %4839 = vmatpush1.msra.mxu0 0.0
    %4840 = vmatprep.subr.mxu0 0.0
    %4841 = vmatpush1.msra.mxu0 0.0
    %4842 = vmatprep.subr.mxu0 0.0
    %4843 = vmatpush1.msra.mxu0 0.0
    %4844 = vmatprep.subr.mxu0 0.0
    %4845 = vmatpush1.msra.mxu0 0.0
    %4846 = vmatprep.subr.mxu0 0.0
    %4847 = vmatpush1.msra.mxu0 0.0
    %4848 = vmatprep.subr.mxu0 0.0
    %4849 = vmatpush1.msra.mxu0 0.0
    %4850 = vmatprep.subr.mxu0 0.0
    %4851 = vmatpush1.msra.mxu0 0.0
    %4852 = vmatprep.subr.mxu0 0.0
    %4853 = vmatpush1.msra.mxu0 0.0
    %4854 = vmatprep.subr.mxu0 0.0
    %4855 = vmatpush1.msra.mxu0 0.0
    %4856 = vmatprep.subr.mxu0 0.0
    %4857 = vmatpush1.msra.mxu0 0.0
    %4858 = vmatprep.subr.mxu0 0.0
    %4859 = vmatpush1.msra.mxu0 0.0
    %4860 = vmatprep.subr.mxu0 0.0
    %4861 = vmatpush1.msra.mxu0 0.0
    %4862 = vmatprep.subr.mxu0 0.0
    %4863 = vmatpush1.msra.mxu0 0.0
    %4864 = vmatprep.subr.mxu0 0.0
    %4865 = vmatpush1.msra.mxu0 0.0
    %4866 = vmatprep.subr.mxu0 0.0
    %4867 = vmatpush1.msra.mxu0 0.0
    %4868 = vmatprep.subr.mxu0 0.0
    %4869 = vmatpush1.msra.mxu0 0.0
    %4870 = vmatprep.subr.mxu0 0.0
    %4871 = vmatpush1.msra.mxu0 0.0
    %4872 = vmatprep.subr.mxu0 0.0
    %4873 = vmatpush1.msra.mxu0 0.0
    %4874 = vmatprep.subr.mxu0 0.0
    %4875 = vmatpush1.msra.mxu0 0.0
    %4876 = vmatprep.subr.mxu0 0.0
    %4877 = vmatpush1.msra.mxu0 0.0
    %4878 = vmatprep.subr.mxu0 0.0
    %4879 = vmatpush1.msra.mxu0 0.0
    %4880 = vmatprep.subr.mxu0 0.0
    %4881 = vmatpush1.msra.mxu0 0.0
    %4882 = vmatprep.subr.mxu0 0.0
    %4883 = vmatpush1.msra.mxu0 0.0
    %4884 = vmatprep.subr.mxu0 0.0
    %4885 = vmatpush1.msra.mxu0 0.0
    %4886 = vmatprep.subr.mxu0 0.0
    %4887 = vmatpush1.msra.mxu0 0.0
    %4888 = vmatprep.subr.mxu0 0.0
    %4889 = vmatpush1.msra.mxu0 0.0
    %4890 = vmatprep.subr.mxu0 0.0
    %4891 = vmatpush1.msra.mxu0 0.0
    %4892 = vmatprep.mubr.f32.mxu0 0.0
    %4893 = vmatmul.mubr.f32.gmra.mrb[0].mxu0 %v4826
    %v4894 = vpop.f32.mrb[0].mxu0
    %v4895 = vadd.f32 %v4820, %v4894
    %v4896 = vpop.f32.mrb[0].mxu0
    %4897 = vdwg.mxu0
    %v4898 = vadd.f32 %v4895, %v746
    %v4899 = vtanh.pop %v4898
    %v4900 = vmul.f32 %v4899, 0.5
    %v4901 = vadd.f32 %v4900, 0.5
    %v4902 = vsel %vm264, %v4899, %v4901
    %v4903 = vld [vmem:[#allocation3] sm:$0xff]
    %4905 = vrot.lane.b32.xlu0 %v4903, 96
    %v4906 = vpop.permute.xlu0 %4905
    %v4908 = vmul.f32 %v4902, %v4906
    %4910 = vrot.lane.b32.xlu0 %v4902, 64
    %v4911 = vpop.permute.xlu0 %4910
    %v4913 = vmul.f32 %v4902, %v4911
    %4915 = vrot.lane.b32.xlu0 %v4913, 32
    %v4916 = vpop.permute.xlu0 %4915
    %v4918 = vadd.f32 %v4908, %v4916
    %v4919 = vtanh.pop %v4918
    %4921 = vrot.lane.b32.xlu0 %v4919, 64
    %v4922 = vpop.permute.xlu0 %4921
    %v4924 = vmul.f32 %v4902, %v4922
    %4926 = vrot.lane.b32.xlu0 %v4918, 32
    %v4927 = vpop.permute.xlu0 %4926
    %4929 = vst.msk [vmem:[#allocation3] sm:$0xff] %vm779, %v4927
    %4931 = vrot.lane.b32.xlu0 %v4924, 96
    %v4932 = vpop.permute.xlu0 %4931
    %4934 = vst.msk [vmem:[#allocation2] sm:$0xff] %vm779, %v4932
    %v4935 = vld [vmem:[%s786] sm:$0xff]
    %v4936 = vld [vmem:[%s786 + $0x8] sm:$0xff]
    %v4937 = vld [vmem:[%s786 + $0x10] sm:$0xff]
    %v4938 = vld [vmem:[%s786 + $0x18] sm:$0xff]
    %v4939 = vld [vmem:[#allocation2] sm:$0xff]
    %v4940 = vld [vmem:[%s792] sm:$0xff]
    %v4941 = vld [vmem:[%s792 + $0x8] sm:$0xff]
    %v4942 = vld [vmem:[%s792 + $0x10] sm:$0xff]
    %v4943 = vld [vmem:[%s792 + $0x18] sm:$0xff]
    %4945 = vrot.lane.b32.xlu0 %v4939, 32
    %v4946 = vpop.permute.xlu0 %4945
    %v4947 = vsel %vm276, %v4946, 0
    %4949 = vmatprep.subr.mxu0 0.0
    %4950 = vmatpush1.msra.mxu0 %v4940
    %4951 = vmatprep.subr.mxu0 0.0
    %4952 = vmatpush1.msra.mxu0 %v4941
    %4953 = vmatprep.subr.mxu0 0.0
    %4954 = vmatpush1.msra.mxu0 %v4942
    %4955 = vmatprep.subr.mxu0 0.0
    %4956 = vmatpush1.msra.mxu0 %v4943
    %4957 = vmatprep.subr.mxu0 0.0
    %4958 = vmatpush1.msra.mxu0 0.0
    %4959 = vmatprep.subr.mxu0 0.0
    %4960 = vmatpush1.msra.mxu0 0.0
    %4961 = vmatprep.subr.mxu0 0.0
    %4962 = vmatpush1.msra.mxu0 0.0
    %4963 = vmatprep.subr.mxu0 0.0
    %4964 = vmatpush1.msra.mxu0 0.0
    %4965 = vmatprep.subr.mxu0 0.0
    %4966 = vmatpush1.msra.mxu0 0.0
    %4967 = vmatprep.subr.mxu0 0.0
    %4968 = vmatpush1.msra.mxu0 0.0
    %4969 = vmatprep.subr.mxu0 0.0
    %4970 = vmatpush1.msra.mxu0 0.0
    %4971 = vmatprep.subr.mxu0 0.0
    %4972 = vmatpush1.msra.mxu0 0.0
    %4973 = vmatprep.subr.mxu0 0.0
    %4974 = vmatpush1.msra.mxu0 0.0
    %4975 = vmatprep.subr.mxu0 0.0
    %4976 = vmatpush1.msra.mxu0 0.0
    %4977 = vmatprep.subr.mxu0 0.0
    %4978 = vmatpush1.msra.mxu0 0.0
    %4979 = vmatprep.subr.mxu0 0.0
    %4980 = vmatpush1.msra.mxu0 0.0
    %4981 = vmatprep.subr.mxu0 0.0
    %4982 = vmatpush1.msra.mxu0 0.0
    %4983 = vmatprep.subr.mxu0 0.0
    %4984 = vmatpush1.msra.mxu0 0.0
    %4985 = vmatprep.subr.mxu0 0.0
    %4986 = vmatpush1.msra.mxu0 0.0
    %4987 = vmatprep.subr.mxu0 0.0
    %4988 = vmatpush1.msra.mxu0 0.0
    %4989 = vmatprep.subr.mxu0 0.0
    %4990 = vmatpush1.msra.mxu0 0.0
    %4991 = vmatprep.subr.mxu0 0.0
    %4992 = vmatpush1.msra.mxu0 0.0
    %4993 = vmatprep.subr.mxu0 0.0
    %4994 = vmatpush1.msra.mxu0 0.0
    %4995 = vmatprep.subr.mxu0 0.0
    %4996 = vmatpush1.msra.mxu0 0.0
    %4997 = vmatprep.subr.mxu0 0.0
    %4998 = vmatpush1.msra.mxu0 0.0
    %4999 = vmatprep.subr.mxu0 0.0
    %5000 = vmatpush1.msra.mxu0 0.0
    %5001 = vmatprep.subr.mxu0 0.0
    %5002 = vmatpush1.msra.mxu0 0.0
    %5003 = vmatprep.subr.mxu0 0.0
    %5004 = vmatpush1.msra.mxu0 0.0
    %5005 = vmatprep.subr.mxu0 0.0
    %5006 = vmatpush1.msra.mxu0 0.0
    %5007 = vmatprep.subr.mxu0 0.0
    %5008 = vmatpush1.msra.mxu0 0.0
    %5009 = vmatprep.subr.mxu0 0.0
    %5010 = vmatpush1.msra.mxu0 0.0
    %5011 = vmatprep.subr.mxu0 0.0
    %5012 = vmatpush1.msra.mxu0 0.0
    %5013 = vmatprep.mubr.f32.mxu0 0.0
    %5014 = vmatmul.mubr.f32.gmra.mrb[0].mxu0 %v4947
    %v5015 = vpop.f32.mrb[0].mxu0
    %v5016 = vadd.f32 0.0, %v5015
    %v5017 = vpop.f32.mrb[0].mxu0
    %5018 = vdwg.mxu0
    %5019 = vrot.lane.b32.xlu0 %v4924, 32
    %v5020 = vpop.permute.xlu0 %5019
    %v5021 = vsel %vm276, %v5020, 0
    %5023 = vmatprep.subr.mxu0 0.0
    %5024 = vmatpush1.msra.mxu0 %v4935
    %5025 = vmatprep.subr.mxu0 0.0
    %5026 = vmatpush1.msra.mxu0 %v4936
    %5027 = vmatprep.subr.mxu0 0.0
    %5028 = vmatpush1.msra.mxu0 %v4937
    %5029 = vmatprep.subr.mxu0 0.0
    %5030 = vmatpush1.msra.mxu0 %v4938
    %5031 = vmatprep.subr.mxu0 0.0
    %5032 = vmatpush1.msra.mxu0 0.0
    %5033 = vmatprep.subr.mxu0 0.0
    %5034 = vmatpush1.msra.mxu0 0.0
    %5035 = vmatprep.subr.mxu0 0.0
    %5036 = vmatpush1.msra.mxu0 0.0
    %5037 = vmatprep.subr.mxu0 0.0
    %5038 = vmatpush1.msra.mxu0 0.0
    %5039 = vmatprep.subr.mxu0 0.0
    %5040 = vmatpush1.msra.mxu0 0.0
    %5041 = vmatprep.subr.mxu0 0.0
    %5042 = vmatpush1.msra.mxu0 0.0
    %5043 = vmatprep.subr.mxu0 0.0
    %5044 = vmatpush1.msra.mxu0 0.0
    %5045 = vmatprep.subr.mxu0 0.0
    %5046 = vmatpush1.msra.mxu0 0.0
    %5047 = vmatprep.subr.mxu0 0.0
    %5048 = vmatpush1.msra.mxu0 0.0
    %5049 = vmatprep.subr.mxu0 0.0
    %5050 = vmatpush1.msra.mxu0 0.0
    %5051 = vmatprep.subr.mxu0 0.0
    %5052 = vmatpush1.msra.mxu0 0.0
    %5053 = vmatprep.subr.mxu0 0.0
    %5054 = vmatpush1.msra.mxu0 0.0
    %5055 = vmatprep.subr.mxu0 0.0
    %5056 = vmatpush1.msra.mxu0 0.0
    %5057 = vmatprep.subr.mxu0 0.0
    %5058 = vmatpush1.msra.mxu0 0.0
    %5059 = vmatprep.subr.mxu0 0.0
    %5060 = vmatpush1.msra.mxu0 0.0
    %5061 = vmatprep.subr.mxu0 0.0
    %5062 = vmatpush1.msra.mxu0 0.0
    %5063 = vmatprep.subr.mxu0 0.0
    %5064 = vmatpush1.msra.mxu0 0.0
    %5065 = vmatprep.subr.mxu0 0.0
    %5066 = vmatpush1.msra.mxu0 0.0
    %5067 = vmatprep.subr.mxu0 0.0
    %5068 = vmatpush1.msra.mxu0 0.0
    %5069 = vmatprep.subr.mxu0 0.0
    %5070 = vmatpush1.msra.mxu0 0.0
    %5071 = vmatprep.subr.mxu0 0.0
    %5072 = vmatpush1.msra.mxu0 0.0
    %5073 = vmatprep.subr.mxu0 0.0
    %5074 = vmatpush1.msra.mxu0 0.0
    %5075 = vmatprep.subr.mxu0 0.0
    %5076 = vmatpush1.msra.mxu0 0.0
    %5077 = vmatprep.subr.mxu0 0.0
    %5078 = vmatpush1.msra.mxu0 0.0
    %5079 = vmatprep.subr.mxu0 0.0
    %5080 = vmatpush1.msra.mxu0 0.0
    %5081 = vmatprep.subr.mxu0 0.0
    %5082 = vmatpush1.msra.mxu0 0.0
    %5083 = vmatprep.subr.mxu0 0.0
    %5084 = vmatpush1.msra.mxu0 0.0
    %5085 = vmatprep.subr.mxu0 0.0
    %5086 = vmatpush1.msra.mxu0 0.0
    %5087 = vmatprep.mubr.f32.mxu0 0.0
    %5088 = vmatmul.mubr.f32.gmra.mrb[0].mxu0 %v5021
    %v5089 = vpop.f32.mrb[0].mxu0
    %v5090 = vadd.f32 %v5016, %v5089
    %v5091 = vpop.f32.mrb[0].mxu0
    %5092 = vdwg.mxu0
    %v5093 = vadd.f32 %v5090, %v950
    %v5094 = vtanh.pop %v5093
    %v5095 = vmul.f32 %v5094, 0.5
    %v5096 = vadd.f32 %v5095, 0.5
    %v5097 = vsel %vm264, %v5094, %v5096
    %v5098 = vld [vmem:[#allocation3] sm:$0xff]
    %5100 = vrot.lane.b32.xlu0 %v5098, 64
    %v5101 = vpop.permute.xlu0 %5100
    %v5103 = vmul.f32 %v5097, %v5101
    %5105 = vrot.lane.b32.xlu0 %v5097, 64
    %v5106 = vpop.permute.xlu0 %5105
    %v5108 = vmul.f32 %v5097, %v5106
    %5110 = vrot.lane.b32.xlu0 %v5108, 32
    %v5111 = vpop.permute.xlu0 %5110
    %v5113 = vadd.f32 %v5103, %v5111
    %v5114 = vtanh.pop %v5113
    %5116 = vrot.lane.b32.xlu0 %v5114, 64
    %v5117 = vpop.permute.xlu0 %5116
    %v5119 = vmul.f32 %v5097, %v5117
    %5121 = vrot.lane.b32.xlu0 %v5113, 64
    %v5122 = vpop.permute.xlu0 %5121
    %5124 = vst.msk [vmem:[#allocation3] sm:$0xff] %vm983, %v5122
    %5125 = vst.msk [vmem:[#allocation2] sm:$0xff] %vm983, %v5119
    %s5126 = scalar_lea.vmem [#allocation4], 56
    %v5127 = vld [vmem:[%s5126] sm:$0xff]
    %v5128 = vld [vmem:[#allocation2] sm:$0xff]
    %v5129 = vld [vmem:[#allocation11] sm:$0xff]
    %v5130 = vld [vmem:[#allocation11 + $0x8] sm:$0xff]
    %v5131 = vld [vmem:[#allocation11 + $0x10] sm:$0xff]
    %v5132 = vld [vmem:[#allocation11 + $0x18] sm:$0xff]
    %v5134 = vsel %vm276, %v5128, 0
    %5136 = vmatprep.subr.mxu0 0.0
    %5137 = vmatpush1.msra.mxu0 %v5129
    %5138 = vmatprep.subr.mxu0 0.0
    %5139 = vmatpush1.msra.mxu0 %v5130
    %5140 = vmatprep.subr.mxu0 0.0
    %5141 = vmatpush1.msra.mxu0 %v5131
    %5142 = vmatprep.subr.mxu0 0.0
    %5143 = vmatpush1.msra.mxu0 %v5132
    %5144 = vmatprep.subr.mxu0 0.0
    %5145 = vmatpush1.msra.mxu0 0.0
    %5146 = vmatprep.subr.mxu0 0.0
    %5147 = vmatpush1.msra.mxu0 0.0
    %5148 = vmatprep.subr.mxu0 0.0
    %5149 = vmatpush1.msra.mxu0 0.0
    %5150 = vmatprep.subr.mxu0 0.0
    %5151 = vmatpush1.msra.mxu0 0.0
    %5152 = vmatprep.subr.mxu0 0.0
    %5153 = vmatpush1.msra.mxu0 0.0
    %5154 = vmatprep.subr.mxu0 0.0
    %5155 = vmatpush1.msra.mxu0 0.0
    %5156 = vmatprep.subr.mxu0 0.0
    %5157 = vmatpush1.msra.mxu0 0.0
    %5158 = vmatprep.subr.mxu0 0.0
    %5159 = vmatpush1.msra.mxu0 0.0
    %5160 = vmatprep.subr.mxu0 0.0
    %5161 = vmatpush1.msra.mxu0 0.0
    %5162 = vmatprep.subr.mxu0 0.0
    %5163 = vmatpush1.msra.mxu0 0.0
    %5164 = vmatprep.subr.mxu0 0.0
    %5165 = vmatpush1.msra.mxu0 0.0
    %5166 = vmatprep.subr.mxu0 0.0
    %5167 = vmatpush1.msra.mxu0 0.0
    %5168 = vmatprep.subr.mxu0 0.0
    %5169 = vmatpush1.msra.mxu0 0.0
    %5170 = vmatprep.subr.mxu0 0.0
    %5171 = vmatpush1.msra.mxu0 0.0
    %5172 = vmatprep.subr.mxu0 0.0
    %5173 = vmatpush1.msra.mxu0 0.0
    %5174 = vmatprep.subr.mxu0 0.0
    %5175 = vmatpush1.msra.mxu0 0.0
    %5176 = vmatprep.subr.mxu0 0.0
    %5177 = vmatpush1.msra.mxu0 0.0
    %5178 = vmatprep.subr.mxu0 0.0
    %5179 = vmatpush1.msra.mxu0 0.0
    %5180 = vmatprep.subr.mxu0 0.0
    %5181 = vmatpush1.msra.mxu0 0.0
    %5182 = vmatprep.subr.mxu0 0.0
    %5183 = vmatpush1.msra.mxu0 0.0
    %5184 = vmatprep.subr.mxu0 0.0
    %5185 = vmatpush1.msra.mxu0 0.0
    %5186 = vmatprep.subr.mxu0 0.0
    %5187 = vmatpush1.msra.mxu0 0.0
    %5188 = vmatprep.subr.mxu0 0.0
    %5189 = vmatpush1.msra.mxu0 0.0
    %5190 = vmatprep.subr.mxu0 0.0
    %5191 = vmatpush1.msra.mxu0 0.0
    %5192 = vmatprep.subr.mxu0 0.0
    %5193 = vmatpush1.msra.mxu0 0.0
    %5194 = vmatprep.subr.mxu0 0.0
    %5195 = vmatpush1.msra.mxu0 0.0
    %5196 = vmatprep.subr.mxu0 0.0
    %5197 = vmatpush1.msra.mxu0 0.0
    %5198 = vmatprep.subr.mxu0 0.0
    %5199 = vmatpush1.msra.mxu0 0.0
    %5200 = vmatprep.mubr.f32.mxu0 0.0
    %5201 = vmatmul.mubr.f32.gmra.mrb[0].mxu0 %v5134
    %v5202 = vpop.f32.mrb[0].mxu0
    %v5203 = vadd.f32 0.0, %v5202
    %v5204 = vpop.f32.mrb[0].mxu0
    %5205 = vdwg.mxu0
    %v5206 = vadd.f32 %v5127, %v5203
    %v5207 = vtanh.pop %v5206
    %v5208 = vmul.f32 %v5207, 0.5
    %v5209 = vadd.f32 %v5208, 0.5
    %v5210 = vsel %vm264, %v5207, %v5209
    %v5211 = vld [vmem:[#allocation3] sm:$0xff]
    %5213 = vrot.lane.b32.xlu0 %v5211, 32
    %v5214 = vpop.permute.xlu0 %5213
    %v5216 = vmul.f32 %v5210, %v5214
    %5218 = vrot.lane.b32.xlu0 %v5210, 64
    %v5219 = vpop.permute.xlu0 %5218
    %v5221 = vmul.f32 %v5210, %v5219
    %5223 = vrot.lane.b32.xlu0 %v5221, 32
    %v5224 = vpop.permute.xlu0 %5223
    %v5226 = vadd.f32 %v5216, %v5224
    %v5227 = vtanh.pop %v5226
    %5229 = vrot.lane.b32.xlu0 %v5227, 64
    %v5230 = vpop.permute.xlu0 %5229
    %v5232 = vmul.f32 %v5210, %v5230
    %5234 = vrot.lane.b32.xlu0 %v5226, 96
    %v5235 = vpop.permute.xlu0 %5234
    %5237 = vst.msk [vmem:[#allocation3] sm:$0xff] %vm276, %v5235
    %5239 = vrot.lane.b32.xlu0 %v5232, 32
    %v5240 = vpop.permute.xlu0 %5239
    %5242 = vst.msk [vmem:[#allocation2] sm:$0xff] %vm276, %v5240
    %v5243 = vld [vmem:[#allocation10] sm:$0xff]
    %v5244 = vld [vmem:[#allocation10 + $0x8] sm:$0xff]
    %v5245 = vld [vmem:[#allocation10 + $0x10] sm:$0xff]
    %v5246 = vld [vmem:[#allocation10 + $0x18] sm:$0xff]
    %v5247 = vld [vmem:[#allocation2] sm:$0xff]
    %v5248 = vld [vmem:[%s392] sm:$0xff]
    %v5249 = vld [vmem:[%s392 + $0x8] sm:$0xff]
    %v5250 = vld [vmem:[%s392 + $0x10] sm:$0xff]
    %v5251 = vld [vmem:[%s392 + $0x18] sm:$0xff]
    %5253 = vrot.lane.b32.xlu0 %v5247, 96
    %v5254 = vpop.permute.xlu0 %5253
    %v5255 = vsel %vm276, %v5254, 0
    %5257 = vmatprep.subr.mxu0 0.0
    %5258 = vmatpush1.msra.mxu0 %v5248
    %5259 = vmatprep.subr.mxu0 0.0
    %5260 = vmatpush1.msra.mxu0 %v5249
    %5261 = vmatprep.subr.mxu0 0.0
    %5262 = vmatpush1.msra.mxu0 %v5250
    %5263 = vmatprep.subr.mxu0 0.0
    %5264 = vmatpush1.msra.mxu0 %v5251
    %5265 = vmatprep.subr.mxu0 0.0
    %5266 = vmatpush1.msra.mxu0 0.0
    %5267 = vmatprep.subr.mxu0 0.0
    %5268 = vmatpush1.msra.mxu0 0.0
    %5269 = vmatprep.subr.mxu0 0.0
    %5270 = vmatpush1.msra.mxu0 0.0
    %5271 = vmatprep.subr.mxu0 0.0
    %5272 = vmatpush1.msra.mxu0 0.0
    %5273 = vmatprep.subr.mxu0 0.0
    %5274 = vmatpush1.msra.mxu0 0.0
    %5275 = vmatprep.subr.mxu0 0.0
    %5276 = vmatpush1.msra.mxu0 0.0
    %5277 = vmatprep.subr.mxu0 0.0
    %5278 = vmatpush1.msra.mxu0 0.0
    %5279 = vmatprep.subr.mxu0 0.0
    %5280 = vmatpush1.msra.mxu0 0.0
    %5281 = vmatprep.subr.mxu0 0.0
    %5282 = vmatpush1.msra.mxu0 0.0
    %5283 = vmatprep.subr.mxu0 0.0
    %5284 = vmatpush1.msra.mxu0 0.0
    %5285 = vmatprep.subr.mxu0 0.0
    %5286 = vmatpush1.msra.mxu0 0.0
    %5287 = vmatprep.subr.mxu0 0.0
    %5288 = vmatpush1.msra.mxu0 0.0
    %5289 = vmatprep.subr.mxu0 0.0
    %5290 = vmatpush1.msra.mxu0 0.0
    %5291 = vmatprep.subr.mxu0 0.0
    %5292 = vmatpush1.msra.mxu0 0.0
    %5293 = vmatprep.subr.mxu0 0.0
    %5294 = vmatpush1.msra.mxu0 0.0
    %5295 = vmatprep.subr.mxu0 0.0
    %5296 = vmatpush1.msra.mxu0 0.0
    %5297 = vmatprep.subr.mxu0 0.0
    %5298 = vmatpush1.msra.mxu0 0.0
    %5299 = vmatprep.subr.mxu0 0.0
    %5300 = vmatpush1.msra.mxu0 0.0
    %5301 = vmatprep.subr.mxu0 0.0
    %5302 = vmatpush1.msra.mxu0 0.0
    %5303 = vmatprep.subr.mxu0 0.0
    %5304 = vmatpush1.msra.mxu0 0.0
    %5305 = vmatprep.subr.mxu0 0.0
    %5306 = vmatpush1.msra.mxu0 0.0
    %5307 = vmatprep.subr.mxu0 0.0
    %5308 = vmatpush1.msra.mxu0 0.0
    %5309 = vmatprep.subr.mxu0 0.0
    %5310 = vmatpush1.msra.mxu0 0.0
    %5311 = vmatprep.subr.mxu0 0.0
    %5312 = vmatpush1.msra.mxu0 0.0
    %5313 = vmatprep.subr.mxu0 0.0
    %5314 = vmatpush1.msra.mxu0 0.0
    %5315 = vmatprep.subr.mxu0 0.0
    %5316 = vmatpush1.msra.mxu0 0.0
    %5317 = vmatprep.subr.mxu0 0.0
    %5318 = vmatpush1.msra.mxu0 0.0
    %5319 = vmatprep.subr.mxu0 0.0
    %5320 = vmatpush1.msra.mxu0 0.0
    %5321 = vmatprep.mubr.f32.mxu0 0.0
    %5322 = vmatmul.mubr.f32.gmra.mrb[0].mxu0 %v5255
    %v5323 = vpop.f32.mrb[0].mxu0
    %v5324 = vadd.f32 0.0, %v5323
    %v5325 = vpop.f32.mrb[0].mxu0
    %5326 = vdwg.mxu0
    %v5327 = vsel %vm276, %v5240, 0
    %5329 = vmatprep.subr.mxu0 0.0
    %5330 = vmatpush1.msra.mxu0 %v5243
    %5331 = vmatprep.subr.mxu0 0.0
    %5332 = vmatpush1.msra.mxu0 %v5244
    %5333 = vmatprep.subr.mxu0 0.0
    %5334 = vmatpush1.msra.mxu0 %v5245
    %5335 = vmatprep.subr.mxu0 0.0
    %5336 = vmatpush1.msra.mxu0 %v5246
    %5337 = vmatprep.subr.mxu0 0.0
    %5338 = vmatpush1.msra.mxu0 0.0
    %5339 = vmatprep.subr.mxu0 0.0
    %5340 = vmatpush1.msra.mxu0 0.0
    %5341 = vmatprep.subr.mxu0 0.0
    %5342 = vmatpush1.msra.mxu0 0.0
    %5343 = vmatprep.subr.mxu0 0.0
    %5344 = vmatpush1.msra.mxu0 0.0
    %5345 = vmatprep.subr.mxu0 0.0
    %5346 = vmatpush1.msra.mxu0 0.0
    %5347 = vmatprep.subr.mxu0 0.0
    %5348 = vmatpush1.msra.mxu0 0.0
    %5349 = vmatprep.subr.mxu0 0.0
    %5350 = vmatpush1.msra.mxu0 0.0
    %5351 = vmatprep.subr.mxu0 0.0
    %5352 = vmatpush1.msra.mxu0 0.0
    %5353 = vmatprep.subr.mxu0 0.0
    %5354 = vmatpush1.msra.mxu0 0.0
    %5355 = vmatprep.subr.mxu0 0.0
    %5356 = vmatpush1.msra.mxu0 0.0
    %5357 = vmatprep.subr.mxu0 0.0
    %5358 = vmatpush1.msra.mxu0 0.0
    %5359 = vmatprep.subr.mxu0 0.0
    %5360 = vmatpush1.msra.mxu0 0.0
    %5361 = vmatprep.subr.mxu0 0.0
    %5362 = vmatpush1.msra.mxu0 0.0
    %5363 = vmatprep.subr.mxu0 0.0
    %5364 = vmatpush1.msra.mxu0 0.0
    %5365 = vmatprep.subr.mxu0 0.0
    %5366 = vmatpush1.msra.mxu0 0.0
    %5367 = vmatprep.subr.mxu0 0.0
    %5368 = vmatpush1.msra.mxu0 0.0
    %5369 = vmatprep.subr.mxu0 0.0
    %5370 = vmatpush1.msra.mxu0 0.0
    %5371 = vmatprep.subr.mxu0 0.0
    %5372 = vmatpush1.msra.mxu0 0.0
    %5373 = vmatprep.subr.mxu0 0.0
    %5374 = vmatpush1.msra.mxu0 0.0
    %5375 = vmatprep.subr.mxu0 0.0
    %5376 = vmatpush1.msra.mxu0 0.0
    %5377 = vmatprep.subr.mxu0 0.0
    %5378 = vmatpush1.msra.mxu0 0.0
    %5379 = vmatprep.subr.mxu0 0.0
    %5380 = vmatpush1.msra.mxu0 0.0
    %5381 = vmatprep.subr.mxu0 0.0
    %5382 = vmatpush1.msra.mxu0 0.0
    %5383 = vmatprep.subr.mxu0 0.0
    %5384 = vmatpush1.msra.mxu0 0.0
    %5385 = vmatprep.subr.mxu0 0.0
    %5386 = vmatpush1.msra.mxu0 0.0
    %5387 = vmatprep.subr.mxu0 0.0
    %5388 = vmatpush1.msra.mxu0 0.0
    %5389 = vmatprep.subr.mxu0 0.0
    %5390 = vmatpush1.msra.mxu0 0.0
    %5391 = vmatprep.subr.mxu0 0.0
    %5392 = vmatpush1.msra.mxu0 0.0
    %5393 = vmatprep.mubr.f32.mxu0 0.0
    %5394 = vmatmul.mubr.f32.gmra.mrb[0].mxu0 %v5327
    %v5395 = vpop.f32.mrb[0].mxu0
    %v5396 = vadd.f32 %v5324, %v5395
    %v5397 = vpop.f32.mrb[0].mxu0
    %5398 = vdwg.mxu0
    %v5399 = vadd.f32 %v5396, %v548
    %v5400 = vtanh.pop %v5399
    %v5401 = vmul.f32 %v5400, 0.5
    %v5402 = vadd.f32 %v5401, 0.5
    %v5403 = vsel %vm264, %v5400, %v5402
    %v5404 = vld [vmem:[#allocation3] sm:$0xff]
    %v5405 = vmul.f32 %v5403, %v5404
    %5407 = vrot.lane.b32.xlu0 %v5403, 64
    %v5408 = vpop.permute.xlu0 %5407
    %v5410 = vmul.f32 %v5403, %v5408
    %5412 = vrot.lane.b32.xlu0 %v5410, 32
    %v5413 = vpop.permute.xlu0 %5412
    %v5415 = vadd.f32 %v5405, %v5413
    %v5416 = vtanh.pop %v5415
    %5418 = vrot.lane.b32.xlu0 %v5416, 64
    %v5419 = vpop.permute.xlu0 %5418
    %v5421 = vmul.f32 %v5403, %v5419
    %5422 = vst.msk [vmem:[#allocation3] sm:$0xff] %vm573, %v5415
    %5424 = vrot.lane.b32.xlu0 %v5421, 64
    %v5425 = vpop.permute.xlu0 %5424
    %5427 = vst.msk [vmem:[#allocation2] sm:$0xff] %vm573, %v5425
    %v5428 = vmax.f32 %v5421, 0.0
    %v5429 = vld [vmem:[%s581] sm:$0xff]
    %v5430 = vld [vmem:[%s581 + $0x8] sm:$0xff]
    %v5431 = vld [vmem:[%s581 + $0x10] sm:$0xff]
    %v5432 = vld [vmem:[%s581 + $0x18] sm:$0xff]
    %v5433 = vld [vmem:[#allocation2] sm:$0xff]
    %v5434 = vld [vmem:[%s587] sm:$0xff]
    %v5435 = vld [vmem:[%s587 + $0x8] sm:$0xff]
    %v5436 = vld [vmem:[%s587 + $0x10] sm:$0xff]
    %v5437 = vld [vmem:[%s587 + $0x18] sm:$0xff]
    %5439 = vrot.lane.b32.xlu0 %v5433, 64
    %v5440 = vpop.permute.xlu0 %5439
    %v5441 = vsel %vm276, %v5440, 0
    %5443 = vmatprep.subr.mxu0 0.0
    %5444 = vmatpush1.msra.mxu0 %v5434
    %5445 = vmatprep.subr.mxu0 0.0
    %5446 = vmatpush1.msra.mxu0 %v5435
    %5447 = vmatprep.subr.mxu0 0.0
    %5448 = vmatpush1.msra.mxu0 %v5436
    %5449 = vmatprep.subr.mxu0 0.0
    %5450 = vmatpush1.msra.mxu0 %v5437
    %5451 = vmatprep.subr.mxu0 0.0
    %5452 = vmatpush1.msra.mxu0 0.0
    %5453 = vmatprep.subr.mxu0 0.0
    %5454 = vmatpush1.msra.mxu0 0.0
    %5455 = vmatprep.subr.mxu0 0.0
    %5456 = vmatpush1.msra.mxu0 0.0
    %5457 = vmatprep.subr.mxu0 0.0
    %5458 = vmatpush1.msra.mxu0 0.0
    %5459 = vmatprep.subr.mxu0 0.0
    %5460 = vmatpush1.msra.mxu0 0.0
    %5461 = vmatprep.subr.mxu0 0.0
    %5462 = vmatpush1.msra.mxu0 0.0
    %5463 = vmatprep.subr.mxu0 0.0
    %5464 = vmatpush1.msra.mxu0 0.0
    %5465 = vmatprep.subr.mxu0 0.0
    %5466 = vmatpush1.msra.mxu0 0.0
    %5467 = vmatprep.subr.mxu0 0.0
    %5468 = vmatpush1.msra.mxu0 0.0
    %5469 = vmatprep.subr.mxu0 0.0
    %5470 = vmatpush1.msra.mxu0 0.0
    %5471 = vmatprep.subr.mxu0 0.0
    %5472 = vmatpush1.msra.mxu0 0.0
    %5473 = vmatprep.subr.mxu0 0.0
    %5474 = vmatpush1.msra.mxu0 0.0
    %5475 = vmatprep.subr.mxu0 0.0
    %5476 = vmatpush1.msra.mxu0 0.0
    %5477 = vmatprep.subr.mxu0 0.0
    %5478 = vmatpush1.msra.mxu0 0.0
    %5479 = vmatprep.subr.mxu0 0.0
    %5480 = vmatpush1.msra.mxu0 0.0
    %5481 = vmatprep.subr.mxu0 0.0
    %5482 = vmatpush1.msra.mxu0 0.0
    %5483 = vmatprep.subr.mxu0 0.0
    %5484 = vmatpush1.msra.mxu0 0.0
    %5485 = vmatprep.subr.mxu0 0.0
    %5486 = vmatpush1.msra.mxu0 0.0
    %5487 = vmatprep.subr.mxu0 0.0
    %5488 = vmatpush1.msra.mxu0 0.0
    %5489 = vmatprep.subr.mxu0 0.0
    %5490 = vmatpush1.msra.mxu0 0.0
    %5491 = vmatprep.subr.mxu0 0.0
    %5492 = vmatpush1.msra.mxu0 0.0
    %5493 = vmatprep.subr.mxu0 0.0
    %5494 = vmatpush1.msra.mxu0 0.0
    %5495 = vmatprep.subr.mxu0 0.0
    %5496 = vmatpush1.msra.mxu0 0.0
    %5497 = vmatprep.subr.mxu0 0.0
    %5498 = vmatpush1.msra.mxu0 0.0
    %5499 = vmatprep.subr.mxu0 0.0
    %5500 = vmatpush1.msra.mxu0 0.0
    %5501 = vmatprep.subr.mxu0 0.0
    %5502 = vmatpush1.msra.mxu0 0.0
    %5503 = vmatprep.subr.mxu0 0.0
    %5504 = vmatpush1.msra.mxu0 0.0
    %5505 = vmatprep.subr.mxu0 0.0
    %5506 = vmatpush1.msra.mxu0 0.0
    %5507 = vmatprep.mubr.f32.mxu0 0.0
    %5508 = vmatmul.mubr.f32.gmra.mrb[0].mxu0 %v5441
    %v5509 = vpop.f32.mrb[0].mxu0
    %v5510 = vadd.f32 0.0, %v5509
    %v5511 = vpop.f32.mrb[0].mxu0
    %5512 = vdwg.mxu0
    %5514 = vrot.lane.b32.xlu0 %v5428, 32
    %v5515 = vpop.permute.xlu0 %5514
    %v5516 = vsel %vm276, %v5515, 0
    %5518 = vmatprep.subr.mxu0 0.0
    %5519 = vmatpush1.msra.mxu0 %v5429
    %5520 = vmatprep.subr.mxu0 0.0
    %5521 = vmatpush1.msra.mxu0 %v5430
    %5522 = vmatprep.subr.mxu0 0.0
    %5523 = vmatpush1.msra.mxu0 %v5431
    %5524 = vmatprep.subr.mxu0 0.0
    %5525 = vmatpush1.msra.mxu0 %v5432
    %5526 = vmatprep.subr.mxu0 0.0
    %5527 = vmatpush1.msra.mxu0 0.0
    %5528 = vmatprep.subr.mxu0 0.0
    %5529 = vmatpush1.msra.mxu0 0.0
    %5530 = vmatprep.subr.mxu0 0.0
    %5531 = vmatpush1.msra.mxu0 0.0
    %5532 = vmatprep.subr.mxu0 0.0
    %5533 = vmatpush1.msra.mxu0 0.0
    %5534 = vmatprep.subr.mxu0 0.0
    %5535 = vmatpush1.msra.mxu0 0.0
    %5536 = vmatprep.subr.mxu0 0.0
    %5537 = vmatpush1.msra.mxu0 0.0
    %5538 = vmatprep.subr.mxu0 0.0
    %5539 = vmatpush1.msra.mxu0 0.0
    %5540 = vmatprep.subr.mxu0 0.0
    %5541 = vmatpush1.msra.mxu0 0.0
    %5542 = vmatprep.subr.mxu0 0.0
    %5543 = vmatpush1.msra.mxu0 0.0
    %5544 = vmatprep.subr.mxu0 0.0
    %5545 = vmatpush1.msra.mxu0 0.0
    %5546 = vmatprep.subr.mxu0 0.0
    %5547 = vmatpush1.msra.mxu0 0.0
    %5548 = vmatprep.subr.mxu0 0.0
    %5549 = vmatpush1.msra.mxu0 0.0
    %5550 = vmatprep.subr.mxu0 0.0
    %5551 = vmatpush1.msra.mxu0 0.0
    %5552 = vmatprep.subr.mxu0 0.0
    %5553 = vmatpush1.msra.mxu0 0.0
    %5554 = vmatprep.subr.mxu0 0.0
    %5555 = vmatpush1.msra.mxu0 0.0
    %5556 = vmatprep.subr.mxu0 0.0
    %5557 = vmatpush1.msra.mxu0 0.0
    %5558 = vmatprep.subr.mxu0 0.0
    %5559 = vmatpush1.msra.mxu0 0.0
    %5560 = vmatprep.subr.mxu0 0.0
    %5561 = vmatpush1.msra.mxu0 0.0
    %5562 = vmatprep.subr.mxu0 0.0
    %5563 = vmatpush1.msra.mxu0 0.0
    %5564 = vmatprep.subr.mxu0 0.0
    %5565 = vmatpush1.msra.mxu0 0.0
    %5566 = vmatprep.subr.mxu0 0.0
    %5567 = vmatpush1.msra.mxu0 0.0
    %5568 = vmatprep.subr.mxu0 0.0
    %5569 = vmatpush1.msra.mxu0 0.0
    %5570 = vmatprep.subr.mxu0 0.0
    %5571 = vmatpush1.msra.mxu0 0.0
    %5572 = vmatprep.subr.mxu0 0.0
    %5573 = vmatpush1.msra.mxu0 0.0
    %5574 = vmatprep.subr.mxu0 0.0
    %5575 = vmatpush1.msra.mxu0 0.0
    %5576 = vmatprep.subr.mxu0 0.0
    %5577 = vmatpush1.msra.mxu0 0.0
    %5578 = vmatprep.subr.mxu0 0.0
    %5579 = vmatpush1.msra.mxu0 0.0
    %5580 = vmatprep.subr.mxu0 0.0
    %5581 = vmatpush1.msra.mxu0 0.0
    %5582 = vmatprep.mubr.f32.mxu0 0.0
    %5583 = vmatmul.mubr.f32.gmra.mrb[0].mxu0 %v5516
    %v5584 = vpop.f32.mrb[0].mxu0
    %v5585 = vadd.f32 %v5510, %v5584
    %v5586 = vpop.f32.mrb[0].mxu0
    %5587 = vdwg.mxu0
    %v5588 = vadd.f32 %v5585, %v746
    %v5589 = vtanh.pop %v5588
    %v5590 = vmul.f32 %v5589, 0.5
    %v5591 = vadd.f32 %v5590, 0.5
    %v5592 = vsel %vm264, %v5589, %v5591
    %v5593 = vld [vmem:[#allocation3] sm:$0xff]
    %5595 = vrot.lane.b32.xlu0 %v5593, 96
    %v5596 = vpop.permute.xlu0 %5595
    %v5598 = vmul.f32 %v5592, %v5596
    %5600 = vrot.lane.b32.xlu0 %v5592, 64
    %v5601 = vpop.permute.xlu0 %5600
    %v5603 = vmul.f32 %v5592, %v5601
    %5605 = vrot.lane.b32.xlu0 %v5603, 32
    %v5606 = vpop.permute.xlu0 %5605
    %v5608 = vadd.f32 %v5598, %v5606
    %v5609 = vtanh.pop %v5608
    %5611 = vrot.lane.b32.xlu0 %v5609, 64
    %v5612 = vpop.permute.xlu0 %5611
    %v5614 = vmul.f32 %v5592, %v5612
    %5616 = vrot.lane.b32.xlu0 %v5608, 32
    %v5617 = vpop.permute.xlu0 %5616
    %5619 = vst.msk [vmem:[#allocation3] sm:$0xff] %vm779, %v5617
    %5621 = vrot.lane.b32.xlu0 %v5614, 96
    %v5622 = vpop.permute.xlu0 %5621
    %5624 = vst.msk [vmem:[#allocation2] sm:$0xff] %vm779, %v5622
    %v5625 = vld [vmem:[%s786] sm:$0xff]
    %v5626 = vld [vmem:[%s786 + $0x8] sm:$0xff]
    %v5627 = vld [vmem:[%s786 + $0x10] sm:$0xff]
    %v5628 = vld [vmem:[%s786 + $0x18] sm:$0xff]
    %v5629 = vld [vmem:[#allocation2] sm:$0xff]
    %v5630 = vld [vmem:[%s792] sm:$0xff]
    %v5631 = vld [vmem:[%s792 + $0x8] sm:$0xff]
    %v5632 = vld [vmem:[%s792 + $0x10] sm:$0xff]
    %v5633 = vld [vmem:[%s792 + $0x18] sm:$0xff]
    %5635 = vrot.lane.b32.xlu0 %v5629, 32
    %v5636 = vpop.permute.xlu0 %5635
    %v5637 = vsel %vm276, %v5636, 0
    %5639 = vmatprep.subr.mxu0 0.0
    %5640 = vmatpush1.msra.mxu0 %v5630
    %5641 = vmatprep.subr.mxu0 0.0
    %5642 = vmatpush1.msra.mxu0 %v5631
    %5643 = vmatprep.subr.mxu0 0.0
    %5644 = vmatpush1.msra.mxu0 %v5632
    %5645 = vmatprep.subr.mxu0 0.0
    %5646 = vmatpush1.msra.mxu0 %v5633
    %5647 = vmatprep.subr.mxu0 0.0
    %5648 = vmatpush1.msra.mxu0 0.0
    %5649 = vmatprep.subr.mxu0 0.0
    %5650 = vmatpush1.msra.mxu0 0.0
    %5651 = vmatprep.subr.mxu0 0.0
    %5652 = vmatpush1.msra.mxu0 0.0
    %5653 = vmatprep.subr.mxu0 0.0
    %5654 = vmatpush1.msra.mxu0 0.0
    %5655 = vmatprep.subr.mxu0 0.0
    %5656 = vmatpush1.msra.mxu0 0.0
    %5657 = vmatprep.subr.mxu0 0.0
    %5658 = vmatpush1.msra.mxu0 0.0
    %5659 = vmatprep.subr.mxu0 0.0
    %5660 = vmatpush1.msra.mxu0 0.0
    %5661 = vmatprep.subr.mxu0 0.0
    %5662 = vmatpush1.msra.mxu0 0.0
    %5663 = vmatprep.subr.mxu0 0.0
    %5664 = vmatpush1.msra.mxu0 0.0
    %5665 = vmatprep.subr.mxu0 0.0
    %5666 = vmatpush1.msra.mxu0 0.0
    %5667 = vmatprep.subr.mxu0 0.0
    %5668 = vmatpush1.msra.mxu0 0.0
    %5669 = vmatprep.subr.mxu0 0.0
    %5670 = vmatpush1.msra.mxu0 0.0
    %5671 = vmatprep.subr.mxu0 0.0
    %5672 = vmatpush1.msra.mxu0 0.0
    %5673 = vmatprep.subr.mxu0 0.0
    %5674 = vmatpush1.msra.mxu0 0.0
    %5675 = vmatprep.subr.mxu0 0.0
    %5676 = vmatpush1.msra.mxu0 0.0
    %5677 = vmatprep.subr.mxu0 0.0
    %5678 = vmatpush1.msra.mxu0 0.0
    %5679 = vmatprep.subr.mxu0 0.0
    %5680 = vmatpush1.msra.mxu0 0.0
    %5681 = vmatprep.subr.mxu0 0.0
    %5682 = vmatpush1.msra.mxu0 0.0
    %5683 = vmatprep.subr.mxu0 0.0
    %5684 = vmatpush1.msra.mxu0 0.0
    %5685 = vmatprep.subr.mxu0 0.0
    %5686 = vmatpush1.msra.mxu0 0.0
    %5687 = vmatprep.subr.mxu0 0.0
    %5688 = vmatpush1.msra.mxu0 0.0
    %5689 = vmatprep.subr.mxu0 0.0
    %5690 = vmatpush1.msra.mxu0 0.0
    %5691 = vmatprep.subr.mxu0 0.0
    %5692 = vmatpush1.msra.mxu0 0.0
    %5693 = vmatprep.subr.mxu0 0.0
    %5694 = vmatpush1.msra.mxu0 0.0
    %5695 = vmatprep.subr.mxu0 0.0
    %5696 = vmatpush1.msra.mxu0 0.0
    %5697 = vmatprep.subr.mxu0 0.0
    %5698 = vmatpush1.msra.mxu0 0.0
    %5699 = vmatprep.subr.mxu0 0.0
    %5700 = vmatpush1.msra.mxu0 0.0
    %5701 = vmatprep.subr.mxu0 0.0
    %5702 = vmatpush1.msra.mxu0 0.0
    %5703 = vmatprep.mubr.f32.mxu0 0.0
    %5704 = vmatmul.mubr.f32.gmra.mrb[0].mxu0 %v5637
    %v5705 = vpop.f32.mrb[0].mxu0
    %v5706 = vadd.f32 0.0, %v5705
    %v5707 = vpop.f32.mrb[0].mxu0
    %5708 = vdwg.mxu0
    %5709 = vrot.lane.b32.xlu0 %v5614, 32
    %v5710 = vpop.permute.xlu0 %5709
    %v5711 = vsel %vm276, %v5710, 0
    %5713 = vmatprep.subr.mxu0 0.0
    %5714 = vmatpush1.msra.mxu0 %v5625
    %5715 = vmatprep.subr.mxu0 0.0
    %5716 = vmatpush1.msra.mxu0 %v5626
    %5717 = vmatprep.subr.mxu0 0.0
    %5718 = vmatpush1.msra.mxu0 %v5627
    %5719 = vmatprep.subr.mxu0 0.0
    %5720 = vmatpush1.msra.mxu0 %v5628
    %5721 = vmatprep.subr.mxu0 0.0
    %5722 = vmatpush1.msra.mxu0 0.0
    %5723 = vmatprep.subr.mxu0 0.0
    %5724 = vmatpush1.msra.mxu0 0.0
    %5725 = vmatprep.subr.mxu0 0.0
    %5726 = vmatpush1.msra.mxu0 0.0
    %5727 = vmatprep.subr.mxu0 0.0
    %5728 = vmatpush1.msra.mxu0 0.0
    %5729 = vmatprep.subr.mxu0 0.0
    %5730 = vmatpush1.msra.mxu0 0.0
    %5731 = vmatprep.subr.mxu0 0.0
    %5732 = vmatpush1.msra.mxu0 0.0
    %5733 = vmatprep.subr.mxu0 0.0
    %5734 = vmatpush1.msra.mxu0 0.0
    %5735 = vmatprep.subr.mxu0 0.0
    %5736 = vmatpush1.msra.mxu0 0.0
    %5737 = vmatprep.subr.mxu0 0.0
    %5738 = vmatpush1.msra.mxu0 0.0
    %5739 = vmatprep.subr.mxu0 0.0
    %5740 = vmatpush1.msra.mxu0 0.0
    %5741 = vmatprep.subr.mxu0 0.0
    %5742 = vmatpush1.msra.mxu0 0.0
    %5743 = vmatprep.subr.mxu0 0.0
    %5744 = vmatpush1.msra.mxu0 0.0
    %5745 = vmatprep.subr.mxu0 0.0
    %5746 = vmatpush1.msra.mxu0 0.0
    %5747 = vmatprep.subr.mxu0 0.0
    %5748 = vmatpush1.msra.mxu0 0.0
    %5749 = vmatprep.subr.mxu0 0.0
    %5750 = vmatpush1.msra.mxu0 0.0
    %5751 = vmatprep.subr.mxu0 0.0
    %5752 = vmatpush1.msra.mxu0 0.0
    %5753 = vmatprep.subr.mxu0 0.0
    %5754 = vmatpush1.msra.mxu0 0.0
    %5755 = vmatprep.subr.mxu0 0.0
    %5756 = vmatpush1.msra.mxu0 0.0
    %5757 = vmatprep.subr.mxu0 0.0
    %5758 = vmatpush1.msra.mxu0 0.0
    %5759 = vmatprep.subr.mxu0 0.0
    %5760 = vmatpush1.msra.mxu0 0.0
    %5761 = vmatprep.subr.mxu0 0.0
    %5762 = vmatpush1.msra.mxu0 0.0
    %5763 = vmatprep.subr.mxu0 0.0
    %5764 = vmatpush1.msra.mxu0 0.0
    %5765 = vmatprep.subr.mxu0 0.0
    %5766 = vmatpush1.msra.mxu0 0.0
    %5767 = vmatprep.subr.mxu0 0.0
    %5768 = vmatpush1.msra.mxu0 0.0
    %5769 = vmatprep.subr.mxu0 0.0
    %5770 = vmatpush1.msra.mxu0 0.0
    %5771 = vmatprep.subr.mxu0 0.0
    %5772 = vmatpush1.msra.mxu0 0.0
    %5773 = vmatprep.subr.mxu0 0.0
    %5774 = vmatpush1.msra.mxu0 0.0
    %5775 = vmatprep.subr.mxu0 0.0
    %5776 = vmatpush1.msra.mxu0 0.0
    %5777 = vmatprep.mubr.f32.mxu0 0.0
    %5778 = vmatmul.mubr.f32.gmra.mrb[0].mxu0 %v5711
    %v5779 = vpop.f32.mrb[0].mxu0
    %v5780 = vadd.f32 %v5706, %v5779
    %v5781 = vpop.f32.mrb[0].mxu0
    %5782 = vdwg.mxu0
    %v5783 = vadd.f32 %v5780, %v950
    %v5784 = vtanh.pop %v5783
    %v5785 = vmul.f32 %v5784, 0.5
    %v5786 = vadd.f32 %v5785, 0.5
    %v5787 = vsel %vm264, %v5784, %v5786
    %v5788 = vld [vmem:[#allocation3] sm:$0xff]
    %5790 = vrot.lane.b32.xlu0 %v5788, 64
    %v5791 = vpop.permute.xlu0 %5790
    %v5793 = vmul.f32 %v5787, %v5791
    %5795 = vrot.lane.b32.xlu0 %v5787, 64
    %v5796 = vpop.permute.xlu0 %5795
    %v5798 = vmul.f32 %v5787, %v5796
    %5800 = vrot.lane.b32.xlu0 %v5798, 32
    %v5801 = vpop.permute.xlu0 %5800
    %v5803 = vadd.f32 %v5793, %v5801
    %v5804 = vtanh.pop %v5803
    %5806 = vrot.lane.b32.xlu0 %v5804, 64
    %v5807 = vpop.permute.xlu0 %5806
    %v5809 = vmul.f32 %v5787, %v5807
    %5811 = vrot.lane.b32.xlu0 %v5803, 64
    %v5812 = vpop.permute.xlu0 %5811
    %5814 = vst.msk [vmem:[#allocation3] sm:$0xff] %vm983, %v5812
    %5815 = vst.msk [vmem:[#allocation2] sm:$0xff] %vm983, %v5809
    %v5816 = vld [vmem:[#allocation2] sm:$0xff]
    %v5817 = vld [vmem:[#allocation13] sm:$0xff]
    %v5818 = vld [vmem:[#allocation13 + $0x8] sm:$0xff]
    %v5819 = vld [vmem:[#allocation13 + $0x10] sm:$0xff]
    %v5820 = vld [vmem:[#allocation13 + $0x18] sm:$0xff]
    %v5821 = vld [vmem:[%s7] sm:$0x1]
    %v5823 = vlaneseq
    %v5824 = vshrl.u32 %v5823, 7
    %v5825 = vsub.s32 0, %v5824
    %v5826 = vrot.slane %v5821, %v5825
    %5829 = vrot.lane.b32.xlu0 %v5816, 32
    %v5830 = vpop.permute.xlu0 %5829
    %v5831 = vsel %vm276, %v5830, 0
    %5833 = vmatprep.subr.mxu0 0.0
    %5834 = vmatpush1.msra.mxu0 %v5817
    %5835 = vmatprep.subr.mxu0 0.0
    %5836 = vmatpush1.msra.mxu0 %v5818
    %5837 = vmatprep.subr.mxu0 0.0
    %5838 = vmatpush1.msra.mxu0 %v5819
    %5839 = vmatprep.subr.mxu0 0.0
    %5840 = vmatpush1.msra.mxu0 %v5820
    %5841 = vmatprep.subr.mxu0 0.0
    %5842 = vmatpush1.msra.mxu0 0.0
    %5843 = vmatprep.subr.mxu0 0.0
    %5844 = vmatpush1.msra.mxu0 0.0
    %5845 = vmatprep.subr.mxu0 0.0
    %5846 = vmatpush1.msra.mxu0 0.0
    %5847 = vmatprep.subr.mxu0 0.0
    %5848 = vmatpush1.msra.mxu0 0.0
    %5849 = vmatprep.subr.mxu0 0.0
    %5850 = vmatpush1.msra.mxu0 0.0
    %5851 = vmatprep.subr.mxu0 0.0
    %5852 = vmatpush1.msra.mxu0 0.0
    %5853 = vmatprep.subr.mxu0 0.0
    %5854 = vmatpush1.msra.mxu0 0.0
    %5855 = vmatprep.subr.mxu0 0.0
    %5856 = vmatpush1.msra.mxu0 0.0
    %5857 = vmatprep.subr.mxu0 0.0
    %5858 = vmatpush1.msra.mxu0 0.0
    %5859 = vmatprep.subr.mxu0 0.0
    %5860 = vmatpush1.msra.mxu0 0.0
    %5861 = vmatprep.subr.mxu0 0.0
    %5862 = vmatpush1.msra.mxu0 0.0
    %5863 = vmatprep.subr.mxu0 0.0
    %5864 = vmatpush1.msra.mxu0 0.0
    %5865 = vmatprep.subr.mxu0 0.0
    %5866 = vmatpush1.msra.mxu0 0.0
    %5867 = vmatprep.subr.mxu0 0.0
    %5868 = vmatpush1.msra.mxu0 0.0
    %5869 = vmatprep.subr.mxu0 0.0
    %5870 = vmatpush1.msra.mxu0 0.0
    %5871 = vmatprep.subr.mxu0 0.0
    %5872 = vmatpush1.msra.mxu0 0.0
    %5873 = vmatprep.subr.mxu0 0.0
    %5874 = vmatpush1.msra.mxu0 0.0
    %5875 = vmatprep.subr.mxu0 0.0
    %5876 = vmatpush1.msra.mxu0 0.0
    %5877 = vmatprep.subr.mxu0 0.0
    %5878 = vmatpush1.msra.mxu0 0.0
    %5879 = vmatprep.subr.mxu0 0.0
    %5880 = vmatpush1.msra.mxu0 0.0
    %5881 = vmatprep.subr.mxu0 0.0
    %5882 = vmatpush1.msra.mxu0 0.0
    %5883 = vmatprep.subr.mxu0 0.0
    %5884 = vmatpush1.msra.mxu0 0.0
    %5885 = vmatprep.subr.mxu0 0.0
    %5886 = vmatpush1.msra.mxu0 0.0
    %5887 = vmatprep.subr.mxu0 0.0
    %5888 = vmatpush1.msra.mxu0 0.0
    %5889 = vmatprep.subr.mxu0 0.0
    %5890 = vmatpush1.msra.mxu0 0.0
    %5891 = vmatprep.subr.mxu0 0.0
    %5892 = vmatpush1.msra.mxu0 0.0
    %5893 = vmatprep.subr.mxu0 0.0
    %5894 = vmatpush1.msra.mxu0 0.0
    %5895 = vmatprep.subr.mxu0 0.0
    %5896 = vmatpush1.msra.mxu0 0.0
    %5897 = vmatprep.mubr.f32.mxu0 0.0
    %5898 = vmatmul.mubr.f32.gmra.mrb[0].mxu0 %v5831
    %v5899 = vpop.f32.mrb[0].mxu0
    %v5900 = vadd.f32 %v5826, %v5899
    %v5901 = vpop.f32.mrb[0].mxu0
    %5902 = vdwg.mxu0
    %5903 = vst [vmem:[#allocation14] sm:$0xff] %v5900
    // Predicated region
    $region54: #{tpu_custom_call.1} parent=1 // pred_check
      _
    $region55: #{tpu_custom_call.1} parent=1 // pred_check_branch
      %5905 = sbr.rel (0) target = $region57
    $region56: #{tpu_custom_call.1} parent=1 // pred_region
      %s5907 = ssub.s32 128, 128
      %5908 = vsyncadd [#allocation7], %s5907
      %s5910 = sshll.u32 [#allocation14], 4
      %s5911 = int_to_ptr.vmem [resolvable:$true] %s5910
      %5913 = dma.vmem_to_hbm [thread:$0]  %s5911, 128, %s8, [#allocation7]
    $region57: #{tpu_custom_call.1} parent=1 // pred_fallthru
      _
    // Predicated region
    $region58: #{tpu_custom_call.1} parent=1 // pred_check
      _
    $region59: #{tpu_custom_call.1} parent=1 // pred_check_branch
      %5915 = sbr.rel (0) target = $region61
    $region60: #{tpu_custom_call.1} parent=1 // pred_region
      %5916 = dma.done [#allocation7], 128
    $region61: #{tpu_custom_call.1} parent=1 // pred_fallthru
      _
    %5917 = vsyncpa [#allocation6], 1
    %5918 = vsyncpa [#allocation9], 1
    %5919 = vsyncpa [#allocation12], 1
    %5920 = vsyncpa [#allocation7], 1

</llo_original>
